<compile_context>
chip_gen: v6e
topology: v6e:2x2x1
jax: 0.10.0
libtpu: 0.0.40
codegen_flags: <defaults>
</compile_context>

<pallas_src>
import functools

import jax
import jax.numpy as jnp
from jax.experimental import pallas as pl
from jax.experimental.pallas import tpu as pltpu

_EPS = 1e-5


def _round_up(x, m):
    return ((x + m - 1) // m) * m


def _vmem_capacity_bytes():
    try:
        return int(pltpu.get_tpu_info().vmem_capacity_bytes)
    except Exception:
        return 64 * 1024 * 1024          # conservative (v7x-sized) fallback


def _pick_band_rows(h, wp, c_in, cp, budget_bytes):
    """Largest band height `th` whose per-grid-step VMEM footprint fits the budget.

    Counts the x2 double-buffering Pallas applies to every BlockSpec operand, the
    resident weight taps and the in-kernel f32 accumulator.
    """
    weights = 2 * 9 * c_in * cp * 2                  # (9, C, cp) bf16, double-buffered
    best = 1
    for th in range(1, h + 1):
        rows_band = (th + 2) * wp + 8
        mr = th * wp
        step = (2 * rows_band * c_in * 2             # halo'd band block, bf16, x2 buffers
                + 2 * mr * cp * 2                    # bf16 conv-output block, x2 buffers
                + 2 * 2 * cp * 4                     # stats block
                + 2 * mr * 4                         # validity-mask block
                + mr * cp * 4                        # f32 accumulator temporary
                + weights)
        if step <= budget_bytes:
            best = th
    return best


# ----------------------------------------------------------------------------
# Pass 1: 3x3 conv (nine shifted-slice MXU matmuls) + per-band partial BN stats
# ----------------------------------------------------------------------------
def _conv_stats_kernel(band_ref, w_ref, mask_ref, y_ref, stats_ref, *, wp, rows):
    # band_ref : (1, 1, (th+2)*wp + 8, C) bf16  halo'd band, rows flattened (h, w)-major
    # w_ref    : (9, C, cp)                bf16  per-(kh, kw) tap weight matrices
    # mask_ref : (1, th*wp, 1)             f32   1.0 on valid (row < H, col < W) positions
    # y_ref    : (1, 1, th*wp, cp)         bf16  raw conv output (padded-width layout)
    # stats_ref: (1, 1, 2, cp)             f32   [sum, sum of squares] over valid positions
    acc = None
    for kh in range(3):
        for kw in range(3):
            off = kh * wp + kw                        # static; kw != 0 slices are sublane-
            tap = band_ref[0, 0, off:off + rows, :]   # unaligned -> cheap in-VMEM relayout
            part = jnp.dot(tap, w_ref[kh * 3 + kw],
                           preferred_element_type=jnp.float32)
            acc = part if acc is None else acc + part
    y_ref[0, 0] = acc.astype(y_ref.dtype)             # bf16 store: halves HBM writeback
    valid = mask_ref[0]                               # (rows, 1)
    am = acc * valid                                  # stats from the f32 accumulator
    stats_ref[0, 0, 0:1, :] = jnp.sum(am, axis=0, keepdims=True)
    stats_ref[0, 0, 1:2, :] = jnp.sum(am * am, axis=0, keepdims=True)


# ----------------------------------------------------------------------------
# Pass 2 (final stage only): fused BatchNorm affine + ReLU, f32 output
# ----------------------------------------------------------------------------
def _bn_relu_kernel(y_ref, s_ref, t_ref, o_ref):
    # y_ref : (1, 1, MR, cp) bf16 ; s_ref/t_ref : (1, cp) f32 ; o_ref : (1, 1, MR, cp) f32
    y = y_ref[0, 0].astype(jnp.float32)
    o_ref[0, 0] = jnp.maximum(y * s_ref[...] + t_ref[...], 0.0)


# ----------------------------------------------------------------------------
# JAX glue
# ----------------------------------------------------------------------------
def _build_bands(a_nhwc, th, wp):
    """(N, H, W, C) -> (N, nb, (th+2)*wp + 8, C) bf16 halo'd bands (no kw expansion)."""
    N, H, W, C = a_nhwc.shape
    nb = -(-H // th)
    hp = nb * th
    xp = jnp.pad(a_nhwc, ((0, 0), (1, hp - H + 1), (1, wp - W - 1), (0, 0)))
    bands = jnp.stack([xp[:, b * th:b * th + th + 2] for b in range(nb)], axis=1)
    bands = bands.reshape(N, nb, (th + 2) * wp, C)
    bands = jnp.pad(bands, ((0, 0), (0, 0), (0, 8), (0, 0)))   # room for the +2 tap overhang
    return bands.astype(jnp.bfloat16), nb


def _weight_to_taps(w_oihw, cin_pad, cout_pad):
    # PyTorch (C_out, C_in, 3, 3) -> (9, cin_pad, cout_pad) bf16, tap index = kh*3 + kw.
    co, ci = w_oihw.shape[0], w_oihw.shape[1]
    w = jnp.transpose(w_oihw, (2, 3, 1, 0))                    # (3, 3, C_in, C_out)
    w = jnp.pad(w, ((0, 0), (0, 0), (0, cin_pad - ci), (0, cout_pad - co)))
    return w.reshape(9, cin_pad, cout_pad).astype(jnp.bfloat16)


def _valid_mask(h, th, nb, wp, w_valid):
    # (nb, th*wp, 1) f32: 1.0 where the output position is a real (row < H, col < W) pixel.
    h_ok = (jnp.arange(nb)[:, None] * th + jnp.arange(th)[None, :]) < h      # (nb, th)
    w_ok = jnp.arange(wp) < w_valid                                          # (wp,)
    m = (h_ok[:, :, None] & w_ok[None, None, :]).astype(jnp.float32)
    return m.reshape(nb, th * wp, 1)


def _conv_bn_stage(a_nhwc, w_oihw, gamma, beta, cp, *, band_budget, vmem_limit):
    N, H, W, C = a_nhwc.shape
    co = w_oihw.shape[0]
    wp = _round_up(W + 2, 8)                       # sublane-aligned padded width
    th = _pick_band_rows(H, wp, C, cp, band_budget)
    bands, nb = _build_bands(a_nhwc, th, wp)
    rows_band = bands.shape[2]
    MR = th * wp
    w_taps = _weight_to_taps(w_oihw, C, cp)
    mask = _valid_mask(H, th, nb, wp, W)

    y, stats = pl.pallas_call(
        functools.partial(_conv_stats_kernel, wp=wp, rows=MR),
        out_shape=(jax.ShapeDtypeStruct((N, nb, MR, cp), jnp.bfloat16),
                   jax.ShapeDtypeStruct((N, nb, 2, cp), jnp.float32)),
        grid_spec=pltpu.PrefetchScalarGridSpec(
            num_scalar_prefetch=0,
            grid=(N, nb),
            in_specs=[pl.BlockSpec((1, 1, rows_band, C), lambda n, b: (n, b, 0, 0)),
                      pl.BlockSpec((9, C, cp), lambda n, b: (0, 0, 0)),   # resident weights
                      pl.BlockSpec((1, MR, 1), lambda n, b: (b, 0, 0))],
            out_specs=[pl.BlockSpec((1, 1, MR, cp), lambda n, b: (n, b, 0, 0)),
                       pl.BlockSpec((1, 1, 2, cp), lambda n, b: (n, b, 0, 0))]),
        compiler_params=pltpu.CompilerParams(
            # Both axes independent -> shards across TensorCores on multi-TC chips.
            # TODO(synk): verify both v7x TCs engage; else switch to pltpu.CORE_PARALLEL.
            dimension_semantics=("parallel", "parallel"),
            vmem_limit_bytes=vmem_limit),
    )(bands, w_taps, mask)

    # BN finalize: O(C) plain JAX.  Biased batch variance, as nn.BatchNorm2d (training).
    # TODO(synk): E[x^2]-mean^2 in f32 can lose precision at very large N*H*W; switch to
    #             per-band centered moments + Chan's combine if production sizes need it.
    cnt = jnp.float32(N * H * W)
    mean = jnp.sum(stats[:, :, 0, :], axis=(0, 1)) / cnt
    var = jnp.maximum(jnp.sum(stats[:, :, 1, :], axis=(0, 1)) / cnt - mean * mean, 0.0)
    g_p = jnp.pad(gamma, (0, cp - co))
    b_p = jnp.pad(beta, (0, cp - co))
    scale = (g_p * jax.lax.rsqrt(var + _EPS)).astype(jnp.float32)
    shift = (b_p - mean * scale).astype(jnp.float32)
    return y, scale.reshape(1, cp), shift.reshape(1, cp), (nb, th, wp)


def conv_block_forward(x_nchw, params):
    N, C_in, H, W = x_nchw.shape
    C_out = params["w1"].shape[0]
    cp = _round_up(C_out, 128)                     # lane-dense output channels
    cap = _vmem_capacity_bytes()
    vmem_limit = (cap * 3) // 4                    # ~48 MiB on v7x, ~96 MiB on v5e/v6e
    band_budget = cap // 8                         # per-step blocks incl. double-buffering

    x = jnp.transpose(x_nchw, (0, 2, 3, 1))        # NCHW -> NHWC
    # Padded channels (>= C_out) stay exactly zero through both stages (zero weights,
    # zero gamma/beta) and are sliced off at the end.

    # ---- stage 1: conv1 + BN1 statistics (Pallas) ----
    y1, s1, t1, (nb1, th1, wp1) = _conv_bn_stage(
        x, params["w1"], params["g1"], params["beta1"], cp,
        band_budget=band_budget, vmem_limit=vmem_limit)
    # BN1 affine + ReLU: fused by XLA into the stage-2 band build (no extra Pallas pass,
    # no extra activation round trip through HBM).
    a1 = jnp.maximum(y1.astype(jnp.float32) * s1 + t1, 0.0)
    a1 = a1.reshape(N, nb1 * th1, wp1, cp)[:, :H, :W, :]

    # ---- stage 2: conv2 + BN2 statistics (Pallas) ----
    y2, s2, t2, (nb2, th2, wp2) = _conv_bn_stage(
        a1, params["w2"], params["g2"], params["beta2"], cp,
        band_budget=band_budget, vmem_limit=vmem_limit)

    # ---- final BN2 affine + ReLU (Pallas pass 2, f32 output) ----
    MR2 = th2 * wp2
    out = pl.pallas_call(
        _bn_relu_kernel,
        out_shape=jax.ShapeDtypeStruct((N, nb2, MR2, cp), jnp.float32),
        grid_spec=pltpu.PrefetchScalarGridSpec(
            num_scalar_prefetch=0,
            grid=(N, nb2),
            in_specs=[pl.BlockSpec((1, 1, MR2, cp), lambda n, b: (n, b, 0, 0)),
                      pl.BlockSpec((1, cp), lambda n, b: (0, 0)),
                      pl.BlockSpec((1, cp), lambda n, b: (0, 0))],
            out_specs=pl.BlockSpec((1, 1, MR2, cp), lambda n, b: (n, b, 0, 0))),
        compiler_params=pltpu.CompilerParams(
            dimension_semantics=("parallel", "parallel"),
            vmem_limit_bytes=vmem_limit),
    )(y2, s2, t2)

    out = out.reshape(N, nb2 * th2, wp2, cp)[:, :H, :W, :C_out]
    return jnp.transpose(out, (0, 3, 1, 2))        # NHWC -> NCHW


# ----------------------------------------------------------------------------
# Deterministic parameter init (shapes from the module's __init__)
# ----------------------------------------------------------------------------
def init_params(key, ch_in, ch_out):
    ks = jax.random.split(key, 8)
    s1 = 1.0 / jnp.sqrt(jnp.float32(ch_in * 9))
    s2 = 1.0 / jnp.sqrt(jnp.float32(ch_out * 9))
    return dict(
        w1=jax.random.uniform(ks[0], (ch_out, ch_in, 3, 3), jnp.float32, -s1, s1),
        b1=jax.random.uniform(ks[1], (ch_out,), jnp.float32, -s1, s1),
        g1=1.0 + 0.1 * jax.random.normal(ks[2], (ch_out,), jnp.float32),
        beta1=0.1 * jax.random.normal(ks[3], (ch_out,), jnp.float32),
        w2=jax.random.uniform(ks[4], (ch_out, ch_out, 3, 3), jnp.float32, -s2, s2),
        b2=jax.random.uniform(ks[5], (ch_out,), jnp.float32, -s2, s2),
        g2=1.0 + 0.1 * jax.random.normal(ks[6], (ch_out,), jnp.float32),
        beta2=0.1 * jax.random.normal(ks[7], (ch_out,), jnp.float32),
    )


# ----------------------------------------------------------------------------
# Pure-JAX f32 reference (keeps the conv bias; it must cancel under BN)
# ----------------------------------------------------------------------------
def _ref_forward(x, p):
    def conv(x, w, b):
        y = jax.lax.conv_general_dilated(
            x, w, (1, 1), ((1, 1), (1, 1)),
            dimension_numbers=("NCHW", "OIHW", "NCHW"),
            precision=jax.lax.Precision.HIGHEST)
        return y + b[None, :, None, None]

    def bn_relu(y, g, be):
        mean = jnp.mean(y, axis=(0, 2, 3), keepdims=True)
        var = jnp.mean(jnp.square(y - mean), axis=(0, 2, 3), keepdims=True)
        yh = (y - mean) * jax.lax.rsqrt(var + _EPS)
        return jnp.maximum(yh * g[None, :, None, None] + be[None, :, None, None], 0.0)

    y = bn_relu(conv(x, p["w1"], p["b1"]), p["g1"], p["beta1"])
    return bn_relu(conv(y, p["w2"], p["b2"]), p["g2"], p["beta2"])


if __name__ == "__main__":
    key = jax.random.PRNGKey(0)
    k_x, k_p = jax.random.split(key)

    N, C_in, C_out, H, W = 2, 4, 8, 16, 16
    x = jax.random.normal(k_x, (N, C_in, H, W), jnp.float32)
    params = init_params(k_p, C_in, C_out)

    out = jax.block_until_ready(jax.jit(conv_block_forward)(x, params))
    ref = jax.block_until_ready(jax.jit(_ref_forward)(x, params))

    assert out.shape == (N, C_out, H, W)
    max_err = float(jnp.max(jnp.abs(out - ref)))
    # bf16 MXU inputs and bf16 intermediate activations vs an f32 HIGHEST reference.
    assert jnp.allclose(out, ref, atol=8e-2, rtol=5e-2), max_err

    print("KERNEL_OK")
</pallas_src>

<mosaic_0001>
module attributes {stable_mosaic.version = 11 : i64} {
  func.func @_conv_stats_kernel(%arg0: i32, %arg1: i32, %arg2: memref<1x1x440x4xbf16, #tpu.memory_space<vmem>>, %arg3: memref<9x4x128xbf16, #tpu.memory_space<vmem>>, %arg4: memref<1x384x1xf32, #tpu.memory_space<vmem>>, %arg5: memref<1x1x384x128xbf16, #tpu.memory_space<vmem>>, %arg6: memref<1x1x2x128xf32, #tpu.memory_space<vmem>>) attributes {dimension_semantics = [#tpu.dimension_semantics<parallel>, #tpu.dimension_semantics<parallel>], iteration_bounds = array<i64: 2, 1>, scalar_prefetch = 0 : i64, scratch_operands = 0 : i64, tpu.core_type = #tpu.core_type<tc>, window_params = [{transform_indices = @transform_0, window_bounds = array<i64: 1, 1, 440, 4>}, {pipeline_mode = #tpu.pipeline_mode<synchronous>, transform_indices = @transform_1, window_bounds = array<i64: 9, 4, 128>}, {transform_indices = @transform_2, window_bounds = array<i64: 1, 384, 1>}, {transform_indices = @transform_3, window_bounds = array<i64: 1, 1, 384, 128>}, {transform_indices = @transform_4, window_bounds = array<i64: 1, 1, 2, 128>}]} {
    %c0 = arith.constant 0 : index
    %c0_0 = arith.constant 0 : index
    %c0_1 = arith.constant 0 : index
    %c0_2 = arith.constant 0 : index
    %0 = vector.load %arg2[%c0, %c0_0, %c0_1, %c0_2] : memref<1x1x440x4xbf16, #tpu.memory_space<vmem>>, vector<1x1x384x4xbf16>
    %1 = vector.shape_cast %0 : vector<1x1x384x4xbf16> to vector<384x4xbf16>
    %c0_3 = arith.constant 0 : index
    %c0_4 = arith.constant 0 : index
    %c0_5 = arith.constant 0 : index
    %2 = vector.load %arg3[%c0_3, %c0_4, %c0_5] : memref<9x4x128xbf16, #tpu.memory_space<vmem>>, vector<1x4x128xbf16>
    %3 = vector.shape_cast %2 : vector<1x4x128xbf16> to vector<4x128xbf16>
    %cst = arith.constant dense<0.000000e+00> : vector<384x128xf32>
    %4 = tpu.matmul %1, %3, %cst {dimension_numbers = #tpu.dot_dimension_numbers<[1], [0], [0], [1], [0, 0, 1, 1], [], []>} : vector<384x4xbf16>, vector<4x128xbf16>, vector<384x128xf32> -> vector<384x128xf32>
    %c0_6 = arith.constant 0 : index
    %c0_7 = arith.constant 0 : index
    %c1 = arith.constant 1 : index
    %c0_8 = arith.constant 0 : index
    %5 = vector.load %arg2[%c0_6, %c0_7, %c1, %c0_8] : memref<1x1x440x4xbf16, #tpu.memory_space<vmem>>, vector<1x1x384x4xbf16>
    %6 = vector.shape_cast %5 : vector<1x1x384x4xbf16> to vector<384x4xbf16>
    %c1_9 = arith.constant 1 : index
    %c0_10 = arith.constant 0 : index
    %c0_11 = arith.constant 0 : index
    %7 = vector.load %arg3[%c1_9, %c0_10, %c0_11] : memref<9x4x128xbf16, #tpu.memory_space<vmem>>, vector<1x4x128xbf16>
    %8 = vector.shape_cast %7 : vector<1x4x128xbf16> to vector<4x128xbf16>
    %cst_12 = arith.constant dense<0.000000e+00> : vector<384x128xf32>
    %9 = tpu.matmul %6, %8, %cst_12 {dimension_numbers = #tpu.dot_dimension_numbers<[1], [0], [0], [1], [0, 0, 1, 1], [], []>} : vector<384x4xbf16>, vector<4x128xbf16>, vector<384x128xf32> -> vector<384x128xf32>
    %10 = arith.addf %4, %9 : vector<384x128xf32>
    %c0_13 = arith.constant 0 : index
    %c0_14 = arith.constant 0 : index
    %c2 = arith.constant 2 : index
    %c0_15 = arith.constant 0 : index
    %11 = vector.load %arg2[%c0_13, %c0_14, %c2, %c0_15] : memref<1x1x440x4xbf16, #tpu.memory_space<vmem>>, vector<1x1x384x4xbf16>
    %12 = vector.shape_cast %11 : vector<1x1x384x4xbf16> to vector<384x4xbf16>
    %c2_16 = arith.constant 2 : index
    %c0_17 = arith.constant 0 : index
    %c0_18 = arith.constant 0 : index
    %13 = vector.load %arg3[%c2_16, %c0_17, %c0_18] : memref<9x4x128xbf16, #tpu.memory_space<vmem>>, vector<1x4x128xbf16>
    %14 = vector.shape_cast %13 : vector<1x4x128xbf16> to vector<4x128xbf16>
    %cst_19 = arith.constant dense<0.000000e+00> : vector<384x128xf32>
    %15 = tpu.matmul %12, %14, %cst_19 {dimension_numbers = #tpu.dot_dimension_numbers<[1], [0], [0], [1], [0, 0, 1, 1], [], []>} : vector<384x4xbf16>, vector<4x128xbf16>, vector<384x128xf32> -> vector<384x128xf32>
    %16 = arith.addf %10, %15 : vector<384x128xf32>
    %c0_20 = arith.constant 0 : index
    %c0_21 = arith.constant 0 : index
    %c24 = arith.constant 24 : index
    %c0_22 = arith.constant 0 : index
    %17 = vector.load %arg2[%c0_20, %c0_21, %c24, %c0_22] : memref<1x1x440x4xbf16, #tpu.memory_space<vmem>>, vector<1x1x384x4xbf16>
    %18 = vector.shape_cast %17 : vector<1x1x384x4xbf16> to vector<384x4xbf16>
    %c3 = arith.constant 3 : index
    %c0_23 = arith.constant 0 : index
    %c0_24 = arith.constant 0 : index
    %19 = vector.load %arg3[%c3, %c0_23, %c0_24] : memref<9x4x128xbf16, #tpu.memory_space<vmem>>, vector<1x4x128xbf16>
    %20 = vector.shape_cast %19 : vector<1x4x128xbf16> to vector<4x128xbf16>
    %cst_25 = arith.constant dense<0.000000e+00> : vector<384x128xf32>
    %21 = tpu.matmul %18, %20, %cst_25 {dimension_numbers = #tpu.dot_dimension_numbers<[1], [0], [0], [1], [0, 0, 1, 1], [], []>} : vector<384x4xbf16>, vector<4x128xbf16>, vector<384x128xf32> -> vector<384x128xf32>
    %22 = arith.addf %16, %21 : vector<384x128xf32>
    %c0_26 = arith.constant 0 : index
    %c0_27 = arith.constant 0 : index
    %c25 = arith.constant 25 : index
    %c0_28 = arith.constant 0 : index
    %23 = vector.load %arg2[%c0_26, %c0_27, %c25, %c0_28] : memref<1x1x440x4xbf16, #tpu.memory_space<vmem>>, vector<1x1x384x4xbf16>
    %24 = vector.shape_cast %23 : vector<1x1x384x4xbf16> to vector<384x4xbf16>
    %c4 = arith.constant 4 : index
    %c0_29 = arith.constant 0 : index
    %c0_30 = arith.constant 0 : index
    %25 = vector.load %arg3[%c4, %c0_29, %c0_30] : memref<9x4x128xbf16, #tpu.memory_space<vmem>>, vector<1x4x128xbf16>
    %26 = vector.shape_cast %25 : vector<1x4x128xbf16> to vector<4x128xbf16>
    %cst_31 = arith.constant dense<0.000000e+00> : vector<384x128xf32>
    %27 = tpu.matmul %24, %26, %cst_31 {dimension_numbers = #tpu.dot_dimension_numbers<[1], [0], [0], [1], [0, 0, 1, 1], [], []>} : vector<384x4xbf16>, vector<4x128xbf16>, vector<384x128xf32> -> vector<384x128xf32>
    %28 = arith.addf %22, %27 : vector<384x128xf32>
    %c0_32 = arith.constant 0 : index
    %c0_33 = arith.constant 0 : index
    %c26 = arith.constant 26 : index
    %c0_34 = arith.constant 0 : index
    %29 = vector.load %arg2[%c0_32, %c0_33, %c26, %c0_34] : memref<1x1x440x4xbf16, #tpu.memory_space<vmem>>, vector<1x1x384x4xbf16>
    %30 = vector.shape_cast %29 : vector<1x1x384x4xbf16> to vector<384x4xbf16>
    %c5 = arith.constant 5 : index
    %c0_35 = arith.constant 0 : index
    %c0_36 = arith.constant 0 : index
    %31 = vector.load %arg3[%c5, %c0_35, %c0_36] : memref<9x4x128xbf16, #tpu.memory_space<vmem>>, vector<1x4x128xbf16>
    %32 = vector.shape_cast %31 : vector<1x4x128xbf16> to vector<4x128xbf16>
    %cst_37 = arith.constant dense<0.000000e+00> : vector<384x128xf32>
    %33 = tpu.matmul %30, %32, %cst_37 {dimension_numbers = #tpu.dot_dimension_numbers<[1], [0], [0], [1], [0, 0, 1, 1], [], []>} : vector<384x4xbf16>, vector<4x128xbf16>, vector<384x128xf32> -> vector<384x128xf32>
    %34 = arith.addf %28, %33 : vector<384x128xf32>
    %c0_38 = arith.constant 0 : index
    %c0_39 = arith.constant 0 : index
    %c48 = arith.constant 48 : index
    %c0_40 = arith.constant 0 : index
    %35 = vector.load %arg2[%c0_38, %c0_39, %c48, %c0_40] : memref<1x1x440x4xbf16, #tpu.memory_space<vmem>>, vector<1x1x384x4xbf16>
    %36 = vector.shape_cast %35 : vector<1x1x384x4xbf16> to vector<384x4xbf16>
    %c6 = arith.constant 6 : index
    %c0_41 = arith.constant 0 : index
    %c0_42 = arith.constant 0 : index
    %37 = vector.load %arg3[%c6, %c0_41, %c0_42] : memref<9x4x128xbf16, #tpu.memory_space<vmem>>, vector<1x4x128xbf16>
    %38 = vector.shape_cast %37 : vector<1x4x128xbf16> to vector<4x128xbf16>
    %cst_43 = arith.constant dense<0.000000e+00> : vector<384x128xf32>
    %39 = tpu.matmul %36, %38, %cst_43 {dimension_numbers = #tpu.dot_dimension_numbers<[1], [0], [0], [1], [0, 0, 1, 1], [], []>} : vector<384x4xbf16>, vector<4x128xbf16>, vector<384x128xf32> -> vector<384x128xf32>
    %40 = arith.addf %34, %39 : vector<384x128xf32>
    %c0_44 = arith.constant 0 : index
    %c0_45 = arith.constant 0 : index
    %c49 = arith.constant 49 : index
    %c0_46 = arith.constant 0 : index
    %41 = vector.load %arg2[%c0_44, %c0_45, %c49, %c0_46] : memref<1x1x440x4xbf16, #tpu.memory_space<vmem>>, vector<1x1x384x4xbf16>
    %42 = vector.shape_cast %41 : vector<1x1x384x4xbf16> to vector<384x4xbf16>
    %c7 = arith.constant 7 : index
    %c0_47 = arith.constant 0 : index
    %c0_48 = arith.constant 0 : index
    %43 = vector.load %arg3[%c7, %c0_47, %c0_48] : memref<9x4x128xbf16, #tpu.memory_space<vmem>>, vector<1x4x128xbf16>
    %44 = vector.shape_cast %43 : vector<1x4x128xbf16> to vector<4x128xbf16>
    %cst_49 = arith.constant dense<0.000000e+00> : vector<384x128xf32>
    %45 = tpu.matmul %42, %44, %cst_49 {dimension_numbers = #tpu.dot_dimension_numbers<[1], [0], [0], [1], [0, 0, 1, 1], [], []>} : vector<384x4xbf16>, vector<4x128xbf16>, vector<384x128xf32> -> vector<384x128xf32>
    %46 = arith.addf %40, %45 : vector<384x128xf32>
    %c0_50 = arith.constant 0 : index
    %c0_51 = arith.constant 0 : index
    %c50 = arith.constant 50 : index
    %c0_52 = arith.constant 0 : index
    %47 = vector.load %arg2[%c0_50, %c0_51, %c50, %c0_52] : memref<1x1x440x4xbf16, #tpu.memory_space<vmem>>, vector<1x1x384x4xbf16>
    %48 = vector.shape_cast %47 : vector<1x1x384x4xbf16> to vector<384x4xbf16>
    %c8 = arith.constant 8 : index
    %c0_53 = arith.constant 0 : index
    %c0_54 = arith.constant 0 : index
    %49 = vector.load %arg3[%c8, %c0_53, %c0_54] : memref<9x4x128xbf16, #tpu.memory_space<vmem>>, vector<1x4x128xbf16>
    %50 = vector.shape_cast %49 : vector<1x4x128xbf16> to vector<4x128xbf16>
    %cst_55 = arith.constant dense<0.000000e+00> : vector<384x128xf32>
    %51 = tpu.matmul %48, %50, %cst_55 {dimension_numbers = #tpu.dot_dimension_numbers<[1], [0], [0], [1], [0, 0, 1, 1], [], []>} : vector<384x4xbf16>, vector<4x128xbf16>, vector<384x128xf32> -> vector<384x128xf32>
    %52 = arith.addf %46, %51 : vector<384x128xf32>
    %53 = arith.truncf %52 : vector<384x128xf32> to vector<384x128xbf16>
    %c0_56 = arith.constant 0 : index
    %c0_57 = arith.constant 0 : index
    %c0_58 = arith.constant 0 : index
    %c0_59 = arith.constant 0 : index
    %54 = vector.load %arg5[%c0_56, %c0_57, %c0_58, %c0_59] : memref<1x1x384x128xbf16, #tpu.memory_space<vmem>>, vector<1x1x384x128xbf16>
    %55 = vector.shape_cast %54 : vector<1x1x384x128xbf16> to vector<384x128xbf16>
    %56 = vector.shape_cast %53 : vector<384x128xbf16> to vector<1x1x384x128xbf16>
    tpu.vector_store %arg5[%c0_56, %c0_57, %c0_58, %c0_59], %56 {strides = array<i32>} : memref<1x1x384x128xbf16, #tpu.memory_space<vmem>>, vector<1x1x384x128xbf16>,
    %c0_60 = arith.constant 0 : index
    %c0_61 = arith.constant 0 : index
    %c0_62 = arith.constant 0 : index
    %57 = vector.load %arg4[%c0_60, %c0_61, %c0_62] : memref<1x384x1xf32, #tpu.memory_space<vmem>>, vector<1x384x1xf32>
    %58 = vector.shape_cast %57 : vector<1x384x1xf32> to vector<384x1xf32>
    %59 = vector.broadcast %58 : vector<384x1xf32> to vector<384x128xf32>
    %60 = arith.mulf %52, %59 : vector<384x128xf32>
    %cst_63 = arith.constant dense<0.000000e+00> : vector<128xf32>
    %61 = vector.multi_reduction <add>, %60, %cst_63 [0] : vector<384x128xf32> to vector<128xf32>
    %62 = vector.shape_cast %61 : vector<128xf32> to vector<1x128xf32>
    %c0_64 = arith.constant 0 : index
    %c0_65 = arith.constant 0 : index
    %c0_66 = arith.constant 0 : index
    %c0_67 = arith.constant 0 : index
    %63 = vector.load %arg6[%c0_64, %c0_65, %c0_66, %c0_67] : memref<1x1x2x128xf32, #tpu.memory_space<vmem>>, vector<1x1x1x128xf32>
    %64 = vector.shape_cast %63 : vector<1x1x1x128xf32> to vector<1x128xf32>
    %65 = vector.shape_cast %62 : vector<1x128xf32> to vector<1x1x1x128xf32>
    tpu.vector_store %arg6[%c0_64, %c0_65, %c0_66, %c0_67], %65 {strides = array<i32>} : memref<1x1x2x128xf32, #tpu.memory_space<vmem>>, vector<1x1x1x128xf32>,
    %66 = arith.mulf %60, %60 : vector<384x128xf32>
    %cst_68 = arith.constant dense<0.000000e+00> : vector<128xf32>
    %67 = vector.multi_reduction <add>, %66, %cst_68 [0] : vector<384x128xf32> to vector<128xf32>
    %68 = vector.shape_cast %67 : vector<128xf32> to vector<1x128xf32>
    %c0_69 = arith.constant 0 : index
    %c0_70 = arith.constant 0 : index
    %c1_71 = arith.constant 1 : index
    %c0_72 = arith.constant 0 : index
    %69 = vector.load %arg6[%c0_69, %c0_70, %c1_71, %c0_72] : memref<1x1x2x128xf32, #tpu.memory_space<vmem>>, vector<1x1x1x128xf32>
    %70 = vector.shape_cast %69 : vector<1x1x1x128xf32> to vector<1x128xf32>
    %71 = vector.shape_cast %68 : vector<1x128xf32> to vector<1x1x1x128xf32>
    tpu.vector_store %arg6[%c0_69, %c0_70, %c1_71, %c0_72], %71 {strides = array<i32>} : memref<1x1x2x128xf32, #tpu.memory_space<vmem>>, vector<1x1x1x128xf32>,
    return
  }
  func.func @transform_0(%arg0: i32, %arg1: i32) -> (i32, i32, i32, i32) {
    %c0_i32 = arith.constant 0 : i32
    %c0_i32_0 = arith.constant 0 : i32
    %c0_i32_1 = arith.constant 0 : i32
    return %arg0, %arg1, %c0_i32, %c0_i32_0 : i32, i32, i32, i32
  }
  func.func @transform_1(%arg0: i32, %arg1: i32) -> (i32, i32, i32) {
    %c0_i32 = arith.constant 0 : i32
    %c0_i32_0 = arith.constant 0 : i32
    %c0_i32_1 = arith.constant 0 : i32
    %c0_i32_2 = arith.constant 0 : i32
    return %c0_i32, %c0_i32_0, %c0_i32_1 : i32, i32, i32
  }
  func.func @transform_2(%arg0: i32, %arg1: i32) -> (i32, i32, i32) {
    %c0_i32 = arith.constant 0 : i32
    %c0_i32_0 = arith.constant 0 : i32
    %c0_i32_1 = arith.constant 0 : i32
    return %arg1, %c0_i32, %c0_i32_0 : i32, i32, i32
  }
  func.func @transform_3(%arg0: i32, %arg1: i32) -> (i32, i32, i32, i32) {
    %c0_i32 = arith.constant 0 : i32
    %c0_i32_0 = arith.constant 0 : i32
    %c0_i32_1 = arith.constant 0 : i32
    return %arg0, %arg1, %c0_i32, %c0_i32_0 : i32, i32, i32, i32
  }
  func.func @transform_4(%arg0: i32, %arg1: i32) -> (i32, i32, i32, i32) {
    %c0_i32 = arith.constant 0 : i32
    %c0_i32_0 = arith.constant 0 : i32
    %c0_i32_1 = arith.constant 0 : i32
    return %arg0, %arg1, %c0_i32, %c0_i32_0 : i32, i32, i32, i32
  }
}

module attributes {stable_mosaic.version = 11 : i64} {
  func.func @_conv_stats_kernel(%arg0: i32, %arg1: i32, %arg2: memref<1x1x440x128xbf16, #tpu.memory_space<vmem>>, %arg3: memref<9x128x128xbf16, #tpu.memory_space<vmem>>, %arg4: memref<1x384x1xf32, #tpu.memory_space<vmem>>, %arg5: memref<1x1x384x128xbf16, #tpu.memory_space<vmem>>, %arg6: memref<1x1x2x128xf32, #tpu.memory_space<vmem>>) attributes {dimension_semantics = [#tpu.dimension_semantics<parallel>, #tpu.dimension_semantics<parallel>], iteration_bounds = array<i64: 2, 1>, scalar_prefetch = 0 : i64, scratch_operands = 0 : i64, tpu.core_type = #tpu.core_type<tc>, window_params = [{transform_indices = @transform_0, window_bounds = array<i64: 1, 1, 440, 128>}, {pipeline_mode = #tpu.pipeline_mode<synchronous>, transform_indices = @transform_1, window_bounds = array<i64: 9, 128, 128>}, {transform_indices = @transform_2, window_bounds = array<i64: 1, 384, 1>}, {transform_indices = @transform_3, window_bounds = array<i64: 1, 1, 384, 128>}, {transform_indices = @transform_4, window_bounds = array<i64: 1, 1, 2, 128>}]} {
    %c0 = arith.constant 0 : index
    %c0_0 = arith.constant 0 : index
    %c0_1 = arith.constant 0 : index
    %c0_2 = arith.constant 0 : index
    %0 = vector.load %arg2[%c0, %c0_0, %c0_1, %c0_2] : memref<1x1x440x128xbf16, #tpu.memory_space<vmem>>, vector<1x1x384x128xbf16>
    %1 = vector.shape_cast %0 : vector<1x1x384x128xbf16> to vector<384x128xbf16>
    %c0_3 = arith.constant 0 : index
    %c0_4 = arith.constant 0 : index
    %c0_5 = arith.constant 0 : index
    %2 = vector.load %arg3[%c0_3, %c0_4, %c0_5] : memref<9x128x128xbf16, #tpu.memory_space<vmem>>, vector<1x128x128xbf16>
    %3 = vector.shape_cast %2 : vector<1x128x128xbf16> to vector<128x128xbf16>
    %cst = arith.constant dense<0.000000e+00> : vector<384x128xf32>
    %4 = tpu.matmul %1, %3, %cst {dimension_numbers = #tpu.dot_dimension_numbers<[1], [0], [0], [1], [0, 0, 1, 1], [], []>} : vector<384x128xbf16>, vector<128x128xbf16>, vector<384x128xf32> -> vector<384x128xf32>
    %c0_6 = arith.constant 0 : index
    %c0_7 = arith.constant 0 : index
    %c1 = arith.constant 1 : index
    %c0_8 = arith.constant 0 : index
    %5 = vector.load %arg2[%c0_6, %c0_7, %c1, %c0_8] : memref<1x1x440x128xbf16, #tpu.memory_space<vmem>>, vector<1x1x384x128xbf16>
    %6 = vector.shape_cast %5 : vector<1x1x384x128xbf16> to vector<384x128xbf16>
    %c1_9 = arith.constant 1 : index
    %c0_10 = arith.constant 0 : index
    %c0_11 = arith.constant 0 : index
    %7 = vector.load %arg3[%c1_9, %c0_10, %c0_11] : memref<9x128x128xbf16, #tpu.memory_space<vmem>>, vector<1x128x128xbf16>
    %8 = vector.shape_cast %7 : vector<1x128x128xbf16> to vector<128x128xbf16>
    %cst_12 = arith.constant dense<0.000000e+00> : vector<384x128xf32>
    %9 = tpu.matmul %6, %8, %cst_12 {dimension_numbers = #tpu.dot_dimension_numbers<[1], [0], [0], [1], [0, 0, 1, 1], [], []>} : vector<384x128xbf16>, vector<128x128xbf16>, vector<384x128xf32> -> vector<384x128xf32>
    %10 = arith.addf %4, %9 : vector<384x128xf32>
    %c0_13 = arith.constant 0 : index
    %c0_14 = arith.constant 0 : index
    %c2 = arith.constant 2 : index
    %c0_15 = arith.constant 0 : index
    %11 = vector.load %arg2[%c0_13, %c0_14, %c2, %c0_15] : memref<1x1x440x128xbf16, #tpu.memory_space<vmem>>, vector<1x1x384x128xbf16>
    %12 = vector.shape_cast %11 : vector<1x1x384x128xbf16> to vector<384x128xbf16>
    %c2_16 = arith.constant 2 : index
    %c0_17 = arith.constant 0 : index
    %c0_18 = arith.constant 0 : index
    %13 = vector.load %arg3[%c2_16, %c0_17, %c0_18] : memref<9x128x128xbf16, #tpu.memory_space<vmem>>, vector<1x128x128xbf16>
    %14 = vector.shape_cast %13 : vector<1x128x128xbf16> to vector<128x128xbf16>
    %cst_19 = arith.constant dense<0.000000e+00> : vector<384x128xf32>
    %15 = tpu.matmul %12, %14, %cst_19 {dimension_numbers = #tpu.dot_dimension_numbers<[1], [0], [0], [1], [0, 0, 1, 1], [], []>} : vector<384x128xbf16>, vector<128x128xbf16>, vector<384x128xf32> -> vector<384x128xf32>
    %16 = arith.addf %10, %15 : vector<384x128xf32>
    %c0_20 = arith.constant 0 : index
    %c0_21 = arith.constant 0 : index
    %c24 = arith.constant 24 : index
    %c0_22 = arith.constant 0 : index
    %17 = vector.load %arg2[%c0_20, %c0_21, %c24, %c0_22] : memref<1x1x440x128xbf16, #tpu.memory_space<vmem>>, vector<1x1x384x128xbf16>
    %18 = vector.shape_cast %17 : vector<1x1x384x128xbf16> to vector<384x128xbf16>
    %c3 = arith.constant 3 : index
    %c0_23 = arith.constant 0 : index
    %c0_24 = arith.constant 0 : index
    %19 = vector.load %arg3[%c3, %c0_23, %c0_24] : memref<9x128x128xbf16, #tpu.memory_space<vmem>>, vector<1x128x128xbf16>
    %20 = vector.shape_cast %19 : vector<1x128x128xbf16> to vector<128x128xbf16>
    %cst_25 = arith.constant dense<0.000000e+00> : vector<384x128xf32>
    %21 = tpu.matmul %18, %20, %cst_25 {dimension_numbers = #tpu.dot_dimension_numbers<[1], [0], [0], [1], [0, 0, 1, 1], [], []>} : vector<384x128xbf16>, vector<128x128xbf16>, vector<384x128xf32> -> vector<384x128xf32>
    %22 = arith.addf %16, %21 : vector<384x128xf32>
    %c0_26 = arith.constant 0 : index
    %c0_27 = arith.constant 0 : index
    %c25 = arith.constant 25 : index
    %c0_28 = arith.constant 0 : index
    %23 = vector.load %arg2[%c0_26, %c0_27, %c25, %c0_28] : memref<1x1x440x128xbf16, #tpu.memory_space<vmem>>, vector<1x1x384x128xbf16>
    %24 = vector.shape_cast %23 : vector<1x1x384x128xbf16> to vector<384x128xbf16>
    %c4 = arith.constant 4 : index
    %c0_29 = arith.constant 0 : index
    %c0_30 = arith.constant 0 : index
    %25 = vector.load %arg3[%c4, %c0_29, %c0_30] : memref<9x128x128xbf16, #tpu.memory_space<vmem>>, vector<1x128x128xbf16>
    %26 = vector.shape_cast %25 : vector<1x128x128xbf16> to vector<128x128xbf16>
    %cst_31 = arith.constant dense<0.000000e+00> : vector<384x128xf32>
    %27 = tpu.matmul %24, %26, %cst_31 {dimension_numbers = #tpu.dot_dimension_numbers<[1], [0], [0], [1], [0, 0, 1, 1], [], []>} : vector<384x128xbf16>, vector<128x128xbf16>, vector<384x128xf32> -> vector<384x128xf32>
    %28 = arith.addf %22, %27 : vector<384x128xf32>
    %c0_32 = arith.constant 0 : index
    %c0_33 = arith.constant 0 : index
    %c26 = arith.constant 26 : index
    %c0_34 = arith.constant 0 : index
    %29 = vector.load %arg2[%c0_32, %c0_33, %c26, %c0_34] : memref<1x1x440x128xbf16, #tpu.memory_space<vmem>>, vector<1x1x384x128xbf16>
    %30 = vector.shape_cast %29 : vector<1x1x384x128xbf16> to vector<384x128xbf16>
    %c5 = arith.constant 5 : index
    %c0_35 = arith.constant 0 : index
    %c0_36 = arith.constant 0 : index
    %31 = vector.load %arg3[%c5, %c0_35, %c0_36] : memref<9x128x128xbf16, #tpu.memory_space<vmem>>, vector<1x128x128xbf16>
    %32 = vector.shape_cast %31 : vector<1x128x128xbf16> to vector<128x128xbf16>
    %cst_37 = arith.constant dense<0.000000e+00> : vector<384x128xf32>
    %33 = tpu.matmul %30, %32, %cst_37 {dimension_numbers = #tpu.dot_dimension_numbers<[1], [0], [0], [1], [0, 0, 1, 1], [], []>} : vector<384x128xbf16>, vector<128x128xbf16>, vector<384x128xf32> -> vector<384x128xf32>
    %34 = arith.addf %28, %33 : vector<384x128xf32>
    %c0_38 = arith.constant 0 : index
    %c0_39 = arith.constant 0 : index
    %c48 = arith.constant 48 : index
    %c0_40 = arith.constant 0 : index
    %35 = vector.load %arg2[%c0_38, %c0_39, %c48, %c0_40] : memref<1x1x440x128xbf16, #tpu.memory_space<vmem>>, vector<1x1x384x128xbf16>
    %36 = vector.shape_cast %35 : vector<1x1x384x128xbf16> to vector<384x128xbf16>
    %c6 = arith.constant 6 : index
    %c0_41 = arith.constant 0 : index
    %c0_42 = arith.constant 0 : index
    %37 = vector.load %arg3[%c6, %c0_41, %c0_42] : memref<9x128x128xbf16, #tpu.memory_space<vmem>>, vector<1x128x128xbf16>
    %38 = vector.shape_cast %37 : vector<1x128x128xbf16> to vector<128x128xbf16>
    %cst_43 = arith.constant dense<0.000000e+00> : vector<384x128xf32>
    %39 = tpu.matmul %36, %38, %cst_43 {dimension_numbers = #tpu.dot_dimension_numbers<[1], [0], [0], [1], [0, 0, 1, 1], [], []>} : vector<384x128xbf16>, vector<128x128xbf16>, vector<384x128xf32> -> vector<384x128xf32>
    %40 = arith.addf %34, %39 : vector<384x128xf32>
    %c0_44 = arith.constant 0 : index
    %c0_45 = arith.constant 0 : index
    %c49 = arith.constant 49 : index
    %c0_46 = arith.constant 0 : index
    %41 = vector.load %arg2[%c0_44, %c0_45, %c49, %c0_46] : memref<1x1x440x128xbf16, #tpu.memory_space<vmem>>, vector<1x1x384x128xbf16>
    %42 = vector.shape_cast %41 : vector<1x1x384x128xbf16> to vector<384x128xbf16>
    %c7 = arith.constant 7 : index
    %c0_47 = arith.constant 0 : index
    %c0_48 = arith.constant 0 : index
    %43 = vector.load %arg3[%c7, %c0_47, %c0_48] : memref<9x128x128xbf16, #tpu.memory_space<vmem>>, vector<1x128x128xbf16>
    %44 = vector.shape_cast %43 : vector<1x128x128xbf16> to vector<128x128xbf16>
    %cst_49 = arith.constant dense<0.000000e+00> : vector<384x128xf32>
    %45 = tpu.matmul %42, %44, %cst_49 {dimension_numbers = #tpu.dot_dimension_numbers<[1], [0], [0], [1], [0, 0, 1, 1], [], []>} : vector<384x128xbf16>, vector<128x128xbf16>, vector<384x128xf32> -> vector<384x128xf32>
    %46 = arith.addf %40, %45 : vector<384x128xf32>
    %c0_50 = arith.constant 0 : index
    %c0_51 = arith.constant 0 : index
    %c50 = arith.constant 50 : index
    %c0_52 = arith.constant 0 : index
    %47 = vector.load %arg2[%c0_50, %c0_51, %c50, %c0_52] : memref<1x1x440x128xbf16, #tpu.memory_space<vmem>>, vector<1x1x384x128xbf16>
    %48 = vector.shape_cast %47 : vector<1x1x384x128xbf16> to vector<384x128xbf16>
    %c8 = arith.constant 8 : index
    %c0_53 = arith.constant 0 : index
    %c0_54 = arith.constant 0 : index
    %49 = vector.load %arg3[%c8, %c0_53, %c0_54] : memref<9x128x128xbf16, #tpu.memory_space<vmem>>, vector<1x128x128xbf16>
    %50 = vector.shape_cast %49 : vector<1x128x128xbf16> to vector<128x128xbf16>
    %cst_55 = arith.constant dense<0.000000e+00> : vector<384x128xf32>
    %51 = tpu.matmul %48, %50, %cst_55 {dimension_numbers = #tpu.dot_dimension_numbers<[1], [0], [0], [1], [0, 0, 1, 1], [], []>} : vector<384x128xbf16>, vector<128x128xbf16>, vector<384x128xf32> -> vector<384x128xf32>
    %52 = arith.addf %46, %51 : vector<384x128xf32>
    %53 = arith.truncf %52 : vector<384x128xf32> to vector<384x128xbf16>
    %c0_56 = arith.constant 0 : index
    %c0_57 = arith.constant 0 : index
    %c0_58 = arith.constant 0 : index
    %c0_59 = arith.constant 0 : index
    %54 = vector.load %arg5[%c0_56, %c0_57, %c0_58, %c0_59] : memref<1x1x384x128xbf16, #tpu.memory_space<vmem>>, vector<1x1x384x128xbf16>
    %55 = vector.shape_cast %54 : vector<1x1x384x128xbf16> to vector<384x128xbf16>
    %56 = vector.shape_cast %53 : vector<384x128xbf16> to vector<1x1x384x128xbf16>
    tpu.vector_store %arg5[%c0_56, %c0_57, %c0_58, %c0_59], %56 {strides = array<i32>} : memref<1x1x384x128xbf16, #tpu.memory_space<vmem>>, vector<1x1x384x128xbf16>,
    %c0_60 = arith.constant 0 : index
    %c0_61 = arith.constant 0 : index
    %c0_62 = arith.constant 0 : index
    %57 = vector.load %arg4[%c0_60, %c0_61, %c0_62] : memref<1x384x1xf32, #tpu.memory_space<vmem>>, vector<1x384x1xf32>
    %58 = vector.shape_cast %57 : vector<1x384x1xf32> to vector<384x1xf32>
    %59 = vector.broadcast %58 : vector<384x1xf32> to vector<384x128xf32>
    %60 = arith.mulf %52, %59 : vector<384x128xf32>
    %cst_63 = arith.constant dense<0.000000e+00> : vector<128xf32>
    %61 = vector.multi_reduction <add>, %60, %cst_63 [0] : vector<384x128xf32> to vector<128xf32>
    %62 = vector.shape_cast %61 : vector<128xf32> to vector<1x128xf32>
    %c0_64 = arith.constant 0 : index
    %c0_65 = arith.constant 0 : index
    %c0_66 = arith.constant 0 : index
    %c0_67 = arith.constant 0 : index
    %63 = vector.load %arg6[%c0_64, %c0_65, %c0_66, %c0_67] : memref<1x1x2x128xf32, #tpu.memory_space<vmem>>, vector<1x1x1x128xf32>
    %64 = vector.shape_cast %63 : vector<1x1x1x128xf32> to vector<1x128xf32>
    %65 = vector.shape_cast %62 : vector<1x128xf32> to vector<1x1x1x128xf32>
    tpu.vector_store %arg6[%c0_64, %c0_65, %c0_66, %c0_67], %65 {strides = array<i32>} : memref<1x1x2x128xf32, #tpu.memory_space<vmem>>, vector<1x1x1x128xf32>,
    %66 = arith.mulf %60, %60 : vector<384x128xf32>
    %cst_68 = arith.constant dense<0.000000e+00> : vector<128xf32>
    %67 = vector.multi_reduction <add>, %66, %cst_68 [0] : vector<384x128xf32> to vector<128xf32>
    %68 = vector.shape_cast %67 : vector<128xf32> to vector<1x128xf32>
    %c0_69 = arith.constant 0 : index
    %c0_70 = arith.constant 0 : index
    %c1_71 = arith.constant 1 : index
    %c0_72 = arith.constant 0 : index
    %69 = vector.load %arg6[%c0_69, %c0_70, %c1_71, %c0_72] : memref<1x1x2x128xf32, #tpu.memory_space<vmem>>, vector<1x1x1x128xf32>
    %70 = vector.shape_cast %69 : vector<1x1x1x128xf32> to vector<1x128xf32>
    %71 = vector.shape_cast %68 : vector<1x128xf32> to vector<1x1x1x128xf32>
    tpu.vector_store %arg6[%c0_69, %c0_70, %c1_71, %c0_72], %71 {strides = array<i32>} : memref<1x1x2x128xf32, #tpu.memory_space<vmem>>, vector<1x1x1x128xf32>,
    return
  }
  func.func @transform_0(%arg0: i32, %arg1: i32) -> (i32, i32, i32, i32) {
    %c0_i32 = arith.constant 0 : i32
    %c0_i32_0 = arith.constant 0 : i32
    %c0_i32_1 = arith.constant 0 : i32
    return %arg0, %arg1, %c0_i32, %c0_i32_0 : i32, i32, i32, i32
  }
  func.func @transform_1(%arg0: i32, %arg1: i32) -> (i32, i32, i32) {
    %c0_i32 = arith.constant 0 : i32
    %c0_i32_0 = arith.constant 0 : i32
    %c0_i32_1 = arith.constant 0 : i32
    %c0_i32_2 = arith.constant 0 : i32
    return %c0_i32, %c0_i32_0, %c0_i32_1 : i32, i32, i32
  }
  func.func @transform_2(%arg0: i32, %arg1: i32) -> (i32, i32, i32) {
    %c0_i32 = arith.constant 0 : i32
    %c0_i32_0 = arith.constant 0 : i32
    %c0_i32_1 = arith.constant 0 : i32
    return %arg1, %c0_i32, %c0_i32_0 : i32, i32, i32
  }
  func.func @transform_3(%arg0: i32, %arg1: i32) -> (i32, i32, i32, i32) {
    %c0_i32 = arith.constant 0 : i32
    %c0_i32_0 = arith.constant 0 : i32
    %c0_i32_1 = arith.constant 0 : i32
    return %arg0, %arg1, %c0_i32, %c0_i32_0 : i32, i32, i32, i32
  }
  func.func @transform_4(%arg0: i32, %arg1: i32) -> (i32, i32, i32, i32) {
    %c0_i32 = arith.constant 0 : i32
    %c0_i32_0 = arith.constant 0 : i32
    %c0_i32_1 = arith.constant 0 : i32
    return %arg0, %arg1, %c0_i32, %c0_i32_0 : i32, i32, i32, i32
  }
}

module attributes {stable_mosaic.version = 11 : i64} {
  func.func @_bn_relu_kernel(%arg0: i32, %arg1: i32, %arg2: memref<1x1x384x128xbf16, #tpu.memory_space<vmem>>, %arg3: memref<1x128xf32, #tpu.memory_space<vmem>>, %arg4: memref<1x128xf32, #tpu.memory_space<vmem>>, %arg5: memref<1x1x384x128xf32, #tpu.memory_space<vmem>>) attributes {dimension_semantics = [#tpu.dimension_semantics<parallel>, #tpu.dimension_semantics<parallel>], iteration_bounds = array<i64: 2, 1>, scalar_prefetch = 0 : i64, scratch_operands = 0 : i64, tpu.core_type = #tpu.core_type<tc>, window_params = [{transform_indices = @transform_0, window_bounds = array<i64: 1, 1, 384, 128>}, {pipeline_mode = #tpu.pipeline_mode<synchronous>, transform_indices = @transform_1, window_bounds = array<i64: 1, 128>}, {pipeline_mode = #tpu.pipeline_mode<synchronous>, transform_indices = @transform_2, window_bounds = array<i64: 1, 128>}, {transform_indices = @transform_3, window_bounds = array<i64: 1, 1, 384, 128>}]} {
    %c0 = arith.constant 0 : index
    %c0_0 = arith.constant 0 : index
    %c0_1 = arith.constant 0 : index
    %c0_2 = arith.constant 0 : index
    %0 = vector.load %arg2[%c0, %c0_0, %c0_1, %c0_2] : memref<1x1x384x128xbf16, #tpu.memory_space<vmem>>, vector<1x1x384x128xbf16>
    %1 = vector.shape_cast %0 : vector<1x1x384x128xbf16> to vector<384x128xbf16>
    %2 = arith.extf %1 : vector<384x128xbf16> to vector<384x128xf32>
    %c0_3 = arith.constant 0 : index
    %c0_4 = arith.constant 0 : index
    %3 = vector.load %arg3[%c0_3, %c0_4] : memref<1x128xf32, #tpu.memory_space<vmem>>, vector<1x128xf32>
    %4 = vector.broadcast %3 : vector<1x128xf32> to vector<384x128xf32>
    %5 = arith.mulf %2, %4 : vector<384x128xf32>
    %c0_5 = arith.constant 0 : index
    %c0_6 = arith.constant 0 : index
    %6 = vector.load %arg4[%c0_5, %c0_6] : memref<1x128xf32, #tpu.memory_space<vmem>>, vector<1x128xf32>
    %7 = vector.broadcast %6 : vector<1x128xf32> to vector<384x128xf32>
    %8 = arith.addf %5, %7 : vector<384x128xf32>
    %cst = arith.constant 0.000000e+00 : f32
    %9 = vector.broadcast %cst : f32 to vector<384x128xf32>
    %10 = arith.maximumf %8, %9 : vector<384x128xf32>
    %c0_7 = arith.constant 0 : index
    %c0_8 = arith.constant 0 : index
    %c0_9 = arith.constant 0 : index
    %c0_10 = arith.constant 0 : index
    %11 = vector.load %arg5[%c0_7, %c0_8, %c0_9, %c0_10] : memref<1x1x384x128xf32, #tpu.memory_space<vmem>>, vector<1x1x384x128xf32>
    %12 = vector.shape_cast %11 : vector<1x1x384x128xf32> to vector<384x128xf32>
    %13 = vector.shape_cast %10 : vector<384x128xf32> to vector<1x1x384x128xf32>
    tpu.vector_store %arg5[%c0_7, %c0_8, %c0_9, %c0_10], %13 {strides = array<i32>} : memref<1x1x384x128xf32, #tpu.memory_space<vmem>>, vector<1x1x384x128xf32>,
    return
  }
  func.func @transform_0(%arg0: i32, %arg1: i32) -> (i32, i32, i32, i32) {
    %c0_i32 = arith.constant 0 : i32
    %c0_i32_0 = arith.constant 0 : i32
    %c0_i32_1 = arith.constant 0 : i32
    return %arg0, %arg1, %c0_i32, %c0_i32_0 : i32, i32, i32, i32
  }
  func.func @transform_1(%arg0: i32, %arg1: i32) -> (i32, i32) {
    %c0_i32 = arith.constant 0 : i32
    %c0_i32_0 = arith.constant 0 : i32
    %c0_i32_1 = arith.constant 0 : i32
    return %c0_i32, %c0_i32_0 : i32, i32
  }
  func.func @transform_2(%arg0: i32, %arg1: i32) -> (i32, i32) {
    %c0_i32 = arith.constant 0 : i32
    %c0_i32_0 = arith.constant 0 : i32
    %c0_i32_1 = arith.constant 0 : i32
    return %c0_i32, %c0_i32_0 : i32, i32
  }
  func.func @transform_3(%arg0: i32, %arg1: i32) -> (i32, i32, i32, i32) {
    %c0_i32 = arith.constant 0 : i32
    %c0_i32_0 = arith.constant 0 : i32
    %c0_i32_1 = arith.constant 0 : i32
    return %arg0, %arg1, %c0_i32, %c0_i32_0 : i32, i32, i32, i32
  }
}

</mosaic_0001>

<llo_original>
// kernel: conv_block_forward.5
$region0: #{conv_block_forward.5}
  #allocation0 [shape = 'u32[]', space=smem, size = 0x4, offset = 0x4, fixed_abs, tag = 'smem constant byte address 0x4 - core index']
  #allocation1 [shape = 'u32[144,128]{1,0:T(1,128)}', space=vmem, size = 0x12000, scoped, tag = 'internal scratch']
  %s0 = inlined_call_operand.vmem [shape: bf16[2,1,384,128], index: 0, kind: input, shape index: {}]
  %s1 = inlined_call_operand.vmem [shape: f32[1,128], index: 1, kind: input, shape index: {}]
  %s2 = inlined_call_operand.vmem [shape: f32[1,128], index: 2, kind: input, shape index: {}]
  %s3 = inlined_call_operand.vmem [shape: f32[2,1,384,128], index: 3, kind: output, shape index: {}]
  %s4 = sld [smem:[#allocation0]]
  $region45: #{conv_block_forward.5} parent=0
    _
  %s6 = ssub.s32 1, %s4
  %s7 = scalar_select 0, %s6, %s4
  loop: start=0, step=1, limit=4
  $region2: #{conv_block_forward.5} parent=0 // loop_pre_header
    _
  $region3: #{conv_block_forward.5} parent=0 // loop_header
    %s9 = sphi 0, %s13
    %p10 = scmp.ge.s32.totalorder %s9, 4
    %s16 = sphi 0, %s28
    %s17 = sphi 0, %s24
    %s18 = sphi 0, %s16
    %s19 = sphi 0, %s17
    %s20 = sphi 0, %s18
    %s21 = sphi 0, %s19
    %s33 = sphi 0, %s35
    %s36 = sphi 0, %s33
    %s37 = sphi 0, %s36
    %s53 = sphi 0, %s37
    %s57 = sphi 0, %s57
    %s59 = sphi 0, %s57
    %s60 = sphi 0, %s59
    %s74 = sphi 0, %s60
    %s78 = sphi 0, %s78
    %s80 = sphi 0, %s78
    %s81 = sphi 0, %s80
    %s95 = sphi 0, %s81
    %s103 = sphi 0, %s105
    %s106 = sphi 0, %s103
    %s107 = sphi 0, %s106
    %s123 = sphi 0, %s107
  $region4: #{conv_block_forward.5} parent=0 // loop_header_branch
    %12 = sbr.rel (%p10) target = $region8
  $region5: #{conv_block_forward.5} parent=0 // loop_body
    %s14 = ssub.s32 %s9, 1
    %s15 = ssub.s32 %s9, 2
    %s22 = sadd.s32 1, %s17
    %p23 = scmp.ge.s32.totalorder %s22, 1
    %s24 = scalar_select %p23, 0, %s22
    %s25 = sadd.s32 1, %s16
    %s26 = scalar_select %p23, %s25, %s16
    %p27 = scmp.ge.s32.totalorder %s26, 2
    %s28 = scalar_select %p27, 0, %s26
    %s29 = ssub.s32 %s16, %s28
    %s30 = ssub.s32 %s17, %s24
    %s31 = sor.u32 %s29, %s30
    %p32 = scmp.eq.s32.totalorder %s31, 0
    %s34 = sadd.s32 %s33, 1
    %s35 = scalar_select %p32, %s33, %s34
    %p38 = pneg %p32
    %p39 = scmp.eq.s32.totalorder %s9, 1
    %p40 = por %p38, %p39
    %p41 = scmp.ne.s32.totalorder %s33, %s36
    %p42 = scmp.eq.s32.totalorder %s9, 0
    %p43 = por %p41, %p42
    %p44 = scmp.ne.s32.totalorder %s33, %s36
    %p45 = scmp.eq.s32.totalorder %s14, 1
    %p46 = por %p44, %p45
    %p47 = scmp.ne.s32.totalorder %s36, %s37
    %p48 = scmp.eq.s32.totalorder %s14, 0
    %p49 = por %p47, %p48
    %p50 = scmp.ne.s32.totalorder %s36, %s37
    %p51 = scmp.eq.s32.totalorder %s15, 1
    %p52 = por %p50, %p51
    %p54 = scmp.ne.s32.totalorder %s37, %s53
    %p55 = scmp.eq.s32.totalorder %s15, 0
    %p56 = por %p54, %p55
    %s58 = sadd.s32 %s57, 1
    %p61 = scmp.eq.s32.totalorder %s9, 1
    %p62 = scmp.ne.s32.totalorder %s57, %s59
    %p63 = scmp.eq.s32.totalorder %s9, 0
    %p64 = por %p62, %p63
    %p65 = scmp.ne.s32.totalorder %s57, %s59
    %p66 = scmp.eq.s32.totalorder %s14, 1
    %p67 = por %p65, %p66
    %p68 = scmp.ne.s32.totalorder %s59, %s60
    %p69 = scmp.eq.s32.totalorder %s14, 0
    %p70 = por %p68, %p69
    %p71 = scmp.ne.s32.totalorder %s59, %s60
    %p72 = scmp.eq.s32.totalorder %s15, 1
    %p73 = por %p71, %p72
    %p75 = scmp.ne.s32.totalorder %s60, %s74
    %p76 = scmp.eq.s32.totalorder %s15, 0
    %p77 = por %p75, %p76
    %s79 = sadd.s32 %s78, 1
    %p82 = scmp.eq.s32.totalorder %s9, 1
    %p83 = scmp.ne.s32.totalorder %s78, %s80
    %p84 = scmp.eq.s32.totalorder %s9, 0
    %p85 = por %p83, %p84
    %p86 = scmp.ne.s32.totalorder %s78, %s80
    %p87 = scmp.eq.s32.totalorder %s14, 1
    %p88 = por %p86, %p87
    %p89 = scmp.ne.s32.totalorder %s80, %s81
    %p90 = scmp.eq.s32.totalorder %s14, 0
    %p91 = por %p89, %p90
    %p92 = scmp.ne.s32.totalorder %s80, %s81
    %p93 = scmp.eq.s32.totalorder %s15, 1
    %p94 = por %p92, %p93
    %p96 = scmp.ne.s32.totalorder %s81, %s95
    %p97 = scmp.eq.s32.totalorder %s15, 0
    %p98 = por %p96, %p97
    %s99 = ssub.s32 %s16, %s28
    %s100 = ssub.s32 %s17, %s24
    %s101 = sor.u32 %s99, %s100
    %p102 = scmp.eq.s32.totalorder %s101, 0
    %s104 = sadd.s32 %s103, 1
    %s105 = scalar_select %p102, %s103, %s104
    %p108 = pneg %p102
    %p109 = scmp.eq.s32.totalorder %s9, 1
    %p110 = por %p108, %p109
    %p111 = scmp.ne.s32.totalorder %s103, %s106
    %p112 = scmp.eq.s32.totalorder %s9, 0
    %p113 = por %p111, %p112
    %p114 = scmp.ne.s32.totalorder %s103, %s106
    %p115 = scmp.eq.s32.totalorder %s14, 1
    %p116 = por %p114, %p115
    %p117 = scmp.ne.s32.totalorder %s106, %s107
    %p118 = scmp.eq.s32.totalorder %s14, 0
    %p119 = por %p117, %p118
    %p120 = scmp.ne.s32.totalorder %s106, %s107
    %p121 = scmp.eq.s32.totalorder %s15, 1
    %p122 = por %p120, %p121
    %p124 = scmp.ne.s32.totalorder %s107, %s123
    %p125 = scmp.eq.s32.totalorder %s15, 0
    %p126 = por %p124, %p125
    %p127 = scmp.le.s32.totalorder 1, %s9
    %p128 = scmp.lt.s32.totalorder %s9, 3
    %p129 = pnand %p127, %p128
    %p130 = pneg %p129
    // Predicated region
    $region9: #{conv_block_forward.5} parent=5 // pred_check
      _
    $region10: #{conv_block_forward.5} parent=5 // pred_check_branch
      %132 = sbr.rel (%p129) target = $region12
    $region11: #{conv_block_forward.5} parent=5 // pred_region
      %s133 = ssub.s32 %s9, 1
      // Predicated region
      $region13: #{conv_block_forward.5} parent=11 // pred_check
        %p134 = pneg %p70
      $region14: #{conv_block_forward.5} parent=11 // pred_check_branch
        %136 = sbr.rel (%p134) target = $region16
      $region15: #{conv_block_forward.5} parent=11 // pred_region
        _
      $region16: #{conv_block_forward.5} parent=11 // pred_fallthru
        _
      // Predicated region
      $region17: #{conv_block_forward.5} parent=11 // pred_check
        %p137 = pneg %p91
      $region18: #{conv_block_forward.5} parent=11 // pred_check_branch
        %139 = sbr.rel (%p137) target = $region20
      $region19: #{conv_block_forward.5} parent=11 // pred_region
        _
      $region20: #{conv_block_forward.5} parent=11 // pred_fallthru
        _
    $region12: #{conv_block_forward.5} parent=5 // pred_fallthru
      _
    %p140 = scmp.lt.s32.totalorder %s9, 2
    // Predicated region
    $region21: #{conv_block_forward.5} parent=5 // pred_check
      %p141 = pneg %p140
    $region22: #{conv_block_forward.5} parent=5 // pred_check_branch
      %143 = sbr.rel (%p141) target = $region24
    $region23: #{conv_block_forward.5} parent=5 // pred_region
      // Predicated region
      $region25: #{conv_block_forward.5} parent=23 // pred_check
        %p144 = pneg %p43
      $region26: #{conv_block_forward.5} parent=23 // pred_check_branch
        %146 = sbr.rel (%p144) target = $region28
      $region27: #{conv_block_forward.5} parent=23 // pred_region
        %p147 = scmp.lt.s32.totalorder %s16, 1
        %s148 = scalar_select %p147, %s16, 1
        %p149 = scmp.lt.s32.totalorder %s17, 0
        %s150 = scalar_select %p149, %s17, 0
        %s151 = smul.addr %s150, 48
        %s152 = smul.addr %s148, 48
        %s153 = sadd.s32 %s151, %s152
        %s154 = smul.addr %s153, 4
        %s155 = scalar_lea.vmem %s0, %s154
      $region28: #{conv_block_forward.5} parent=23 // pred_fallthru
        _
    $region24: #{conv_block_forward.5} parent=5 // pred_fallthru
      _
    %p156 = scmp.le.s32.totalorder 1, %s9
    %p157 = scmp.lt.s32.totalorder %s9, 3
    %p158 = pnand %p156, %p157
    %p159 = pneg %p158
    // Predicated region
    $region29: #{conv_block_forward.5} parent=5 // pred_check
      _
    $region30: #{conv_block_forward.5} parent=5 // pred_check_branch
      %161 = sbr.rel (%p158) target = $region32
    $region31: #{conv_block_forward.5} parent=5 // pred_region
      %s162 = ssub.s32 %s9, 1
      %p163 = scmp.lt.s32.totalorder %s18, 1
      %s164 = scalar_select %p163, %s18, 1
      %p165 = scmp.lt.s32.totalorder %s19, 0
      %s166 = scalar_select %p165, %s19, 0
      %s167 = smul.addr %s166, 48
      %s168 = smul.addr %s164, 48
      %s169 = sadd.s32 %s167, %s168
      %s170 = smul.addr %s169, 4
      %s171 = scalar_lea.vmem %s0, %s170
      %p172 = pneg %p49
      %p173 = pneg %p46
      %p174 = pneg %p70
      %p175 = pneg %p67
      %p176 = pneg %p91
      %p177 = pneg %p88
      %p178 = pneg %p119
      %p179 = pneg %p116
      %p180 = scmp.lt.s32.totalorder %s18, 1
      %s181 = scalar_select %p180, %s18, 1
      %p182 = scmp.lt.s32.totalorder %s19, 0
      %s183 = scalar_select %p182, %s19, 0
      %s184 = smul.addr %s183, 48
      %s185 = smul.addr %s181, 48
      %s186 = sadd.s32 %s184, %s185
      %s187 = smul.addr %s186, 8
      %s188 = scalar_lea.vmem %s3, %s187
      %p189 = scmp.lt.s32.totalorder %s18, 1
      %s190 = scalar_select %p189, %s18, 1
      %p191 = scmp.lt.s32.totalorder %s19, 0
      %s192 = scalar_select %p191, %s19, 0
      %s193 = smul.addr %s192, 48
      %s194 = smul.addr %s190, 48
      %s195 = sadd.s32 %s193, %s194
      %s196 = smul.addr %s195, 4
      %s197 = scalar_lea.vmem %s0, %s196
      %p198 = scmp.lt.s32.totalorder %s18, 1
      %s199 = scalar_select %p198, %s18, 1
      %p200 = scmp.lt.s32.totalorder %s19, 0
      %s201 = scalar_select %p200, %s19, 0
      %s202 = smul.addr %s201, 48
      %s203 = smul.addr %s199, 48
      %s204 = sadd.s32 %s202, %s203
      %s205 = smul.addr %s204, 8
      %s206 = scalar_lea.vmem %s3, %s205
      %v207 = vld [vmem:[%s197] sm:$0xf]
      %v208 = vld [vmem:[%s197 + $0x4] sm:$0xf]
      %v209 = vld [vmem:[%s197 + $0x8] sm:$0xf]
      %v210 = vld [vmem:[%s197 + $0xc] sm:$0xf]
      %v211 = vld [vmem:[%s197 + $0x10] sm:$0xf]
      %v212 = vld [vmem:[%s197 + $0x14] sm:$0xf]
      %v213 = vld [vmem:[%s197 + $0x18] sm:$0xf]
      %v214 = vld [vmem:[%s197 + $0x1c] sm:$0xf]
      %v215 = vld [vmem:[%s197 + $0x20] sm:$0xf]
      %v216 = vld [vmem:[%s197 + $0x24] sm:$0xf]
      %v217 = vld [vmem:[%s197 + $0x28] sm:$0xf]
      %v218 = vld [vmem:[%s197 + $0x2c] sm:$0xf]
      %v219 = vld [vmem:[%s197 + $0x30] sm:$0xf]
      %v220 = vld [vmem:[%s197 + $0x34] sm:$0xf]
      %v221 = vld [vmem:[%s197 + $0x38] sm:$0xf]
      %v222 = vld [vmem:[%s197 + $0x3c] sm:$0xf]
      %v223 = vld [vmem:[%s197 + $0x40] sm:$0xf]
      %v224 = vld [vmem:[%s197 + $0x44] sm:$0xf]
      %v225 = vld [vmem:[%s197 + $0x48] sm:$0xf]
      %v226 = vld [vmem:[%s197 + $0x4c] sm:$0xf]
      %v227 = vld [vmem:[%s197 + $0x50] sm:$0xf]
      %v228 = vld [vmem:[%s197 + $0x54] sm:$0xf]
      %v229 = vld [vmem:[%s197 + $0x58] sm:$0xf]
      %v230 = vld [vmem:[%s197 + $0x5c] sm:$0xf]
      %v231 = vld [vmem:[%s197 + $0x60] sm:$0xf]
      %v232 = vld [vmem:[%s197 + $0x64] sm:$0xf]
      %v233 = vld [vmem:[%s197 + $0x68] sm:$0xf]
      %v234 = vld [vmem:[%s197 + $0x6c] sm:$0xf]
      %v235 = vld [vmem:[%s197 + $0x70] sm:$0xf]
      %v236 = vld [vmem:[%s197 + $0x74] sm:$0xf]
      %v237 = vld [vmem:[%s197 + $0x78] sm:$0xf]
      %v238 = vld [vmem:[%s197 + $0x7c] sm:$0xf]
      %v239 = vld [vmem:[%s197 + $0x80] sm:$0xf]
      %v240 = vld [vmem:[%s197 + $0x84] sm:$0xf]
      %v241 = vld [vmem:[%s197 + $0x88] sm:$0xf]
      %v242 = vld [vmem:[%s197 + $0x8c] sm:$0xf]
      %v243 = vld [vmem:[%s197 + $0x90] sm:$0xf]
      %v244 = vld [vmem:[%s197 + $0x94] sm:$0xf]
      %v245 = vld [vmem:[%s197 + $0x98] sm:$0xf]
      %v246 = vld [vmem:[%s197 + $0x9c] sm:$0xf]
      %v247 = vld [vmem:[%s197 + $0xa0] sm:$0xf]
      %v248 = vld [vmem:[%s197 + $0xa4] sm:$0xf]
      %v249 = vld [vmem:[%s197 + $0xa8] sm:$0xf]
      %v250 = vld [vmem:[%s197 + $0xac] sm:$0xf]
      %v251 = vld [vmem:[%s197 + $0xb0] sm:$0xf]
      %v252 = vld [vmem:[%s197 + $0xb4] sm:$0xf]
      %v253 = vld [vmem:[%s197 + $0xb8] sm:$0xf]
      %v254 = vld [vmem:[%s197 + $0xbc] sm:$0xf]
      %v255 = vunpack.c.l.bf16 %v207
      %v256 = vunpack.c.l.bf16 %v208
      %v257 = vunpack.c.l.bf16 %v209
      %v258 = vunpack.c.l.bf16 %v210
      %v259 = vunpack.c.l.bf16 %v211
      %v260 = vunpack.c.l.bf16 %v212
      %v261 = vunpack.c.l.bf16 %v213
      %v262 = vunpack.c.l.bf16 %v214
      %v263 = vunpack.c.l.bf16 %v215
      %v264 = vunpack.c.l.bf16 %v216
      %v265 = vunpack.c.l.bf16 %v217
      %v266 = vunpack.c.l.bf16 %v218
      %v267 = vunpack.c.l.bf16 %v219
      %v268 = vunpack.c.l.bf16 %v220
      %v269 = vunpack.c.l.bf16 %v221
      %v270 = vunpack.c.l.bf16 %v222
      %v271 = vunpack.c.l.bf16 %v223
      %v272 = vunpack.c.l.bf16 %v224
      %v273 = vunpack.c.l.bf16 %v225
      %v274 = vunpack.c.l.bf16 %v226
      %v275 = vunpack.c.l.bf16 %v227
      %v276 = vunpack.c.l.bf16 %v228
      %v277 = vunpack.c.l.bf16 %v229
      %v278 = vunpack.c.l.bf16 %v230
      %v279 = vunpack.c.l.bf16 %v231
      %v280 = vunpack.c.l.bf16 %v232
      %v281 = vunpack.c.l.bf16 %v233
      %v282 = vunpack.c.l.bf16 %v234
      %v283 = vunpack.c.l.bf16 %v235
      %v284 = vunpack.c.l.bf16 %v236
      %v285 = vunpack.c.l.bf16 %v237
      %v286 = vunpack.c.l.bf16 %v238
      %v287 = vunpack.c.l.bf16 %v239
      %v288 = vunpack.c.l.bf16 %v240
      %v289 = vunpack.c.l.bf16 %v241
      %v290 = vunpack.c.l.bf16 %v242
      %v291 = vunpack.c.l.bf16 %v243
      %v292 = vunpack.c.l.bf16 %v244
      %v293 = vunpack.c.l.bf16 %v245
      %v294 = vunpack.c.l.bf16 %v246
      %v295 = vunpack.c.l.bf16 %v247
      %v296 = vunpack.c.l.bf16 %v248
      %v297 = vunpack.c.l.bf16 %v249
      %v298 = vunpack.c.l.bf16 %v250
      %v299 = vunpack.c.l.bf16 %v251
      %v300 = vunpack.c.l.bf16 %v252
      %v301 = vunpack.c.l.bf16 %v253
      %v302 = vunpack.c.l.bf16 %v254
      %v303 = vld [vmem:[%s1] sm:$0x1]
      %v305 = vlaneseq
      %v306 = vshrl.u32 %v305, 7
      %v307 = vsub.s32 0, %v306
      %v308 = vrot.slane %v303, %v307
      %v310 = vmul.f32 %v255, %v308
      %v311 = vmul.f32 %v256, %v308
      %v312 = vmul.f32 %v257, %v308
      %v313 = vmul.f32 %v258, %v308
      %v314 = vmul.f32 %v259, %v308
      %v315 = vmul.f32 %v260, %v308
      %v316 = vmul.f32 %v261, %v308
      %v317 = vmul.f32 %v262, %v308
      %v318 = vmul.f32 %v263, %v308
      %v319 = vmul.f32 %v264, %v308
      %v320 = vmul.f32 %v265, %v308
      %v321 = vmul.f32 %v266, %v308
      %v322 = vmul.f32 %v267, %v308
      %v323 = vmul.f32 %v268, %v308
      %v324 = vmul.f32 %v269, %v308
      %v325 = vmul.f32 %v270, %v308
      %v326 = vmul.f32 %v271, %v308
      %v327 = vmul.f32 %v272, %v308
      %v328 = vmul.f32 %v273, %v308
      %v329 = vmul.f32 %v274, %v308
      %v330 = vmul.f32 %v275, %v308
      %v331 = vmul.f32 %v276, %v308
      %v332 = vmul.f32 %v277, %v308
      %v333 = vmul.f32 %v278, %v308
      %v334 = vmul.f32 %v279, %v308
      %v335 = vmul.f32 %v280, %v308
      %v336 = vmul.f32 %v281, %v308
      %v337 = vmul.f32 %v282, %v308
      %v338 = vmul.f32 %v283, %v308
      %v339 = vmul.f32 %v284, %v308
      %v340 = vmul.f32 %v285, %v308
      %v341 = vmul.f32 %v286, %v308
      %v342 = vmul.f32 %v287, %v308
      %v343 = vmul.f32 %v288, %v308
      %v344 = vmul.f32 %v289, %v308
      %v345 = vmul.f32 %v290, %v308
      %v346 = vmul.f32 %v291, %v308
      %v347 = vmul.f32 %v292, %v308
      %v348 = vmul.f32 %v293, %v308
      %v349 = vmul.f32 %v294, %v308
      %v350 = vmul.f32 %v295, %v308
      %v351 = vmul.f32 %v296, %v308
      %v352 = vmul.f32 %v297, %v308
      %v353 = vmul.f32 %v298, %v308
      %v354 = vmul.f32 %v299, %v308
      %v355 = vmul.f32 %v300, %v308
      %v356 = vmul.f32 %v301, %v308
      %v357 = vmul.f32 %v302, %v308
      %v358 = vld [vmem:[%s2] sm:$0x1]
      %v360 = vlaneseq
      %v361 = vshrl.u32 %v360, 7
      %v362 = vsub.s32 0, %v361
      %v363 = vrot.slane %v358, %v362
      %v365 = vadd.f32 %v310, %v363
      %v366 = vadd.f32 %v311, %v363
      %v367 = vadd.f32 %v312, %v363
      %v368 = vadd.f32 %v313, %v363
      %v369 = vadd.f32 %v314, %v363
      %v370 = vadd.f32 %v315, %v363
      %v371 = vadd.f32 %v316, %v363
      %v372 = vadd.f32 %v317, %v363
      %v373 = vadd.f32 %v318, %v363
      %v374 = vadd.f32 %v319, %v363
      %v375 = vadd.f32 %v320, %v363
      %v376 = vadd.f32 %v321, %v363
      %v377 = vadd.f32 %v322, %v363
      %v378 = vadd.f32 %v323, %v363
      %v379 = vadd.f32 %v324, %v363
      %v380 = vadd.f32 %v325, %v363
      %v381 = vadd.f32 %v326, %v363
      %v382 = vadd.f32 %v327, %v363
      %v383 = vadd.f32 %v328, %v363
      %v384 = vadd.f32 %v329, %v363
      %v385 = vadd.f32 %v330, %v363
      %v386 = vadd.f32 %v331, %v363
      %v387 = vadd.f32 %v332, %v363
      %v388 = vadd.f32 %v333, %v363
      %v389 = vadd.f32 %v334, %v363
      %v390 = vadd.f32 %v335, %v363
      %v391 = vadd.f32 %v336, %v363
      %v392 = vadd.f32 %v337, %v363
      %v393 = vadd.f32 %v338, %v363
      %v394 = vadd.f32 %v339, %v363
      %v395 = vadd.f32 %v340, %v363
      %v396 = vadd.f32 %v341, %v363
      %v397 = vadd.f32 %v342, %v363
      %v398 = vadd.f32 %v343, %v363
      %v399 = vadd.f32 %v344, %v363
      %v400 = vadd.f32 %v345, %v363
      %v401 = vadd.f32 %v346, %v363
      %v402 = vadd.f32 %v347, %v363
      %v403 = vadd.f32 %v348, %v363
      %v404 = vadd.f32 %v349, %v363
      %v405 = vadd.f32 %v350, %v363
      %v406 = vadd.f32 %v351, %v363
      %v407 = vadd.f32 %v352, %v363
      %v408 = vadd.f32 %v353, %v363
      %v409 = vadd.f32 %v354, %v363
      %v410 = vadd.f32 %v355, %v363
      %v411 = vadd.f32 %v356, %v363
      %v412 = vadd.f32 %v357, %v363
      %v413 = vmax.f32 %v365, 0.0
      %v414 = vmax.f32 %v366, 0.0
      %v415 = vmax.f32 %v367, 0.0
      %v416 = vmax.f32 %v368, 0.0
      %v417 = vmax.f32 %v369, 0.0
      %v418 = vmax.f32 %v370, 0.0
      %v419 = vmax.f32 %v371, 0.0
      %v420 = vmax.f32 %v372, 0.0
      %v421 = vmax.f32 %v373, 0.0
      %v422 = vmax.f32 %v374, 0.0
      %v423 = vmax.f32 %v375, 0.0
      %v424 = vmax.f32 %v376, 0.0
      %v425 = vmax.f32 %v377, 0.0
      %v426 = vmax.f32 %v378, 0.0
      %v427 = vmax.f32 %v379, 0.0
      %v428 = vmax.f32 %v380, 0.0
      %v429 = vmax.f32 %v381, 0.0
      %v430 = vmax.f32 %v382, 0.0
      %v431 = vmax.f32 %v383, 0.0
      %v432 = vmax.f32 %v384, 0.0
      %v433 = vmax.f32 %v385, 0.0
      %v434 = vmax.f32 %v386, 0.0
      %v435 = vmax.f32 %v387, 0.0
      %v436 = vmax.f32 %v388, 0.0
      %v437 = vmax.f32 %v389, 0.0
      %v438 = vmax.f32 %v390, 0.0
      %v439 = vmax.f32 %v391, 0.0
      %v440 = vmax.f32 %v392, 0.0
      %v441 = vmax.f32 %v393, 0.0
      %v442 = vmax.f32 %v394, 0.0
      %v443 = vmax.f32 %v395, 0.0
      %v444 = vmax.f32 %v396, 0.0
      %v445 = vmax.f32 %v397, 0.0
      %v446 = vmax.f32 %v398, 0.0
      %v447 = vmax.f32 %v399, 0.0
      %v448 = vmax.f32 %v400, 0.0
      %v449 = vmax.f32 %v401, 0.0
      %v450 = vmax.f32 %v402, 0.0
      %v451 = vmax.f32 %v403, 0.0
      %v452 = vmax.f32 %v404, 0.0
      %v453 = vmax.f32 %v405, 0.0
      %v454 = vmax.f32 %v406, 0.0
      %v455 = vmax.f32 %v407, 0.0
      %v456 = vmax.f32 %v408, 0.0
      %v457 = vmax.f32 %v409, 0.0
      %v458 = vmax.f32 %v410, 0.0
      %v459 = vmax.f32 %v411, 0.0
      %v460 = vmax.f32 %v412, 0.0
      %461 = vst [vmem:[%s206] sm:$0xff] %v413
      %462 = vst [vmem:[%s206 + $0x8] sm:$0xff] %v414
      %463 = vst [vmem:[%s206 + $0x10] sm:$0xff] %v415
      %464 = vst [vmem:[%s206 + $0x18] sm:$0xff] %v416
      %465 = vst [vmem:[%s206 + $0x20] sm:$0xff] %v417
      %466 = vst [vmem:[%s206 + $0x28] sm:$0xff] %v418
      %467 = vst [vmem:[%s206 + $0x30] sm:$0xff] %v419
      %468 = vst [vmem:[%s206 + $0x38] sm:$0xff] %v420
      %469 = vst [vmem:[%s206 + $0x40] sm:$0xff] %v421
      %470 = vst [vmem:[%s206 + $0x48] sm:$0xff] %v422
      %471 = vst [vmem:[%s206 + $0x50] sm:$0xff] %v423
      %472 = vst [vmem:[%s206 + $0x58] sm:$0xff] %v424
      %473 = vst [vmem:[%s206 + $0x60] sm:$0xff] %v425
      %474 = vst [vmem:[%s206 + $0x68] sm:$0xff] %v426
      %475 = vst [vmem:[%s206 + $0x70] sm:$0xff] %v427
      %476 = vst [vmem:[%s206 + $0x78] sm:$0xff] %v428
      %477 = vst [vmem:[%s206 + $0x80] sm:$0xff] %v429
      %478 = vst [vmem:[%s206 + $0x88] sm:$0xff] %v430
      %479 = vst [vmem:[%s206 + $0x90] sm:$0xff] %v431
      %480 = vst [vmem:[%s206 + $0x98] sm:$0xff] %v432
      %481 = vst [vmem:[%s206 + $0xa0] sm:$0xff] %v433
      %482 = vst [vmem:[%s206 + $0xa8] sm:$0xff] %v434
      %483 = vst [vmem:[%s206 + $0xb0] sm:$0xff] %v435
      %484 = vst [vmem:[%s206 + $0xb8] sm:$0xff] %v436
      %485 = vst [vmem:[%s206 + $0xc0] sm:$0xff] %v437
      %486 = vst [vmem:[%s206 + $0xc8] sm:$0xff] %v438
      %487 = vst [vmem:[%s206 + $0xd0] sm:$0xff] %v439
      %488 = vst [vmem:[%s206 + $0xd8] sm:$0xff] %v440
      %489 = vst [vmem:[%s206 + $0xe0] sm:$0xff] %v441
      %490 = vst [vmem:[%s206 + $0xe8] sm:$0xff] %v442
      %491 = vst [vmem:[%s206 + $0xf0] sm:$0xff] %v443
      %492 = vst [vmem:[%s206 + $0xf8] sm:$0xff] %v444
      %493 = vst [vmem:[%s206 + $0x100] sm:$0xff] %v445
      %494 = vst [vmem:[%s206 + $0x108] sm:$0xff] %v446
      %495 = vst [vmem:[%s206 + $0x110] sm:$0xff] %v447
      %496 = vst [vmem:[%s206 + $0x118] sm:$0xff] %v448
      %497 = vst [vmem:[%s206 + $0x120] sm:$0xff] %v449
      %498 = vst [vmem:[%s206 + $0x128] sm:$0xff] %v450
      %499 = vst [vmem:[%s206 + $0x130] sm:$0xff] %v451
      %500 = vst [vmem:[%s206 + $0x138] sm:$0xff] %v452
      %501 = vst [vmem:[%s206 + $0x140] sm:$0xff] %v453
      %502 = vst [vmem:[%s206 + $0x148] sm:$0xff] %v454
      %503 = vst [vmem:[%s206 + $0x150] sm:$0xff] %v455
      %504 = vst [vmem:[%s206 + $0x158] sm:$0xff] %v456
      %505 = vst [vmem:[%s206 + $0x160] sm:$0xff] %v457
      %506 = vst [vmem:[%s206 + $0x168] sm:$0xff] %v458
      %507 = vst [vmem:[%s206 + $0x170] sm:$0xff] %v459
      %508 = vst [vmem:[%s206 + $0x178] sm:$0xff] %v460
      %p509 = scmp.lt.s32.totalorder %s18, 1
      %s510 = scalar_select %p509, %s18, 1
      %p511 = scmp.lt.s32.totalorder %s19, 0
      %s512 = scalar_select %p511, %s19, 0
      %s513 = smul.addr %s512, 48
      %s514 = smul.addr %s510, 48
      %s515 = sadd.s32 %s513, %s514
      %s516 = smul.addr %s515, 8
      %s517 = scalar_lea.vmem %s3, %s516
      // Predicated region
      $region33: #{conv_block_forward.5} parent=31 // pred_check
        %p518 = pneg %p116
      $region34: #{conv_block_forward.5} parent=31 // pred_check_branch
        %520 = sbr.rel (%p518) target = $region36
      $region35: #{conv_block_forward.5} parent=31 // pred_region
        _
      $region36: #{conv_block_forward.5} parent=31 // pred_fallthru
        _
    $region32: #{conv_block_forward.5} parent=5 // pred_fallthru
      _
    %p521 = scmp.le.s32.totalorder 2, %s9
    // Predicated region
    $region37: #{conv_block_forward.5} parent=5 // pred_check
      %p522 = pneg %p521
    $region38: #{conv_block_forward.5} parent=5 // pred_check_branch
      %524 = sbr.rel (%p522) target = $region40
    $region39: #{conv_block_forward.5} parent=5 // pred_region
      %s525 = ssub.s32 %s9, 2
      // Predicated region
      $region41: #{conv_block_forward.5} parent=39 // pred_check
        %p526 = pneg %p122
      $region42: #{conv_block_forward.5} parent=39 // pred_check_branch
        %528 = sbr.rel (%p526) target = $region44
      $region43: #{conv_block_forward.5} parent=39 // pred_region
        %p529 = scmp.lt.s32.totalorder %s20, 1
        %s530 = scalar_select %p529, %s20, 1
        %p531 = scmp.lt.s32.totalorder %s21, 0
        %s532 = scalar_select %p531, %s21, 0
        %s533 = smul.addr %s532, 48
        %s534 = smul.addr %s530, 48
        %s535 = sadd.s32 %s533, %s534
        %s536 = smul.addr %s535, 8
        %s537 = scalar_lea.vmem %s3, %s536
      $region44: #{conv_block_forward.5} parent=39 // pred_fallthru
        _
    $region40: #{conv_block_forward.5} parent=5 // pred_fallthru
      _
  $region6: #{conv_block_forward.5} parent=0 // loop_footer
    %s13 = sadd.s32 1, %s9
  $region7: #{conv_block_forward.5} parent=0 // loop_footer_branch
    %8 = sbr.rel target = $region3
  $region8: #{conv_block_forward.5} parent=0 // loop_exit
    _

// kernel: conv_block_forward.4
$region0: #{conv_block_forward.4}
  #allocation0 [shape = 'u32[]', space=smem, size = 0x4, offset = 0x4, fixed_abs, tag = 'smem constant byte address 0x4 - core index']
  #allocation1 [shape = 'u32[144,128]{1,0:T(1,128)}', space=vmem, size = 0x12000, scoped, tag = 'internal scratch']
  %s0 = inlined_call_operand.vmem [shape: bf16[2,1,440,128], index: 0, kind: input, shape index: {}]
  %s1 = inlined_call_operand.vmem [shape: bf16[9,128,128], index: 1, kind: input, shape index: {}]
  %s2 = inlined_call_operand.vmem [shape: f32[1,384,1], index: 2, kind: input, shape index: {}]
  %s3 = inlined_call_operand.vmem [shape: bf16[2,1,384,128], index: 3, kind: output, shape index: {0}]
  %s4 = inlined_call_operand.vmem [shape: f32[2,1,2,128], index: 4, kind: output, shape index: {1}]
  %5 = xla_tuple %s3, %s4
  %s6 = sld [smem:[#allocation0]]
  $region53: #{conv_block_forward.4} parent=0
    _
  %s8 = ssub.s32 1, %s6
  %s9 = scalar_select 0, %s8, %s6
  loop: start=0, step=1, limit=4
  $region2: #{conv_block_forward.4} parent=0 // loop_pre_header
    _
  $region3: #{conv_block_forward.4} parent=0 // loop_header
    %s11 = sphi 0, %s15
    %p12 = scmp.ge.s32.totalorder %s11, 4
    %s18 = sphi 0, %s30
    %s19 = sphi 0, %s26
    %s20 = sphi 0, %s18
    %s21 = sphi 0, %s19
    %s22 = sphi 0, %s20
    %s23 = sphi 0, %s21
    %s35 = sphi 0, %s37
    %s38 = sphi 0, %s35
    %s39 = sphi 0, %s38
    %s55 = sphi 0, %s39
    %s59 = sphi 0, %s59
    %s61 = sphi 0, %s59
    %s62 = sphi 0, %s61
    %s76 = sphi 0, %s62
    %s82 = sphi 0, %s84
    %s85 = sphi 0, %s82
    %s86 = sphi 0, %s85
    %s102 = sphi 0, %s86
    %s110 = sphi 0, %s112
    %s113 = sphi 0, %s110
    %s114 = sphi 0, %s113
    %s130 = sphi 0, %s114
    %s138 = sphi 0, %s140
    %s141 = sphi 0, %s138
    %s142 = sphi 0, %s141
    %s158 = sphi 0, %s142
  $region4: #{conv_block_forward.4} parent=0 // loop_header_branch
    %14 = sbr.rel (%p12) target = $region8
  $region5: #{conv_block_forward.4} parent=0 // loop_body
    %s16 = ssub.s32 %s11, 1
    %s17 = ssub.s32 %s11, 2
    %s24 = sadd.s32 1, %s19
    %p25 = scmp.ge.s32.totalorder %s24, 1
    %s26 = scalar_select %p25, 0, %s24
    %s27 = sadd.s32 1, %s18
    %s28 = scalar_select %p25, %s27, %s18
    %p29 = scmp.ge.s32.totalorder %s28, 2
    %s30 = scalar_select %p29, 0, %s28
    %s31 = ssub.s32 %s18, %s30
    %s32 = ssub.s32 %s19, %s26
    %s33 = sor.u32 %s31, %s32
    %p34 = scmp.eq.s32.totalorder %s33, 0
    %s36 = sadd.s32 %s35, 1
    %s37 = scalar_select %p34, %s35, %s36
    %p40 = pneg %p34
    %p41 = scmp.eq.s32.totalorder %s11, 1
    %p42 = por %p40, %p41
    %p43 = scmp.ne.s32.totalorder %s35, %s38
    %p44 = scmp.eq.s32.totalorder %s11, 0
    %p45 = por %p43, %p44
    %p46 = scmp.ne.s32.totalorder %s35, %s38
    %p47 = scmp.eq.s32.totalorder %s16, 1
    %p48 = por %p46, %p47
    %p49 = scmp.ne.s32.totalorder %s38, %s39
    %p50 = scmp.eq.s32.totalorder %s16, 0
    %p51 = por %p49, %p50
    %p52 = scmp.ne.s32.totalorder %s38, %s39
    %p53 = scmp.eq.s32.totalorder %s17, 1
    %p54 = por %p52, %p53
    %p56 = scmp.ne.s32.totalorder %s39, %s55
    %p57 = scmp.eq.s32.totalorder %s17, 0
    %p58 = por %p56, %p57
    %s60 = sadd.s32 %s59, 1
    %p63 = scmp.eq.s32.totalorder %s11, 1
    %p64 = scmp.ne.s32.totalorder %s59, %s61
    %p65 = scmp.eq.s32.totalorder %s11, 0
    %p66 = por %p64, %p65
    %p67 = scmp.ne.s32.totalorder %s59, %s61
    %p68 = scmp.eq.s32.totalorder %s16, 1
    %p69 = por %p67, %p68
    %p70 = scmp.ne.s32.totalorder %s61, %s62
    %p71 = scmp.eq.s32.totalorder %s16, 0
    %p72 = por %p70, %p71
    %p73 = scmp.ne.s32.totalorder %s61, %s62
    %p74 = scmp.eq.s32.totalorder %s17, 1
    %p75 = por %p73, %p74
    %p77 = scmp.ne.s32.totalorder %s62, %s76
    %p78 = scmp.eq.s32.totalorder %s17, 0
    %p79 = por %p77, %p78
    %s80 = ssub.s32 %s19, %s26
    %p81 = scmp.eq.s32.totalorder %s80, 0
    %s83 = sadd.s32 %s82, 1
    %s84 = scalar_select %p81, %s82, %s83
    %p87 = pneg %p81
    %p88 = scmp.eq.s32.totalorder %s11, 1
    %p89 = por %p87, %p88
    %p90 = scmp.ne.s32.totalorder %s82, %s85
    %p91 = scmp.eq.s32.totalorder %s11, 0
    %p92 = por %p90, %p91
    %p93 = scmp.ne.s32.totalorder %s82, %s85
    %p94 = scmp.eq.s32.totalorder %s16, 1
    %p95 = por %p93, %p94
    %p96 = scmp.ne.s32.totalorder %s85, %s86
    %p97 = scmp.eq.s32.totalorder %s16, 0
    %p98 = por %p96, %p97
    %p99 = scmp.ne.s32.totalorder %s85, %s86
    %p100 = scmp.eq.s32.totalorder %s17, 1
    %p101 = por %p99, %p100
    %p103 = scmp.ne.s32.totalorder %s86, %s102
    %p104 = scmp.eq.s32.totalorder %s17, 0
    %p105 = por %p103, %p104
    %s106 = ssub.s32 %s18, %s30
    %s107 = ssub.s32 %s19, %s26
    %s108 = sor.u32 %s106, %s107
    %p109 = scmp.eq.s32.totalorder %s108, 0
    %s111 = sadd.s32 %s110, 1
    %s112 = scalar_select %p109, %s110, %s111
    %p115 = pneg %p109
    %p116 = scmp.eq.s32.totalorder %s11, 1
    %p117 = por %p115, %p116
    %p118 = scmp.ne.s32.totalorder %s110, %s113
    %p119 = scmp.eq.s32.totalorder %s11, 0
    %p120 = por %p118, %p119
    %p121 = scmp.ne.s32.totalorder %s110, %s113
    %p122 = scmp.eq.s32.totalorder %s16, 1
    %p123 = por %p121, %p122
    %p124 = scmp.ne.s32.totalorder %s113, %s114
    %p125 = scmp.eq.s32.totalorder %s16, 0
    %p126 = por %p124, %p125
    %p127 = scmp.ne.s32.totalorder %s113, %s114
    %p128 = scmp.eq.s32.totalorder %s17, 1
    %p129 = por %p127, %p128
    %p131 = scmp.ne.s32.totalorder %s114, %s130
    %p132 = scmp.eq.s32.totalorder %s17, 0
    %p133 = por %p131, %p132
    %s134 = ssub.s32 %s18, %s30
    %s135 = ssub.s32 %s19, %s26
    %s136 = sor.u32 %s134, %s135
    %p137 = scmp.eq.s32.totalorder %s136, 0
    %s139 = sadd.s32 %s138, 1
    %s140 = scalar_select %p137, %s138, %s139
    %p143 = pneg %p137
    %p144 = scmp.eq.s32.totalorder %s11, 1
    %p145 = por %p143, %p144
    %p146 = scmp.ne.s32.totalorder %s138, %s141
    %p147 = scmp.eq.s32.totalorder %s11, 0
    %p148 = por %p146, %p147
    %p149 = scmp.ne.s32.totalorder %s138, %s141
    %p150 = scmp.eq.s32.totalorder %s16, 1
    %p151 = por %p149, %p150
    %p152 = scmp.ne.s32.totalorder %s141, %s142
    %p153 = scmp.eq.s32.totalorder %s16, 0
    %p154 = por %p152, %p153
    %p155 = scmp.ne.s32.totalorder %s141, %s142
    %p156 = scmp.eq.s32.totalorder %s17, 1
    %p157 = por %p155, %p156
    %p159 = scmp.ne.s32.totalorder %s142, %s158
    %p160 = scmp.eq.s32.totalorder %s17, 0
    %p161 = por %p159, %p160
    %p162 = scmp.le.s32.totalorder 1, %s11
    %p163 = scmp.lt.s32.totalorder %s11, 3
    %p164 = pnand %p162, %p163
    %p165 = pneg %p164
    // Predicated region
    $region9: #{conv_block_forward.4} parent=5 // pred_check
      _
    $region10: #{conv_block_forward.4} parent=5 // pred_check_branch
      %167 = sbr.rel (%p164) target = $region12
    $region11: #{conv_block_forward.4} parent=5 // pred_region
      %s168 = ssub.s32 %s11, 1
      // Predicated region
      $region13: #{conv_block_forward.4} parent=11 // pred_check
        %p169 = pneg %p72
      $region14: #{conv_block_forward.4} parent=11 // pred_check_branch
        %171 = sbr.rel (%p169) target = $region16
      $region15: #{conv_block_forward.4} parent=11 // pred_region
        _
      $region16: #{conv_block_forward.4} parent=11 // pred_fallthru
        _
      // Predicated region
      $region17: #{conv_block_forward.4} parent=11 // pred_check
        %p172 = pneg %p98
      $region18: #{conv_block_forward.4} parent=11 // pred_check_branch
        %174 = sbr.rel (%p172) target = $region20
      $region19: #{conv_block_forward.4} parent=11 // pred_region
        %p175 = scmp.lt.s32.totalorder %s21, 0
        %s176 = scalar_select %p175, %s21, 0
        %s177 = smul.addr %s176, 48
        %s178 = smul.addr %s177, 8
        %s179 = scalar_lea.vmem %s2, %s178
      $region20: #{conv_block_forward.4} parent=11 // pred_fallthru
        _
    $region12: #{conv_block_forward.4} parent=5 // pred_fallthru
      _
    %p180 = scmp.lt.s32.totalorder %s11, 2
    // Predicated region
    $region21: #{conv_block_forward.4} parent=5 // pred_check
      %p181 = pneg %p180
    $region22: #{conv_block_forward.4} parent=5 // pred_check_branch
      %183 = sbr.rel (%p181) target = $region24
    $region23: #{conv_block_forward.4} parent=5 // pred_region
      // Predicated region
      $region25: #{conv_block_forward.4} parent=23 // pred_check
        %p184 = pneg %p45
      $region26: #{conv_block_forward.4} parent=23 // pred_check_branch
        %186 = sbr.rel (%p184) target = $region28
      $region27: #{conv_block_forward.4} parent=23 // pred_region
        %p187 = scmp.lt.s32.totalorder %s18, 1
        %s188 = scalar_select %p187, %s18, 1
        %p189 = scmp.lt.s32.totalorder %s19, 0
        %s190 = scalar_select %p189, %s19, 0
        %s191 = smul.addr %s190, 55
        %s192 = smul.addr %s188, 55
        %s193 = sadd.s32 %s191, %s192
        %s194 = smul.addr %s193, 4
        %s195 = scalar_lea.vmem %s0, %s194
      $region28: #{conv_block_forward.4} parent=23 // pred_fallthru
        _
    $region24: #{conv_block_forward.4} parent=5 // pred_fallthru
      _
    %p196 = scmp.le.s32.totalorder 1, %s11
    %p197 = scmp.lt.s32.totalorder %s11, 3
    %p198 = pnand %p196, %p197
    %p199 = pneg %p198
    // Predicated region
    $region29: #{conv_block_forward.4} parent=5 // pred_check
      _
    $region30: #{conv_block_forward.4} parent=5 // pred_check_branch
      %201 = sbr.rel (%p198) target = $region32
    $region31: #{conv_block_forward.4} parent=5 // pred_region
      %s202 = ssub.s32 %s11, 1
      %p203 = scmp.lt.s32.totalorder %s20, 1
      %s204 = scalar_select %p203, %s20, 1
      %p205 = scmp.lt.s32.totalorder %s21, 0
      %s206 = scalar_select %p205, %s21, 0
      %s207 = smul.addr %s206, 55
      %s208 = smul.addr %s204, 55
      %s209 = sadd.s32 %s207, %s208
      %s210 = smul.addr %s209, 4
      %s211 = scalar_lea.vmem %s0, %s210
      %p212 = pneg %p51
      %p213 = pneg %p48
      %p214 = pneg %p72
      %p215 = pneg %p69
      %p216 = scmp.lt.s32.totalorder %s21, 0
      %s217 = scalar_select %p216, %s21, 0
      %s218 = smul.addr %s217, 48
      %s219 = smul.addr %s218, 8
      %s220 = scalar_lea.vmem %s2, %s219
      %p221 = pneg %p98
      %p222 = pneg %p95
      %p223 = pneg %p126
      %p224 = pneg %p123
      %p225 = scmp.lt.s32.totalorder %s20, 1
      %s226 = scalar_select %p225, %s20, 1
      %p227 = scmp.lt.s32.totalorder %s21, 0
      %s228 = scalar_select %p227, %s21, 0
      %s229 = smul.addr %s228, 48
      %s230 = smul.addr %s226, 48
      %s231 = sadd.s32 %s229, %s230
      %s232 = smul.addr %s231, 4
      %s233 = scalar_lea.vmem %s3, %s232
      %p234 = pneg %p154
      %p235 = pneg %p151
      %p236 = scmp.lt.s32.totalorder %s20, 1
      %s237 = scalar_select %p236, %s20, 1
      %p238 = scmp.lt.s32.totalorder %s21, 0
      %s239 = scalar_select %p238, %s21, 0
      %s240 = sadd.s32 %s239, %s237
      %s241 = smul.addr %s240, 2
      %s242 = scalar_lea.vmem %s4, %s241
      %p243 = scmp.lt.s32.totalorder %s20, 1
      %s244 = scalar_select %p243, %s20, 1
      %p245 = scmp.lt.s32.totalorder %s21, 0
      %s246 = scalar_select %p245, %s21, 0
      %s247 = smul.addr %s246, 55
      %s248 = smul.addr %s244, 55
      %s249 = sadd.s32 %s247, %s248
      %s250 = smul.addr %s249, 4
      %s251 = scalar_lea.vmem %s0, %s250
      %p252 = scmp.lt.s32.totalorder %s21, 0
      %s253 = scalar_select %p252, %s21, 0
      %s254 = smul.addr %s253, 48
      %s255 = smul.addr %s254, 8
      %s256 = scalar_lea.vmem %s2, %s255
      %p257 = scmp.lt.s32.totalorder %s20, 1
      %s258 = scalar_select %p257, %s20, 1
      %p259 = scmp.lt.s32.totalorder %s21, 0
      %s260 = scalar_select %p259, %s21, 0
      %s261 = smul.addr %s260, 48
      %s262 = smul.addr %s258, 48
      %s263 = sadd.s32 %s261, %s262
      %s264 = smul.addr %s263, 4
      %s265 = scalar_lea.vmem %s3, %s264
      %p266 = scmp.lt.s32.totalorder %s20, 1
      %s267 = scalar_select %p266, %s20, 1
      %p268 = scmp.lt.s32.totalorder %s21, 0
      %s269 = scalar_select %p268, %s21, 0
      %s270 = sadd.s32 %s269, %s267
      %s271 = smul.addr %s270, 2
      %s272 = scalar_lea.vmem %s4, %s271
      %v274 = vld [vmem:[%s251] sm:$0xf]
      %v275 = vld [vmem:[%s251 + $0x4] sm:$0xf]
      %v276 = vld [vmem:[%s251 + $0x8] sm:$0xf]
      %v277 = vld [vmem:[%s251 + $0xc] sm:$0xf]
      %v278 = vld [vmem:[%s251 + $0x10] sm:$0xf]
      %v279 = vld [vmem:[%s251 + $0x14] sm:$0xf]
      %v280 = vld [vmem:[%s251 + $0x18] sm:$0xf]
      %v281 = vld [vmem:[%s251 + $0x1c] sm:$0xf]
      %v282 = vld [vmem:[%s251 + $0x20] sm:$0xf]
      %v283 = vld [vmem:[%s251 + $0x24] sm:$0xf]
      %v284 = vld [vmem:[%s251 + $0x28] sm:$0xf]
      %v285 = vld [vmem:[%s251 + $0x2c] sm:$0xf]
      %v286 = vld [vmem:[%s251 + $0x30] sm:$0xf]
      %v287 = vld [vmem:[%s251 + $0x34] sm:$0xf]
      %v288 = vld [vmem:[%s251 + $0x38] sm:$0xf]
      %v289 = vld [vmem:[%s251 + $0x3c] sm:$0xf]
      %v290 = vld [vmem:[%s251 + $0x40] sm:$0xf]
      %v291 = vld [vmem:[%s251 + $0x44] sm:$0xf]
      %v292 = vld [vmem:[%s251 + $0x48] sm:$0xf]
      %v293 = vld [vmem:[%s251 + $0x4c] sm:$0xf]
      %v294 = vld [vmem:[%s251 + $0x50] sm:$0xf]
      %v295 = vld [vmem:[%s251 + $0x54] sm:$0xf]
      %v296 = vld [vmem:[%s251 + $0x58] sm:$0xf]
      %v297 = vld [vmem:[%s251 + $0x5c] sm:$0xf]
      %v298 = vld [vmem:[%s251 + $0x60] sm:$0xf]
      %v299 = vld [vmem:[%s251 + $0x64] sm:$0xf]
      %v300 = vld [vmem:[%s251 + $0x68] sm:$0xf]
      %v301 = vld [vmem:[%s251 + $0x6c] sm:$0xf]
      %v302 = vld [vmem:[%s251 + $0x70] sm:$0xf]
      %v303 = vld [vmem:[%s251 + $0x74] sm:$0xf]
      %v304 = vld [vmem:[%s251 + $0x78] sm:$0xf]
      %v305 = vld [vmem:[%s251 + $0x7c] sm:$0xf]
      %v306 = vld [vmem:[%s251 + $0x80] sm:$0xf]
      %v307 = vld [vmem:[%s251 + $0x84] sm:$0xf]
      %v308 = vld [vmem:[%s251 + $0x88] sm:$0xf]
      %v309 = vld [vmem:[%s251 + $0x8c] sm:$0xf]
      %v310 = vld [vmem:[%s251 + $0x90] sm:$0xf]
      %v311 = vld [vmem:[%s251 + $0x94] sm:$0xf]
      %v312 = vld [vmem:[%s251 + $0x98] sm:$0xf]
      %v313 = vld [vmem:[%s251 + $0x9c] sm:$0xf]
      %v314 = vld [vmem:[%s251 + $0xa0] sm:$0xf]
      %v315 = vld [vmem:[%s251 + $0xa4] sm:$0xf]
      %v316 = vld [vmem:[%s251 + $0xa8] sm:$0xf]
      %v317 = vld [vmem:[%s251 + $0xac] sm:$0xf]
      %v318 = vld [vmem:[%s251 + $0xb0] sm:$0xf]
      %v319 = vld [vmem:[%s251 + $0xb4] sm:$0xf]
      %v320 = vld [vmem:[%s251 + $0xb8] sm:$0xf]
      %v321 = vld [vmem:[%s251 + $0xbc] sm:$0xf]
      %v322 = vld [vmem:[%s1] sm:$0xf]
      %v323 = vld [vmem:[%s1 + $0x4] sm:$0xf]
      %v324 = vld [vmem:[%s1 + $0x8] sm:$0xf]
      %v325 = vld [vmem:[%s1 + $0xc] sm:$0xf]
      %v326 = vld [vmem:[%s1 + $0x10] sm:$0xf]
      %v327 = vld [vmem:[%s1 + $0x14] sm:$0xf]
      %v328 = vld [vmem:[%s1 + $0x18] sm:$0xf]
      %v329 = vld [vmem:[%s1 + $0x1c] sm:$0xf]
      %v330 = vld [vmem:[%s1 + $0x20] sm:$0xf]
      %v331 = vld [vmem:[%s1 + $0x24] sm:$0xf]
      %v332 = vld [vmem:[%s1 + $0x28] sm:$0xf]
      %v333 = vld [vmem:[%s1 + $0x2c] sm:$0xf]
      %v334 = vld [vmem:[%s1 + $0x30] sm:$0xf]
      %v335 = vld [vmem:[%s1 + $0x34] sm:$0xf]
      %v336 = vld [vmem:[%s1 + $0x38] sm:$0xf]
      %v337 = vld [vmem:[%s1 + $0x3c] sm:$0xf]
      %v338 = vld [vmem:[%s251 + $0xc0] sm:$0x1]
      %s339 = scalar_lea.vmem %s1, 64
      %v340 = vld [vmem:[%s339] sm:$0xf]
      %v341 = vld [vmem:[%s339 + $0x4] sm:$0xf]
      %v342 = vld [vmem:[%s339 + $0x8] sm:$0xf]
      %v343 = vld [vmem:[%s339 + $0xc] sm:$0xf]
      %v344 = vld [vmem:[%s339 + $0x10] sm:$0xf]
      %v345 = vld [vmem:[%s339 + $0x14] sm:$0xf]
      %v346 = vld [vmem:[%s339 + $0x18] sm:$0xf]
      %v347 = vld [vmem:[%s339 + $0x1c] sm:$0xf]
      %v348 = vld [vmem:[%s339 + $0x20] sm:$0xf]
      %v349 = vld [vmem:[%s339 + $0x24] sm:$0xf]
      %v350 = vld [vmem:[%s339 + $0x28] sm:$0xf]
      %v351 = vld [vmem:[%s339 + $0x2c] sm:$0xf]
      %v352 = vld [vmem:[%s339 + $0x30] sm:$0xf]
      %v353 = vld [vmem:[%s339 + $0x34] sm:$0xf]
      %v354 = vld [vmem:[%s339 + $0x38] sm:$0xf]
      %v355 = vld [vmem:[%s339 + $0x3c] sm:$0xf]
      %v405 = vunpack.c.l.b16 %v274
      %v406 = vunpack.c.l.b16 %v275
      %v407 = vunpack.c.l.b16 %v276
      %v408 = vunpack.c.l.b16 %v277
      %v409 = vunpack.c.l.b16 %v278
      %v410 = vunpack.c.l.b16 %v279
      %v411 = vunpack.c.l.b16 %v280
      %v412 = vunpack.c.l.b16 %v281
      %v413 = vunpack.c.l.b16 %v282
      %v414 = vunpack.c.l.b16 %v283
      %v415 = vunpack.c.l.b16 %v284
      %v416 = vunpack.c.l.b16 %v285
      %v417 = vunpack.c.l.b16 %v286
      %v418 = vunpack.c.l.b16 %v287
      %v419 = vunpack.c.l.b16 %v288
      %v420 = vunpack.c.l.b16 %v289
      %v421 = vunpack.c.l.b16 %v290
      %v422 = vunpack.c.l.b16 %v291
      %v423 = vunpack.c.l.b16 %v292
      %v424 = vunpack.c.l.b16 %v293
      %v425 = vunpack.c.l.b16 %v294
      %v426 = vunpack.c.l.b16 %v295
      %v427 = vunpack.c.l.b16 %v296
      %v428 = vunpack.c.l.b16 %v297
      %v429 = vunpack.c.l.b16 %v298
      %v430 = vunpack.c.l.b16 %v299
      %v431 = vunpack.c.l.b16 %v300
      %v432 = vunpack.c.l.b16 %v301
      %v433 = vunpack.c.l.b16 %v302
      %v434 = vunpack.c.l.b16 %v303
      %v435 = vunpack.c.l.b16 %v304
      %v436 = vunpack.c.l.b16 %v305
      %v437 = vunpack.c.l.b16 %v306
      %v438 = vunpack.c.l.b16 %v307
      %v439 = vunpack.c.l.b16 %v308
      %v440 = vunpack.c.l.b16 %v309
      %v441 = vunpack.c.l.b16 %v310
      %v442 = vunpack.c.l.b16 %v311
      %v443 = vunpack.c.l.b16 %v312
      %v444 = vunpack.c.l.b16 %v313
      %v445 = vunpack.c.l.b16 %v314
      %v446 = vunpack.c.l.b16 %v315
      %v447 = vunpack.c.l.b16 %v316
      %v448 = vunpack.c.l.b16 %v317
      %v449 = vunpack.c.l.b16 %v318
      %v450 = vunpack.c.l.b16 %v319
      %v451 = vunpack.c.l.b16 %v320
      %v452 = vunpack.c.l.b16 %v321
      %v453 = vunpack.c.l.b16 %v338
      %v454 = vpack.c.b16 %v406, %v405
      %v455 = vpack.c.b16 %v408, %v407
      %v456 = vpack.c.b16 %v410, %v409
      %v457 = vpack.c.b16 %v412, %v411
      %v458 = vpack.c.b16 %v414, %v413
      %v459 = vpack.c.b16 %v416, %v415
      %v460 = vpack.c.b16 %v418, %v417
      %v461 = vpack.c.b16 %v420, %v419
      %v462 = vpack.c.b16 %v422, %v421
      %v463 = vpack.c.b16 %v424, %v423
      %v464 = vpack.c.b16 %v426, %v425
      %v465 = vpack.c.b16 %v428, %v427
      %v466 = vpack.c.b16 %v430, %v429
      %v467 = vpack.c.b16 %v432, %v431
      %v468 = vpack.c.b16 %v434, %v433
      %v469 = vpack.c.b16 %v436, %v435
      %v470 = vpack.c.b16 %v438, %v437
      %v471 = vpack.c.b16 %v440, %v439
      %v472 = vpack.c.b16 %v442, %v441
      %v473 = vpack.c.b16 %v444, %v443
      %v474 = vpack.c.b16 %v446, %v445
      %v475 = vpack.c.b16 %v448, %v447
      %v476 = vpack.c.b16 %v450, %v449
      %v477 = vpack.c.b16 %v452, %v451
      %v478 = vpack.c.b16 %v453, %v453
      %vm479 = vsmask.f32 7424
      %v481 = vshrl.u32 %v454, 16
      %v483 = vshll.u32 %v454, 16
      %v485 = vrot.slane %v483, 1
      %v486 = vor.u32 %v481, %v485
      %v488 = vshll.u32 %v455, 16
      %v490 = vrot.slane %v488, 1
      %v491 = vsel %vm479, %v486, %v490
      %v492 = vshrl.u32 %v455, 16
      %v494 = vor.u32 %v492, %v490
      %v496 = vshll.u32 %v456, 16
      %v498 = vrot.slane %v496, 1
      %v499 = vsel %vm479, %v494, %v498
      %v500 = vshrl.u32 %v456, 16
      %v502 = vor.u32 %v500, %v498
      %v504 = vshll.u32 %v457, 16
      %v506 = vrot.slane %v504, 1
      %v507 = vsel %vm479, %v502, %v506
      %v508 = vshrl.u32 %v457, 16
      %v510 = vor.u32 %v508, %v506
      %v512 = vshll.u32 %v458, 16
      %v514 = vrot.slane %v512, 1
      %v515 = vsel %vm479, %v510, %v514
      %v516 = vshrl.u32 %v458, 16
      %v518 = vor.u32 %v516, %v514
      %v520 = vshll.u32 %v459, 16
      %v522 = vrot.slane %v520, 1
      %v523 = vsel %vm479, %v518, %v522
      %v524 = vshrl.u32 %v459, 16
      %v526 = vor.u32 %v524, %v522
      %v528 = vshll.u32 %v460, 16
      %v530 = vrot.slane %v528, 1
      %v531 = vsel %vm479, %v526, %v530
      %v532 = vshrl.u32 %v460, 16
      %v534 = vor.u32 %v532, %v530
      %v536 = vshll.u32 %v461, 16
      %v538 = vrot.slane %v536, 1
      %v539 = vsel %vm479, %v534, %v538
      %v540 = vshrl.u32 %v461, 16
      %v542 = vor.u32 %v540, %v538
      %v544 = vshll.u32 %v462, 16
      %v546 = vrot.slane %v544, 1
      %v547 = vsel %vm479, %v542, %v546
      %v548 = vshrl.u32 %v462, 16
      %v550 = vor.u32 %v548, %v546
      %v552 = vshll.u32 %v463, 16
      %v554 = vrot.slane %v552, 1
      %v555 = vsel %vm479, %v550, %v554
      %v556 = vshrl.u32 %v463, 16
      %v558 = vor.u32 %v556, %v554
      %v560 = vshll.u32 %v464, 16
      %v562 = vrot.slane %v560, 1
      %v563 = vsel %vm479, %v558, %v562
      %v564 = vshrl.u32 %v464, 16
      %v566 = vor.u32 %v564, %v562
      %v568 = vshll.u32 %v465, 16
      %v570 = vrot.slane %v568, 1
      %v571 = vsel %vm479, %v566, %v570
      %v572 = vshrl.u32 %v465, 16
      %v574 = vor.u32 %v572, %v570
      %v576 = vshll.u32 %v466, 16
      %v578 = vrot.slane %v576, 1
      %v579 = vsel %vm479, %v574, %v578
      %v580 = vshrl.u32 %v466, 16
      %v582 = vor.u32 %v580, %v578
      %v584 = vshll.u32 %v467, 16
      %v586 = vrot.slane %v584, 1
      %v587 = vsel %vm479, %v582, %v586
      %v588 = vshrl.u32 %v467, 16
      %v590 = vor.u32 %v588, %v586
      %v592 = vshll.u32 %v468, 16
      %v594 = vrot.slane %v592, 1
      %v595 = vsel %vm479, %v590, %v594
      %v596 = vshrl.u32 %v468, 16
      %v598 = vor.u32 %v596, %v594
      %v600 = vshll.u32 %v469, 16
      %v602 = vrot.slane %v600, 1
      %v603 = vsel %vm479, %v598, %v602
      %v604 = vshrl.u32 %v469, 16
      %v606 = vor.u32 %v604, %v602
      %v608 = vshll.u32 %v470, 16
      %v610 = vrot.slane %v608, 1
      %v611 = vsel %vm479, %v606, %v610
      %v612 = vshrl.u32 %v470, 16
      %v614 = vor.u32 %v612, %v610
      %v616 = vshll.u32 %v471, 16
      %v618 = vrot.slane %v616, 1
      %v619 = vsel %vm479, %v614, %v618
      %v620 = vshrl.u32 %v471, 16
      %v622 = vor.u32 %v620, %v618
      %v624 = vshll.u32 %v472, 16
      %v626 = vrot.slane %v624, 1
      %v627 = vsel %vm479, %v622, %v626
      %v628 = vshrl.u32 %v472, 16
      %v630 = vor.u32 %v628, %v626
      %v632 = vshll.u32 %v473, 16
      %v634 = vrot.slane %v632, 1
      %v635 = vsel %vm479, %v630, %v634
      %v636 = vshrl.u32 %v473, 16
      %v638 = vor.u32 %v636, %v634
      %v640 = vshll.u32 %v474, 16
      %v642 = vrot.slane %v640, 1
      %v643 = vsel %vm479, %v638, %v642
      %v644 = vshrl.u32 %v474, 16
      %v646 = vor.u32 %v644, %v642
      %v648 = vshll.u32 %v475, 16
      %v650 = vrot.slane %v648, 1
      %v651 = vsel %vm479, %v646, %v650
      %v652 = vshrl.u32 %v475, 16
      %v654 = vor.u32 %v652, %v650
      %v656 = vshll.u32 %v476, 16
      %v658 = vrot.slane %v656, 1
      %v659 = vsel %vm479, %v654, %v658
      %v660 = vshrl.u32 %v476, 16
      %v662 = vor.u32 %v660, %v658
      %v664 = vshll.u32 %v477, 16
      %v666 = vrot.slane %v664, 1
      %v667 = vsel %vm479, %v662, %v666
      %v668 = vshrl.u32 %v477, 16
      %v670 = vor.u32 %v668, %v666
      %v672 = vshll.u32 %v478, 16
      %v674 = vrot.slane %v672, 1
      %v675 = vsel %vm479, %v670, %v674
      %v716 = vunpack.c.l.b16 %v340
      %v717 = vunpack.c.l.b16 %v341
      %v718 = vunpack.c.l.b16 %v342
      %v719 = vunpack.c.l.b16 %v343
      %v720 = vunpack.c.l.b16 %v344
      %v721 = vunpack.c.l.b16 %v345
      %v722 = vunpack.c.l.b16 %v346
      %v723 = vunpack.c.l.b16 %v347
      %v724 = vunpack.c.l.b16 %v348
      %v725 = vunpack.c.l.b16 %v349
      %v726 = vunpack.c.l.b16 %v350
      %v727 = vunpack.c.l.b16 %v351
      %v728 = vunpack.c.l.b16 %v352
      %v729 = vunpack.c.l.b16 %v353
      %v730 = vunpack.c.l.b16 %v354
      %v731 = vunpack.c.l.b16 %v355
      %v732 = vpack.c.b16 %v717, %v716
      %v733 = vpack.c.b16 %v719, %v718
      %v734 = vpack.c.b16 %v721, %v720
      %v735 = vpack.c.b16 %v723, %v722
      %v736 = vpack.c.b16 %v725, %v724
      %v737 = vpack.c.b16 %v727, %v726
      %v738 = vpack.c.b16 %v729, %v728
      %v739 = vpack.c.b16 %v731, %v730
      %748 = vmatprep.subr.bf16.mxu0 0
      %749 = vmatpush1.bf16.msra.mxu0 %v739
      %750 = vmatprep.subr.bf16.mxu0 0
      %751 = vmatpush1.bf16.msra.mxu0 %v738
      %752 = vmatprep.subr.bf16.mxu0 0
      %753 = vmatpush1.bf16.msra.mxu0 %v737
      %754 = vmatprep.subr.bf16.mxu0 0
      %755 = vmatpush1.bf16.msra.mxu0 %v736
      %756 = vmatprep.subr.bf16.mxu0 0
      %757 = vmatpush1.bf16.msra.mxu0 %v735
      %758 = vmatprep.subr.bf16.mxu0 0
      %759 = vmatpush1.bf16.msra.mxu0 %v734
      %760 = vmatprep.subr.bf16.mxu0 0
      %761 = vmatpush1.bf16.msra.mxu0 %v733
      %762 = vmatprep.subr.bf16.mxu0 0
      %763 = vmatpush1.bf16.msra.mxu0 %v732
      %764 = vmatprep.subr.bf16.mxu0 0
      %765 = vmatpush2.bf16.msra.mxu0 0
      %766 = vmatprep.subr.bf16.mxu0 0
      %767 = vmatpush2.bf16.msra.mxu0 0
      %768 = vmatprep.subr.bf16.mxu0 0
      %769 = vmatpush2.bf16.msra.mxu0 0
      %770 = vmatprep.subr.bf16.mxu0 0
      %771 = vmatpush2.bf16.msra.mxu0 0
      %772 = vmatprep.subr.bf16.mxu0 0
      %773 = vmatpush2.bf16.msra.mxu0 0
      %774 = vmatprep.subr.bf16.mxu0 0
      %775 = vmatpush2.bf16.msra.mxu0 0
      %776 = vmatprep.subr.bf16.mxu0 0
      %777 = vmatpush2.bf16.msra.mxu0 0
      %778 = vmatprep.subr.bf16.mxu0 0
      %779 = vmatpush2.bf16.msra.mxu0 0
      %780 = vmatprep.mubr.bf16.mxu0 0
      %781 = vmatmul.mubr.bf16.gmra.mxu0 %v491
      %v782 = vpop.f32.mrf.mxu0
      %v783 = vadd.f32 0.0, %v782
      %v784 = vpop.f32.mrf.mxu0
      %v785 = vpop.f32.mrf.mxu0
      %v786 = vadd.f32 0.0, %v785
      %v787 = vpop.f32.mrf.mxu0
      %788 = vmatprep.mubr.bf16.mxu0 0
      %789 = vmatmul.mubr.bf16.gmra.mxu0 %v499
      %v790 = vpop.f32.mrf.mxu0
      %v791 = vadd.f32 0.0, %v790
      %v792 = vpop.f32.mrf.mxu0
      %v793 = vpop.f32.mrf.mxu0
      %v794 = vadd.f32 0.0, %v793
      %v795 = vpop.f32.mrf.mxu0
      %796 = vmatprep.mubr.bf16.mxu0 0
      %797 = vmatmul.mubr.bf16.gmra.mxu0 %v507
      %v798 = vpop.f32.mrf.mxu0
      %v799 = vadd.f32 0.0, %v798
      %v800 = vpop.f32.mrf.mxu0
      %v801 = vpop.f32.mrf.mxu0
      %v802 = vadd.f32 0.0, %v801
      %v803 = vpop.f32.mrf.mxu0
      %804 = vmatprep.mubr.bf16.mxu0 0
      %805 = vmatmul.mubr.bf16.gmra.mxu0 %v515
      %v806 = vpop.f32.mrf.mxu0
      %v807 = vadd.f32 0.0, %v806
      %v808 = vpop.f32.mrf.mxu0
      %v809 = vpop.f32.mrf.mxu0
      %v810 = vadd.f32 0.0, %v809
      %v811 = vpop.f32.mrf.mxu0
      %812 = vmatprep.mubr.bf16.mxu0 0
      %813 = vmatmul.mubr.bf16.gmra.mxu0 %v523
      %v814 = vpop.f32.mrf.mxu0
      %v815 = vadd.f32 0.0, %v814
      %v816 = vpop.f32.mrf.mxu0
      %v817 = vpop.f32.mrf.mxu0
      %v818 = vadd.f32 0.0, %v817
      %v819 = vpop.f32.mrf.mxu0
      %820 = vmatprep.mubr.bf16.mxu0 0
      %821 = vmatmul.mubr.bf16.gmra.mxu0 %v531
      %v822 = vpop.f32.mrf.mxu0
      %v823 = vadd.f32 0.0, %v822
      %v824 = vpop.f32.mrf.mxu0
      %v825 = vpop.f32.mrf.mxu0
      %v826 = vadd.f32 0.0, %v825
      %v827 = vpop.f32.mrf.mxu0
      %828 = vmatprep.mubr.bf16.mxu0 0
      %829 = vmatmul.mubr.bf16.gmra.mxu0 %v539
      %v830 = vpop.f32.mrf.mxu0
      %v831 = vadd.f32 0.0, %v830
      %v832 = vpop.f32.mrf.mxu0
      %v833 = vpop.f32.mrf.mxu0
      %v834 = vadd.f32 0.0, %v833
      %v835 = vpop.f32.mrf.mxu0
      %836 = vmatprep.mubr.bf16.mxu0 0
      %837 = vmatmul.mubr.bf16.gmra.mxu0 %v547
      %v838 = vpop.f32.mrf.mxu0
      %v839 = vadd.f32 0.0, %v838
      %v840 = vpop.f32.mrf.mxu0
      %v841 = vpop.f32.mrf.mxu0
      %v842 = vadd.f32 0.0, %v841
      %v843 = vpop.f32.mrf.mxu0
      %844 = vmatprep.mubr.bf16.mxu0 0
      %845 = vmatmul.mubr.bf16.gmra.mxu0 %v555
      %v846 = vpop.f32.mrf.mxu0
      %v847 = vadd.f32 0.0, %v846
      %v848 = vpop.f32.mrf.mxu0
      %v849 = vpop.f32.mrf.mxu0
      %v850 = vadd.f32 0.0, %v849
      %v851 = vpop.f32.mrf.mxu0
      %852 = vmatprep.mubr.bf16.mxu0 0
      %853 = vmatmul.mubr.bf16.gmra.mxu0 %v563
      %v854 = vpop.f32.mrf.mxu0
      %v855 = vadd.f32 0.0, %v854
      %v856 = vpop.f32.mrf.mxu0
      %v857 = vpop.f32.mrf.mxu0
      %v858 = vadd.f32 0.0, %v857
      %v859 = vpop.f32.mrf.mxu0
      %860 = vmatprep.mubr.bf16.mxu0 0
      %861 = vmatmul.mubr.bf16.gmra.mxu0 %v571
      %v862 = vpop.f32.mrf.mxu0
      %v863 = vadd.f32 0.0, %v862
      %v864 = vpop.f32.mrf.mxu0
      %v865 = vpop.f32.mrf.mxu0
      %v866 = vadd.f32 0.0, %v865
      %v867 = vpop.f32.mrf.mxu0
      %868 = vmatprep.mubr.bf16.mxu0 0
      %869 = vmatmul.mubr.bf16.gmra.mxu0 %v579
      %v870 = vpop.f32.mrf.mxu0
      %v871 = vadd.f32 0.0, %v870
      %v872 = vpop.f32.mrf.mxu0
      %v873 = vpop.f32.mrf.mxu0
      %v874 = vadd.f32 0.0, %v873
      %v875 = vpop.f32.mrf.mxu0
      %876 = vmatprep.mubr.bf16.mxu0 0
      %877 = vmatmul.mubr.bf16.gmra.mxu0 %v587
      %v878 = vpop.f32.mrf.mxu0
      %v879 = vadd.f32 0.0, %v878
      %v880 = vpop.f32.mrf.mxu0
      %v881 = vpop.f32.mrf.mxu0
      %v882 = vadd.f32 0.0, %v881
      %v883 = vpop.f32.mrf.mxu0
      %884 = vmatprep.mubr.bf16.mxu0 0
      %885 = vmatmul.mubr.bf16.gmra.mxu0 %v595
      %v886 = vpop.f32.mrf.mxu0
      %v887 = vadd.f32 0.0, %v886
      %v888 = vpop.f32.mrf.mxu0
      %v889 = vpop.f32.mrf.mxu0
      %v890 = vadd.f32 0.0, %v889
      %v891 = vpop.f32.mrf.mxu0
      %892 = vmatprep.mubr.bf16.mxu0 0
      %893 = vmatmul.mubr.bf16.gmra.mxu0 %v603
      %v894 = vpop.f32.mrf.mxu0
      %v895 = vadd.f32 0.0, %v894
      %v896 = vpop.f32.mrf.mxu0
      %v897 = vpop.f32.mrf.mxu0
      %v898 = vadd.f32 0.0, %v897
      %v899 = vpop.f32.mrf.mxu0
      %900 = vmatprep.mubr.bf16.mxu0 0
      %901 = vmatmul.mubr.bf16.gmra.mxu0 %v611
      %v902 = vpop.f32.mrf.mxu0
      %v903 = vadd.f32 0.0, %v902
      %v904 = vpop.f32.mrf.mxu0
      %v905 = vpop.f32.mrf.mxu0
      %v906 = vadd.f32 0.0, %v905
      %v907 = vpop.f32.mrf.mxu0
      %908 = vmatprep.mubr.bf16.mxu0 0
      %909 = vmatmul.mubr.bf16.gmra.mxu0 %v619
      %v910 = vpop.f32.mrf.mxu0
      %v911 = vadd.f32 0.0, %v910
      %v912 = vpop.f32.mrf.mxu0
      %v913 = vpop.f32.mrf.mxu0
      %v914 = vadd.f32 0.0, %v913
      %v915 = vpop.f32.mrf.mxu0
      %916 = vmatprep.mubr.bf16.mxu0 0
      %917 = vmatmul.mubr.bf16.gmra.mxu0 %v627
      %v918 = vpop.f32.mrf.mxu0
      %v919 = vadd.f32 0.0, %v918
      %v920 = vpop.f32.mrf.mxu0
      %v921 = vpop.f32.mrf.mxu0
      %v922 = vadd.f32 0.0, %v921
      %v923 = vpop.f32.mrf.mxu0
      %924 = vmatprep.mubr.bf16.mxu0 0
      %925 = vmatmul.mubr.bf16.gmra.mxu0 %v635
      %v926 = vpop.f32.mrf.mxu0
      %v927 = vadd.f32 0.0, %v926
      %v928 = vpop.f32.mrf.mxu0
      %v929 = vpop.f32.mrf.mxu0
      %v930 = vadd.f32 0.0, %v929
      %v931 = vpop.f32.mrf.mxu0
      %932 = vmatprep.mubr.bf16.mxu0 0
      %933 = vmatmul.mubr.bf16.gmra.mxu0 %v643
      %v934 = vpop.f32.mrf.mxu0
      %v935 = vadd.f32 0.0, %v934
      %v936 = vpop.f32.mrf.mxu0
      %v937 = vpop.f32.mrf.mxu0
      %v938 = vadd.f32 0.0, %v937
      %v939 = vpop.f32.mrf.mxu0
      %940 = vmatprep.mubr.bf16.mxu0 0
      %941 = vmatmul.mubr.bf16.gmra.mxu0 %v651
      %v942 = vpop.f32.mrf.mxu0
      %v943 = vadd.f32 0.0, %v942
      %v944 = vpop.f32.mrf.mxu0
      %v945 = vpop.f32.mrf.mxu0
      %v946 = vadd.f32 0.0, %v945
      %v947 = vpop.f32.mrf.mxu0
      %948 = vmatprep.mubr.bf16.mxu0 0
      %949 = vmatmul.mubr.bf16.gmra.mxu0 %v659
      %v950 = vpop.f32.mrf.mxu0
      %v951 = vadd.f32 0.0, %v950
      %v952 = vpop.f32.mrf.mxu0
      %v953 = vpop.f32.mrf.mxu0
      %v954 = vadd.f32 0.0, %v953
      %v955 = vpop.f32.mrf.mxu0
      %956 = vmatprep.mubr.bf16.mxu0 0
      %957 = vmatmul.mubr.bf16.gmra.mxu0 %v667
      %v958 = vpop.f32.mrf.mxu0
      %v959 = vadd.f32 0.0, %v958
      %v960 = vpop.f32.mrf.mxu0
      %v961 = vpop.f32.mrf.mxu0
      %v962 = vadd.f32 0.0, %v961
      %v963 = vpop.f32.mrf.mxu0
      %964 = vmatprep.mubr.bf16.mxu0 0
      %965 = vmatmul.mubr.bf16.gmra.mxu0 %v675
      %v966 = vpop.f32.mrf.mxu0
      %v967 = vadd.f32 0.0, %v966
      %v968 = vpop.f32.mrf.mxu0
      %v969 = vpop.f32.mrf.mxu0
      %v970 = vadd.f32 0.0, %v969
      %v971 = vpop.f32.mrf.mxu0
      %972 = vdwg.mxu0
      %v1013 = vunpack.c.l.b16 %v322
      %v1014 = vunpack.c.l.b16 %v323
      %v1015 = vunpack.c.l.b16 %v324
      %v1016 = vunpack.c.l.b16 %v325
      %v1017 = vunpack.c.l.b16 %v326
      %v1018 = vunpack.c.l.b16 %v327
      %v1019 = vunpack.c.l.b16 %v328
      %v1020 = vunpack.c.l.b16 %v329
      %v1021 = vunpack.c.l.b16 %v330
      %v1022 = vunpack.c.l.b16 %v331
      %v1023 = vunpack.c.l.b16 %v332
      %v1024 = vunpack.c.l.b16 %v333
      %v1025 = vunpack.c.l.b16 %v334
      %v1026 = vunpack.c.l.b16 %v335
      %v1027 = vunpack.c.l.b16 %v336
      %v1028 = vunpack.c.l.b16 %v337
      %v1029 = vpack.c.b16 %v1014, %v1013
      %v1030 = vpack.c.b16 %v1016, %v1015
      %v1031 = vpack.c.b16 %v1018, %v1017
      %v1032 = vpack.c.b16 %v1020, %v1019
      %v1033 = vpack.c.b16 %v1022, %v1021
      %v1034 = vpack.c.b16 %v1024, %v1023
      %v1035 = vpack.c.b16 %v1026, %v1025
      %v1036 = vpack.c.b16 %v1028, %v1027
      %1045 = vmatprep.subr.bf16.mxu0 0
      %1046 = vmatpush1.bf16.msra.mxu0 %v1036
      %1047 = vmatprep.subr.bf16.mxu0 0
      %1048 = vmatpush1.bf16.msra.mxu0 %v1035
      %1049 = vmatprep.subr.bf16.mxu0 0
      %1050 = vmatpush1.bf16.msra.mxu0 %v1034
      %1051 = vmatprep.subr.bf16.mxu0 0
      %1052 = vmatpush1.bf16.msra.mxu0 %v1033
      %1053 = vmatprep.subr.bf16.mxu0 0
      %1054 = vmatpush1.bf16.msra.mxu0 %v1032
      %1055 = vmatprep.subr.bf16.mxu0 0
      %1056 = vmatpush1.bf16.msra.mxu0 %v1031
      %1057 = vmatprep.subr.bf16.mxu0 0
      %1058 = vmatpush1.bf16.msra.mxu0 %v1030
      %1059 = vmatprep.subr.bf16.mxu0 0
      %1060 = vmatpush1.bf16.msra.mxu0 %v1029
      %1061 = vmatprep.subr.bf16.mxu0 0
      %1062 = vmatpush2.bf16.msra.mxu0 0
      %1063 = vmatprep.subr.bf16.mxu0 0
      %1064 = vmatpush2.bf16.msra.mxu0 0
      %1065 = vmatprep.subr.bf16.mxu0 0
      %1066 = vmatpush2.bf16.msra.mxu0 0
      %1067 = vmatprep.subr.bf16.mxu0 0
      %1068 = vmatpush2.bf16.msra.mxu0 0
      %1069 = vmatprep.subr.bf16.mxu0 0
      %1070 = vmatpush2.bf16.msra.mxu0 0
      %1071 = vmatprep.subr.bf16.mxu0 0
      %1072 = vmatpush2.bf16.msra.mxu0 0
      %1073 = vmatprep.subr.bf16.mxu0 0
      %1074 = vmatpush2.bf16.msra.mxu0 0
      %1075 = vmatprep.subr.bf16.mxu0 0
      %1076 = vmatpush2.bf16.msra.mxu0 0
      %1077 = vmatprep.mubr.bf16.mxu0 0
      %1078 = vmatmul.mubr.bf16.gmra.mxu0 %v454
      %v1079 = vpop.f32.mrf.mxu0
      %v1080 = vadd.f32 %v783, %v1079
      %v1081 = vpop.f32.mrf.mxu0
      %v1082 = vpop.f32.mrf.mxu0
      %v1083 = vadd.f32 %v786, %v1082
      %v1084 = vpop.f32.mrf.mxu0
      %1085 = vmatprep.mubr.bf16.mxu0 0
      %1086 = vmatmul.mubr.bf16.gmra.mxu0 %v455
      %v1087 = vpop.f32.mrf.mxu0
      %v1088 = vadd.f32 %v791, %v1087
      %v1089 = vpop.f32.mrf.mxu0
      %v1090 = vpop.f32.mrf.mxu0
      %v1091 = vadd.f32 %v794, %v1090
      %v1092 = vpop.f32.mrf.mxu0
      %1093 = vmatprep.mubr.bf16.mxu0 0
      %1094 = vmatmul.mubr.bf16.gmra.mxu0 %v456
      %v1095 = vpop.f32.mrf.mxu0
      %v1096 = vadd.f32 %v799, %v1095
      %v1097 = vpop.f32.mrf.mxu0
      %v1098 = vpop.f32.mrf.mxu0
      %v1099 = vadd.f32 %v802, %v1098
      %v1100 = vpop.f32.mrf.mxu0
      %1101 = vmatprep.mubr.bf16.mxu0 0
      %1102 = vmatmul.mubr.bf16.gmra.mxu0 %v457
      %v1103 = vpop.f32.mrf.mxu0
      %v1104 = vadd.f32 %v807, %v1103
      %v1105 = vpop.f32.mrf.mxu0
      %v1106 = vpop.f32.mrf.mxu0
      %v1107 = vadd.f32 %v810, %v1106
      %v1108 = vpop.f32.mrf.mxu0
      %1109 = vmatprep.mubr.bf16.mxu0 0
      %1110 = vmatmul.mubr.bf16.gmra.mxu0 %v458
      %v1111 = vpop.f32.mrf.mxu0
      %v1112 = vadd.f32 %v815, %v1111
      %v1113 = vpop.f32.mrf.mxu0
      %v1114 = vpop.f32.mrf.mxu0
      %v1115 = vadd.f32 %v818, %v1114
      %v1116 = vpop.f32.mrf.mxu0
      %1117 = vmatprep.mubr.bf16.mxu0 0
      %1118 = vmatmul.mubr.bf16.gmra.mxu0 %v459
      %v1119 = vpop.f32.mrf.mxu0
      %v1120 = vadd.f32 %v823, %v1119
      %v1121 = vpop.f32.mrf.mxu0
      %v1122 = vpop.f32.mrf.mxu0
      %v1123 = vadd.f32 %v826, %v1122
      %v1124 = vpop.f32.mrf.mxu0
      %1125 = vmatprep.mubr.bf16.mxu0 0
      %1126 = vmatmul.mubr.bf16.gmra.mxu0 %v460
      %v1127 = vpop.f32.mrf.mxu0
      %v1128 = vadd.f32 %v831, %v1127
      %v1129 = vpop.f32.mrf.mxu0
      %v1130 = vpop.f32.mrf.mxu0
      %v1131 = vadd.f32 %v834, %v1130
      %v1132 = vpop.f32.mrf.mxu0
      %1133 = vmatprep.mubr.bf16.mxu0 0
      %1134 = vmatmul.mubr.bf16.gmra.mxu0 %v461
      %v1135 = vpop.f32.mrf.mxu0
      %v1136 = vadd.f32 %v839, %v1135
      %v1137 = vpop.f32.mrf.mxu0
      %v1138 = vpop.f32.mrf.mxu0
      %v1139 = vadd.f32 %v842, %v1138
      %v1140 = vpop.f32.mrf.mxu0
      %1141 = vmatprep.mubr.bf16.mxu0 0
      %1142 = vmatmul.mubr.bf16.gmra.mxu0 %v462
      %v1143 = vpop.f32.mrf.mxu0
      %v1144 = vadd.f32 %v847, %v1143
      %v1145 = vpop.f32.mrf.mxu0
      %v1146 = vpop.f32.mrf.mxu0
      %v1147 = vadd.f32 %v850, %v1146
      %v1148 = vpop.f32.mrf.mxu0
      %1149 = vmatprep.mubr.bf16.mxu0 0
      %1150 = vmatmul.mubr.bf16.gmra.mxu0 %v463
      %v1151 = vpop.f32.mrf.mxu0
      %v1152 = vadd.f32 %v855, %v1151
      %v1153 = vpop.f32.mrf.mxu0
      %v1154 = vpop.f32.mrf.mxu0
      %v1155 = vadd.f32 %v858, %v1154
      %v1156 = vpop.f32.mrf.mxu0
      %1157 = vmatprep.mubr.bf16.mxu0 0
      %1158 = vmatmul.mubr.bf16.gmra.mxu0 %v464
      %v1159 = vpop.f32.mrf.mxu0
      %v1160 = vadd.f32 %v863, %v1159
      %v1161 = vpop.f32.mrf.mxu0
      %v1162 = vpop.f32.mrf.mxu0
      %v1163 = vadd.f32 %v866, %v1162
      %v1164 = vpop.f32.mrf.mxu0
      %1165 = vmatprep.mubr.bf16.mxu0 0
      %1166 = vmatmul.mubr.bf16.gmra.mxu0 %v465
      %v1167 = vpop.f32.mrf.mxu0
      %v1168 = vadd.f32 %v871, %v1167
      %v1169 = vpop.f32.mrf.mxu0
      %v1170 = vpop.f32.mrf.mxu0
      %v1171 = vadd.f32 %v874, %v1170
      %v1172 = vpop.f32.mrf.mxu0
      %1173 = vmatprep.mubr.bf16.mxu0 0
      %1174 = vmatmul.mubr.bf16.gmra.mxu0 %v466
      %v1175 = vpop.f32.mrf.mxu0
      %v1176 = vadd.f32 %v879, %v1175
      %v1177 = vpop.f32.mrf.mxu0
      %v1178 = vpop.f32.mrf.mxu0
      %v1179 = vadd.f32 %v882, %v1178
      %v1180 = vpop.f32.mrf.mxu0
      %1181 = vmatprep.mubr.bf16.mxu0 0
      %1182 = vmatmul.mubr.bf16.gmra.mxu0 %v467
      %v1183 = vpop.f32.mrf.mxu0
      %v1184 = vadd.f32 %v887, %v1183
      %v1185 = vpop.f32.mrf.mxu0
      %v1186 = vpop.f32.mrf.mxu0
      %v1187 = vadd.f32 %v890, %v1186
      %v1188 = vpop.f32.mrf.mxu0
      %1189 = vmatprep.mubr.bf16.mxu0 0
      %1190 = vmatmul.mubr.bf16.gmra.mxu0 %v468
      %v1191 = vpop.f32.mrf.mxu0
      %v1192 = vadd.f32 %v895, %v1191
      %v1193 = vpop.f32.mrf.mxu0
      %v1194 = vpop.f32.mrf.mxu0
      %v1195 = vadd.f32 %v898, %v1194
      %v1196 = vpop.f32.mrf.mxu0
      %1197 = vmatprep.mubr.bf16.mxu0 0
      %1198 = vmatmul.mubr.bf16.gmra.mxu0 %v469
      %v1199 = vpop.f32.mrf.mxu0
      %v1200 = vadd.f32 %v903, %v1199
      %v1201 = vpop.f32.mrf.mxu0
      %v1202 = vpop.f32.mrf.mxu0
      %v1203 = vadd.f32 %v906, %v1202
      %v1204 = vpop.f32.mrf.mxu0
      %1205 = vmatprep.mubr.bf16.mxu0 0
      %1206 = vmatmul.mubr.bf16.gmra.mxu0 %v470
      %v1207 = vpop.f32.mrf.mxu0
      %v1208 = vadd.f32 %v911, %v1207
      %v1209 = vpop.f32.mrf.mxu0
      %v1210 = vpop.f32.mrf.mxu0
      %v1211 = vadd.f32 %v914, %v1210
      %v1212 = vpop.f32.mrf.mxu0
      %1213 = vmatprep.mubr.bf16.mxu0 0
      %1214 = vmatmul.mubr.bf16.gmra.mxu0 %v471
      %v1215 = vpop.f32.mrf.mxu0
      %v1216 = vadd.f32 %v919, %v1215
      %v1217 = vpop.f32.mrf.mxu0
      %v1218 = vpop.f32.mrf.mxu0
      %v1219 = vadd.f32 %v922, %v1218
      %v1220 = vpop.f32.mrf.mxu0
      %1221 = vmatprep.mubr.bf16.mxu0 0
      %1222 = vmatmul.mubr.bf16.gmra.mxu0 %v472
      %v1223 = vpop.f32.mrf.mxu0
      %v1224 = vadd.f32 %v927, %v1223
      %v1225 = vpop.f32.mrf.mxu0
      %v1226 = vpop.f32.mrf.mxu0
      %v1227 = vadd.f32 %v930, %v1226
      %v1228 = vpop.f32.mrf.mxu0
      %1229 = vmatprep.mubr.bf16.mxu0 0
      %1230 = vmatmul.mubr.bf16.gmra.mxu0 %v473
      %v1231 = vpop.f32.mrf.mxu0
      %v1232 = vadd.f32 %v935, %v1231
      %v1233 = vpop.f32.mrf.mxu0
      %v1234 = vpop.f32.mrf.mxu0
      %v1235 = vadd.f32 %v938, %v1234
      %v1236 = vpop.f32.mrf.mxu0
      %1237 = vmatprep.mubr.bf16.mxu0 0
      %1238 = vmatmul.mubr.bf16.gmra.mxu0 %v474
      %v1239 = vpop.f32.mrf.mxu0
      %v1240 = vadd.f32 %v943, %v1239
      %v1241 = vpop.f32.mrf.mxu0
      %v1242 = vpop.f32.mrf.mxu0
      %v1243 = vadd.f32 %v946, %v1242
      %v1244 = vpop.f32.mrf.mxu0
      %1245 = vmatprep.mubr.bf16.mxu0 0
      %1246 = vmatmul.mubr.bf16.gmra.mxu0 %v475
      %v1247 = vpop.f32.mrf.mxu0
      %v1248 = vadd.f32 %v951, %v1247
      %v1249 = vpop.f32.mrf.mxu0
      %v1250 = vpop.f32.mrf.mxu0
      %v1251 = vadd.f32 %v954, %v1250
      %v1252 = vpop.f32.mrf.mxu0
      %1253 = vmatprep.mubr.bf16.mxu0 0
      %1254 = vmatmul.mubr.bf16.gmra.mxu0 %v476
      %v1255 = vpop.f32.mrf.mxu0
      %v1256 = vadd.f32 %v959, %v1255
      %v1257 = vpop.f32.mrf.mxu0
      %v1258 = vpop.f32.mrf.mxu0
      %v1259 = vadd.f32 %v962, %v1258
      %v1260 = vpop.f32.mrf.mxu0
      %1261 = vmatprep.mubr.bf16.mxu0 0
      %1262 = vmatmul.mubr.bf16.gmra.mxu0 %v477
      %v1263 = vpop.f32.mrf.mxu0
      %v1264 = vadd.f32 %v967, %v1263
      %v1265 = vpop.f32.mrf.mxu0
      %v1266 = vpop.f32.mrf.mxu0
      %v1267 = vadd.f32 %v970, %v1266
      %v1268 = vpop.f32.mrf.mxu0
      %1269 = vdwg.mxu0
      %v1270 = vld [vmem:[%s251] sm:$0xe]
      %s1271 = scalar_lea.vmem %s1, 128
      %v1272 = vld [vmem:[%s1271] sm:$0xf]
      %v1273 = vld [vmem:[%s1271 + $0x4] sm:$0xf]
      %v1274 = vld [vmem:[%s1271 + $0x8] sm:$0xf]
      %v1275 = vld [vmem:[%s1271 + $0xc] sm:$0xf]
      %v1276 = vld [vmem:[%s1271 + $0x10] sm:$0xf]
      %v1277 = vld [vmem:[%s1271 + $0x14] sm:$0xf]
      %v1278 = vld [vmem:[%s1271 + $0x18] sm:$0xf]
      %v1279 = vld [vmem:[%s1271 + $0x1c] sm:$0xf]
      %v1280 = vld [vmem:[%s1271 + $0x20] sm:$0xf]
      %v1281 = vld [vmem:[%s1271 + $0x24] sm:$0xf]
      %v1282 = vld [vmem:[%s1271 + $0x28] sm:$0xf]
      %v1283 = vld [vmem:[%s1271 + $0x2c] sm:$0xf]
      %v1284 = vld [vmem:[%s1271 + $0x30] sm:$0xf]
      %v1285 = vld [vmem:[%s1271 + $0x34] sm:$0xf]
      %v1286 = vld [vmem:[%s1271 + $0x38] sm:$0xf]
      %v1287 = vld [vmem:[%s1271 + $0x3c] sm:$0xf]
      %v1289 = vunpack.c.l.b16 %v1270
      %v1290 = vpack.c.b16 %v406, %v1289
      %vm1291 = vcmask 1046528
      %v1292 = vrot.slane %v1290, 1
      %v1293 = vrot.slane %v455, 1
      %v1294 = vsel %vm1291, %v1292, %v1293
      %v1295 = vrot.slane %v456, 1
      %v1296 = vsel %vm1291, %v1293, %v1295
      %v1297 = vrot.slane %v457, 1
      %v1298 = vsel %vm1291, %v1295, %v1297
      %v1299 = vrot.slane %v458, 1
      %v1300 = vsel %vm1291, %v1297, %v1299
      %v1301 = vrot.slane %v459, 1
      %v1302 = vsel %vm1291, %v1299, %v1301
      %v1303 = vrot.slane %v460, 1
      %v1304 = vsel %vm1291, %v1301, %v1303
      %v1305 = vrot.slane %v461, 1
      %v1306 = vsel %vm1291, %v1303, %v1305
      %v1307 = vrot.slane %v462, 1
      %v1308 = vsel %vm1291, %v1305, %v1307
      %v1309 = vrot.slane %v463, 1
      %v1310 = vsel %vm1291, %v1307, %v1309
      %v1311 = vrot.slane %v464, 1
      %v1312 = vsel %vm1291, %v1309, %v1311
      %v1313 = vrot.slane %v465, 1
      %v1314 = vsel %vm1291, %v1311, %v1313
      %v1315 = vrot.slane %v466, 1
      %v1316 = vsel %vm1291, %v1313, %v1315
      %v1317 = vrot.slane %v467, 1
      %v1318 = vsel %vm1291, %v1315, %v1317
      %v1319 = vrot.slane %v468, 1
      %v1320 = vsel %vm1291, %v1317, %v1319
      %v1321 = vrot.slane %v469, 1
      %v1322 = vsel %vm1291, %v1319, %v1321
      %v1323 = vrot.slane %v470, 1
      %v1324 = vsel %vm1291, %v1321, %v1323
      %v1325 = vrot.slane %v471, 1
      %v1326 = vsel %vm1291, %v1323, %v1325
      %v1327 = vrot.slane %v472, 1
      %v1328 = vsel %vm1291, %v1325, %v1327
      %v1329 = vrot.slane %v473, 1
      %v1330 = vsel %vm1291, %v1327, %v1329
      %v1331 = vrot.slane %v474, 1
      %v1332 = vsel %vm1291, %v1329, %v1331
      %v1333 = vrot.slane %v475, 1
      %v1334 = vsel %vm1291, %v1331, %v1333
      %v1335 = vrot.slane %v476, 1
      %v1336 = vsel %vm1291, %v1333, %v1335
      %v1337 = vrot.slane %v477, 1
      %v1338 = vsel %vm1291, %v1335, %v1337
      %v1339 = vrot.slane %v478, 1
      %v1340 = vsel %vm1291, %v1337, %v1339
      %v1381 = vunpack.c.l.b16 %v1272
      %v1382 = vunpack.c.l.b16 %v1273
      %v1383 = vunpack.c.l.b16 %v1274
      %v1384 = vunpack.c.l.b16 %v1275
      %v1385 = vunpack.c.l.b16 %v1276
      %v1386 = vunpack.c.l.b16 %v1277
      %v1387 = vunpack.c.l.b16 %v1278
      %v1388 = vunpack.c.l.b16 %v1279
      %v1389 = vunpack.c.l.b16 %v1280
      %v1390 = vunpack.c.l.b16 %v1281
      %v1391 = vunpack.c.l.b16 %v1282
      %v1392 = vunpack.c.l.b16 %v1283
      %v1393 = vunpack.c.l.b16 %v1284
      %v1394 = vunpack.c.l.b16 %v1285
      %v1395 = vunpack.c.l.b16 %v1286
      %v1396 = vunpack.c.l.b16 %v1287
      %v1397 = vpack.c.b16 %v1382, %v1381
      %v1398 = vpack.c.b16 %v1384, %v1383
      %v1399 = vpack.c.b16 %v1386, %v1385
      %v1400 = vpack.c.b16 %v1388, %v1387
      %v1401 = vpack.c.b16 %v1390, %v1389
      %v1402 = vpack.c.b16 %v1392, %v1391
      %v1403 = vpack.c.b16 %v1394, %v1393
      %v1404 = vpack.c.b16 %v1396, %v1395
      %1413 = vmatprep.subr.bf16.mxu0 0
      %1414 = vmatpush1.bf16.msra.mxu0 %v1404
      %1415 = vmatprep.subr.bf16.mxu0 0
      %1416 = vmatpush1.bf16.msra.mxu0 %v1403
      %1417 = vmatprep.subr.bf16.mxu0 0
      %1418 = vmatpush1.bf16.msra.mxu0 %v1402
      %1419 = vmatprep.subr.bf16.mxu0 0
      %1420 = vmatpush1.bf16.msra.mxu0 %v1401
      %1421 = vmatprep.subr.bf16.mxu0 0
      %1422 = vmatpush1.bf16.msra.mxu0 %v1400
      %1423 = vmatprep.subr.bf16.mxu0 0
      %1424 = vmatpush1.bf16.msra.mxu0 %v1399
      %1425 = vmatprep.subr.bf16.mxu0 0
      %1426 = vmatpush1.bf16.msra.mxu0 %v1398
      %1427 = vmatprep.subr.bf16.mxu0 0
      %1428 = vmatpush1.bf16.msra.mxu0 %v1397
      %1429 = vmatprep.subr.bf16.mxu0 0
      %1430 = vmatpush2.bf16.msra.mxu0 0
      %1431 = vmatprep.subr.bf16.mxu0 0
      %1432 = vmatpush2.bf16.msra.mxu0 0
      %1433 = vmatprep.subr.bf16.mxu0 0
      %1434 = vmatpush2.bf16.msra.mxu0 0
      %1435 = vmatprep.subr.bf16.mxu0 0
      %1436 = vmatpush2.bf16.msra.mxu0 0
      %1437 = vmatprep.subr.bf16.mxu0 0
      %1438 = vmatpush2.bf16.msra.mxu0 0
      %1439 = vmatprep.subr.bf16.mxu0 0
      %1440 = vmatpush2.bf16.msra.mxu0 0
      %1441 = vmatprep.subr.bf16.mxu0 0
      %1442 = vmatpush2.bf16.msra.mxu0 0
      %1443 = vmatprep.subr.bf16.mxu0 0
      %1444 = vmatpush2.bf16.msra.mxu0 0
      %1445 = vmatprep.mubr.bf16.mxu0 0
      %1446 = vmatmul.mubr.bf16.gmra.mxu0 %v1294
      %v1447 = vpop.f32.mrf.mxu0
      %v1448 = vadd.f32 0.0, %v1447
      %v1449 = vpop.f32.mrf.mxu0
      %v1450 = vpop.f32.mrf.mxu0
      %v1451 = vadd.f32 0.0, %v1450
      %v1452 = vpop.f32.mrf.mxu0
      %1453 = vmatprep.mubr.bf16.mxu0 0
      %1454 = vmatmul.mubr.bf16.gmra.mxu0 %v1296
      %v1455 = vpop.f32.mrf.mxu0
      %v1456 = vadd.f32 0.0, %v1455
      %v1457 = vpop.f32.mrf.mxu0
      %v1458 = vpop.f32.mrf.mxu0
      %v1459 = vadd.f32 0.0, %v1458
      %v1460 = vpop.f32.mrf.mxu0
      %1461 = vmatprep.mubr.bf16.mxu0 0
      %1462 = vmatmul.mubr.bf16.gmra.mxu0 %v1298
      %v1463 = vpop.f32.mrf.mxu0
      %v1464 = vadd.f32 0.0, %v1463
      %v1465 = vpop.f32.mrf.mxu0
      %v1466 = vpop.f32.mrf.mxu0
      %v1467 = vadd.f32 0.0, %v1466
      %v1468 = vpop.f32.mrf.mxu0
      %1469 = vmatprep.mubr.bf16.mxu0 0
      %1470 = vmatmul.mubr.bf16.gmra.mxu0 %v1300
      %v1471 = vpop.f32.mrf.mxu0
      %v1472 = vadd.f32 0.0, %v1471
      %v1473 = vpop.f32.mrf.mxu0
      %v1474 = vpop.f32.mrf.mxu0
      %v1475 = vadd.f32 0.0, %v1474
      %v1476 = vpop.f32.mrf.mxu0
      %1477 = vmatprep.mubr.bf16.mxu0 0
      %1478 = vmatmul.mubr.bf16.gmra.mxu0 %v1302
      %v1479 = vpop.f32.mrf.mxu0
      %v1480 = vadd.f32 0.0, %v1479
      %v1481 = vpop.f32.mrf.mxu0
      %v1482 = vpop.f32.mrf.mxu0
      %v1483 = vadd.f32 0.0, %v1482
      %v1484 = vpop.f32.mrf.mxu0
      %1485 = vmatprep.mubr.bf16.mxu0 0
      %1486 = vmatmul.mubr.bf16.gmra.mxu0 %v1304
      %v1487 = vpop.f32.mrf.mxu0
      %v1488 = vadd.f32 0.0, %v1487
      %v1489 = vpop.f32.mrf.mxu0
      %v1490 = vpop.f32.mrf.mxu0
      %v1491 = vadd.f32 0.0, %v1490
      %v1492 = vpop.f32.mrf.mxu0
      %1493 = vmatprep.mubr.bf16.mxu0 0
      %1494 = vmatmul.mubr.bf16.gmra.mxu0 %v1306
      %v1495 = vpop.f32.mrf.mxu0
      %v1496 = vadd.f32 0.0, %v1495
      %v1497 = vpop.f32.mrf.mxu0
      %v1498 = vpop.f32.mrf.mxu0
      %v1499 = vadd.f32 0.0, %v1498
      %v1500 = vpop.f32.mrf.mxu0
      %1501 = vmatprep.mubr.bf16.mxu0 0
      %1502 = vmatmul.mubr.bf16.gmra.mxu0 %v1308
      %v1503 = vpop.f32.mrf.mxu0
      %v1504 = vadd.f32 0.0, %v1503
      %v1505 = vpop.f32.mrf.mxu0
      %v1506 = vpop.f32.mrf.mxu0
      %v1507 = vadd.f32 0.0, %v1506
      %v1508 = vpop.f32.mrf.mxu0
      %1509 = vmatprep.mubr.bf16.mxu0 0
      %1510 = vmatmul.mubr.bf16.gmra.mxu0 %v1310
      %v1511 = vpop.f32.mrf.mxu0
      %v1512 = vadd.f32 0.0, %v1511
      %v1513 = vpop.f32.mrf.mxu0
      %v1514 = vpop.f32.mrf.mxu0
      %v1515 = vadd.f32 0.0, %v1514
      %v1516 = vpop.f32.mrf.mxu0
      %1517 = vmatprep.mubr.bf16.mxu0 0
      %1518 = vmatmul.mubr.bf16.gmra.mxu0 %v1312
      %v1519 = vpop.f32.mrf.mxu0
      %v1520 = vadd.f32 0.0, %v1519
      %v1521 = vpop.f32.mrf.mxu0
      %v1522 = vpop.f32.mrf.mxu0
      %v1523 = vadd.f32 0.0, %v1522
      %v1524 = vpop.f32.mrf.mxu0
      %1525 = vmatprep.mubr.bf16.mxu0 0
      %1526 = vmatmul.mubr.bf16.gmra.mxu0 %v1314
      %v1527 = vpop.f32.mrf.mxu0
      %v1528 = vadd.f32 0.0, %v1527
      %v1529 = vpop.f32.mrf.mxu0
      %v1530 = vpop.f32.mrf.mxu0
      %v1531 = vadd.f32 0.0, %v1530
      %v1532 = vpop.f32.mrf.mxu0
      %1533 = vmatprep.mubr.bf16.mxu0 0
      %1534 = vmatmul.mubr.bf16.gmra.mxu0 %v1316
      %v1535 = vpop.f32.mrf.mxu0
      %v1536 = vadd.f32 0.0, %v1535
      %v1537 = vpop.f32.mrf.mxu0
      %v1538 = vpop.f32.mrf.mxu0
      %v1539 = vadd.f32 0.0, %v1538
      %v1540 = vpop.f32.mrf.mxu0
      %1541 = vmatprep.mubr.bf16.mxu0 0
      %1542 = vmatmul.mubr.bf16.gmra.mxu0 %v1318
      %v1543 = vpop.f32.mrf.mxu0
      %v1544 = vadd.f32 0.0, %v1543
      %v1545 = vpop.f32.mrf.mxu0
      %v1546 = vpop.f32.mrf.mxu0
      %v1547 = vadd.f32 0.0, %v1546
      %v1548 = vpop.f32.mrf.mxu0
      %1549 = vmatprep.mubr.bf16.mxu0 0
      %1550 = vmatmul.mubr.bf16.gmra.mxu0 %v1320
      %v1551 = vpop.f32.mrf.mxu0
      %v1552 = vadd.f32 0.0, %v1551
      %v1553 = vpop.f32.mrf.mxu0
      %v1554 = vpop.f32.mrf.mxu0
      %v1555 = vadd.f32 0.0, %v1554
      %v1556 = vpop.f32.mrf.mxu0
      %1557 = vmatprep.mubr.bf16.mxu0 0
      %1558 = vmatmul.mubr.bf16.gmra.mxu0 %v1322
      %v1559 = vpop.f32.mrf.mxu0
      %v1560 = vadd.f32 0.0, %v1559
      %v1561 = vpop.f32.mrf.mxu0
      %v1562 = vpop.f32.mrf.mxu0
      %v1563 = vadd.f32 0.0, %v1562
      %v1564 = vpop.f32.mrf.mxu0
      %1565 = vmatprep.mubr.bf16.mxu0 0
      %1566 = vmatmul.mubr.bf16.gmra.mxu0 %v1324
      %v1567 = vpop.f32.mrf.mxu0
      %v1568 = vadd.f32 0.0, %v1567
      %v1569 = vpop.f32.mrf.mxu0
      %v1570 = vpop.f32.mrf.mxu0
      %v1571 = vadd.f32 0.0, %v1570
      %v1572 = vpop.f32.mrf.mxu0
      %1573 = vmatprep.mubr.bf16.mxu0 0
      %1574 = vmatmul.mubr.bf16.gmra.mxu0 %v1326
      %v1575 = vpop.f32.mrf.mxu0
      %v1576 = vadd.f32 0.0, %v1575
      %v1577 = vpop.f32.mrf.mxu0
      %v1578 = vpop.f32.mrf.mxu0
      %v1579 = vadd.f32 0.0, %v1578
      %v1580 = vpop.f32.mrf.mxu0
      %1581 = vmatprep.mubr.bf16.mxu0 0
      %1582 = vmatmul.mubr.bf16.gmra.mxu0 %v1328
      %v1583 = vpop.f32.mrf.mxu0
      %v1584 = vadd.f32 0.0, %v1583
      %v1585 = vpop.f32.mrf.mxu0
      %v1586 = vpop.f32.mrf.mxu0
      %v1587 = vadd.f32 0.0, %v1586
      %v1588 = vpop.f32.mrf.mxu0
      %1589 = vmatprep.mubr.bf16.mxu0 0
      %1590 = vmatmul.mubr.bf16.gmra.mxu0 %v1330
      %v1591 = vpop.f32.mrf.mxu0
      %v1592 = vadd.f32 0.0, %v1591
      %v1593 = vpop.f32.mrf.mxu0
      %v1594 = vpop.f32.mrf.mxu0
      %v1595 = vadd.f32 0.0, %v1594
      %v1596 = vpop.f32.mrf.mxu0
      %1597 = vmatprep.mubr.bf16.mxu0 0
      %1598 = vmatmul.mubr.bf16.gmra.mxu0 %v1332
      %v1599 = vpop.f32.mrf.mxu0
      %v1600 = vadd.f32 0.0, %v1599
      %v1601 = vpop.f32.mrf.mxu0
      %v1602 = vpop.f32.mrf.mxu0
      %v1603 = vadd.f32 0.0, %v1602
      %v1604 = vpop.f32.mrf.mxu0
      %1605 = vmatprep.mubr.bf16.mxu0 0
      %1606 = vmatmul.mubr.bf16.gmra.mxu0 %v1334
      %v1607 = vpop.f32.mrf.mxu0
      %v1608 = vadd.f32 0.0, %v1607
      %v1609 = vpop.f32.mrf.mxu0
      %v1610 = vpop.f32.mrf.mxu0
      %v1611 = vadd.f32 0.0, %v1610
      %v1612 = vpop.f32.mrf.mxu0
      %1613 = vmatprep.mubr.bf16.mxu0 0
      %1614 = vmatmul.mubr.bf16.gmra.mxu0 %v1336
      %v1615 = vpop.f32.mrf.mxu0
      %v1616 = vadd.f32 0.0, %v1615
      %v1617 = vpop.f32.mrf.mxu0
      %v1618 = vpop.f32.mrf.mxu0
      %v1619 = vadd.f32 0.0, %v1618
      %v1620 = vpop.f32.mrf.mxu0
      %1621 = vmatprep.mubr.bf16.mxu0 0
      %1622 = vmatmul.mubr.bf16.gmra.mxu0 %v1338
      %v1623 = vpop.f32.mrf.mxu0
      %v1624 = vadd.f32 0.0, %v1623
      %v1625 = vpop.f32.mrf.mxu0
      %v1626 = vpop.f32.mrf.mxu0
      %v1627 = vadd.f32 0.0, %v1626
      %v1628 = vpop.f32.mrf.mxu0
      %1629 = vmatprep.mubr.bf16.mxu0 0
      %1630 = vmatmul.mubr.bf16.gmra.mxu0 %v1340
      %v1631 = vpop.f32.mrf.mxu0
      %v1632 = vadd.f32 0.0, %v1631
      %v1633 = vpop.f32.mrf.mxu0
      %v1634 = vpop.f32.mrf.mxu0
      %v1635 = vadd.f32 0.0, %v1634
      %v1636 = vpop.f32.mrf.mxu0
      %1637 = vdwg.mxu0
      %v1638 = vadd.f32 %v1080, %v1448
      %v1639 = vadd.f32 %v1083, %v1451
      %v1640 = vadd.f32 %v1088, %v1456
      %v1641 = vadd.f32 %v1091, %v1459
      %v1642 = vadd.f32 %v1096, %v1464
      %v1643 = vadd.f32 %v1099, %v1467
      %v1644 = vadd.f32 %v1104, %v1472
      %v1645 = vadd.f32 %v1107, %v1475
      %v1646 = vadd.f32 %v1112, %v1480
      %v1647 = vadd.f32 %v1115, %v1483
      %v1648 = vadd.f32 %v1120, %v1488
      %v1649 = vadd.f32 %v1123, %v1491
      %v1650 = vadd.f32 %v1128, %v1496
      %v1651 = vadd.f32 %v1131, %v1499
      %v1652 = vadd.f32 %v1136, %v1504
      %v1653 = vadd.f32 %v1139, %v1507
      %v1654 = vadd.f32 %v1144, %v1512
      %v1655 = vadd.f32 %v1147, %v1515
      %v1656 = vadd.f32 %v1152, %v1520
      %v1657 = vadd.f32 %v1155, %v1523
      %v1658 = vadd.f32 %v1160, %v1528
      %v1659 = vadd.f32 %v1163, %v1531
      %v1660 = vadd.f32 %v1168, %v1536
      %v1661 = vadd.f32 %v1171, %v1539
      %v1662 = vadd.f32 %v1176, %v1544
      %v1663 = vadd.f32 %v1179, %v1547
      %v1664 = vadd.f32 %v1184, %v1552
      %v1665 = vadd.f32 %v1187, %v1555
      %v1666 = vadd.f32 %v1192, %v1560
      %v1667 = vadd.f32 %v1195, %v1563
      %v1668 = vadd.f32 %v1200, %v1568
      %v1669 = vadd.f32 %v1203, %v1571
      %v1670 = vadd.f32 %v1208, %v1576
      %v1671 = vadd.f32 %v1211, %v1579
      %v1672 = vadd.f32 %v1216, %v1584
      %v1673 = vadd.f32 %v1219, %v1587
      %v1674 = vadd.f32 %v1224, %v1592
      %v1675 = vadd.f32 %v1227, %v1595
      %v1676 = vadd.f32 %v1232, %v1600
      %v1677 = vadd.f32 %v1235, %v1603
      %v1678 = vadd.f32 %v1240, %v1608
      %v1679 = vadd.f32 %v1243, %v1611
      %v1680 = vadd.f32 %v1248, %v1616
      %v1681 = vadd.f32 %v1251, %v1619
      %v1682 = vadd.f32 %v1256, %v1624
      %v1683 = vadd.f32 %v1259, %v1627
      %v1684 = vadd.f32 %v1264, %v1632
      %v1685 = vadd.f32 %v1267, %v1635
      %v1686 = vld [vmem:[%s251 + $0xc] sm:$0xf]
      %v1687 = vld [vmem:[%s251 + $0x10] sm:$0xf]
      %v1688 = vld [vmem:[%s251 + $0x14] sm:$0xf]
      %v1689 = vld [vmem:[%s251 + $0x18] sm:$0xf]
      %v1690 = vld [vmem:[%s251 + $0x1c] sm:$0xf]
      %v1691 = vld [vmem:[%s251 + $0x20] sm:$0xf]
      %v1692 = vld [vmem:[%s251 + $0x24] sm:$0xf]
      %v1693 = vld [vmem:[%s251 + $0x28] sm:$0xf]
      %v1694 = vld [vmem:[%s251 + $0x2c] sm:$0xf]
      %v1695 = vld [vmem:[%s251 + $0x30] sm:$0xf]
      %v1696 = vld [vmem:[%s251 + $0x34] sm:$0xf]
      %v1697 = vld [vmem:[%s251 + $0x38] sm:$0xf]
      %v1698 = vld [vmem:[%s251 + $0x3c] sm:$0xf]
      %v1699 = vld [vmem:[%s251 + $0x40] sm:$0xf]
      %v1700 = vld [vmem:[%s251 + $0x44] sm:$0xf]
      %v1701 = vld [vmem:[%s251 + $0x48] sm:$0xf]
      %v1702 = vld [vmem:[%s251 + $0x4c] sm:$0xf]
      %v1703 = vld [vmem:[%s251 + $0x50] sm:$0xf]
      %v1704 = vld [vmem:[%s251 + $0x54] sm:$0xf]
      %v1705 = vld [vmem:[%s251 + $0x58] sm:$0xf]
      %v1706 = vld [vmem:[%s251 + $0x5c] sm:$0xf]
      %v1707 = vld [vmem:[%s251 + $0x60] sm:$0xf]
      %v1708 = vld [vmem:[%s251 + $0x64] sm:$0xf]
      %v1709 = vld [vmem:[%s251 + $0x68] sm:$0xf]
      %v1710 = vld [vmem:[%s251 + $0x6c] sm:$0xf]
      %v1711 = vld [vmem:[%s251 + $0x70] sm:$0xf]
      %v1712 = vld [vmem:[%s251 + $0x74] sm:$0xf]
      %v1713 = vld [vmem:[%s251 + $0x78] sm:$0xf]
      %v1714 = vld [vmem:[%s251 + $0x7c] sm:$0xf]
      %v1715 = vld [vmem:[%s251 + $0x80] sm:$0xf]
      %v1716 = vld [vmem:[%s251 + $0x84] sm:$0xf]
      %v1717 = vld [vmem:[%s251 + $0x88] sm:$0xf]
      %v1718 = vld [vmem:[%s251 + $0x8c] sm:$0xf]
      %v1719 = vld [vmem:[%s251 + $0x90] sm:$0xf]
      %v1720 = vld [vmem:[%s251 + $0x94] sm:$0xf]
      %v1721 = vld [vmem:[%s251 + $0x98] sm:$0xf]
      %v1722 = vld [vmem:[%s251 + $0x9c] sm:$0xf]
      %v1723 = vld [vmem:[%s251 + $0xa0] sm:$0xf]
      %v1724 = vld [vmem:[%s251 + $0xa4] sm:$0xf]
      %v1725 = vld [vmem:[%s251 + $0xa8] sm:$0xf]
      %v1726 = vld [vmem:[%s251 + $0xac] sm:$0xf]
      %v1727 = vld [vmem:[%s251 + $0xb0] sm:$0xf]
      %v1728 = vld [vmem:[%s251 + $0xb4] sm:$0xf]
      %v1729 = vld [vmem:[%s251 + $0xb8] sm:$0xf]
      %v1730 = vld [vmem:[%s251 + $0xbc] sm:$0xf]
      %v1731 = vld [vmem:[%s251 + $0xc0] sm:$0xf]
      %v1732 = vld [vmem:[%s251 + $0xc4] sm:$0xf]
      %v1733 = vld [vmem:[%s251 + $0xc8] sm:$0xf]
      %s1734 = scalar_lea.vmem %s1, 192
      %v1735 = vld [vmem:[%s1734] sm:$0xf]
      %v1736 = vld [vmem:[%s1734 + $0x4] sm:$0xf]
      %v1737 = vld [vmem:[%s1734 + $0x8] sm:$0xf]
      %v1738 = vld [vmem:[%s1734 + $0xc] sm:$0xf]
      %v1739 = vld [vmem:[%s1734 + $0x10] sm:$0xf]
      %v1740 = vld [vmem:[%s1734 + $0x14] sm:$0xf]
      %v1741 = vld [vmem:[%s1734 + $0x18] sm:$0xf]
      %v1742 = vld [vmem:[%s1734 + $0x1c] sm:$0xf]
      %v1743 = vld [vmem:[%s1734 + $0x20] sm:$0xf]
      %v1744 = vld [vmem:[%s1734 + $0x24] sm:$0xf]
      %v1745 = vld [vmem:[%s1734 + $0x28] sm:$0xf]
      %v1746 = vld [vmem:[%s1734 + $0x2c] sm:$0xf]
      %v1747 = vld [vmem:[%s1734 + $0x30] sm:$0xf]
      %v1748 = vld [vmem:[%s1734 + $0x34] sm:$0xf]
      %v1749 = vld [vmem:[%s1734 + $0x38] sm:$0xf]
      %v1750 = vld [vmem:[%s1734 + $0x3c] sm:$0xf]
      %v1799 = vunpack.c.l.b16 %v1686
      %v1800 = vunpack.c.l.b16 %v1687
      %v1801 = vunpack.c.l.b16 %v1688
      %v1802 = vunpack.c.l.b16 %v1689
      %v1803 = vunpack.c.l.b16 %v1690
      %v1804 = vunpack.c.l.b16 %v1691
      %v1805 = vunpack.c.l.b16 %v1692
      %v1806 = vunpack.c.l.b16 %v1693
      %v1807 = vunpack.c.l.b16 %v1694
      %v1808 = vunpack.c.l.b16 %v1695
      %v1809 = vunpack.c.l.b16 %v1696
      %v1810 = vunpack.c.l.b16 %v1697
      %v1811 = vunpack.c.l.b16 %v1698
      %v1812 = vunpack.c.l.b16 %v1699
      %v1813 = vunpack.c.l.b16 %v1700
      %v1814 = vunpack.c.l.b16 %v1701
      %v1815 = vunpack.c.l.b16 %v1702
      %v1816 = vunpack.c.l.b16 %v1703
      %v1817 = vunpack.c.l.b16 %v1704
      %v1818 = vunpack.c.l.b16 %v1705
      %v1819 = vunpack.c.l.b16 %v1706
      %v1820 = vunpack.c.l.b16 %v1707
      %v1821 = vunpack.c.l.b16 %v1708
      %v1822 = vunpack.c.l.b16 %v1709
      %v1823 = vunpack.c.l.b16 %v1710
      %v1824 = vunpack.c.l.b16 %v1711
      %v1825 = vunpack.c.l.b16 %v1712
      %v1826 = vunpack.c.l.b16 %v1713
      %v1827 = vunpack.c.l.b16 %v1714
      %v1828 = vunpack.c.l.b16 %v1715
      %v1829 = vunpack.c.l.b16 %v1716
      %v1830 = vunpack.c.l.b16 %v1717
      %v1831 = vunpack.c.l.b16 %v1718
      %v1832 = vunpack.c.l.b16 %v1719
      %v1833 = vunpack.c.l.b16 %v1720
      %v1834 = vunpack.c.l.b16 %v1721
      %v1835 = vunpack.c.l.b16 %v1722
      %v1836 = vunpack.c.l.b16 %v1723
      %v1837 = vunpack.c.l.b16 %v1724
      %v1838 = vunpack.c.l.b16 %v1725
      %v1839 = vunpack.c.l.b16 %v1726
      %v1840 = vunpack.c.l.b16 %v1727
      %v1841 = vunpack.c.l.b16 %v1728
      %v1842 = vunpack.c.l.b16 %v1729
      %v1843 = vunpack.c.l.b16 %v1730
      %v1844 = vunpack.c.l.b16 %v1731
      %v1845 = vunpack.c.l.b16 %v1732
      %v1846 = vunpack.c.l.b16 %v1733
      %v1847 = vpack.c.b16 %v1800, %v1799
      %v1848 = vpack.c.b16 %v1802, %v1801
      %v1849 = vpack.c.b16 %v1804, %v1803
      %v1850 = vpack.c.b16 %v1806, %v1805
      %v1851 = vpack.c.b16 %v1808, %v1807
      %v1852 = vpack.c.b16 %v1810, %v1809
      %v1853 = vpack.c.b16 %v1812, %v1811
      %v1854 = vpack.c.b16 %v1814, %v1813
      %v1855 = vpack.c.b16 %v1816, %v1815
      %v1856 = vpack.c.b16 %v1818, %v1817
      %v1857 = vpack.c.b16 %v1820, %v1819
      %v1858 = vpack.c.b16 %v1822, %v1821
      %v1859 = vpack.c.b16 %v1824, %v1823
      %v1860 = vpack.c.b16 %v1826, %v1825
      %v1861 = vpack.c.b16 %v1828, %v1827
      %v1862 = vpack.c.b16 %v1830, %v1829
      %v1863 = vpack.c.b16 %v1832, %v1831
      %v1864 = vpack.c.b16 %v1834, %v1833
      %v1865 = vpack.c.b16 %v1836, %v1835
      %v1866 = vpack.c.b16 %v1838, %v1837
      %v1867 = vpack.c.b16 %v1840, %v1839
      %v1868 = vpack.c.b16 %v1842, %v1841
      %v1869 = vpack.c.b16 %v1844, %v1843
      %v1870 = vpack.c.b16 %v1846, %v1845
      %v1911 = vunpack.c.l.b16 %v1735
      %v1912 = vunpack.c.l.b16 %v1736
      %v1913 = vunpack.c.l.b16 %v1737
      %v1914 = vunpack.c.l.b16 %v1738
      %v1915 = vunpack.c.l.b16 %v1739
      %v1916 = vunpack.c.l.b16 %v1740
      %v1917 = vunpack.c.l.b16 %v1741
      %v1918 = vunpack.c.l.b16 %v1742
      %v1919 = vunpack.c.l.b16 %v1743
      %v1920 = vunpack.c.l.b16 %v1744
      %v1921 = vunpack.c.l.b16 %v1745
      %v1922 = vunpack.c.l.b16 %v1746
      %v1923 = vunpack.c.l.b16 %v1747
      %v1924 = vunpack.c.l.b16 %v1748
      %v1925 = vunpack.c.l.b16 %v1749
      %v1926 = vunpack.c.l.b16 %v1750
      %v1927 = vpack.c.b16 %v1912, %v1911
      %v1928 = vpack.c.b16 %v1914, %v1913
      %v1929 = vpack.c.b16 %v1916, %v1915
      %v1930 = vpack.c.b16 %v1918, %v1917
      %v1931 = vpack.c.b16 %v1920, %v1919
      %v1932 = vpack.c.b16 %v1922, %v1921
      %v1933 = vpack.c.b16 %v1924, %v1923
      %v1934 = vpack.c.b16 %v1926, %v1925
      %1943 = vmatprep.subr.bf16.mxu0 0
      %1944 = vmatpush1.bf16.msra.mxu0 %v1934
      %1945 = vmatprep.subr.bf16.mxu0 0
      %1946 = vmatpush1.bf16.msra.mxu0 %v1933
      %1947 = vmatprep.subr.bf16.mxu0 0
      %1948 = vmatpush1.bf16.msra.mxu0 %v1932
      %1949 = vmatprep.subr.bf16.mxu0 0
      %1950 = vmatpush1.bf16.msra.mxu0 %v1931
      %1951 = vmatprep.subr.bf16.mxu0 0
      %1952 = vmatpush1.bf16.msra.mxu0 %v1930
      %1953 = vmatprep.subr.bf16.mxu0 0
      %1954 = vmatpush1.bf16.msra.mxu0 %v1929
      %1955 = vmatprep.subr.bf16.mxu0 0
      %1956 = vmatpush1.bf16.msra.mxu0 %v1928
      %1957 = vmatprep.subr.bf16.mxu0 0
      %1958 = vmatpush1.bf16.msra.mxu0 %v1927
      %1959 = vmatprep.subr.bf16.mxu0 0
      %1960 = vmatpush2.bf16.msra.mxu0 0
      %1961 = vmatprep.subr.bf16.mxu0 0
      %1962 = vmatpush2.bf16.msra.mxu0 0
      %1963 = vmatprep.subr.bf16.mxu0 0
      %1964 = vmatpush2.bf16.msra.mxu0 0
      %1965 = vmatprep.subr.bf16.mxu0 0
      %1966 = vmatpush2.bf16.msra.mxu0 0
      %1967 = vmatprep.subr.bf16.mxu0 0
      %1968 = vmatpush2.bf16.msra.mxu0 0
      %1969 = vmatprep.subr.bf16.mxu0 0
      %1970 = vmatpush2.bf16.msra.mxu0 0
      %1971 = vmatprep.subr.bf16.mxu0 0
      %1972 = vmatpush2.bf16.msra.mxu0 0
      %1973 = vmatprep.subr.bf16.mxu0 0
      %1974 = vmatpush2.bf16.msra.mxu0 0
      %1975 = vmatprep.mubr.bf16.mxu0 0
      %1976 = vmatmul.mubr.bf16.gmra.mxu0 %v1847
      %v1977 = vpop.f32.mrf.mxu0
      %v1978 = vadd.f32 0.0, %v1977
      %v1979 = vpop.f32.mrf.mxu0
      %v1980 = vpop.f32.mrf.mxu0
      %v1981 = vadd.f32 0.0, %v1980
      %v1982 = vpop.f32.mrf.mxu0
      %1983 = vmatprep.mubr.bf16.mxu0 0
      %1984 = vmatmul.mubr.bf16.gmra.mxu0 %v1848
      %v1985 = vpop.f32.mrf.mxu0
      %v1986 = vadd.f32 0.0, %v1985
      %v1987 = vpop.f32.mrf.mxu0
      %v1988 = vpop.f32.mrf.mxu0
      %v1989 = vadd.f32 0.0, %v1988
      %v1990 = vpop.f32.mrf.mxu0
      %1991 = vmatprep.mubr.bf16.mxu0 0
      %1992 = vmatmul.mubr.bf16.gmra.mxu0 %v1849
      %v1993 = vpop.f32.mrf.mxu0
      %v1994 = vadd.f32 0.0, %v1993
      %v1995 = vpop.f32.mrf.mxu0
      %v1996 = vpop.f32.mrf.mxu0
      %v1997 = vadd.f32 0.0, %v1996
      %v1998 = vpop.f32.mrf.mxu0
      %1999 = vmatprep.mubr.bf16.mxu0 0
      %2000 = vmatmul.mubr.bf16.gmra.mxu0 %v1850
      %v2001 = vpop.f32.mrf.mxu0
      %v2002 = vadd.f32 0.0, %v2001
      %v2003 = vpop.f32.mrf.mxu0
      %v2004 = vpop.f32.mrf.mxu0
      %v2005 = vadd.f32 0.0, %v2004
      %v2006 = vpop.f32.mrf.mxu0
      %2007 = vmatprep.mubr.bf16.mxu0 0
      %2008 = vmatmul.mubr.bf16.gmra.mxu0 %v1851
      %v2009 = vpop.f32.mrf.mxu0
      %v2010 = vadd.f32 0.0, %v2009
      %v2011 = vpop.f32.mrf.mxu0
      %v2012 = vpop.f32.mrf.mxu0
      %v2013 = vadd.f32 0.0, %v2012
      %v2014 = vpop.f32.mrf.mxu0
      %2015 = vmatprep.mubr.bf16.mxu0 0
      %2016 = vmatmul.mubr.bf16.gmra.mxu0 %v1852
      %v2017 = vpop.f32.mrf.mxu0
      %v2018 = vadd.f32 0.0, %v2017
      %v2019 = vpop.f32.mrf.mxu0
      %v2020 = vpop.f32.mrf.mxu0
      %v2021 = vadd.f32 0.0, %v2020
      %v2022 = vpop.f32.mrf.mxu0
      %2023 = vmatprep.mubr.bf16.mxu0 0
      %2024 = vmatmul.mubr.bf16.gmra.mxu0 %v1853
      %v2025 = vpop.f32.mrf.mxu0
      %v2026 = vadd.f32 0.0, %v2025
      %v2027 = vpop.f32.mrf.mxu0
      %v2028 = vpop.f32.mrf.mxu0
      %v2029 = vadd.f32 0.0, %v2028
      %v2030 = vpop.f32.mrf.mxu0
      %2031 = vmatprep.mubr.bf16.mxu0 0
      %2032 = vmatmul.mubr.bf16.gmra.mxu0 %v1854
      %v2033 = vpop.f32.mrf.mxu0
      %v2034 = vadd.f32 0.0, %v2033
      %v2035 = vpop.f32.mrf.mxu0
      %v2036 = vpop.f32.mrf.mxu0
      %v2037 = vadd.f32 0.0, %v2036
      %v2038 = vpop.f32.mrf.mxu0
      %2039 = vmatprep.mubr.bf16.mxu0 0
      %2040 = vmatmul.mubr.bf16.gmra.mxu0 %v1855
      %v2041 = vpop.f32.mrf.mxu0
      %v2042 = vadd.f32 0.0, %v2041
      %v2043 = vpop.f32.mrf.mxu0
      %v2044 = vpop.f32.mrf.mxu0
      %v2045 = vadd.f32 0.0, %v2044
      %v2046 = vpop.f32.mrf.mxu0
      %2047 = vmatprep.mubr.bf16.mxu0 0
      %2048 = vmatmul.mubr.bf16.gmra.mxu0 %v1856
      %v2049 = vpop.f32.mrf.mxu0
      %v2050 = vadd.f32 0.0, %v2049
      %v2051 = vpop.f32.mrf.mxu0
      %v2052 = vpop.f32.mrf.mxu0
      %v2053 = vadd.f32 0.0, %v2052
      %v2054 = vpop.f32.mrf.mxu0
      %2055 = vmatprep.mubr.bf16.mxu0 0
      %2056 = vmatmul.mubr.bf16.gmra.mxu0 %v1857
      %v2057 = vpop.f32.mrf.mxu0
      %v2058 = vadd.f32 0.0, %v2057
      %v2059 = vpop.f32.mrf.mxu0
      %v2060 = vpop.f32.mrf.mxu0
      %v2061 = vadd.f32 0.0, %v2060
      %v2062 = vpop.f32.mrf.mxu0
      %2063 = vmatprep.mubr.bf16.mxu0 0
      %2064 = vmatmul.mubr.bf16.gmra.mxu0 %v1858
      %v2065 = vpop.f32.mrf.mxu0
      %v2066 = vadd.f32 0.0, %v2065
      %v2067 = vpop.f32.mrf.mxu0
      %v2068 = vpop.f32.mrf.mxu0
      %v2069 = vadd.f32 0.0, %v2068
      %v2070 = vpop.f32.mrf.mxu0
      %2071 = vmatprep.mubr.bf16.mxu0 0
      %2072 = vmatmul.mubr.bf16.gmra.mxu0 %v1859
      %v2073 = vpop.f32.mrf.mxu0
      %v2074 = vadd.f32 0.0, %v2073
      %v2075 = vpop.f32.mrf.mxu0
      %v2076 = vpop.f32.mrf.mxu0
      %v2077 = vadd.f32 0.0, %v2076
      %v2078 = vpop.f32.mrf.mxu0
      %2079 = vmatprep.mubr.bf16.mxu0 0
      %2080 = vmatmul.mubr.bf16.gmra.mxu0 %v1860
      %v2081 = vpop.f32.mrf.mxu0
      %v2082 = vadd.f32 0.0, %v2081
      %v2083 = vpop.f32.mrf.mxu0
      %v2084 = vpop.f32.mrf.mxu0
      %v2085 = vadd.f32 0.0, %v2084
      %v2086 = vpop.f32.mrf.mxu0
      %2087 = vmatprep.mubr.bf16.mxu0 0
      %2088 = vmatmul.mubr.bf16.gmra.mxu0 %v1861
      %v2089 = vpop.f32.mrf.mxu0
      %v2090 = vadd.f32 0.0, %v2089
      %v2091 = vpop.f32.mrf.mxu0
      %v2092 = vpop.f32.mrf.mxu0
      %v2093 = vadd.f32 0.0, %v2092
      %v2094 = vpop.f32.mrf.mxu0
      %2095 = vmatprep.mubr.bf16.mxu0 0
      %2096 = vmatmul.mubr.bf16.gmra.mxu0 %v1862
      %v2097 = vpop.f32.mrf.mxu0
      %v2098 = vadd.f32 0.0, %v2097
      %v2099 = vpop.f32.mrf.mxu0
      %v2100 = vpop.f32.mrf.mxu0
      %v2101 = vadd.f32 0.0, %v2100
      %v2102 = vpop.f32.mrf.mxu0
      %2103 = vmatprep.mubr.bf16.mxu0 0
      %2104 = vmatmul.mubr.bf16.gmra.mxu0 %v1863
      %v2105 = vpop.f32.mrf.mxu0
      %v2106 = vadd.f32 0.0, %v2105
      %v2107 = vpop.f32.mrf.mxu0
      %v2108 = vpop.f32.mrf.mxu0
      %v2109 = vadd.f32 0.0, %v2108
      %v2110 = vpop.f32.mrf.mxu0
      %2111 = vmatprep.mubr.bf16.mxu0 0
      %2112 = vmatmul.mubr.bf16.gmra.mxu0 %v1864
      %v2113 = vpop.f32.mrf.mxu0
      %v2114 = vadd.f32 0.0, %v2113
      %v2115 = vpop.f32.mrf.mxu0
      %v2116 = vpop.f32.mrf.mxu0
      %v2117 = vadd.f32 0.0, %v2116
      %v2118 = vpop.f32.mrf.mxu0
      %2119 = vmatprep.mubr.bf16.mxu0 0
      %2120 = vmatmul.mubr.bf16.gmra.mxu0 %v1865
      %v2121 = vpop.f32.mrf.mxu0
      %v2122 = vadd.f32 0.0, %v2121
      %v2123 = vpop.f32.mrf.mxu0
      %v2124 = vpop.f32.mrf.mxu0
      %v2125 = vadd.f32 0.0, %v2124
      %v2126 = vpop.f32.mrf.mxu0
      %2127 = vmatprep.mubr.bf16.mxu0 0
      %2128 = vmatmul.mubr.bf16.gmra.mxu0 %v1866
      %v2129 = vpop.f32.mrf.mxu0
      %v2130 = vadd.f32 0.0, %v2129
      %v2131 = vpop.f32.mrf.mxu0
      %v2132 = vpop.f32.mrf.mxu0
      %v2133 = vadd.f32 0.0, %v2132
      %v2134 = vpop.f32.mrf.mxu0
      %2135 = vmatprep.mubr.bf16.mxu0 0
      %2136 = vmatmul.mubr.bf16.gmra.mxu0 %v1867
      %v2137 = vpop.f32.mrf.mxu0
      %v2138 = vadd.f32 0.0, %v2137
      %v2139 = vpop.f32.mrf.mxu0
      %v2140 = vpop.f32.mrf.mxu0
      %v2141 = vadd.f32 0.0, %v2140
      %v2142 = vpop.f32.mrf.mxu0
      %2143 = vmatprep.mubr.bf16.mxu0 0
      %2144 = vmatmul.mubr.bf16.gmra.mxu0 %v1868
      %v2145 = vpop.f32.mrf.mxu0
      %v2146 = vadd.f32 0.0, %v2145
      %v2147 = vpop.f32.mrf.mxu0
      %v2148 = vpop.f32.mrf.mxu0
      %v2149 = vadd.f32 0.0, %v2148
      %v2150 = vpop.f32.mrf.mxu0
      %2151 = vmatprep.mubr.bf16.mxu0 0
      %2152 = vmatmul.mubr.bf16.gmra.mxu0 %v1869
      %v2153 = vpop.f32.mrf.mxu0
      %v2154 = vadd.f32 0.0, %v2153
      %v2155 = vpop.f32.mrf.mxu0
      %v2156 = vpop.f32.mrf.mxu0
      %v2157 = vadd.f32 0.0, %v2156
      %v2158 = vpop.f32.mrf.mxu0
      %2159 = vmatprep.mubr.bf16.mxu0 0
      %2160 = vmatmul.mubr.bf16.gmra.mxu0 %v1870
      %v2161 = vpop.f32.mrf.mxu0
      %v2162 = vadd.f32 0.0, %v2161
      %v2163 = vpop.f32.mrf.mxu0
      %v2164 = vpop.f32.mrf.mxu0
      %v2165 = vadd.f32 0.0, %v2164
      %v2166 = vpop.f32.mrf.mxu0
      %2167 = vdwg.mxu0
      %v2168 = vadd.f32 %v1638, %v1978
      %v2169 = vadd.f32 %v1639, %v1981
      %v2170 = vadd.f32 %v1640, %v1986
      %v2171 = vadd.f32 %v1641, %v1989
      %v2172 = vadd.f32 %v1642, %v1994
      %v2173 = vadd.f32 %v1643, %v1997
      %v2174 = vadd.f32 %v1644, %v2002
      %v2175 = vadd.f32 %v1645, %v2005
      %v2176 = vadd.f32 %v1646, %v2010
      %v2177 = vadd.f32 %v1647, %v2013
      %v2178 = vadd.f32 %v1648, %v2018
      %v2179 = vadd.f32 %v1649, %v2021
      %v2180 = vadd.f32 %v1650, %v2026
      %v2181 = vadd.f32 %v1651, %v2029
      %v2182 = vadd.f32 %v1652, %v2034
      %v2183 = vadd.f32 %v1653, %v2037
      %v2184 = vadd.f32 %v1654, %v2042
      %v2185 = vadd.f32 %v1655, %v2045
      %v2186 = vadd.f32 %v1656, %v2050
      %v2187 = vadd.f32 %v1657, %v2053
      %v2188 = vadd.f32 %v1658, %v2058
      %v2189 = vadd.f32 %v1659, %v2061
      %v2190 = vadd.f32 %v1660, %v2066
      %v2191 = vadd.f32 %v1661, %v2069
      %v2192 = vadd.f32 %v1662, %v2074
      %v2193 = vadd.f32 %v1663, %v2077
      %v2194 = vadd.f32 %v1664, %v2082
      %v2195 = vadd.f32 %v1665, %v2085
      %v2196 = vadd.f32 %v1666, %v2090
      %v2197 = vadd.f32 %v1667, %v2093
      %v2198 = vadd.f32 %v1668, %v2098
      %v2199 = vadd.f32 %v1669, %v2101
      %v2200 = vadd.f32 %v1670, %v2106
      %v2201 = vadd.f32 %v1671, %v2109
      %v2202 = vadd.f32 %v1672, %v2114
      %v2203 = vadd.f32 %v1673, %v2117
      %v2204 = vadd.f32 %v1674, %v2122
      %v2205 = vadd.f32 %v1675, %v2125
      %v2206 = vadd.f32 %v1676, %v2130
      %v2207 = vadd.f32 %v1677, %v2133
      %v2208 = vadd.f32 %v1678, %v2138
      %v2209 = vadd.f32 %v1679, %v2141
      %v2210 = vadd.f32 %v1680, %v2146
      %v2211 = vadd.f32 %v1681, %v2149
      %v2212 = vadd.f32 %v1682, %v2154
      %v2213 = vadd.f32 %v1683, %v2157
      %v2214 = vadd.f32 %v1684, %v2162
      %v2215 = vadd.f32 %v1685, %v2165
      %v2216 = vld [vmem:[%s251 + $0xc] sm:$0xf]
      %v2217 = vld [vmem:[%s251 + $0x10] sm:$0xf]
      %v2218 = vld [vmem:[%s251 + $0x14] sm:$0xf]
      %v2219 = vld [vmem:[%s251 + $0x18] sm:$0xf]
      %v2220 = vld [vmem:[%s251 + $0x1c] sm:$0xf]
      %v2221 = vld [vmem:[%s251 + $0x20] sm:$0xf]
      %v2222 = vld [vmem:[%s251 + $0x24] sm:$0xf]
      %v2223 = vld [vmem:[%s251 + $0x28] sm:$0xf]
      %v2224 = vld [vmem:[%s251 + $0x2c] sm:$0xf]
      %v2225 = vld [vmem:[%s251 + $0x30] sm:$0xf]
      %v2226 = vld [vmem:[%s251 + $0x34] sm:$0xf]
      %v2227 = vld [vmem:[%s251 + $0x38] sm:$0xf]
      %v2228 = vld [vmem:[%s251 + $0x3c] sm:$0xf]
      %v2229 = vld [vmem:[%s251 + $0x40] sm:$0xf]
      %v2230 = vld [vmem:[%s251 + $0x44] sm:$0xf]
      %v2231 = vld [vmem:[%s251 + $0x48] sm:$0xf]
      %v2232 = vld [vmem:[%s251 + $0x4c] sm:$0xf]
      %v2233 = vld [vmem:[%s251 + $0x50] sm:$0xf]
      %v2234 = vld [vmem:[%s251 + $0x54] sm:$0xf]
      %v2235 = vld [vmem:[%s251 + $0x58] sm:$0xf]
      %v2236 = vld [vmem:[%s251 + $0x5c] sm:$0xf]
      %v2237 = vld [vmem:[%s251 + $0x60] sm:$0xf]
      %v2238 = vld [vmem:[%s251 + $0x64] sm:$0xf]
      %v2239 = vld [vmem:[%s251 + $0x68] sm:$0xf]
      %v2240 = vld [vmem:[%s251 + $0x6c] sm:$0xf]
      %v2241 = vld [vmem:[%s251 + $0x70] sm:$0xf]
      %v2242 = vld [vmem:[%s251 + $0x74] sm:$0xf]
      %v2243 = vld [vmem:[%s251 + $0x78] sm:$0xf]
      %v2244 = vld [vmem:[%s251 + $0x7c] sm:$0xf]
      %v2245 = vld [vmem:[%s251 + $0x80] sm:$0xf]
      %v2246 = vld [vmem:[%s251 + $0x84] sm:$0xf]
      %v2247 = vld [vmem:[%s251 + $0x88] sm:$0xf]
      %v2248 = vld [vmem:[%s251 + $0x8c] sm:$0xf]
      %v2249 = vld [vmem:[%s251 + $0x90] sm:$0xf]
      %v2250 = vld [vmem:[%s251 + $0x94] sm:$0xf]
      %v2251 = vld [vmem:[%s251 + $0x98] sm:$0xf]
      %v2252 = vld [vmem:[%s251 + $0x9c] sm:$0xf]
      %v2253 = vld [vmem:[%s251 + $0xa0] sm:$0xf]
      %v2254 = vld [vmem:[%s251 + $0xa4] sm:$0xf]
      %v2255 = vld [vmem:[%s251 + $0xa8] sm:$0xf]
      %v2256 = vld [vmem:[%s251 + $0xac] sm:$0xf]
      %v2257 = vld [vmem:[%s251 + $0xb0] sm:$0xf]
      %v2258 = vld [vmem:[%s251 + $0xb4] sm:$0xf]
      %v2259 = vld [vmem:[%s251 + $0xb8] sm:$0xf]
      %v2260 = vld [vmem:[%s251 + $0xbc] sm:$0xf]
      %v2261 = vld [vmem:[%s251 + $0xc0] sm:$0xf]
      %v2262 = vld [vmem:[%s251 + $0xc4] sm:$0xf]
      %v2263 = vld [vmem:[%s251 + $0xc8] sm:$0xf]
      %v2264 = vld [vmem:[%s251 + $0xcc] sm:$0x1]
      %s2265 = scalar_lea.vmem %s1, 256
      %v2266 = vld [vmem:[%s2265] sm:$0xf]
      %v2267 = vld [vmem:[%s2265 + $0x4] sm:$0xf]
      %v2268 = vld [vmem:[%s2265 + $0x8] sm:$0xf]
      %v2269 = vld [vmem:[%s2265 + $0xc] sm:$0xf]
      %v2270 = vld [vmem:[%s2265 + $0x10] sm:$0xf]
      %v2271 = vld [vmem:[%s2265 + $0x14] sm:$0xf]
      %v2272 = vld [vmem:[%s2265 + $0x18] sm:$0xf]
      %v2273 = vld [vmem:[%s2265 + $0x1c] sm:$0xf]
      %v2274 = vld [vmem:[%s2265 + $0x20] sm:$0xf]
      %v2275 = vld [vmem:[%s2265 + $0x24] sm:$0xf]
      %v2276 = vld [vmem:[%s2265 + $0x28] sm:$0xf]
      %v2277 = vld [vmem:[%s2265 + $0x2c] sm:$0xf]
      %v2278 = vld [vmem:[%s2265 + $0x30] sm:$0xf]
      %v2279 = vld [vmem:[%s2265 + $0x34] sm:$0xf]
      %v2280 = vld [vmem:[%s2265 + $0x38] sm:$0xf]
      %v2281 = vld [vmem:[%s2265 + $0x3c] sm:$0xf]
      %v2331 = vunpack.c.l.b16 %v2216
      %v2332 = vunpack.c.l.b16 %v2217
      %v2333 = vunpack.c.l.b16 %v2218
      %v2334 = vunpack.c.l.b16 %v2219
      %v2335 = vunpack.c.l.b16 %v2220
      %v2336 = vunpack.c.l.b16 %v2221
      %v2337 = vunpack.c.l.b16 %v2222
      %v2338 = vunpack.c.l.b16 %v2223
      %v2339 = vunpack.c.l.b16 %v2224
      %v2340 = vunpack.c.l.b16 %v2225
      %v2341 = vunpack.c.l.b16 %v2226
      %v2342 = vunpack.c.l.b16 %v2227
      %v2343 = vunpack.c.l.b16 %v2228
      %v2344 = vunpack.c.l.b16 %v2229
      %v2345 = vunpack.c.l.b16 %v2230
      %v2346 = vunpack.c.l.b16 %v2231
      %v2347 = vunpack.c.l.b16 %v2232
      %v2348 = vunpack.c.l.b16 %v2233
      %v2349 = vunpack.c.l.b16 %v2234
      %v2350 = vunpack.c.l.b16 %v2235
      %v2351 = vunpack.c.l.b16 %v2236
      %v2352 = vunpack.c.l.b16 %v2237
      %v2353 = vunpack.c.l.b16 %v2238
      %v2354 = vunpack.c.l.b16 %v2239
      %v2355 = vunpack.c.l.b16 %v2240
      %v2356 = vunpack.c.l.b16 %v2241
      %v2357 = vunpack.c.l.b16 %v2242
      %v2358 = vunpack.c.l.b16 %v2243
      %v2359 = vunpack.c.l.b16 %v2244
      %v2360 = vunpack.c.l.b16 %v2245
      %v2361 = vunpack.c.l.b16 %v2246
      %v2362 = vunpack.c.l.b16 %v2247
      %v2363 = vunpack.c.l.b16 %v2248
      %v2364 = vunpack.c.l.b16 %v2249
      %v2365 = vunpack.c.l.b16 %v2250
      %v2366 = vunpack.c.l.b16 %v2251
      %v2367 = vunpack.c.l.b16 %v2252
      %v2368 = vunpack.c.l.b16 %v2253
      %v2369 = vunpack.c.l.b16 %v2254
      %v2370 = vunpack.c.l.b16 %v2255
      %v2371 = vunpack.c.l.b16 %v2256
      %v2372 = vunpack.c.l.b16 %v2257
      %v2373 = vunpack.c.l.b16 %v2258
      %v2374 = vunpack.c.l.b16 %v2259
      %v2375 = vunpack.c.l.b16 %v2260
      %v2376 = vunpack.c.l.b16 %v2261
      %v2377 = vunpack.c.l.b16 %v2262
      %v2378 = vunpack.c.l.b16 %v2263
      %v2379 = vunpack.c.l.b16 %v2264
      %v2380 = vpack.c.b16 %v2332, %v2331
      %v2381 = vpack.c.b16 %v2334, %v2333
      %v2382 = vpack.c.b16 %v2336, %v2335
      %v2383 = vpack.c.b16 %v2338, %v2337
      %v2384 = vpack.c.b16 %v2340, %v2339
      %v2385 = vpack.c.b16 %v2342, %v2341
      %v2386 = vpack.c.b16 %v2344, %v2343
      %v2387 = vpack.c.b16 %v2346, %v2345
      %v2388 = vpack.c.b16 %v2348, %v2347
      %v2389 = vpack.c.b16 %v2350, %v2349
      %v2390 = vpack.c.b16 %v2352, %v2351
      %v2391 = vpack.c.b16 %v2354, %v2353
      %v2392 = vpack.c.b16 %v2356, %v2355
      %v2393 = vpack.c.b16 %v2358, %v2357
      %v2394 = vpack.c.b16 %v2360, %v2359
      %v2395 = vpack.c.b16 %v2362, %v2361
      %v2396 = vpack.c.b16 %v2364, %v2363
      %v2397 = vpack.c.b16 %v2366, %v2365
      %v2398 = vpack.c.b16 %v2368, %v2367
      %v2399 = vpack.c.b16 %v2370, %v2369
      %v2400 = vpack.c.b16 %v2372, %v2371
      %v2401 = vpack.c.b16 %v2374, %v2373
      %v2402 = vpack.c.b16 %v2376, %v2375
      %v2403 = vpack.c.b16 %v2378, %v2377
      %v2404 = vpack.c.b16 %v2379, %v2379
      %v2406 = vshrl.u32 %v2380, 16
      %v2408 = vshll.u32 %v2380, 16
      %v2410 = vrot.slane %v2408, 1
      %v2411 = vor.u32 %v2406, %v2410
      %v2413 = vshll.u32 %v2381, 16
      %v2415 = vrot.slane %v2413, 1
      %v2416 = vsel %vm479, %v2411, %v2415
      %v2417 = vshrl.u32 %v2381, 16
      %v2419 = vor.u32 %v2417, %v2415
      %v2421 = vshll.u32 %v2382, 16
      %v2423 = vrot.slane %v2421, 1
      %v2424 = vsel %vm479, %v2419, %v2423
      %v2425 = vshrl.u32 %v2382, 16
      %v2427 = vor.u32 %v2425, %v2423
      %v2429 = vshll.u32 %v2383, 16
      %v2431 = vrot.slane %v2429, 1
      %v2432 = vsel %vm479, %v2427, %v2431
      %v2433 = vshrl.u32 %v2383, 16
      %v2435 = vor.u32 %v2433, %v2431
      %v2437 = vshll.u32 %v2384, 16
      %v2439 = vrot.slane %v2437, 1
      %v2440 = vsel %vm479, %v2435, %v2439
      %v2441 = vshrl.u32 %v2384, 16
      %v2443 = vor.u32 %v2441, %v2439
      %v2445 = vshll.u32 %v2385, 16
      %v2447 = vrot.slane %v2445, 1
      %v2448 = vsel %vm479, %v2443, %v2447
      %v2449 = vshrl.u32 %v2385, 16
      %v2451 = vor.u32 %v2449, %v2447
      %v2453 = vshll.u32 %v2386, 16
      %v2455 = vrot.slane %v2453, 1
      %v2456 = vsel %vm479, %v2451, %v2455
      %v2457 = vshrl.u32 %v2386, 16
      %v2459 = vor.u32 %v2457, %v2455
      %v2461 = vshll.u32 %v2387, 16
      %v2463 = vrot.slane %v2461, 1
      %v2464 = vsel %vm479, %v2459, %v2463
      %v2465 = vshrl.u32 %v2387, 16
      %v2467 = vor.u32 %v2465, %v2463
      %v2469 = vshll.u32 %v2388, 16
      %v2471 = vrot.slane %v2469, 1
      %v2472 = vsel %vm479, %v2467, %v2471
      %v2473 = vshrl.u32 %v2388, 16
      %v2475 = vor.u32 %v2473, %v2471
      %v2477 = vshll.u32 %v2389, 16
      %v2479 = vrot.slane %v2477, 1
      %v2480 = vsel %vm479, %v2475, %v2479
      %v2481 = vshrl.u32 %v2389, 16
      %v2483 = vor.u32 %v2481, %v2479
      %v2485 = vshll.u32 %v2390, 16
      %v2487 = vrot.slane %v2485, 1
      %v2488 = vsel %vm479, %v2483, %v2487
      %v2489 = vshrl.u32 %v2390, 16
      %v2491 = vor.u32 %v2489, %v2487
      %v2493 = vshll.u32 %v2391, 16
      %v2495 = vrot.slane %v2493, 1
      %v2496 = vsel %vm479, %v2491, %v2495
      %v2497 = vshrl.u32 %v2391, 16
      %v2499 = vor.u32 %v2497, %v2495
      %v2501 = vshll.u32 %v2392, 16
      %v2503 = vrot.slane %v2501, 1
      %v2504 = vsel %vm479, %v2499, %v2503
      %v2505 = vshrl.u32 %v2392, 16
      %v2507 = vor.u32 %v2505, %v2503
      %v2509 = vshll.u32 %v2393, 16
      %v2511 = vrot.slane %v2509, 1
      %v2512 = vsel %vm479, %v2507, %v2511
      %v2513 = vshrl.u32 %v2393, 16
      %v2515 = vor.u32 %v2513, %v2511
      %v2517 = vshll.u32 %v2394, 16
      %v2519 = vrot.slane %v2517, 1
      %v2520 = vsel %vm479, %v2515, %v2519
      %v2521 = vshrl.u32 %v2394, 16
      %v2523 = vor.u32 %v2521, %v2519
      %v2525 = vshll.u32 %v2395, 16
      %v2527 = vrot.slane %v2525, 1
      %v2528 = vsel %vm479, %v2523, %v2527
      %v2529 = vshrl.u32 %v2395, 16
      %v2531 = vor.u32 %v2529, %v2527
      %v2533 = vshll.u32 %v2396, 16
      %v2535 = vrot.slane %v2533, 1
      %v2536 = vsel %vm479, %v2531, %v2535
      %v2537 = vshrl.u32 %v2396, 16
      %v2539 = vor.u32 %v2537, %v2535
      %v2541 = vshll.u32 %v2397, 16
      %v2543 = vrot.slane %v2541, 1
      %v2544 = vsel %vm479, %v2539, %v2543
      %v2545 = vshrl.u32 %v2397, 16
      %v2547 = vor.u32 %v2545, %v2543
      %v2549 = vshll.u32 %v2398, 16
      %v2551 = vrot.slane %v2549, 1
      %v2552 = vsel %vm479, %v2547, %v2551
      %v2553 = vshrl.u32 %v2398, 16
      %v2555 = vor.u32 %v2553, %v2551
      %v2557 = vshll.u32 %v2399, 16
      %v2559 = vrot.slane %v2557, 1
      %v2560 = vsel %vm479, %v2555, %v2559
      %v2561 = vshrl.u32 %v2399, 16
      %v2563 = vor.u32 %v2561, %v2559
      %v2565 = vshll.u32 %v2400, 16
      %v2567 = vrot.slane %v2565, 1
      %v2568 = vsel %vm479, %v2563, %v2567
      %v2569 = vshrl.u32 %v2400, 16
      %v2571 = vor.u32 %v2569, %v2567
      %v2573 = vshll.u32 %v2401, 16
      %v2575 = vrot.slane %v2573, 1
      %v2576 = vsel %vm479, %v2571, %v2575
      %v2577 = vshrl.u32 %v2401, 16
      %v2579 = vor.u32 %v2577, %v2575
      %v2581 = vshll.u32 %v2402, 16
      %v2583 = vrot.slane %v2581, 1
      %v2584 = vsel %vm479, %v2579, %v2583
      %v2585 = vshrl.u32 %v2402, 16
      %v2587 = vor.u32 %v2585, %v2583
      %v2589 = vshll.u32 %v2403, 16
      %v2591 = vrot.slane %v2589, 1
      %v2592 = vsel %vm479, %v2587, %v2591
      %v2593 = vshrl.u32 %v2403, 16
      %v2595 = vor.u32 %v2593, %v2591
      %v2597 = vshll.u32 %v2404, 16
      %v2599 = vrot.slane %v2597, 1
      %v2600 = vsel %vm479, %v2595, %v2599
      %v2641 = vunpack.c.l.b16 %v2266
      %v2642 = vunpack.c.l.b16 %v2267
      %v2643 = vunpack.c.l.b16 %v2268
      %v2644 = vunpack.c.l.b16 %v2269
      %v2645 = vunpack.c.l.b16 %v2270
      %v2646 = vunpack.c.l.b16 %v2271
      %v2647 = vunpack.c.l.b16 %v2272
      %v2648 = vunpack.c.l.b16 %v2273
      %v2649 = vunpack.c.l.b16 %v2274
      %v2650 = vunpack.c.l.b16 %v2275
      %v2651 = vunpack.c.l.b16 %v2276
      %v2652 = vunpack.c.l.b16 %v2277
      %v2653 = vunpack.c.l.b16 %v2278
      %v2654 = vunpack.c.l.b16 %v2279
      %v2655 = vunpack.c.l.b16 %v2280
      %v2656 = vunpack.c.l.b16 %v2281
      %v2657 = vpack.c.b16 %v2642, %v2641
      %v2658 = vpack.c.b16 %v2644, %v2643
      %v2659 = vpack.c.b16 %v2646, %v2645
      %v2660 = vpack.c.b16 %v2648, %v2647
      %v2661 = vpack.c.b16 %v2650, %v2649
      %v2662 = vpack.c.b16 %v2652, %v2651
      %v2663 = vpack.c.b16 %v2654, %v2653
      %v2664 = vpack.c.b16 %v2656, %v2655
      %2673 = vmatprep.subr.bf16.mxu0 0
      %2674 = vmatpush1.bf16.msra.mxu0 %v2664
      %2675 = vmatprep.subr.bf16.mxu0 0
      %2676 = vmatpush1.bf16.msra.mxu0 %v2663
      %2677 = vmatprep.subr.bf16.mxu0 0
      %2678 = vmatpush1.bf16.msra.mxu0 %v2662
      %2679 = vmatprep.subr.bf16.mxu0 0
      %2680 = vmatpush1.bf16.msra.mxu0 %v2661
      %2681 = vmatprep.subr.bf16.mxu0 0
      %2682 = vmatpush1.bf16.msra.mxu0 %v2660
      %2683 = vmatprep.subr.bf16.mxu0 0
      %2684 = vmatpush1.bf16.msra.mxu0 %v2659
      %2685 = vmatprep.subr.bf16.mxu0 0
      %2686 = vmatpush1.bf16.msra.mxu0 %v2658
      %2687 = vmatprep.subr.bf16.mxu0 0
      %2688 = vmatpush1.bf16.msra.mxu0 %v2657
      %2689 = vmatprep.subr.bf16.mxu0 0
      %2690 = vmatpush2.bf16.msra.mxu0 0
      %2691 = vmatprep.subr.bf16.mxu0 0
      %2692 = vmatpush2.bf16.msra.mxu0 0
      %2693 = vmatprep.subr.bf16.mxu0 0
      %2694 = vmatpush2.bf16.msra.mxu0 0
      %2695 = vmatprep.subr.bf16.mxu0 0
      %2696 = vmatpush2.bf16.msra.mxu0 0
      %2697 = vmatprep.subr.bf16.mxu0 0
      %2698 = vmatpush2.bf16.msra.mxu0 0
      %2699 = vmatprep.subr.bf16.mxu0 0
      %2700 = vmatpush2.bf16.msra.mxu0 0
      %2701 = vmatprep.subr.bf16.mxu0 0
      %2702 = vmatpush2.bf16.msra.mxu0 0
      %2703 = vmatprep.subr.bf16.mxu0 0
      %2704 = vmatpush2.bf16.msra.mxu0 0
      %2705 = vmatprep.mubr.bf16.mxu0 0
      %2706 = vmatmul.mubr.bf16.gmra.mxu0 %v2416
      %v2707 = vpop.f32.mrf.mxu0
      %v2708 = vadd.f32 0.0, %v2707
      %v2709 = vpop.f32.mrf.mxu0
      %v2710 = vpop.f32.mrf.mxu0
      %v2711 = vadd.f32 0.0, %v2710
      %v2712 = vpop.f32.mrf.mxu0
      %2713 = vmatprep.mubr.bf16.mxu0 0
      %2714 = vmatmul.mubr.bf16.gmra.mxu0 %v2424
      %v2715 = vpop.f32.mrf.mxu0
      %v2716 = vadd.f32 0.0, %v2715
      %v2717 = vpop.f32.mrf.mxu0
      %v2718 = vpop.f32.mrf.mxu0
      %v2719 = vadd.f32 0.0, %v2718
      %v2720 = vpop.f32.mrf.mxu0
      %2721 = vmatprep.mubr.bf16.mxu0 0
      %2722 = vmatmul.mubr.bf16.gmra.mxu0 %v2432
      %v2723 = vpop.f32.mrf.mxu0
      %v2724 = vadd.f32 0.0, %v2723
      %v2725 = vpop.f32.mrf.mxu0
      %v2726 = vpop.f32.mrf.mxu0
      %v2727 = vadd.f32 0.0, %v2726
      %v2728 = vpop.f32.mrf.mxu0
      %2729 = vmatprep.mubr.bf16.mxu0 0
      %2730 = vmatmul.mubr.bf16.gmra.mxu0 %v2440
      %v2731 = vpop.f32.mrf.mxu0
      %v2732 = vadd.f32 0.0, %v2731
      %v2733 = vpop.f32.mrf.mxu0
      %v2734 = vpop.f32.mrf.mxu0
      %v2735 = vadd.f32 0.0, %v2734
      %v2736 = vpop.f32.mrf.mxu0
      %2737 = vmatprep.mubr.bf16.mxu0 0
      %2738 = vmatmul.mubr.bf16.gmra.mxu0 %v2448
      %v2739 = vpop.f32.mrf.mxu0
      %v2740 = vadd.f32 0.0, %v2739
      %v2741 = vpop.f32.mrf.mxu0
      %v2742 = vpop.f32.mrf.mxu0
      %v2743 = vadd.f32 0.0, %v2742
      %v2744 = vpop.f32.mrf.mxu0
      %2745 = vmatprep.mubr.bf16.mxu0 0
      %2746 = vmatmul.mubr.bf16.gmra.mxu0 %v2456
      %v2747 = vpop.f32.mrf.mxu0
      %v2748 = vadd.f32 0.0, %v2747
      %v2749 = vpop.f32.mrf.mxu0
      %v2750 = vpop.f32.mrf.mxu0
      %v2751 = vadd.f32 0.0, %v2750
      %v2752 = vpop.f32.mrf.mxu0
      %2753 = vmatprep.mubr.bf16.mxu0 0
      %2754 = vmatmul.mubr.bf16.gmra.mxu0 %v2464
      %v2755 = vpop.f32.mrf.mxu0
      %v2756 = vadd.f32 0.0, %v2755
      %v2757 = vpop.f32.mrf.mxu0
      %v2758 = vpop.f32.mrf.mxu0
      %v2759 = vadd.f32 0.0, %v2758
      %v2760 = vpop.f32.mrf.mxu0
      %2761 = vmatprep.mubr.bf16.mxu0 0
      %2762 = vmatmul.mubr.bf16.gmra.mxu0 %v2472
      %v2763 = vpop.f32.mrf.mxu0
      %v2764 = vadd.f32 0.0, %v2763
      %v2765 = vpop.f32.mrf.mxu0
      %v2766 = vpop.f32.mrf.mxu0
      %v2767 = vadd.f32 0.0, %v2766
      %v2768 = vpop.f32.mrf.mxu0
      %2769 = vmatprep.mubr.bf16.mxu0 0
      %2770 = vmatmul.mubr.bf16.gmra.mxu0 %v2480
      %v2771 = vpop.f32.mrf.mxu0
      %v2772 = vadd.f32 0.0, %v2771
      %v2773 = vpop.f32.mrf.mxu0
      %v2774 = vpop.f32.mrf.mxu0
      %v2775 = vadd.f32 0.0, %v2774
      %v2776 = vpop.f32.mrf.mxu0
      %2777 = vmatprep.mubr.bf16.mxu0 0
      %2778 = vmatmul.mubr.bf16.gmra.mxu0 %v2488
      %v2779 = vpop.f32.mrf.mxu0
      %v2780 = vadd.f32 0.0, %v2779
      %v2781 = vpop.f32.mrf.mxu0
      %v2782 = vpop.f32.mrf.mxu0
      %v2783 = vadd.f32 0.0, %v2782
      %v2784 = vpop.f32.mrf.mxu0
      %2785 = vmatprep.mubr.bf16.mxu0 0
      %2786 = vmatmul.mubr.bf16.gmra.mxu0 %v2496
      %v2787 = vpop.f32.mrf.mxu0
      %v2788 = vadd.f32 0.0, %v2787
      %v2789 = vpop.f32.mrf.mxu0
      %v2790 = vpop.f32.mrf.mxu0
      %v2791 = vadd.f32 0.0, %v2790
      %v2792 = vpop.f32.mrf.mxu0
      %2793 = vmatprep.mubr.bf16.mxu0 0
      %2794 = vmatmul.mubr.bf16.gmra.mxu0 %v2504
      %v2795 = vpop.f32.mrf.mxu0
      %v2796 = vadd.f32 0.0, %v2795
      %v2797 = vpop.f32.mrf.mxu0
      %v2798 = vpop.f32.mrf.mxu0
      %v2799 = vadd.f32 0.0, %v2798
      %v2800 = vpop.f32.mrf.mxu0
      %2801 = vmatprep.mubr.bf16.mxu0 0
      %2802 = vmatmul.mubr.bf16.gmra.mxu0 %v2512
      %v2803 = vpop.f32.mrf.mxu0
      %v2804 = vadd.f32 0.0, %v2803
      %v2805 = vpop.f32.mrf.mxu0
      %v2806 = vpop.f32.mrf.mxu0
      %v2807 = vadd.f32 0.0, %v2806
      %v2808 = vpop.f32.mrf.mxu0
      %2809 = vmatprep.mubr.bf16.mxu0 0
      %2810 = vmatmul.mubr.bf16.gmra.mxu0 %v2520
      %v2811 = vpop.f32.mrf.mxu0
      %v2812 = vadd.f32 0.0, %v2811
      %v2813 = vpop.f32.mrf.mxu0
      %v2814 = vpop.f32.mrf.mxu0
      %v2815 = vadd.f32 0.0, %v2814
      %v2816 = vpop.f32.mrf.mxu0
      %2817 = vmatprep.mubr.bf16.mxu0 0
      %2818 = vmatmul.mubr.bf16.gmra.mxu0 %v2528
      %v2819 = vpop.f32.mrf.mxu0
      %v2820 = vadd.f32 0.0, %v2819
      %v2821 = vpop.f32.mrf.mxu0
      %v2822 = vpop.f32.mrf.mxu0
      %v2823 = vadd.f32 0.0, %v2822
      %v2824 = vpop.f32.mrf.mxu0
      %2825 = vmatprep.mubr.bf16.mxu0 0
      %2826 = vmatmul.mubr.bf16.gmra.mxu0 %v2536
      %v2827 = vpop.f32.mrf.mxu0
      %v2828 = vadd.f32 0.0, %v2827
      %v2829 = vpop.f32.mrf.mxu0
      %v2830 = vpop.f32.mrf.mxu0
      %v2831 = vadd.f32 0.0, %v2830
      %v2832 = vpop.f32.mrf.mxu0
      %2833 = vmatprep.mubr.bf16.mxu0 0
      %2834 = vmatmul.mubr.bf16.gmra.mxu0 %v2544
      %v2835 = vpop.f32.mrf.mxu0
      %v2836 = vadd.f32 0.0, %v2835
      %v2837 = vpop.f32.mrf.mxu0
      %v2838 = vpop.f32.mrf.mxu0
      %v2839 = vadd.f32 0.0, %v2838
      %v2840 = vpop.f32.mrf.mxu0
      %2841 = vmatprep.mubr.bf16.mxu0 0
      %2842 = vmatmul.mubr.bf16.gmra.mxu0 %v2552
      %v2843 = vpop.f32.mrf.mxu0
      %v2844 = vadd.f32 0.0, %v2843
      %v2845 = vpop.f32.mrf.mxu0
      %v2846 = vpop.f32.mrf.mxu0
      %v2847 = vadd.f32 0.0, %v2846
      %v2848 = vpop.f32.mrf.mxu0
      %2849 = vmatprep.mubr.bf16.mxu0 0
      %2850 = vmatmul.mubr.bf16.gmra.mxu0 %v2560
      %v2851 = vpop.f32.mrf.mxu0
      %v2852 = vadd.f32 0.0, %v2851
      %v2853 = vpop.f32.mrf.mxu0
      %v2854 = vpop.f32.mrf.mxu0
      %v2855 = vadd.f32 0.0, %v2854
      %v2856 = vpop.f32.mrf.mxu0
      %2857 = vmatprep.mubr.bf16.mxu0 0
      %2858 = vmatmul.mubr.bf16.gmra.mxu0 %v2568
      %v2859 = vpop.f32.mrf.mxu0
      %v2860 = vadd.f32 0.0, %v2859
      %v2861 = vpop.f32.mrf.mxu0
      %v2862 = vpop.f32.mrf.mxu0
      %v2863 = vadd.f32 0.0, %v2862
      %v2864 = vpop.f32.mrf.mxu0
      %2865 = vmatprep.mubr.bf16.mxu0 0
      %2866 = vmatmul.mubr.bf16.gmra.mxu0 %v2576
      %v2867 = vpop.f32.mrf.mxu0
      %v2868 = vadd.f32 0.0, %v2867
      %v2869 = vpop.f32.mrf.mxu0
      %v2870 = vpop.f32.mrf.mxu0
      %v2871 = vadd.f32 0.0, %v2870
      %v2872 = vpop.f32.mrf.mxu0
      %2873 = vmatprep.mubr.bf16.mxu0 0
      %2874 = vmatmul.mubr.bf16.gmra.mxu0 %v2584
      %v2875 = vpop.f32.mrf.mxu0
      %v2876 = vadd.f32 0.0, %v2875
      %v2877 = vpop.f32.mrf.mxu0
      %v2878 = vpop.f32.mrf.mxu0
      %v2879 = vadd.f32 0.0, %v2878
      %v2880 = vpop.f32.mrf.mxu0
      %2881 = vmatprep.mubr.bf16.mxu0 0
      %2882 = vmatmul.mubr.bf16.gmra.mxu0 %v2592
      %v2883 = vpop.f32.mrf.mxu0
      %v2884 = vadd.f32 0.0, %v2883
      %v2885 = vpop.f32.mrf.mxu0
      %v2886 = vpop.f32.mrf.mxu0
      %v2887 = vadd.f32 0.0, %v2886
      %v2888 = vpop.f32.mrf.mxu0
      %2889 = vmatprep.mubr.bf16.mxu0 0
      %2890 = vmatmul.mubr.bf16.gmra.mxu0 %v2600
      %v2891 = vpop.f32.mrf.mxu0
      %v2892 = vadd.f32 0.0, %v2891
      %v2893 = vpop.f32.mrf.mxu0
      %v2894 = vpop.f32.mrf.mxu0
      %v2895 = vadd.f32 0.0, %v2894
      %v2896 = vpop.f32.mrf.mxu0
      %2897 = vdwg.mxu0
      %v2898 = vadd.f32 %v2168, %v2708
      %v2899 = vadd.f32 %v2169, %v2711
      %v2900 = vadd.f32 %v2170, %v2716
      %v2901 = vadd.f32 %v2171, %v2719
      %v2902 = vadd.f32 %v2172, %v2724
      %v2903 = vadd.f32 %v2173, %v2727
      %v2904 = vadd.f32 %v2174, %v2732
      %v2905 = vadd.f32 %v2175, %v2735
      %v2906 = vadd.f32 %v2176, %v2740
      %v2907 = vadd.f32 %v2177, %v2743
      %v2908 = vadd.f32 %v2178, %v2748
      %v2909 = vadd.f32 %v2179, %v2751
      %v2910 = vadd.f32 %v2180, %v2756
      %v2911 = vadd.f32 %v2181, %v2759
      %v2912 = vadd.f32 %v2182, %v2764
      %v2913 = vadd.f32 %v2183, %v2767
      %v2914 = vadd.f32 %v2184, %v2772
      %v2915 = vadd.f32 %v2185, %v2775
      %v2916 = vadd.f32 %v2186, %v2780
      %v2917 = vadd.f32 %v2187, %v2783
      %v2918 = vadd.f32 %v2188, %v2788
      %v2919 = vadd.f32 %v2189, %v2791
      %v2920 = vadd.f32 %v2190, %v2796
      %v2921 = vadd.f32 %v2191, %v2799
      %v2922 = vadd.f32 %v2192, %v2804
      %v2923 = vadd.f32 %v2193, %v2807
      %v2924 = vadd.f32 %v2194, %v2812
      %v2925 = vadd.f32 %v2195, %v2815
      %v2926 = vadd.f32 %v2196, %v2820
      %v2927 = vadd.f32 %v2197, %v2823
      %v2928 = vadd.f32 %v2198, %v2828
      %v2929 = vadd.f32 %v2199, %v2831
      %v2930 = vadd.f32 %v2200, %v2836
      %v2931 = vadd.f32 %v2201, %v2839
      %v2932 = vadd.f32 %v2202, %v2844
      %v2933 = vadd.f32 %v2203, %v2847
      %v2934 = vadd.f32 %v2204, %v2852
      %v2935 = vadd.f32 %v2205, %v2855
      %v2936 = vadd.f32 %v2206, %v2860
      %v2937 = vadd.f32 %v2207, %v2863
      %v2938 = vadd.f32 %v2208, %v2868
      %v2939 = vadd.f32 %v2209, %v2871
      %v2940 = vadd.f32 %v2210, %v2876
      %v2941 = vadd.f32 %v2211, %v2879
      %v2942 = vadd.f32 %v2212, %v2884
      %v2943 = vadd.f32 %v2213, %v2887
      %v2944 = vadd.f32 %v2214, %v2892
      %v2945 = vadd.f32 %v2215, %v2895
      %v2946 = vld [vmem:[%s251 + $0xc] sm:$0xe]
      %s2947 = scalar_lea.vmem %s1, 320
      %v2948 = vld [vmem:[%s2947] sm:$0xf]
      %v2949 = vld [vmem:[%s2947 + $0x4] sm:$0xf]
      %v2950 = vld [vmem:[%s2947 + $0x8] sm:$0xf]
      %v2951 = vld [vmem:[%s2947 + $0xc] sm:$0xf]
      %v2952 = vld [vmem:[%s2947 + $0x10] sm:$0xf]
      %v2953 = vld [vmem:[%s2947 + $0x14] sm:$0xf]
      %v2954 = vld [vmem:[%s2947 + $0x18] sm:$0xf]
      %v2955 = vld [vmem:[%s2947 + $0x1c] sm:$0xf]
      %v2956 = vld [vmem:[%s2947 + $0x20] sm:$0xf]
      %v2957 = vld [vmem:[%s2947 + $0x24] sm:$0xf]
      %v2958 = vld [vmem:[%s2947 + $0x28] sm:$0xf]
      %v2959 = vld [vmem:[%s2947 + $0x2c] sm:$0xf]
      %v2960 = vld [vmem:[%s2947 + $0x30] sm:$0xf]
      %v2961 = vld [vmem:[%s2947 + $0x34] sm:$0xf]
      %v2962 = vld [vmem:[%s2947 + $0x38] sm:$0xf]
      %v2963 = vld [vmem:[%s2947 + $0x3c] sm:$0xf]
      %v2965 = vunpack.c.l.b16 %v2946
      %v2966 = vpack.c.b16 %v2332, %v2965
      %v2967 = vrot.slane %v2966, 1
      %v2968 = vrot.slane %v2381, 1
      %v2969 = vsel %vm1291, %v2967, %v2968
      %v2970 = vrot.slane %v2382, 1
      %v2971 = vsel %vm1291, %v2968, %v2970
      %v2972 = vrot.slane %v2383, 1
      %v2973 = vsel %vm1291, %v2970, %v2972
      %v2974 = vrot.slane %v2384, 1
      %v2975 = vsel %vm1291, %v2972, %v2974
      %v2976 = vrot.slane %v2385, 1
      %v2977 = vsel %vm1291, %v2974, %v2976
      %v2978 = vrot.slane %v2386, 1
      %v2979 = vsel %vm1291, %v2976, %v2978
      %v2980 = vrot.slane %v2387, 1
      %v2981 = vsel %vm1291, %v2978, %v2980
      %v2982 = vrot.slane %v2388, 1
      %v2983 = vsel %vm1291, %v2980, %v2982
      %v2984 = vrot.slane %v2389, 1
      %v2985 = vsel %vm1291, %v2982, %v2984
      %v2986 = vrot.slane %v2390, 1
      %v2987 = vsel %vm1291, %v2984, %v2986
      %v2988 = vrot.slane %v2391, 1
      %v2989 = vsel %vm1291, %v2986, %v2988
      %v2990 = vrot.slane %v2392, 1
      %v2991 = vsel %vm1291, %v2988, %v2990
      %v2992 = vrot.slane %v2393, 1
      %v2993 = vsel %vm1291, %v2990, %v2992
      %v2994 = vrot.slane %v2394, 1
      %v2995 = vsel %vm1291, %v2992, %v2994
      %v2996 = vrot.slane %v2395, 1
      %v2997 = vsel %vm1291, %v2994, %v2996
      %v2998 = vrot.slane %v2396, 1
      %v2999 = vsel %vm1291, %v2996, %v2998
      %v3000 = vrot.slane %v2397, 1
      %v3001 = vsel %vm1291, %v2998, %v3000
      %v3002 = vrot.slane %v2398, 1
      %v3003 = vsel %vm1291, %v3000, %v3002
      %v3004 = vrot.slane %v2399, 1
      %v3005 = vsel %vm1291, %v3002, %v3004
      %v3006 = vrot.slane %v2400, 1
      %v3007 = vsel %vm1291, %v3004, %v3006
      %v3008 = vrot.slane %v2401, 1
      %v3009 = vsel %vm1291, %v3006, %v3008
      %v3010 = vrot.slane %v2402, 1
      %v3011 = vsel %vm1291, %v3008, %v3010
      %v3012 = vrot.slane %v2403, 1
      %v3013 = vsel %vm1291, %v3010, %v3012
      %v3014 = vrot.slane %v2404, 1
      %v3015 = vsel %vm1291, %v3012, %v3014
      %v3056 = vunpack.c.l.b16 %v2948
      %v3057 = vunpack.c.l.b16 %v2949
      %v3058 = vunpack.c.l.b16 %v2950
      %v3059 = vunpack.c.l.b16 %v2951
      %v3060 = vunpack.c.l.b16 %v2952
      %v3061 = vunpack.c.l.b16 %v2953
      %v3062 = vunpack.c.l.b16 %v2954
      %v3063 = vunpack.c.l.b16 %v2955
      %v3064 = vunpack.c.l.b16 %v2956
      %v3065 = vunpack.c.l.b16 %v2957
      %v3066 = vunpack.c.l.b16 %v2958
      %v3067 = vunpack.c.l.b16 %v2959
      %v3068 = vunpack.c.l.b16 %v2960
      %v3069 = vunpack.c.l.b16 %v2961
      %v3070 = vunpack.c.l.b16 %v2962
      %v3071 = vunpack.c.l.b16 %v2963
      %v3072 = vpack.c.b16 %v3057, %v3056
      %v3073 = vpack.c.b16 %v3059, %v3058
      %v3074 = vpack.c.b16 %v3061, %v3060
      %v3075 = vpack.c.b16 %v3063, %v3062
      %v3076 = vpack.c.b16 %v3065, %v3064
      %v3077 = vpack.c.b16 %v3067, %v3066
      %v3078 = vpack.c.b16 %v3069, %v3068
      %v3079 = vpack.c.b16 %v3071, %v3070
      %3088 = vmatprep.subr.bf16.mxu0 0
      %3089 = vmatpush1.bf16.msra.mxu0 %v3079
      %3090 = vmatprep.subr.bf16.mxu0 0
      %3091 = vmatpush1.bf16.msra.mxu0 %v3078
      %3092 = vmatprep.subr.bf16.mxu0 0
      %3093 = vmatpush1.bf16.msra.mxu0 %v3077
      %3094 = vmatprep.subr.bf16.mxu0 0
      %3095 = vmatpush1.bf16.msra.mxu0 %v3076
      %3096 = vmatprep.subr.bf16.mxu0 0
      %3097 = vmatpush1.bf16.msra.mxu0 %v3075
      %3098 = vmatprep.subr.bf16.mxu0 0
      %3099 = vmatpush1.bf16.msra.mxu0 %v3074
      %3100 = vmatprep.subr.bf16.mxu0 0
      %3101 = vmatpush1.bf16.msra.mxu0 %v3073
      %3102 = vmatprep.subr.bf16.mxu0 0
      %3103 = vmatpush1.bf16.msra.mxu0 %v3072
      %3104 = vmatprep.subr.bf16.mxu0 0
      %3105 = vmatpush2.bf16.msra.mxu0 0
      %3106 = vmatprep.subr.bf16.mxu0 0
      %3107 = vmatpush2.bf16.msra.mxu0 0
      %3108 = vmatprep.subr.bf16.mxu0 0
      %3109 = vmatpush2.bf16.msra.mxu0 0
      %3110 = vmatprep.subr.bf16.mxu0 0
      %3111 = vmatpush2.bf16.msra.mxu0 0
      %3112 = vmatprep.subr.bf16.mxu0 0
      %3113 = vmatpush2.bf16.msra.mxu0 0
      %3114 = vmatprep.subr.bf16.mxu0 0
      %3115 = vmatpush2.bf16.msra.mxu0 0
      %3116 = vmatprep.subr.bf16.mxu0 0
      %3117 = vmatpush2.bf16.msra.mxu0 0
      %3118 = vmatprep.subr.bf16.mxu0 0
      %3119 = vmatpush2.bf16.msra.mxu0 0
      %3120 = vmatprep.mubr.bf16.mxu0 0
      %3121 = vmatmul.mubr.bf16.gmra.mxu0 %v2969
      %v3122 = vpop.f32.mrf.mxu0
      %v3123 = vadd.f32 0.0, %v3122
      %v3124 = vpop.f32.mrf.mxu0
      %v3125 = vpop.f32.mrf.mxu0
      %v3126 = vadd.f32 0.0, %v3125
      %v3127 = vpop.f32.mrf.mxu0
      %3128 = vmatprep.mubr.bf16.mxu0 0
      %3129 = vmatmul.mubr.bf16.gmra.mxu0 %v2971
      %v3130 = vpop.f32.mrf.mxu0
      %v3131 = vadd.f32 0.0, %v3130
      %v3132 = vpop.f32.mrf.mxu0
      %v3133 = vpop.f32.mrf.mxu0
      %v3134 = vadd.f32 0.0, %v3133
      %v3135 = vpop.f32.mrf.mxu0
      %3136 = vmatprep.mubr.bf16.mxu0 0
      %3137 = vmatmul.mubr.bf16.gmra.mxu0 %v2973
      %v3138 = vpop.f32.mrf.mxu0
      %v3139 = vadd.f32 0.0, %v3138
      %v3140 = vpop.f32.mrf.mxu0
      %v3141 = vpop.f32.mrf.mxu0
      %v3142 = vadd.f32 0.0, %v3141
      %v3143 = vpop.f32.mrf.mxu0
      %3144 = vmatprep.mubr.bf16.mxu0 0
      %3145 = vmatmul.mubr.bf16.gmra.mxu0 %v2975
      %v3146 = vpop.f32.mrf.mxu0
      %v3147 = vadd.f32 0.0, %v3146
      %v3148 = vpop.f32.mrf.mxu0
      %v3149 = vpop.f32.mrf.mxu0
      %v3150 = vadd.f32 0.0, %v3149
      %v3151 = vpop.f32.mrf.mxu0
      %3152 = vmatprep.mubr.bf16.mxu0 0
      %3153 = vmatmul.mubr.bf16.gmra.mxu0 %v2977
      %v3154 = vpop.f32.mrf.mxu0
      %v3155 = vadd.f32 0.0, %v3154
      %v3156 = vpop.f32.mrf.mxu0
      %v3157 = vpop.f32.mrf.mxu0
      %v3158 = vadd.f32 0.0, %v3157
      %v3159 = vpop.f32.mrf.mxu0
      %3160 = vmatprep.mubr.bf16.mxu0 0
      %3161 = vmatmul.mubr.bf16.gmra.mxu0 %v2979
      %v3162 = vpop.f32.mrf.mxu0
      %v3163 = vadd.f32 0.0, %v3162
      %v3164 = vpop.f32.mrf.mxu0
      %v3165 = vpop.f32.mrf.mxu0
      %v3166 = vadd.f32 0.0, %v3165
      %v3167 = vpop.f32.mrf.mxu0
      %3168 = vmatprep.mubr.bf16.mxu0 0
      %3169 = vmatmul.mubr.bf16.gmra.mxu0 %v2981
      %v3170 = vpop.f32.mrf.mxu0
      %v3171 = vadd.f32 0.0, %v3170
      %v3172 = vpop.f32.mrf.mxu0
      %v3173 = vpop.f32.mrf.mxu0
      %v3174 = vadd.f32 0.0, %v3173
      %v3175 = vpop.f32.mrf.mxu0
      %3176 = vmatprep.mubr.bf16.mxu0 0
      %3177 = vmatmul.mubr.bf16.gmra.mxu0 %v2983
      %v3178 = vpop.f32.mrf.mxu0
      %v3179 = vadd.f32 0.0, %v3178
      %v3180 = vpop.f32.mrf.mxu0
      %v3181 = vpop.f32.mrf.mxu0
      %v3182 = vadd.f32 0.0, %v3181
      %v3183 = vpop.f32.mrf.mxu0
      %3184 = vmatprep.mubr.bf16.mxu0 0
      %3185 = vmatmul.mubr.bf16.gmra.mxu0 %v2985
      %v3186 = vpop.f32.mrf.mxu0
      %v3187 = vadd.f32 0.0, %v3186
      %v3188 = vpop.f32.mrf.mxu0
      %v3189 = vpop.f32.mrf.mxu0
      %v3190 = vadd.f32 0.0, %v3189
      %v3191 = vpop.f32.mrf.mxu0
      %3192 = vmatprep.mubr.bf16.mxu0 0
      %3193 = vmatmul.mubr.bf16.gmra.mxu0 %v2987
      %v3194 = vpop.f32.mrf.mxu0
      %v3195 = vadd.f32 0.0, %v3194
      %v3196 = vpop.f32.mrf.mxu0
      %v3197 = vpop.f32.mrf.mxu0
      %v3198 = vadd.f32 0.0, %v3197
      %v3199 = vpop.f32.mrf.mxu0
      %3200 = vmatprep.mubr.bf16.mxu0 0
      %3201 = vmatmul.mubr.bf16.gmra.mxu0 %v2989
      %v3202 = vpop.f32.mrf.mxu0
      %v3203 = vadd.f32 0.0, %v3202
      %v3204 = vpop.f32.mrf.mxu0
      %v3205 = vpop.f32.mrf.mxu0
      %v3206 = vadd.f32 0.0, %v3205
      %v3207 = vpop.f32.mrf.mxu0
      %3208 = vmatprep.mubr.bf16.mxu0 0
      %3209 = vmatmul.mubr.bf16.gmra.mxu0 %v2991
      %v3210 = vpop.f32.mrf.mxu0
      %v3211 = vadd.f32 0.0, %v3210
      %v3212 = vpop.f32.mrf.mxu0
      %v3213 = vpop.f32.mrf.mxu0
      %v3214 = vadd.f32 0.0, %v3213
      %v3215 = vpop.f32.mrf.mxu0
      %3216 = vmatprep.mubr.bf16.mxu0 0
      %3217 = vmatmul.mubr.bf16.gmra.mxu0 %v2993
      %v3218 = vpop.f32.mrf.mxu0
      %v3219 = vadd.f32 0.0, %v3218
      %v3220 = vpop.f32.mrf.mxu0
      %v3221 = vpop.f32.mrf.mxu0
      %v3222 = vadd.f32 0.0, %v3221
      %v3223 = vpop.f32.mrf.mxu0
      %3224 = vmatprep.mubr.bf16.mxu0 0
      %3225 = vmatmul.mubr.bf16.gmra.mxu0 %v2995
      %v3226 = vpop.f32.mrf.mxu0
      %v3227 = vadd.f32 0.0, %v3226
      %v3228 = vpop.f32.mrf.mxu0
      %v3229 = vpop.f32.mrf.mxu0
      %v3230 = vadd.f32 0.0, %v3229
      %v3231 = vpop.f32.mrf.mxu0
      %3232 = vmatprep.mubr.bf16.mxu0 0
      %3233 = vmatmul.mubr.bf16.gmra.mxu0 %v2997
      %v3234 = vpop.f32.mrf.mxu0
      %v3235 = vadd.f32 0.0, %v3234
      %v3236 = vpop.f32.mrf.mxu0
      %v3237 = vpop.f32.mrf.mxu0
      %v3238 = vadd.f32 0.0, %v3237
      %v3239 = vpop.f32.mrf.mxu0
      %3240 = vmatprep.mubr.bf16.mxu0 0
      %3241 = vmatmul.mubr.bf16.gmra.mxu0 %v2999
      %v3242 = vpop.f32.mrf.mxu0
      %v3243 = vadd.f32 0.0, %v3242
      %v3244 = vpop.f32.mrf.mxu0
      %v3245 = vpop.f32.mrf.mxu0
      %v3246 = vadd.f32 0.0, %v3245
      %v3247 = vpop.f32.mrf.mxu0
      %3248 = vmatprep.mubr.bf16.mxu0 0
      %3249 = vmatmul.mubr.bf16.gmra.mxu0 %v3001
      %v3250 = vpop.f32.mrf.mxu0
      %v3251 = vadd.f32 0.0, %v3250
      %v3252 = vpop.f32.mrf.mxu0
      %v3253 = vpop.f32.mrf.mxu0
      %v3254 = vadd.f32 0.0, %v3253
      %v3255 = vpop.f32.mrf.mxu0
      %3256 = vmatprep.mubr.bf16.mxu0 0
      %3257 = vmatmul.mubr.bf16.gmra.mxu0 %v3003
      %v3258 = vpop.f32.mrf.mxu0
      %v3259 = vadd.f32 0.0, %v3258
      %v3260 = vpop.f32.mrf.mxu0
      %v3261 = vpop.f32.mrf.mxu0
      %v3262 = vadd.f32 0.0, %v3261
      %v3263 = vpop.f32.mrf.mxu0
      %3264 = vmatprep.mubr.bf16.mxu0 0
      %3265 = vmatmul.mubr.bf16.gmra.mxu0 %v3005
      %v3266 = vpop.f32.mrf.mxu0
      %v3267 = vadd.f32 0.0, %v3266
      %v3268 = vpop.f32.mrf.mxu0
      %v3269 = vpop.f32.mrf.mxu0
      %v3270 = vadd.f32 0.0, %v3269
      %v3271 = vpop.f32.mrf.mxu0
      %3272 = vmatprep.mubr.bf16.mxu0 0
      %3273 = vmatmul.mubr.bf16.gmra.mxu0 %v3007
      %v3274 = vpop.f32.mrf.mxu0
      %v3275 = vadd.f32 0.0, %v3274
      %v3276 = vpop.f32.mrf.mxu0
      %v3277 = vpop.f32.mrf.mxu0
      %v3278 = vadd.f32 0.0, %v3277
      %v3279 = vpop.f32.mrf.mxu0
      %3280 = vmatprep.mubr.bf16.mxu0 0
      %3281 = vmatmul.mubr.bf16.gmra.mxu0 %v3009
      %v3282 = vpop.f32.mrf.mxu0
      %v3283 = vadd.f32 0.0, %v3282
      %v3284 = vpop.f32.mrf.mxu0
      %v3285 = vpop.f32.mrf.mxu0
      %v3286 = vadd.f32 0.0, %v3285
      %v3287 = vpop.f32.mrf.mxu0
      %3288 = vmatprep.mubr.bf16.mxu0 0
      %3289 = vmatmul.mubr.bf16.gmra.mxu0 %v3011
      %v3290 = vpop.f32.mrf.mxu0
      %v3291 = vadd.f32 0.0, %v3290
      %v3292 = vpop.f32.mrf.mxu0
      %v3293 = vpop.f32.mrf.mxu0
      %v3294 = vadd.f32 0.0, %v3293
      %v3295 = vpop.f32.mrf.mxu0
      %3296 = vmatprep.mubr.bf16.mxu0 0
      %3297 = vmatmul.mubr.bf16.gmra.mxu0 %v3013
      %v3298 = vpop.f32.mrf.mxu0
      %v3299 = vadd.f32 0.0, %v3298
      %v3300 = vpop.f32.mrf.mxu0
      %v3301 = vpop.f32.mrf.mxu0
      %v3302 = vadd.f32 0.0, %v3301
      %v3303 = vpop.f32.mrf.mxu0
      %3304 = vmatprep.mubr.bf16.mxu0 0
      %3305 = vmatmul.mubr.bf16.gmra.mxu0 %v3015
      %v3306 = vpop.f32.mrf.mxu0
      %v3307 = vadd.f32 0.0, %v3306
      %v3308 = vpop.f32.mrf.mxu0
      %v3309 = vpop.f32.mrf.mxu0
      %v3310 = vadd.f32 0.0, %v3309
      %v3311 = vpop.f32.mrf.mxu0
      %3312 = vdwg.mxu0
      %v3313 = vadd.f32 %v2898, %v3123
      %v3314 = vadd.f32 %v2899, %v3126
      %v3315 = vadd.f32 %v2900, %v3131
      %v3316 = vadd.f32 %v2901, %v3134
      %v3317 = vadd.f32 %v2902, %v3139
      %v3318 = vadd.f32 %v2903, %v3142
      %v3319 = vadd.f32 %v2904, %v3147
      %v3320 = vadd.f32 %v2905, %v3150
      %v3321 = vadd.f32 %v2906, %v3155
      %v3322 = vadd.f32 %v2907, %v3158
      %v3323 = vadd.f32 %v2908, %v3163
      %v3324 = vadd.f32 %v2909, %v3166
      %v3325 = vadd.f32 %v2910, %v3171
      %v3326 = vadd.f32 %v2911, %v3174
      %v3327 = vadd.f32 %v2912, %v3179
      %v3328 = vadd.f32 %v2913, %v3182
      %v3329 = vadd.f32 %v2914, %v3187
      %v3330 = vadd.f32 %v2915, %v3190
      %v3331 = vadd.f32 %v2916, %v3195
      %v3332 = vadd.f32 %v2917, %v3198
      %v3333 = vadd.f32 %v2918, %v3203
      %v3334 = vadd.f32 %v2919, %v3206
      %v3335 = vadd.f32 %v2920, %v3211
      %v3336 = vadd.f32 %v2921, %v3214
      %v3337 = vadd.f32 %v2922, %v3219
      %v3338 = vadd.f32 %v2923, %v3222
      %v3339 = vadd.f32 %v2924, %v3227
      %v3340 = vadd.f32 %v2925, %v3230
      %v3341 = vadd.f32 %v2926, %v3235
      %v3342 = vadd.f32 %v2927, %v3238
      %v3343 = vadd.f32 %v2928, %v3243
      %v3344 = vadd.f32 %v2929, %v3246
      %v3345 = vadd.f32 %v2930, %v3251
      %v3346 = vadd.f32 %v2931, %v3254
      %v3347 = vadd.f32 %v2932, %v3259
      %v3348 = vadd.f32 %v2933, %v3262
      %v3349 = vadd.f32 %v2934, %v3267
      %v3350 = vadd.f32 %v2935, %v3270
      %v3351 = vadd.f32 %v2936, %v3275
      %v3352 = vadd.f32 %v2937, %v3278
      %v3353 = vadd.f32 %v2938, %v3283
      %v3354 = vadd.f32 %v2939, %v3286
      %v3355 = vadd.f32 %v2940, %v3291
      %v3356 = vadd.f32 %v2941, %v3294
      %v3357 = vadd.f32 %v2942, %v3299
      %v3358 = vadd.f32 %v2943, %v3302
      %v3359 = vadd.f32 %v2944, %v3307
      %v3360 = vadd.f32 %v2945, %v3310
      %v3361 = vld [vmem:[%s251 + $0x18] sm:$0xf]
      %v3362 = vld [vmem:[%s251 + $0x1c] sm:$0xf]
      %v3363 = vld [vmem:[%s251 + $0x20] sm:$0xf]
      %v3364 = vld [vmem:[%s251 + $0x24] sm:$0xf]
      %v3365 = vld [vmem:[%s251 + $0x28] sm:$0xf]
      %v3366 = vld [vmem:[%s251 + $0x2c] sm:$0xf]
      %v3367 = vld [vmem:[%s251 + $0x30] sm:$0xf]
      %v3368 = vld [vmem:[%s251 + $0x34] sm:$0xf]
      %v3369 = vld [vmem:[%s251 + $0x38] sm:$0xf]
      %v3370 = vld [vmem:[%s251 + $0x3c] sm:$0xf]
      %v3371 = vld [vmem:[%s251 + $0x40] sm:$0xf]
      %v3372 = vld [vmem:[%s251 + $0x44] sm:$0xf]
      %v3373 = vld [vmem:[%s251 + $0x48] sm:$0xf]
      %v3374 = vld [vmem:[%s251 + $0x4c] sm:$0xf]
      %v3375 = vld [vmem:[%s251 + $0x50] sm:$0xf]
      %v3376 = vld [vmem:[%s251 + $0x54] sm:$0xf]
      %v3377 = vld [vmem:[%s251 + $0x58] sm:$0xf]
      %v3378 = vld [vmem:[%s251 + $0x5c] sm:$0xf]
      %v3379 = vld [vmem:[%s251 + $0x60] sm:$0xf]
      %v3380 = vld [vmem:[%s251 + $0x64] sm:$0xf]
      %v3381 = vld [vmem:[%s251 + $0x68] sm:$0xf]
      %v3382 = vld [vmem:[%s251 + $0x6c] sm:$0xf]
      %v3383 = vld [vmem:[%s251 + $0x70] sm:$0xf]
      %v3384 = vld [vmem:[%s251 + $0x74] sm:$0xf]
      %v3385 = vld [vmem:[%s251 + $0x78] sm:$0xf]
      %v3386 = vld [vmem:[%s251 + $0x7c] sm:$0xf]
      %v3387 = vld [vmem:[%s251 + $0x80] sm:$0xf]
      %v3388 = vld [vmem:[%s251 + $0x84] sm:$0xf]
      %v3389 = vld [vmem:[%s251 + $0x88] sm:$0xf]
      %v3390 = vld [vmem:[%s251 + $0x8c] sm:$0xf]
      %v3391 = vld [vmem:[%s251 + $0x90] sm:$0xf]
      %v3392 = vld [vmem:[%s251 + $0x94] sm:$0xf]
      %v3393 = vld [vmem:[%s251 + $0x98] sm:$0xf]
      %v3394 = vld [vmem:[%s251 + $0x9c] sm:$0xf]
      %v3395 = vld [vmem:[%s251 + $0xa0] sm:$0xf]
      %v3396 = vld [vmem:[%s251 + $0xa4] sm:$0xf]
      %v3397 = vld [vmem:[%s251 + $0xa8] sm:$0xf]
      %v3398 = vld [vmem:[%s251 + $0xac] sm:$0xf]
      %v3399 = vld [vmem:[%s251 + $0xb0] sm:$0xf]
      %v3400 = vld [vmem:[%s251 + $0xb4] sm:$0xf]
      %v3401 = vld [vmem:[%s251 + $0xb8] sm:$0xf]
      %v3402 = vld [vmem:[%s251 + $0xbc] sm:$0xf]
      %v3403 = vld [vmem:[%s251 + $0xc0] sm:$0xf]
      %v3404 = vld [vmem:[%s251 + $0xc4] sm:$0xf]
      %v3405 = vld [vmem:[%s251 + $0xc8] sm:$0xf]
      %v3406 = vld [vmem:[%s251 + $0xcc] sm:$0xf]
      %v3407 = vld [vmem:[%s251 + $0xd0] sm:$0xf]
      %v3408 = vld [vmem:[%s251 + $0xd4] sm:$0xf]
      %s3409 = scalar_lea.vmem %s1, 384
      %v3410 = vld [vmem:[%s3409] sm:$0xf]
      %v3411 = vld [vmem:[%s3409 + $0x4] sm:$0xf]
      %v3412 = vld [vmem:[%s3409 + $0x8] sm:$0xf]
      %v3413 = vld [vmem:[%s3409 + $0xc] sm:$0xf]
      %v3414 = vld [vmem:[%s3409 + $0x10] sm:$0xf]
      %v3415 = vld [vmem:[%s3409 + $0x14] sm:$0xf]
      %v3416 = vld [vmem:[%s3409 + $0x18] sm:$0xf]
      %v3417 = vld [vmem:[%s3409 + $0x1c] sm:$0xf]
      %v3418 = vld [vmem:[%s3409 + $0x20] sm:$0xf]
      %v3419 = vld [vmem:[%s3409 + $0x24] sm:$0xf]
      %v3420 = vld [vmem:[%s3409 + $0x28] sm:$0xf]
      %v3421 = vld [vmem:[%s3409 + $0x2c] sm:$0xf]
      %v3422 = vld [vmem:[%s3409 + $0x30] sm:$0xf]
      %v3423 = vld [vmem:[%s3409 + $0x34] sm:$0xf]
      %v3424 = vld [vmem:[%s3409 + $0x38] sm:$0xf]
      %v3425 = vld [vmem:[%s3409 + $0x3c] sm:$0xf]
      %v3474 = vunpack.c.l.b16 %v3361
      %v3475 = vunpack.c.l.b16 %v3362
      %v3476 = vunpack.c.l.b16 %v3363
      %v3477 = vunpack.c.l.b16 %v3364
      %v3478 = vunpack.c.l.b16 %v3365
      %v3479 = vunpack.c.l.b16 %v3366
      %v3480 = vunpack.c.l.b16 %v3367
      %v3481 = vunpack.c.l.b16 %v3368
      %v3482 = vunpack.c.l.b16 %v3369
      %v3483 = vunpack.c.l.b16 %v3370
      %v3484 = vunpack.c.l.b16 %v3371
      %v3485 = vunpack.c.l.b16 %v3372
      %v3486 = vunpack.c.l.b16 %v3373
      %v3487 = vunpack.c.l.b16 %v3374
      %v3488 = vunpack.c.l.b16 %v3375
      %v3489 = vunpack.c.l.b16 %v3376
      %v3490 = vunpack.c.l.b16 %v3377
      %v3491 = vunpack.c.l.b16 %v3378
      %v3492 = vunpack.c.l.b16 %v3379
      %v3493 = vunpack.c.l.b16 %v3380
      %v3494 = vunpack.c.l.b16 %v3381
      %v3495 = vunpack.c.l.b16 %v3382
      %v3496 = vunpack.c.l.b16 %v3383
      %v3497 = vunpack.c.l.b16 %v3384
      %v3498 = vunpack.c.l.b16 %v3385
      %v3499 = vunpack.c.l.b16 %v3386
      %v3500 = vunpack.c.l.b16 %v3387
      %v3501 = vunpack.c.l.b16 %v3388
      %v3502 = vunpack.c.l.b16 %v3389
      %v3503 = vunpack.c.l.b16 %v3390
      %v3504 = vunpack.c.l.b16 %v3391
      %v3505 = vunpack.c.l.b16 %v3392
      %v3506 = vunpack.c.l.b16 %v3393
      %v3507 = vunpack.c.l.b16 %v3394
      %v3508 = vunpack.c.l.b16 %v3395
      %v3509 = vunpack.c.l.b16 %v3396
      %v3510 = vunpack.c.l.b16 %v3397
      %v3511 = vunpack.c.l.b16 %v3398
      %v3512 = vunpack.c.l.b16 %v3399
      %v3513 = vunpack.c.l.b16 %v3400
      %v3514 = vunpack.c.l.b16 %v3401
      %v3515 = vunpack.c.l.b16 %v3402
      %v3516 = vunpack.c.l.b16 %v3403
      %v3517 = vunpack.c.l.b16 %v3404
      %v3518 = vunpack.c.l.b16 %v3405
      %v3519 = vunpack.c.l.b16 %v3406
      %v3520 = vunpack.c.l.b16 %v3407
      %v3521 = vunpack.c.l.b16 %v3408
      %v3522 = vpack.c.b16 %v3475, %v3474
      %v3523 = vpack.c.b16 %v3477, %v3476
      %v3524 = vpack.c.b16 %v3479, %v3478
      %v3525 = vpack.c.b16 %v3481, %v3480
      %v3526 = vpack.c.b16 %v3483, %v3482
      %v3527 = vpack.c.b16 %v3485, %v3484
      %v3528 = vpack.c.b16 %v3487, %v3486
      %v3529 = vpack.c.b16 %v3489, %v3488
      %v3530 = vpack.c.b16 %v3491, %v3490
      %v3531 = vpack.c.b16 %v3493, %v3492
      %v3532 = vpack.c.b16 %v3495, %v3494
      %v3533 = vpack.c.b16 %v3497, %v3496
      %v3534 = vpack.c.b16 %v3499, %v3498
      %v3535 = vpack.c.b16 %v3501, %v3500
      %v3536 = vpack.c.b16 %v3503, %v3502
      %v3537 = vpack.c.b16 %v3505, %v3504
      %v3538 = vpack.c.b16 %v3507, %v3506
      %v3539 = vpack.c.b16 %v3509, %v3508
      %v3540 = vpack.c.b16 %v3511, %v3510
      %v3541 = vpack.c.b16 %v3513, %v3512
      %v3542 = vpack.c.b16 %v3515, %v3514
      %v3543 = vpack.c.b16 %v3517, %v3516
      %v3544 = vpack.c.b16 %v3519, %v3518
      %v3545 = vpack.c.b16 %v3521, %v3520
      %v3586 = vunpack.c.l.b16 %v3410
      %v3587 = vunpack.c.l.b16 %v3411
      %v3588 = vunpack.c.l.b16 %v3412
      %v3589 = vunpack.c.l.b16 %v3413
      %v3590 = vunpack.c.l.b16 %v3414
      %v3591 = vunpack.c.l.b16 %v3415
      %v3592 = vunpack.c.l.b16 %v3416
      %v3593 = vunpack.c.l.b16 %v3417
      %v3594 = vunpack.c.l.b16 %v3418
      %v3595 = vunpack.c.l.b16 %v3419
      %v3596 = vunpack.c.l.b16 %v3420
      %v3597 = vunpack.c.l.b16 %v3421
      %v3598 = vunpack.c.l.b16 %v3422
      %v3599 = vunpack.c.l.b16 %v3423
      %v3600 = vunpack.c.l.b16 %v3424
      %v3601 = vunpack.c.l.b16 %v3425
      %v3602 = vpack.c.b16 %v3587, %v3586
      %v3603 = vpack.c.b16 %v3589, %v3588
      %v3604 = vpack.c.b16 %v3591, %v3590
      %v3605 = vpack.c.b16 %v3593, %v3592
      %v3606 = vpack.c.b16 %v3595, %v3594
      %v3607 = vpack.c.b16 %v3597, %v3596
      %v3608 = vpack.c.b16 %v3599, %v3598
      %v3609 = vpack.c.b16 %v3601, %v3600
      %3618 = vmatprep.subr.bf16.mxu0 0
      %3619 = vmatpush1.bf16.msra.mxu0 %v3609
      %3620 = vmatprep.subr.bf16.mxu0 0
      %3621 = vmatpush1.bf16.msra.mxu0 %v3608
      %3622 = vmatprep.subr.bf16.mxu0 0
      %3623 = vmatpush1.bf16.msra.mxu0 %v3607
      %3624 = vmatprep.subr.bf16.mxu0 0
      %3625 = vmatpush1.bf16.msra.mxu0 %v3606
      %3626 = vmatprep.subr.bf16.mxu0 0
      %3627 = vmatpush1.bf16.msra.mxu0 %v3605
      %3628 = vmatprep.subr.bf16.mxu0 0
      %3629 = vmatpush1.bf16.msra.mxu0 %v3604
      %3630 = vmatprep.subr.bf16.mxu0 0
      %3631 = vmatpush1.bf16.msra.mxu0 %v3603
      %3632 = vmatprep.subr.bf16.mxu0 0
      %3633 = vmatpush1.bf16.msra.mxu0 %v3602
      %3634 = vmatprep.subr.bf16.mxu0 0
      %3635 = vmatpush2.bf16.msra.mxu0 0
      %3636 = vmatprep.subr.bf16.mxu0 0
      %3637 = vmatpush2.bf16.msra.mxu0 0
      %3638 = vmatprep.subr.bf16.mxu0 0
      %3639 = vmatpush2.bf16.msra.mxu0 0
      %3640 = vmatprep.subr.bf16.mxu0 0
      %3641 = vmatpush2.bf16.msra.mxu0 0
      %3642 = vmatprep.subr.bf16.mxu0 0
      %3643 = vmatpush2.bf16.msra.mxu0 0
      %3644 = vmatprep.subr.bf16.mxu0 0
      %3645 = vmatpush2.bf16.msra.mxu0 0
      %3646 = vmatprep.subr.bf16.mxu0 0
      %3647 = vmatpush2.bf16.msra.mxu0 0
      %3648 = vmatprep.subr.bf16.mxu0 0
      %3649 = vmatpush2.bf16.msra.mxu0 0
      %3650 = vmatprep.mubr.bf16.mxu0 0
      %3651 = vmatmul.mubr.bf16.gmra.mxu0 %v3522
      %v3652 = vpop.f32.mrf.mxu0
      %v3653 = vadd.f32 0.0, %v3652
      %v3654 = vpop.f32.mrf.mxu0
      %v3655 = vpop.f32.mrf.mxu0
      %v3656 = vadd.f32 0.0, %v3655
      %v3657 = vpop.f32.mrf.mxu0
      %3658 = vmatprep.mubr.bf16.mxu0 0
      %3659 = vmatmul.mubr.bf16.gmra.mxu0 %v3523
      %v3660 = vpop.f32.mrf.mxu0
      %v3661 = vadd.f32 0.0, %v3660
      %v3662 = vpop.f32.mrf.mxu0
      %v3663 = vpop.f32.mrf.mxu0
      %v3664 = vadd.f32 0.0, %v3663
      %v3665 = vpop.f32.mrf.mxu0
      %3666 = vmatprep.mubr.bf16.mxu0 0
      %3667 = vmatmul.mubr.bf16.gmra.mxu0 %v3524
      %v3668 = vpop.f32.mrf.mxu0
      %v3669 = vadd.f32 0.0, %v3668
      %v3670 = vpop.f32.mrf.mxu0
      %v3671 = vpop.f32.mrf.mxu0
      %v3672 = vadd.f32 0.0, %v3671
      %v3673 = vpop.f32.mrf.mxu0
      %3674 = vmatprep.mubr.bf16.mxu0 0
      %3675 = vmatmul.mubr.bf16.gmra.mxu0 %v3525
      %v3676 = vpop.f32.mrf.mxu0
      %v3677 = vadd.f32 0.0, %v3676
      %v3678 = vpop.f32.mrf.mxu0
      %v3679 = vpop.f32.mrf.mxu0
      %v3680 = vadd.f32 0.0, %v3679
      %v3681 = vpop.f32.mrf.mxu0
      %3682 = vmatprep.mubr.bf16.mxu0 0
      %3683 = vmatmul.mubr.bf16.gmra.mxu0 %v3526
      %v3684 = vpop.f32.mrf.mxu0
      %v3685 = vadd.f32 0.0, %v3684
      %v3686 = vpop.f32.mrf.mxu0
      %v3687 = vpop.f32.mrf.mxu0
      %v3688 = vadd.f32 0.0, %v3687
      %v3689 = vpop.f32.mrf.mxu0
      %3690 = vmatprep.mubr.bf16.mxu0 0
      %3691 = vmatmul.mubr.bf16.gmra.mxu0 %v3527
      %v3692 = vpop.f32.mrf.mxu0
      %v3693 = vadd.f32 0.0, %v3692
      %v3694 = vpop.f32.mrf.mxu0
      %v3695 = vpop.f32.mrf.mxu0
      %v3696 = vadd.f32 0.0, %v3695
      %v3697 = vpop.f32.mrf.mxu0
      %3698 = vmatprep.mubr.bf16.mxu0 0
      %3699 = vmatmul.mubr.bf16.gmra.mxu0 %v3528
      %v3700 = vpop.f32.mrf.mxu0
      %v3701 = vadd.f32 0.0, %v3700
      %v3702 = vpop.f32.mrf.mxu0
      %v3703 = vpop.f32.mrf.mxu0
      %v3704 = vadd.f32 0.0, %v3703
      %v3705 = vpop.f32.mrf.mxu0
      %3706 = vmatprep.mubr.bf16.mxu0 0
      %3707 = vmatmul.mubr.bf16.gmra.mxu0 %v3529
      %v3708 = vpop.f32.mrf.mxu0
      %v3709 = vadd.f32 0.0, %v3708
      %v3710 = vpop.f32.mrf.mxu0
      %v3711 = vpop.f32.mrf.mxu0
      %v3712 = vadd.f32 0.0, %v3711
      %v3713 = vpop.f32.mrf.mxu0
      %3714 = vmatprep.mubr.bf16.mxu0 0
      %3715 = vmatmul.mubr.bf16.gmra.mxu0 %v3530
      %v3716 = vpop.f32.mrf.mxu0
      %v3717 = vadd.f32 0.0, %v3716
      %v3718 = vpop.f32.mrf.mxu0
      %v3719 = vpop.f32.mrf.mxu0
      %v3720 = vadd.f32 0.0, %v3719
      %v3721 = vpop.f32.mrf.mxu0
      %3722 = vmatprep.mubr.bf16.mxu0 0
      %3723 = vmatmul.mubr.bf16.gmra.mxu0 %v3531
      %v3724 = vpop.f32.mrf.mxu0
      %v3725 = vadd.f32 0.0, %v3724
      %v3726 = vpop.f32.mrf.mxu0
      %v3727 = vpop.f32.mrf.mxu0
      %v3728 = vadd.f32 0.0, %v3727
      %v3729 = vpop.f32.mrf.mxu0
      %3730 = vmatprep.mubr.bf16.mxu0 0
      %3731 = vmatmul.mubr.bf16.gmra.mxu0 %v3532
      %v3732 = vpop.f32.mrf.mxu0
      %v3733 = vadd.f32 0.0, %v3732
      %v3734 = vpop.f32.mrf.mxu0
      %v3735 = vpop.f32.mrf.mxu0
      %v3736 = vadd.f32 0.0, %v3735
      %v3737 = vpop.f32.mrf.mxu0
      %3738 = vmatprep.mubr.bf16.mxu0 0
      %3739 = vmatmul.mubr.bf16.gmra.mxu0 %v3533
      %v3740 = vpop.f32.mrf.mxu0
      %v3741 = vadd.f32 0.0, %v3740
      %v3742 = vpop.f32.mrf.mxu0
      %v3743 = vpop.f32.mrf.mxu0
      %v3744 = vadd.f32 0.0, %v3743
      %v3745 = vpop.f32.mrf.mxu0
      %3746 = vmatprep.mubr.bf16.mxu0 0
      %3747 = vmatmul.mubr.bf16.gmra.mxu0 %v3534
      %v3748 = vpop.f32.mrf.mxu0
      %v3749 = vadd.f32 0.0, %v3748
      %v3750 = vpop.f32.mrf.mxu0
      %v3751 = vpop.f32.mrf.mxu0
      %v3752 = vadd.f32 0.0, %v3751
      %v3753 = vpop.f32.mrf.mxu0
      %3754 = vmatprep.mubr.bf16.mxu0 0
      %3755 = vmatmul.mubr.bf16.gmra.mxu0 %v3535
      %v3756 = vpop.f32.mrf.mxu0
      %v3757 = vadd.f32 0.0, %v3756
      %v3758 = vpop.f32.mrf.mxu0
      %v3759 = vpop.f32.mrf.mxu0
      %v3760 = vadd.f32 0.0, %v3759
      %v3761 = vpop.f32.mrf.mxu0
      %3762 = vmatprep.mubr.bf16.mxu0 0
      %3763 = vmatmul.mubr.bf16.gmra.mxu0 %v3536
      %v3764 = vpop.f32.mrf.mxu0
      %v3765 = vadd.f32 0.0, %v3764
      %v3766 = vpop.f32.mrf.mxu0
      %v3767 = vpop.f32.mrf.mxu0
      %v3768 = vadd.f32 0.0, %v3767
      %v3769 = vpop.f32.mrf.mxu0
      %3770 = vmatprep.mubr.bf16.mxu0 0
      %3771 = vmatmul.mubr.bf16.gmra.mxu0 %v3537
      %v3772 = vpop.f32.mrf.mxu0
      %v3773 = vadd.f32 0.0, %v3772
      %v3774 = vpop.f32.mrf.mxu0
      %v3775 = vpop.f32.mrf.mxu0
      %v3776 = vadd.f32 0.0, %v3775
      %v3777 = vpop.f32.mrf.mxu0
      %3778 = vmatprep.mubr.bf16.mxu0 0
      %3779 = vmatmul.mubr.bf16.gmra.mxu0 %v3538
      %v3780 = vpop.f32.mrf.mxu0
      %v3781 = vadd.f32 0.0, %v3780
      %v3782 = vpop.f32.mrf.mxu0
      %v3783 = vpop.f32.mrf.mxu0
      %v3784 = vadd.f32 0.0, %v3783
      %v3785 = vpop.f32.mrf.mxu0
      %3786 = vmatprep.mubr.bf16.mxu0 0
      %3787 = vmatmul.mubr.bf16.gmra.mxu0 %v3539
      %v3788 = vpop.f32.mrf.mxu0
      %v3789 = vadd.f32 0.0, %v3788
      %v3790 = vpop.f32.mrf.mxu0
      %v3791 = vpop.f32.mrf.mxu0
      %v3792 = vadd.f32 0.0, %v3791
      %v3793 = vpop.f32.mrf.mxu0
      %3794 = vmatprep.mubr.bf16.mxu0 0
      %3795 = vmatmul.mubr.bf16.gmra.mxu0 %v3540
      %v3796 = vpop.f32.mrf.mxu0
      %v3797 = vadd.f32 0.0, %v3796
      %v3798 = vpop.f32.mrf.mxu0
      %v3799 = vpop.f32.mrf.mxu0
      %v3800 = vadd.f32 0.0, %v3799
      %v3801 = vpop.f32.mrf.mxu0
      %3802 = vmatprep.mubr.bf16.mxu0 0
      %3803 = vmatmul.mubr.bf16.gmra.mxu0 %v3541
      %v3804 = vpop.f32.mrf.mxu0
      %v3805 = vadd.f32 0.0, %v3804
      %v3806 = vpop.f32.mrf.mxu0
      %v3807 = vpop.f32.mrf.mxu0
      %v3808 = vadd.f32 0.0, %v3807
      %v3809 = vpop.f32.mrf.mxu0
      %3810 = vmatprep.mubr.bf16.mxu0 0
      %3811 = vmatmul.mubr.bf16.gmra.mxu0 %v3542
      %v3812 = vpop.f32.mrf.mxu0
      %v3813 = vadd.f32 0.0, %v3812
      %v3814 = vpop.f32.mrf.mxu0
      %v3815 = vpop.f32.mrf.mxu0
      %v3816 = vadd.f32 0.0, %v3815
      %v3817 = vpop.f32.mrf.mxu0
      %3818 = vmatprep.mubr.bf16.mxu0 0
      %3819 = vmatmul.mubr.bf16.gmra.mxu0 %v3543
      %v3820 = vpop.f32.mrf.mxu0
      %v3821 = vadd.f32 0.0, %v3820
      %v3822 = vpop.f32.mrf.mxu0
      %v3823 = vpop.f32.mrf.mxu0
      %v3824 = vadd.f32 0.0, %v3823
      %v3825 = vpop.f32.mrf.mxu0
      %3826 = vmatprep.mubr.bf16.mxu0 0
      %3827 = vmatmul.mubr.bf16.gmra.mxu0 %v3544
      %v3828 = vpop.f32.mrf.mxu0
      %v3829 = vadd.f32 0.0, %v3828
      %v3830 = vpop.f32.mrf.mxu0
      %v3831 = vpop.f32.mrf.mxu0
      %v3832 = vadd.f32 0.0, %v3831
      %v3833 = vpop.f32.mrf.mxu0
      %3834 = vmatprep.mubr.bf16.mxu0 0
      %3835 = vmatmul.mubr.bf16.gmra.mxu0 %v3545
      %v3836 = vpop.f32.mrf.mxu0
      %v3837 = vadd.f32 0.0, %v3836
      %v3838 = vpop.f32.mrf.mxu0
      %v3839 = vpop.f32.mrf.mxu0
      %v3840 = vadd.f32 0.0, %v3839
      %v3841 = vpop.f32.mrf.mxu0
      %3842 = vdwg.mxu0
      %v3843 = vadd.f32 %v3313, %v3653
      %v3844 = vadd.f32 %v3314, %v3656
      %v3845 = vadd.f32 %v3315, %v3661
      %v3846 = vadd.f32 %v3316, %v3664
      %v3847 = vadd.f32 %v3317, %v3669
      %v3848 = vadd.f32 %v3318, %v3672
      %v3849 = vadd.f32 %v3319, %v3677
      %v3850 = vadd.f32 %v3320, %v3680
      %v3851 = vadd.f32 %v3321, %v3685
      %v3852 = vadd.f32 %v3322, %v3688
      %v3853 = vadd.f32 %v3323, %v3693
      %v3854 = vadd.f32 %v3324, %v3696
      %v3855 = vadd.f32 %v3325, %v3701
      %v3856 = vadd.f32 %v3326, %v3704
      %v3857 = vadd.f32 %v3327, %v3709
      %v3858 = vadd.f32 %v3328, %v3712
      %v3859 = vadd.f32 %v3329, %v3717
      %v3860 = vadd.f32 %v3330, %v3720
      %v3861 = vadd.f32 %v3331, %v3725
      %v3862 = vadd.f32 %v3332, %v3728
      %v3863 = vadd.f32 %v3333, %v3733
      %v3864 = vadd.f32 %v3334, %v3736
      %v3865 = vadd.f32 %v3335, %v3741
      %v3866 = vadd.f32 %v3336, %v3744
      %v3867 = vadd.f32 %v3337, %v3749
      %v3868 = vadd.f32 %v3338, %v3752
      %v3869 = vadd.f32 %v3339, %v3757
      %v3870 = vadd.f32 %v3340, %v3760
      %v3871 = vadd.f32 %v3341, %v3765
      %v3872 = vadd.f32 %v3342, %v3768
      %v3873 = vadd.f32 %v3343, %v3773
      %v3874 = vadd.f32 %v3344, %v3776
      %v3875 = vadd.f32 %v3345, %v3781
      %v3876 = vadd.f32 %v3346, %v3784
      %v3877 = vadd.f32 %v3347, %v3789
      %v3878 = vadd.f32 %v3348, %v3792
      %v3879 = vadd.f32 %v3349, %v3797
      %v3880 = vadd.f32 %v3350, %v3800
      %v3881 = vadd.f32 %v3351, %v3805
      %v3882 = vadd.f32 %v3352, %v3808
      %v3883 = vadd.f32 %v3353, %v3813
      %v3884 = vadd.f32 %v3354, %v3816
      %v3885 = vadd.f32 %v3355, %v3821
      %v3886 = vadd.f32 %v3356, %v3824
      %v3887 = vadd.f32 %v3357, %v3829
      %v3888 = vadd.f32 %v3358, %v3832
      %v3889 = vadd.f32 %v3359, %v3837
      %v3890 = vadd.f32 %v3360, %v3840
      %v3891 = vld [vmem:[%s251 + $0x18] sm:$0xf]
      %v3892 = vld [vmem:[%s251 + $0x1c] sm:$0xf]
      %v3893 = vld [vmem:[%s251 + $0x20] sm:$0xf]
      %v3894 = vld [vmem:[%s251 + $0x24] sm:$0xf]
      %v3895 = vld [vmem:[%s251 + $0x28] sm:$0xf]
      %v3896 = vld [vmem:[%s251 + $0x2c] sm:$0xf]
      %v3897 = vld [vmem:[%s251 + $0x30] sm:$0xf]
      %v3898 = vld [vmem:[%s251 + $0x34] sm:$0xf]
      %v3899 = vld [vmem:[%s251 + $0x38] sm:$0xf]
      %v3900 = vld [vmem:[%s251 + $0x3c] sm:$0xf]
      %v3901 = vld [vmem:[%s251 + $0x40] sm:$0xf]
      %v3902 = vld [vmem:[%s251 + $0x44] sm:$0xf]
      %v3903 = vld [vmem:[%s251 + $0x48] sm:$0xf]
      %v3904 = vld [vmem:[%s251 + $0x4c] sm:$0xf]
      %v3905 = vld [vmem:[%s251 + $0x50] sm:$0xf]
      %v3906 = vld [vmem:[%s251 + $0x54] sm:$0xf]
      %v3907 = vld [vmem:[%s251 + $0x58] sm:$0xf]
      %v3908 = vld [vmem:[%s251 + $0x5c] sm:$0xf]
      %v3909 = vld [vmem:[%s251 + $0x60] sm:$0xf]
      %v3910 = vld [vmem:[%s251 + $0x64] sm:$0xf]
      %v3911 = vld [vmem:[%s251 + $0x68] sm:$0xf]
      %v3912 = vld [vmem:[%s251 + $0x6c] sm:$0xf]
      %v3913 = vld [vmem:[%s251 + $0x70] sm:$0xf]
      %v3914 = vld [vmem:[%s251 + $0x74] sm:$0xf]
      %v3915 = vld [vmem:[%s251 + $0x78] sm:$0xf]
      %v3916 = vld [vmem:[%s251 + $0x7c] sm:$0xf]
      %v3917 = vld [vmem:[%s251 + $0x80] sm:$0xf]
      %v3918 = vld [vmem:[%s251 + $0x84] sm:$0xf]
      %v3919 = vld [vmem:[%s251 + $0x88] sm:$0xf]
      %v3920 = vld [vmem:[%s251 + $0x8c] sm:$0xf]
      %v3921 = vld [vmem:[%s251 + $0x90] sm:$0xf]
      %v3922 = vld [vmem:[%s251 + $0x94] sm:$0xf]
      %v3923 = vld [vmem:[%s251 + $0x98] sm:$0xf]
      %v3924 = vld [vmem:[%s251 + $0x9c] sm:$0xf]
      %v3925 = vld [vmem:[%s251 + $0xa0] sm:$0xf]
      %v3926 = vld [vmem:[%s251 + $0xa4] sm:$0xf]
      %v3927 = vld [vmem:[%s251 + $0xa8] sm:$0xf]
      %v3928 = vld [vmem:[%s251 + $0xac] sm:$0xf]
      %v3929 = vld [vmem:[%s251 + $0xb0] sm:$0xf]
      %v3930 = vld [vmem:[%s251 + $0xb4] sm:$0xf]
      %v3931 = vld [vmem:[%s251 + $0xb8] sm:$0xf]
      %v3932 = vld [vmem:[%s251 + $0xbc] sm:$0xf]
      %v3933 = vld [vmem:[%s251 + $0xc0] sm:$0xf]
      %v3934 = vld [vmem:[%s251 + $0xc4] sm:$0xf]
      %v3935 = vld [vmem:[%s251 + $0xc8] sm:$0xf]
      %v3936 = vld [vmem:[%s251 + $0xcc] sm:$0xf]
      %v3937 = vld [vmem:[%s251 + $0xd0] sm:$0xf]
      %v3938 = vld [vmem:[%s251 + $0xd4] sm:$0xf]
      %v3939 = vld [vmem:[%s251 + $0xd8] sm:$0x1]
      %s3940 = scalar_lea.vmem %s1, 448
      %v3941 = vld [vmem:[%s3940] sm:$0xf]
      %v3942 = vld [vmem:[%s3940 + $0x4] sm:$0xf]
      %v3943 = vld [vmem:[%s3940 + $0x8] sm:$0xf]
      %v3944 = vld [vmem:[%s3940 + $0xc] sm:$0xf]
      %v3945 = vld [vmem:[%s3940 + $0x10] sm:$0xf]
      %v3946 = vld [vmem:[%s3940 + $0x14] sm:$0xf]
      %v3947 = vld [vmem:[%s3940 + $0x18] sm:$0xf]
      %v3948 = vld [vmem:[%s3940 + $0x1c] sm:$0xf]
      %v3949 = vld [vmem:[%s3940 + $0x20] sm:$0xf]
      %v3950 = vld [vmem:[%s3940 + $0x24] sm:$0xf]
      %v3951 = vld [vmem:[%s3940 + $0x28] sm:$0xf]
      %v3952 = vld [vmem:[%s3940 + $0x2c] sm:$0xf]
      %v3953 = vld [vmem:[%s3940 + $0x30] sm:$0xf]
      %v3954 = vld [vmem:[%s3940 + $0x34] sm:$0xf]
      %v3955 = vld [vmem:[%s3940 + $0x38] sm:$0xf]
      %v3956 = vld [vmem:[%s3940 + $0x3c] sm:$0xf]
      %v4006 = vunpack.c.l.b16 %v3891
      %v4007 = vunpack.c.l.b16 %v3892
      %v4008 = vunpack.c.l.b16 %v3893
      %v4009 = vunpack.c.l.b16 %v3894
      %v4010 = vunpack.c.l.b16 %v3895
      %v4011 = vunpack.c.l.b16 %v3896
      %v4012 = vunpack.c.l.b16 %v3897
      %v4013 = vunpack.c.l.b16 %v3898
      %v4014 = vunpack.c.l.b16 %v3899
      %v4015 = vunpack.c.l.b16 %v3900
      %v4016 = vunpack.c.l.b16 %v3901
      %v4017 = vunpack.c.l.b16 %v3902
      %v4018 = vunpack.c.l.b16 %v3903
      %v4019 = vunpack.c.l.b16 %v3904
      %v4020 = vunpack.c.l.b16 %v3905
      %v4021 = vunpack.c.l.b16 %v3906
      %v4022 = vunpack.c.l.b16 %v3907
      %v4023 = vunpack.c.l.b16 %v3908
      %v4024 = vunpack.c.l.b16 %v3909
      %v4025 = vunpack.c.l.b16 %v3910
      %v4026 = vunpack.c.l.b16 %v3911
      %v4027 = vunpack.c.l.b16 %v3912
      %v4028 = vunpack.c.l.b16 %v3913
      %v4029 = vunpack.c.l.b16 %v3914
      %v4030 = vunpack.c.l.b16 %v3915
      %v4031 = vunpack.c.l.b16 %v3916
      %v4032 = vunpack.c.l.b16 %v3917
      %v4033 = vunpack.c.l.b16 %v3918
      %v4034 = vunpack.c.l.b16 %v3919
      %v4035 = vunpack.c.l.b16 %v3920
      %v4036 = vunpack.c.l.b16 %v3921
      %v4037 = vunpack.c.l.b16 %v3922
      %v4038 = vunpack.c.l.b16 %v3923
      %v4039 = vunpack.c.l.b16 %v3924
      %v4040 = vunpack.c.l.b16 %v3925
      %v4041 = vunpack.c.l.b16 %v3926
      %v4042 = vunpack.c.l.b16 %v3927
      %v4043 = vunpack.c.l.b16 %v3928
      %v4044 = vunpack.c.l.b16 %v3929
      %v4045 = vunpack.c.l.b16 %v3930
      %v4046 = vunpack.c.l.b16 %v3931
      %v4047 = vunpack.c.l.b16 %v3932
      %v4048 = vunpack.c.l.b16 %v3933
      %v4049 = vunpack.c.l.b16 %v3934
      %v4050 = vunpack.c.l.b16 %v3935
      %v4051 = vunpack.c.l.b16 %v3936
      %v4052 = vunpack.c.l.b16 %v3937
      %v4053 = vunpack.c.l.b16 %v3938
      %v4054 = vunpack.c.l.b16 %v3939
      %v4055 = vpack.c.b16 %v4007, %v4006
      %v4056 = vpack.c.b16 %v4009, %v4008
      %v4057 = vpack.c.b16 %v4011, %v4010
      %v4058 = vpack.c.b16 %v4013, %v4012
      %v4059 = vpack.c.b16 %v4015, %v4014
      %v4060 = vpack.c.b16 %v4017, %v4016
      %v4061 = vpack.c.b16 %v4019, %v4018
      %v4062 = vpack.c.b16 %v4021, %v4020
      %v4063 = vpack.c.b16 %v4023, %v4022
      %v4064 = vpack.c.b16 %v4025, %v4024
      %v4065 = vpack.c.b16 %v4027, %v4026
      %v4066 = vpack.c.b16 %v4029, %v4028
      %v4067 = vpack.c.b16 %v4031, %v4030
      %v4068 = vpack.c.b16 %v4033, %v4032
      %v4069 = vpack.c.b16 %v4035, %v4034
      %v4070 = vpack.c.b16 %v4037, %v4036
      %v4071 = vpack.c.b16 %v4039, %v4038
      %v4072 = vpack.c.b16 %v4041, %v4040
      %v4073 = vpack.c.b16 %v4043, %v4042
      %v4074 = vpack.c.b16 %v4045, %v4044
      %v4075 = vpack.c.b16 %v4047, %v4046
      %v4076 = vpack.c.b16 %v4049, %v4048
      %v4077 = vpack.c.b16 %v4051, %v4050
      %v4078 = vpack.c.b16 %v4053, %v4052
      %v4079 = vpack.c.b16 %v4054, %v4054
      %v4081 = vshrl.u32 %v4055, 16
      %v4083 = vshll.u32 %v4055, 16
      %v4085 = vrot.slane %v4083, 1
      %v4086 = vor.u32 %v4081, %v4085
      %v4088 = vshll.u32 %v4056, 16
      %v4090 = vrot.slane %v4088, 1
      %v4091 = vsel %vm479, %v4086, %v4090
      %v4092 = vshrl.u32 %v4056, 16
      %v4094 = vor.u32 %v4092, %v4090
      %v4096 = vshll.u32 %v4057, 16
      %v4098 = vrot.slane %v4096, 1
      %v4099 = vsel %vm479, %v4094, %v4098
      %v4100 = vshrl.u32 %v4057, 16
      %v4102 = vor.u32 %v4100, %v4098
      %v4104 = vshll.u32 %v4058, 16
      %v4106 = vrot.slane %v4104, 1
      %v4107 = vsel %vm479, %v4102, %v4106
      %v4108 = vshrl.u32 %v4058, 16
      %v4110 = vor.u32 %v4108, %v4106
      %v4112 = vshll.u32 %v4059, 16
      %v4114 = vrot.slane %v4112, 1
      %v4115 = vsel %vm479, %v4110, %v4114
      %v4116 = vshrl.u32 %v4059, 16
      %v4118 = vor.u32 %v4116, %v4114
      %v4120 = vshll.u32 %v4060, 16
      %v4122 = vrot.slane %v4120, 1
      %v4123 = vsel %vm479, %v4118, %v4122
      %v4124 = vshrl.u32 %v4060, 16
      %v4126 = vor.u32 %v4124, %v4122
      %v4128 = vshll.u32 %v4061, 16
      %v4130 = vrot.slane %v4128, 1
      %v4131 = vsel %vm479, %v4126, %v4130
      %v4132 = vshrl.u32 %v4061, 16
      %v4134 = vor.u32 %v4132, %v4130
      %v4136 = vshll.u32 %v4062, 16
      %v4138 = vrot.slane %v4136, 1
      %v4139 = vsel %vm479, %v4134, %v4138
      %v4140 = vshrl.u32 %v4062, 16
      %v4142 = vor.u32 %v4140, %v4138
      %v4144 = vshll.u32 %v4063, 16
      %v4146 = vrot.slane %v4144, 1
      %v4147 = vsel %vm479, %v4142, %v4146
      %v4148 = vshrl.u32 %v4063, 16
      %v4150 = vor.u32 %v4148, %v4146
      %v4152 = vshll.u32 %v4064, 16
      %v4154 = vrot.slane %v4152, 1
      %v4155 = vsel %vm479, %v4150, %v4154
      %v4156 = vshrl.u32 %v4064, 16
      %v4158 = vor.u32 %v4156, %v4154
      %v4160 = vshll.u32 %v4065, 16
      %v4162 = vrot.slane %v4160, 1
      %v4163 = vsel %vm479, %v4158, %v4162
      %v4164 = vshrl.u32 %v4065, 16
      %v4166 = vor.u32 %v4164, %v4162
      %v4168 = vshll.u32 %v4066, 16
      %v4170 = vrot.slane %v4168, 1
      %v4171 = vsel %vm479, %v4166, %v4170
      %v4172 = vshrl.u32 %v4066, 16
      %v4174 = vor.u32 %v4172, %v4170
      %v4176 = vshll.u32 %v4067, 16
      %v4178 = vrot.slane %v4176, 1
      %v4179 = vsel %vm479, %v4174, %v4178
      %v4180 = vshrl.u32 %v4067, 16
      %v4182 = vor.u32 %v4180, %v4178
      %v4184 = vshll.u32 %v4068, 16
      %v4186 = vrot.slane %v4184, 1
      %v4187 = vsel %vm479, %v4182, %v4186
      %v4188 = vshrl.u32 %v4068, 16
      %v4190 = vor.u32 %v4188, %v4186
      %v4192 = vshll.u32 %v4069, 16
      %v4194 = vrot.slane %v4192, 1
      %v4195 = vsel %vm479, %v4190, %v4194
      %v4196 = vshrl.u32 %v4069, 16
      %v4198 = vor.u32 %v4196, %v4194
      %v4200 = vshll.u32 %v4070, 16
      %v4202 = vrot.slane %v4200, 1
      %v4203 = vsel %vm479, %v4198, %v4202
      %v4204 = vshrl.u32 %v4070, 16
      %v4206 = vor.u32 %v4204, %v4202
      %v4208 = vshll.u32 %v4071, 16
      %v4210 = vrot.slane %v4208, 1
      %v4211 = vsel %vm479, %v4206, %v4210
      %v4212 = vshrl.u32 %v4071, 16
      %v4214 = vor.u32 %v4212, %v4210
      %v4216 = vshll.u32 %v4072, 16
      %v4218 = vrot.slane %v4216, 1
      %v4219 = vsel %vm479, %v4214, %v4218
      %v4220 = vshrl.u32 %v4072, 16
      %v4222 = vor.u32 %v4220, %v4218
      %v4224 = vshll.u32 %v4073, 16
      %v4226 = vrot.slane %v4224, 1
      %v4227 = vsel %vm479, %v4222, %v4226
      %v4228 = vshrl.u32 %v4073, 16
      %v4230 = vor.u32 %v4228, %v4226
      %v4232 = vshll.u32 %v4074, 16
      %v4234 = vrot.slane %v4232, 1
      %v4235 = vsel %vm479, %v4230, %v4234
      %v4236 = vshrl.u32 %v4074, 16
      %v4238 = vor.u32 %v4236, %v4234
      %v4240 = vshll.u32 %v4075, 16
      %v4242 = vrot.slane %v4240, 1
      %v4243 = vsel %vm479, %v4238, %v4242
      %v4244 = vshrl.u32 %v4075, 16
      %v4246 = vor.u32 %v4244, %v4242
      %v4248 = vshll.u32 %v4076, 16
      %v4250 = vrot.slane %v4248, 1
      %v4251 = vsel %vm479, %v4246, %v4250
      %v4252 = vshrl.u32 %v4076, 16
      %v4254 = vor.u32 %v4252, %v4250
      %v4256 = vshll.u32 %v4077, 16
      %v4258 = vrot.slane %v4256, 1
      %v4259 = vsel %vm479, %v4254, %v4258
      %v4260 = vshrl.u32 %v4077, 16
      %v4262 = vor.u32 %v4260, %v4258
      %v4264 = vshll.u32 %v4078, 16
      %v4266 = vrot.slane %v4264, 1
      %v4267 = vsel %vm479, %v4262, %v4266
      %v4268 = vshrl.u32 %v4078, 16
      %v4270 = vor.u32 %v4268, %v4266
      %v4272 = vshll.u32 %v4079, 16
      %v4274 = vrot.slane %v4272, 1
      %v4275 = vsel %vm479, %v4270, %v4274
      %v4316 = vunpack.c.l.b16 %v3941
      %v4317 = vunpack.c.l.b16 %v3942
      %v4318 = vunpack.c.l.b16 %v3943
      %v4319 = vunpack.c.l.b16 %v3944
      %v4320 = vunpack.c.l.b16 %v3945
      %v4321 = vunpack.c.l.b16 %v3946
      %v4322 = vunpack.c.l.b16 %v3947
      %v4323 = vunpack.c.l.b16 %v3948
      %v4324 = vunpack.c.l.b16 %v3949
      %v4325 = vunpack.c.l.b16 %v3950
      %v4326 = vunpack.c.l.b16 %v3951
      %v4327 = vunpack.c.l.b16 %v3952
      %v4328 = vunpack.c.l.b16 %v3953
      %v4329 = vunpack.c.l.b16 %v3954
      %v4330 = vunpack.c.l.b16 %v3955
      %v4331 = vunpack.c.l.b16 %v3956
      %v4332 = vpack.c.b16 %v4317, %v4316
      %v4333 = vpack.c.b16 %v4319, %v4318
      %v4334 = vpack.c.b16 %v4321, %v4320
      %v4335 = vpack.c.b16 %v4323, %v4322
      %v4336 = vpack.c.b16 %v4325, %v4324
      %v4337 = vpack.c.b16 %v4327, %v4326
      %v4338 = vpack.c.b16 %v4329, %v4328
      %v4339 = vpack.c.b16 %v4331, %v4330
      %4348 = vmatprep.subr.bf16.mxu0 0
      %4349 = vmatpush1.bf16.msra.mxu0 %v4339
      %4350 = vmatprep.subr.bf16.mxu0 0
      %4351 = vmatpush1.bf16.msra.mxu0 %v4338
      %4352 = vmatprep.subr.bf16.mxu0 0
      %4353 = vmatpush1.bf16.msra.mxu0 %v4337
      %4354 = vmatprep.subr.bf16.mxu0 0
      %4355 = vmatpush1.bf16.msra.mxu0 %v4336
      %4356 = vmatprep.subr.bf16.mxu0 0
      %4357 = vmatpush1.bf16.msra.mxu0 %v4335
      %4358 = vmatprep.subr.bf16.mxu0 0
      %4359 = vmatpush1.bf16.msra.mxu0 %v4334
      %4360 = vmatprep.subr.bf16.mxu0 0
      %4361 = vmatpush1.bf16.msra.mxu0 %v4333
      %4362 = vmatprep.subr.bf16.mxu0 0
      %4363 = vmatpush1.bf16.msra.mxu0 %v4332
      %4364 = vmatprep.subr.bf16.mxu0 0
      %4365 = vmatpush2.bf16.msra.mxu0 0
      %4366 = vmatprep.subr.bf16.mxu0 0
      %4367 = vmatpush2.bf16.msra.mxu0 0
      %4368 = vmatprep.subr.bf16.mxu0 0
      %4369 = vmatpush2.bf16.msra.mxu0 0
      %4370 = vmatprep.subr.bf16.mxu0 0
      %4371 = vmatpush2.bf16.msra.mxu0 0
      %4372 = vmatprep.subr.bf16.mxu0 0
      %4373 = vmatpush2.bf16.msra.mxu0 0
      %4374 = vmatprep.subr.bf16.mxu0 0
      %4375 = vmatpush2.bf16.msra.mxu0 0
      %4376 = vmatprep.subr.bf16.mxu0 0
      %4377 = vmatpush2.bf16.msra.mxu0 0
      %4378 = vmatprep.subr.bf16.mxu0 0
      %4379 = vmatpush2.bf16.msra.mxu0 0
      %4380 = vmatprep.mubr.bf16.mxu0 0
      %4381 = vmatmul.mubr.bf16.gmra.mxu0 %v4091
      %v4382 = vpop.f32.mrf.mxu0
      %v4383 = vadd.f32 0.0, %v4382
      %v4384 = vpop.f32.mrf.mxu0
      %v4385 = vpop.f32.mrf.mxu0
      %v4386 = vadd.f32 0.0, %v4385
      %v4387 = vpop.f32.mrf.mxu0
      %4388 = vmatprep.mubr.bf16.mxu0 0
      %4389 = vmatmul.mubr.bf16.gmra.mxu0 %v4099
      %v4390 = vpop.f32.mrf.mxu0
      %v4391 = vadd.f32 0.0, %v4390
      %v4392 = vpop.f32.mrf.mxu0
      %v4393 = vpop.f32.mrf.mxu0
      %v4394 = vadd.f32 0.0, %v4393
      %v4395 = vpop.f32.mrf.mxu0
      %4396 = vmatprep.mubr.bf16.mxu0 0
      %4397 = vmatmul.mubr.bf16.gmra.mxu0 %v4107
      %v4398 = vpop.f32.mrf.mxu0
      %v4399 = vadd.f32 0.0, %v4398
      %v4400 = vpop.f32.mrf.mxu0
      %v4401 = vpop.f32.mrf.mxu0
      %v4402 = vadd.f32 0.0, %v4401
      %v4403 = vpop.f32.mrf.mxu0
      %4404 = vmatprep.mubr.bf16.mxu0 0
      %4405 = vmatmul.mubr.bf16.gmra.mxu0 %v4115
      %v4406 = vpop.f32.mrf.mxu0
      %v4407 = vadd.f32 0.0, %v4406
      %v4408 = vpop.f32.mrf.mxu0
      %v4409 = vpop.f32.mrf.mxu0
      %v4410 = vadd.f32 0.0, %v4409
      %v4411 = vpop.f32.mrf.mxu0
      %4412 = vmatprep.mubr.bf16.mxu0 0
      %4413 = vmatmul.mubr.bf16.gmra.mxu0 %v4123
      %v4414 = vpop.f32.mrf.mxu0
      %v4415 = vadd.f32 0.0, %v4414
      %v4416 = vpop.f32.mrf.mxu0
      %v4417 = vpop.f32.mrf.mxu0
      %v4418 = vadd.f32 0.0, %v4417
      %v4419 = vpop.f32.mrf.mxu0
      %4420 = vmatprep.mubr.bf16.mxu0 0
      %4421 = vmatmul.mubr.bf16.gmra.mxu0 %v4131
      %v4422 = vpop.f32.mrf.mxu0
      %v4423 = vadd.f32 0.0, %v4422
      %v4424 = vpop.f32.mrf.mxu0
      %v4425 = vpop.f32.mrf.mxu0
      %v4426 = vadd.f32 0.0, %v4425
      %v4427 = vpop.f32.mrf.mxu0
      %4428 = vmatprep.mubr.bf16.mxu0 0
      %4429 = vmatmul.mubr.bf16.gmra.mxu0 %v4139
      %v4430 = vpop.f32.mrf.mxu0
      %v4431 = vadd.f32 0.0, %v4430
      %v4432 = vpop.f32.mrf.mxu0
      %v4433 = vpop.f32.mrf.mxu0
      %v4434 = vadd.f32 0.0, %v4433
      %v4435 = vpop.f32.mrf.mxu0
      %4436 = vmatprep.mubr.bf16.mxu0 0
      %4437 = vmatmul.mubr.bf16.gmra.mxu0 %v4147
      %v4438 = vpop.f32.mrf.mxu0
      %v4439 = vadd.f32 0.0, %v4438
      %v4440 = vpop.f32.mrf.mxu0
      %v4441 = vpop.f32.mrf.mxu0
      %v4442 = vadd.f32 0.0, %v4441
      %v4443 = vpop.f32.mrf.mxu0
      %4444 = vmatprep.mubr.bf16.mxu0 0
      %4445 = vmatmul.mubr.bf16.gmra.mxu0 %v4155
      %v4446 = vpop.f32.mrf.mxu0
      %v4447 = vadd.f32 0.0, %v4446
      %v4448 = vpop.f32.mrf.mxu0
      %v4449 = vpop.f32.mrf.mxu0
      %v4450 = vadd.f32 0.0, %v4449
      %v4451 = vpop.f32.mrf.mxu0
      %4452 = vmatprep.mubr.bf16.mxu0 0
      %4453 = vmatmul.mubr.bf16.gmra.mxu0 %v4163
      %v4454 = vpop.f32.mrf.mxu0
      %v4455 = vadd.f32 0.0, %v4454
      %v4456 = vpop.f32.mrf.mxu0
      %v4457 = vpop.f32.mrf.mxu0
      %v4458 = vadd.f32 0.0, %v4457
      %v4459 = vpop.f32.mrf.mxu0
      %4460 = vmatprep.mubr.bf16.mxu0 0
      %4461 = vmatmul.mubr.bf16.gmra.mxu0 %v4171
      %v4462 = vpop.f32.mrf.mxu0
      %v4463 = vadd.f32 0.0, %v4462
      %v4464 = vpop.f32.mrf.mxu0
      %v4465 = vpop.f32.mrf.mxu0
      %v4466 = vadd.f32 0.0, %v4465
      %v4467 = vpop.f32.mrf.mxu0
      %4468 = vmatprep.mubr.bf16.mxu0 0
      %4469 = vmatmul.mubr.bf16.gmra.mxu0 %v4179
      %v4470 = vpop.f32.mrf.mxu0
      %v4471 = vadd.f32 0.0, %v4470
      %v4472 = vpop.f32.mrf.mxu0
      %v4473 = vpop.f32.mrf.mxu0
      %v4474 = vadd.f32 0.0, %v4473
      %v4475 = vpop.f32.mrf.mxu0
      %4476 = vmatprep.mubr.bf16.mxu0 0
      %4477 = vmatmul.mubr.bf16.gmra.mxu0 %v4187
      %v4478 = vpop.f32.mrf.mxu0
      %v4479 = vadd.f32 0.0, %v4478
      %v4480 = vpop.f32.mrf.mxu0
      %v4481 = vpop.f32.mrf.mxu0
      %v4482 = vadd.f32 0.0, %v4481
      %v4483 = vpop.f32.mrf.mxu0
      %4484 = vmatprep.mubr.bf16.mxu0 0
      %4485 = vmatmul.mubr.bf16.gmra.mxu0 %v4195
      %v4486 = vpop.f32.mrf.mxu0
      %v4487 = vadd.f32 0.0, %v4486
      %v4488 = vpop.f32.mrf.mxu0
      %v4489 = vpop.f32.mrf.mxu0
      %v4490 = vadd.f32 0.0, %v4489
      %v4491 = vpop.f32.mrf.mxu0
      %4492 = vmatprep.mubr.bf16.mxu0 0
      %4493 = vmatmul.mubr.bf16.gmra.mxu0 %v4203
      %v4494 = vpop.f32.mrf.mxu0
      %v4495 = vadd.f32 0.0, %v4494
      %v4496 = vpop.f32.mrf.mxu0
      %v4497 = vpop.f32.mrf.mxu0
      %v4498 = vadd.f32 0.0, %v4497
      %v4499 = vpop.f32.mrf.mxu0
      %4500 = vmatprep.mubr.bf16.mxu0 0
      %4501 = vmatmul.mubr.bf16.gmra.mxu0 %v4211
      %v4502 = vpop.f32.mrf.mxu0
      %v4503 = vadd.f32 0.0, %v4502
      %v4504 = vpop.f32.mrf.mxu0
      %v4505 = vpop.f32.mrf.mxu0
      %v4506 = vadd.f32 0.0, %v4505
      %v4507 = vpop.f32.mrf.mxu0
      %4508 = vmatprep.mubr.bf16.mxu0 0
      %4509 = vmatmul.mubr.bf16.gmra.mxu0 %v4219
      %v4510 = vpop.f32.mrf.mxu0
      %v4511 = vadd.f32 0.0, %v4510
      %v4512 = vpop.f32.mrf.mxu0
      %v4513 = vpop.f32.mrf.mxu0
      %v4514 = vadd.f32 0.0, %v4513
      %v4515 = vpop.f32.mrf.mxu0
      %4516 = vmatprep.mubr.bf16.mxu0 0
      %4517 = vmatmul.mubr.bf16.gmra.mxu0 %v4227
      %v4518 = vpop.f32.mrf.mxu0
      %v4519 = vadd.f32 0.0, %v4518
      %v4520 = vpop.f32.mrf.mxu0
      %v4521 = vpop.f32.mrf.mxu0
      %v4522 = vadd.f32 0.0, %v4521
      %v4523 = vpop.f32.mrf.mxu0
      %4524 = vmatprep.mubr.bf16.mxu0 0
      %4525 = vmatmul.mubr.bf16.gmra.mxu0 %v4235
      %v4526 = vpop.f32.mrf.mxu0
      %v4527 = vadd.f32 0.0, %v4526
      %v4528 = vpop.f32.mrf.mxu0
      %v4529 = vpop.f32.mrf.mxu0
      %v4530 = vadd.f32 0.0, %v4529
      %v4531 = vpop.f32.mrf.mxu0
      %4532 = vmatprep.mubr.bf16.mxu0 0
      %4533 = vmatmul.mubr.bf16.gmra.mxu0 %v4243
      %v4534 = vpop.f32.mrf.mxu0
      %v4535 = vadd.f32 0.0, %v4534
      %v4536 = vpop.f32.mrf.mxu0
      %v4537 = vpop.f32.mrf.mxu0
      %v4538 = vadd.f32 0.0, %v4537
      %v4539 = vpop.f32.mrf.mxu0
      %4540 = vmatprep.mubr.bf16.mxu0 0
      %4541 = vmatmul.mubr.bf16.gmra.mxu0 %v4251
      %v4542 = vpop.f32.mrf.mxu0
      %v4543 = vadd.f32 0.0, %v4542
      %v4544 = vpop.f32.mrf.mxu0
      %v4545 = vpop.f32.mrf.mxu0
      %v4546 = vadd.f32 0.0, %v4545
      %v4547 = vpop.f32.mrf.mxu0
      %4548 = vmatprep.mubr.bf16.mxu0 0
      %4549 = vmatmul.mubr.bf16.gmra.mxu0 %v4259
      %v4550 = vpop.f32.mrf.mxu0
      %v4551 = vadd.f32 0.0, %v4550
      %v4552 = vpop.f32.mrf.mxu0
      %v4553 = vpop.f32.mrf.mxu0
      %v4554 = vadd.f32 0.0, %v4553
      %v4555 = vpop.f32.mrf.mxu0
      %4556 = vmatprep.mubr.bf16.mxu0 0
      %4557 = vmatmul.mubr.bf16.gmra.mxu0 %v4267
      %v4558 = vpop.f32.mrf.mxu0
      %v4559 = vadd.f32 0.0, %v4558
      %v4560 = vpop.f32.mrf.mxu0
      %v4561 = vpop.f32.mrf.mxu0
      %v4562 = vadd.f32 0.0, %v4561
      %v4563 = vpop.f32.mrf.mxu0
      %4564 = vmatprep.mubr.bf16.mxu0 0
      %4565 = vmatmul.mubr.bf16.gmra.mxu0 %v4275
      %v4566 = vpop.f32.mrf.mxu0
      %v4567 = vadd.f32 0.0, %v4566
      %v4568 = vpop.f32.mrf.mxu0
      %v4569 = vpop.f32.mrf.mxu0
      %v4570 = vadd.f32 0.0, %v4569
      %v4571 = vpop.f32.mrf.mxu0
      %4572 = vdwg.mxu0
      %v4573 = vadd.f32 %v3843, %v4383
      %v4574 = vadd.f32 %v3844, %v4386
      %v4575 = vadd.f32 %v3845, %v4391
      %v4576 = vadd.f32 %v3846, %v4394
      %v4577 = vadd.f32 %v3847, %v4399
      %v4578 = vadd.f32 %v3848, %v4402
      %v4579 = vadd.f32 %v3849, %v4407
      %v4580 = vadd.f32 %v3850, %v4410
      %v4581 = vadd.f32 %v3851, %v4415
      %v4582 = vadd.f32 %v3852, %v4418
      %v4583 = vadd.f32 %v3853, %v4423
      %v4584 = vadd.f32 %v3854, %v4426
      %v4585 = vadd.f32 %v3855, %v4431
      %v4586 = vadd.f32 %v3856, %v4434
      %v4587 = vadd.f32 %v3857, %v4439
      %v4588 = vadd.f32 %v3858, %v4442
      %v4589 = vadd.f32 %v3859, %v4447
      %v4590 = vadd.f32 %v3860, %v4450
      %v4591 = vadd.f32 %v3861, %v4455
      %v4592 = vadd.f32 %v3862, %v4458
      %v4593 = vadd.f32 %v3863, %v4463
      %v4594 = vadd.f32 %v3864, %v4466
      %v4595 = vadd.f32 %v3865, %v4471
      %v4596 = vadd.f32 %v3866, %v4474
      %v4597 = vadd.f32 %v3867, %v4479
      %v4598 = vadd.f32 %v3868, %v4482
      %v4599 = vadd.f32 %v3869, %v4487
      %v4600 = vadd.f32 %v3870, %v4490
      %v4601 = vadd.f32 %v3871, %v4495
      %v4602 = vadd.f32 %v3872, %v4498
      %v4603 = vadd.f32 %v3873, %v4503
      %v4604 = vadd.f32 %v3874, %v4506
      %v4605 = vadd.f32 %v3875, %v4511
      %v4606 = vadd.f32 %v3876, %v4514
      %v4607 = vadd.f32 %v3877, %v4519
      %v4608 = vadd.f32 %v3878, %v4522
      %v4609 = vadd.f32 %v3879, %v4527
      %v4610 = vadd.f32 %v3880, %v4530
      %v4611 = vadd.f32 %v3881, %v4535
      %v4612 = vadd.f32 %v3882, %v4538
      %v4613 = vadd.f32 %v3883, %v4543
      %v4614 = vadd.f32 %v3884, %v4546
      %v4615 = vadd.f32 %v3885, %v4551
      %v4616 = vadd.f32 %v3886, %v4554
      %v4617 = vadd.f32 %v3887, %v4559
      %v4618 = vadd.f32 %v3888, %v4562
      %v4619 = vadd.f32 %v3889, %v4567
      %v4620 = vadd.f32 %v3890, %v4570
      %v4621 = vld [vmem:[%s251 + $0x18] sm:$0xe]
      %s4622 = scalar_lea.vmem %s1, 512
      %v4623 = vld [vmem:[%s4622] sm:$0xf]
      %v4624 = vld [vmem:[%s4622 + $0x4] sm:$0xf]
      %v4625 = vld [vmem:[%s4622 + $0x8] sm:$0xf]
      %v4626 = vld [vmem:[%s4622 + $0xc] sm:$0xf]
      %v4627 = vld [vmem:[%s4622 + $0x10] sm:$0xf]
      %v4628 = vld [vmem:[%s4622 + $0x14] sm:$0xf]
      %v4629 = vld [vmem:[%s4622 + $0x18] sm:$0xf]
      %v4630 = vld [vmem:[%s4622 + $0x1c] sm:$0xf]
      %v4631 = vld [vmem:[%s4622 + $0x20] sm:$0xf]
      %v4632 = vld [vmem:[%s4622 + $0x24] sm:$0xf]
      %v4633 = vld [vmem:[%s4622 + $0x28] sm:$0xf]
      %v4634 = vld [vmem:[%s4622 + $0x2c] sm:$0xf]
      %v4635 = vld [vmem:[%s4622 + $0x30] sm:$0xf]
      %v4636 = vld [vmem:[%s4622 + $0x34] sm:$0xf]
      %v4637 = vld [vmem:[%s4622 + $0x38] sm:$0xf]
      %v4638 = vld [vmem:[%s4622 + $0x3c] sm:$0xf]
      %v4640 = vunpack.c.l.b16 %v4621
      %v4641 = vpack.c.b16 %v4007, %v4640
      %v4642 = vrot.slane %v4641, 1
      %v4643 = vrot.slane %v4056, 1
      %v4644 = vsel %vm1291, %v4642, %v4643
      %v4645 = vrot.slane %v4057, 1
      %v4646 = vsel %vm1291, %v4643, %v4645
      %v4647 = vrot.slane %v4058, 1
      %v4648 = vsel %vm1291, %v4645, %v4647
      %v4649 = vrot.slane %v4059, 1
      %v4650 = vsel %vm1291, %v4647, %v4649
      %v4651 = vrot.slane %v4060, 1
      %v4652 = vsel %vm1291, %v4649, %v4651
      %v4653 = vrot.slane %v4061, 1
      %v4654 = vsel %vm1291, %v4651, %v4653
      %v4655 = vrot.slane %v4062, 1
      %v4656 = vsel %vm1291, %v4653, %v4655
      %v4657 = vrot.slane %v4063, 1
      %v4658 = vsel %vm1291, %v4655, %v4657
      %v4659 = vrot.slane %v4064, 1
      %v4660 = vsel %vm1291, %v4657, %v4659
      %v4661 = vrot.slane %v4065, 1
      %v4662 = vsel %vm1291, %v4659, %v4661
      %v4663 = vrot.slane %v4066, 1
      %v4664 = vsel %vm1291, %v4661, %v4663
      %v4665 = vrot.slane %v4067, 1
      %v4666 = vsel %vm1291, %v4663, %v4665
      %v4667 = vrot.slane %v4068, 1
      %v4668 = vsel %vm1291, %v4665, %v4667
      %v4669 = vrot.slane %v4069, 1
      %v4670 = vsel %vm1291, %v4667, %v4669
      %v4671 = vrot.slane %v4070, 1
      %v4672 = vsel %vm1291, %v4669, %v4671
      %v4673 = vrot.slane %v4071, 1
      %v4674 = vsel %vm1291, %v4671, %v4673
      %v4675 = vrot.slane %v4072, 1
      %v4676 = vsel %vm1291, %v4673, %v4675
      %v4677 = vrot.slane %v4073, 1
      %v4678 = vsel %vm1291, %v4675, %v4677
      %v4679 = vrot.slane %v4074, 1
      %v4680 = vsel %vm1291, %v4677, %v4679
      %v4681 = vrot.slane %v4075, 1
      %v4682 = vsel %vm1291, %v4679, %v4681
      %v4683 = vrot.slane %v4076, 1
      %v4684 = vsel %vm1291, %v4681, %v4683
      %v4685 = vrot.slane %v4077, 1
      %v4686 = vsel %vm1291, %v4683, %v4685
      %v4687 = vrot.slane %v4078, 1
      %v4688 = vsel %vm1291, %v4685, %v4687
      %v4689 = vrot.slane %v4079, 1
      %v4690 = vsel %vm1291, %v4687, %v4689
      %v4731 = vunpack.c.l.b16 %v4623
      %v4732 = vunpack.c.l.b16 %v4624
      %v4733 = vunpack.c.l.b16 %v4625
      %v4734 = vunpack.c.l.b16 %v4626
      %v4735 = vunpack.c.l.b16 %v4627
      %v4736 = vunpack.c.l.b16 %v4628
      %v4737 = vunpack.c.l.b16 %v4629
      %v4738 = vunpack.c.l.b16 %v4630
      %v4739 = vunpack.c.l.b16 %v4631
      %v4740 = vunpack.c.l.b16 %v4632
      %v4741 = vunpack.c.l.b16 %v4633
      %v4742 = vunpack.c.l.b16 %v4634
      %v4743 = vunpack.c.l.b16 %v4635
      %v4744 = vunpack.c.l.b16 %v4636
      %v4745 = vunpack.c.l.b16 %v4637
      %v4746 = vunpack.c.l.b16 %v4638
      %v4747 = vpack.c.b16 %v4732, %v4731
      %v4748 = vpack.c.b16 %v4734, %v4733
      %v4749 = vpack.c.b16 %v4736, %v4735
      %v4750 = vpack.c.b16 %v4738, %v4737
      %v4751 = vpack.c.b16 %v4740, %v4739
      %v4752 = vpack.c.b16 %v4742, %v4741
      %v4753 = vpack.c.b16 %v4744, %v4743
      %v4754 = vpack.c.b16 %v4746, %v4745
      %4763 = vmatprep.subr.bf16.mxu0 0
      %4764 = vmatpush1.bf16.msra.mxu0 %v4754
      %4765 = vmatprep.subr.bf16.mxu0 0
      %4766 = vmatpush1.bf16.msra.mxu0 %v4753
      %4767 = vmatprep.subr.bf16.mxu0 0
      %4768 = vmatpush1.bf16.msra.mxu0 %v4752
      %4769 = vmatprep.subr.bf16.mxu0 0
      %4770 = vmatpush1.bf16.msra.mxu0 %v4751
      %4771 = vmatprep.subr.bf16.mxu0 0
      %4772 = vmatpush1.bf16.msra.mxu0 %v4750
      %4773 = vmatprep.subr.bf16.mxu0 0
      %4774 = vmatpush1.bf16.msra.mxu0 %v4749
      %4775 = vmatprep.subr.bf16.mxu0 0
      %4776 = vmatpush1.bf16.msra.mxu0 %v4748
      %4777 = vmatprep.subr.bf16.mxu0 0
      %4778 = vmatpush1.bf16.msra.mxu0 %v4747
      %4779 = vmatprep.subr.bf16.mxu0 0
      %4780 = vmatpush2.bf16.msra.mxu0 0
      %4781 = vmatprep.subr.bf16.mxu0 0
      %4782 = vmatpush2.bf16.msra.mxu0 0
      %4783 = vmatprep.subr.bf16.mxu0 0
      %4784 = vmatpush2.bf16.msra.mxu0 0
      %4785 = vmatprep.subr.bf16.mxu0 0
      %4786 = vmatpush2.bf16.msra.mxu0 0
      %4787 = vmatprep.subr.bf16.mxu0 0
      %4788 = vmatpush2.bf16.msra.mxu0 0
      %4789 = vmatprep.subr.bf16.mxu0 0
      %4790 = vmatpush2.bf16.msra.mxu0 0
      %4791 = vmatprep.subr.bf16.mxu0 0
      %4792 = vmatpush2.bf16.msra.mxu0 0
      %4793 = vmatprep.subr.bf16.mxu0 0
      %4794 = vmatpush2.bf16.msra.mxu0 0
      %4795 = vmatprep.mubr.bf16.mxu0 0
      %4796 = vmatmul.mubr.bf16.gmra.mxu0 %v4644
      %v4797 = vpop.f32.mrf.mxu0
      %v4798 = vadd.f32 0.0, %v4797
      %v4799 = vpop.f32.mrf.mxu0
      %v4800 = vpop.f32.mrf.mxu0
      %v4801 = vadd.f32 0.0, %v4800
      %v4802 = vpop.f32.mrf.mxu0
      %4803 = vmatprep.mubr.bf16.mxu0 0
      %4804 = vmatmul.mubr.bf16.gmra.mxu0 %v4646
      %v4805 = vpop.f32.mrf.mxu0
      %v4806 = vadd.f32 0.0, %v4805
      %v4807 = vpop.f32.mrf.mxu0
      %v4808 = vpop.f32.mrf.mxu0
      %v4809 = vadd.f32 0.0, %v4808
      %v4810 = vpop.f32.mrf.mxu0
      %4811 = vmatprep.mubr.bf16.mxu0 0
      %4812 = vmatmul.mubr.bf16.gmra.mxu0 %v4648
      %v4813 = vpop.f32.mrf.mxu0
      %v4814 = vadd.f32 0.0, %v4813
      %v4815 = vpop.f32.mrf.mxu0
      %v4816 = vpop.f32.mrf.mxu0
      %v4817 = vadd.f32 0.0, %v4816
      %v4818 = vpop.f32.mrf.mxu0
      %4819 = vmatprep.mubr.bf16.mxu0 0
      %4820 = vmatmul.mubr.bf16.gmra.mxu0 %v4650
      %v4821 = vpop.f32.mrf.mxu0
      %v4822 = vadd.f32 0.0, %v4821
      %v4823 = vpop.f32.mrf.mxu0
      %v4824 = vpop.f32.mrf.mxu0
      %v4825 = vadd.f32 0.0, %v4824
      %v4826 = vpop.f32.mrf.mxu0
      %4827 = vmatprep.mubr.bf16.mxu0 0
      %4828 = vmatmul.mubr.bf16.gmra.mxu0 %v4652
      %v4829 = vpop.f32.mrf.mxu0
      %v4830 = vadd.f32 0.0, %v4829
      %v4831 = vpop.f32.mrf.mxu0
      %v4832 = vpop.f32.mrf.mxu0
      %v4833 = vadd.f32 0.0, %v4832
      %v4834 = vpop.f32.mrf.mxu0
      %4835 = vmatprep.mubr.bf16.mxu0 0
      %4836 = vmatmul.mubr.bf16.gmra.mxu0 %v4654
      %v4837 = vpop.f32.mrf.mxu0
      %v4838 = vadd.f32 0.0, %v4837
      %v4839 = vpop.f32.mrf.mxu0
      %v4840 = vpop.f32.mrf.mxu0
      %v4841 = vadd.f32 0.0, %v4840
      %v4842 = vpop.f32.mrf.mxu0
      %4843 = vmatprep.mubr.bf16.mxu0 0
      %4844 = vmatmul.mubr.bf16.gmra.mxu0 %v4656
      %v4845 = vpop.f32.mrf.mxu0
      %v4846 = vadd.f32 0.0, %v4845
      %v4847 = vpop.f32.mrf.mxu0
      %v4848 = vpop.f32.mrf.mxu0
      %v4849 = vadd.f32 0.0, %v4848
      %v4850 = vpop.f32.mrf.mxu0
      %4851 = vmatprep.mubr.bf16.mxu0 0
      %4852 = vmatmul.mubr.bf16.gmra.mxu0 %v4658
      %v4853 = vpop.f32.mrf.mxu0
      %v4854 = vadd.f32 0.0, %v4853
      %v4855 = vpop.f32.mrf.mxu0
      %v4856 = vpop.f32.mrf.mxu0
      %v4857 = vadd.f32 0.0, %v4856
      %v4858 = vpop.f32.mrf.mxu0
      %4859 = vmatprep.mubr.bf16.mxu0 0
      %4860 = vmatmul.mubr.bf16.gmra.mxu0 %v4660
      %v4861 = vpop.f32.mrf.mxu0
      %v4862 = vadd.f32 0.0, %v4861
      %v4863 = vpop.f32.mrf.mxu0
      %v4864 = vpop.f32.mrf.mxu0
      %v4865 = vadd.f32 0.0, %v4864
      %v4866 = vpop.f32.mrf.mxu0
      %4867 = vmatprep.mubr.bf16.mxu0 0
      %4868 = vmatmul.mubr.bf16.gmra.mxu0 %v4662
      %v4869 = vpop.f32.mrf.mxu0
      %v4870 = vadd.f32 0.0, %v4869
      %v4871 = vpop.f32.mrf.mxu0
      %v4872 = vpop.f32.mrf.mxu0
      %v4873 = vadd.f32 0.0, %v4872
      %v4874 = vpop.f32.mrf.mxu0
      %4875 = vmatprep.mubr.bf16.mxu0 0
      %4876 = vmatmul.mubr.bf16.gmra.mxu0 %v4664
      %v4877 = vpop.f32.mrf.mxu0
      %v4878 = vadd.f32 0.0, %v4877
      %v4879 = vpop.f32.mrf.mxu0
      %v4880 = vpop.f32.mrf.mxu0
      %v4881 = vadd.f32 0.0, %v4880
      %v4882 = vpop.f32.mrf.mxu0
      %4883 = vmatprep.mubr.bf16.mxu0 0
      %4884 = vmatmul.mubr.bf16.gmra.mxu0 %v4666
      %v4885 = vpop.f32.mrf.mxu0
      %v4886 = vadd.f32 0.0, %v4885
      %v4887 = vpop.f32.mrf.mxu0
      %v4888 = vpop.f32.mrf.mxu0
      %v4889 = vadd.f32 0.0, %v4888
      %v4890 = vpop.f32.mrf.mxu0
      %4891 = vmatprep.mubr.bf16.mxu0 0
      %4892 = vmatmul.mubr.bf16.gmra.mxu0 %v4668
      %v4893 = vpop.f32.mrf.mxu0
      %v4894 = vadd.f32 0.0, %v4893
      %v4895 = vpop.f32.mrf.mxu0
      %v4896 = vpop.f32.mrf.mxu0
      %v4897 = vadd.f32 0.0, %v4896
      %v4898 = vpop.f32.mrf.mxu0
      %4899 = vmatprep.mubr.bf16.mxu0 0
      %4900 = vmatmul.mubr.bf16.gmra.mxu0 %v4670
      %v4901 = vpop.f32.mrf.mxu0
      %v4902 = vadd.f32 0.0, %v4901
      %v4903 = vpop.f32.mrf.mxu0
      %v4904 = vpop.f32.mrf.mxu0
      %v4905 = vadd.f32 0.0, %v4904
      %v4906 = vpop.f32.mrf.mxu0
      %4907 = vmatprep.mubr.bf16.mxu0 0
      %4908 = vmatmul.mubr.bf16.gmra.mxu0 %v4672
      %v4909 = vpop.f32.mrf.mxu0
      %v4910 = vadd.f32 0.0, %v4909
      %v4911 = vpop.f32.mrf.mxu0
      %v4912 = vpop.f32.mrf.mxu0
      %v4913 = vadd.f32 0.0, %v4912
      %v4914 = vpop.f32.mrf.mxu0
      %4915 = vmatprep.mubr.bf16.mxu0 0
      %4916 = vmatmul.mubr.bf16.gmra.mxu0 %v4674
      %v4917 = vpop.f32.mrf.mxu0
      %v4918 = vadd.f32 0.0, %v4917
      %v4919 = vpop.f32.mrf.mxu0
      %v4920 = vpop.f32.mrf.mxu0
      %v4921 = vadd.f32 0.0, %v4920
      %v4922 = vpop.f32.mrf.mxu0
      %4923 = vmatprep.mubr.bf16.mxu0 0
      %4924 = vmatmul.mubr.bf16.gmra.mxu0 %v4676
      %v4925 = vpop.f32.mrf.mxu0
      %v4926 = vadd.f32 0.0, %v4925
      %v4927 = vpop.f32.mrf.mxu0
      %v4928 = vpop.f32.mrf.mxu0
      %v4929 = vadd.f32 0.0, %v4928
      %v4930 = vpop.f32.mrf.mxu0
      %4931 = vmatprep.mubr.bf16.mxu0 0
      %4932 = vmatmul.mubr.bf16.gmra.mxu0 %v4678
      %v4933 = vpop.f32.mrf.mxu0
      %v4934 = vadd.f32 0.0, %v4933
      %v4935 = vpop.f32.mrf.mxu0
      %v4936 = vpop.f32.mrf.mxu0
      %v4937 = vadd.f32 0.0, %v4936
      %v4938 = vpop.f32.mrf.mxu0
      %4939 = vmatprep.mubr.bf16.mxu0 0
      %4940 = vmatmul.mubr.bf16.gmra.mxu0 %v4680
      %v4941 = vpop.f32.mrf.mxu0
      %v4942 = vadd.f32 0.0, %v4941
      %v4943 = vpop.f32.mrf.mxu0
      %v4944 = vpop.f32.mrf.mxu0
      %v4945 = vadd.f32 0.0, %v4944
      %v4946 = vpop.f32.mrf.mxu0
      %4947 = vmatprep.mubr.bf16.mxu0 0
      %4948 = vmatmul.mubr.bf16.gmra.mxu0 %v4682
      %v4949 = vpop.f32.mrf.mxu0
      %v4950 = vadd.f32 0.0, %v4949
      %v4951 = vpop.f32.mrf.mxu0
      %v4952 = vpop.f32.mrf.mxu0
      %v4953 = vadd.f32 0.0, %v4952
      %v4954 = vpop.f32.mrf.mxu0
      %4955 = vmatprep.mubr.bf16.mxu0 0
      %4956 = vmatmul.mubr.bf16.gmra.mxu0 %v4684
      %v4957 = vpop.f32.mrf.mxu0
      %v4958 = vadd.f32 0.0, %v4957
      %v4959 = vpop.f32.mrf.mxu0
      %v4960 = vpop.f32.mrf.mxu0
      %v4961 = vadd.f32 0.0, %v4960
      %v4962 = vpop.f32.mrf.mxu0
      %4963 = vmatprep.mubr.bf16.mxu0 0
      %4964 = vmatmul.mubr.bf16.gmra.mxu0 %v4686
      %v4965 = vpop.f32.mrf.mxu0
      %v4966 = vadd.f32 0.0, %v4965
      %v4967 = vpop.f32.mrf.mxu0
      %v4968 = vpop.f32.mrf.mxu0
      %v4969 = vadd.f32 0.0, %v4968
      %v4970 = vpop.f32.mrf.mxu0
      %4971 = vmatprep.mubr.bf16.mxu0 0
      %4972 = vmatmul.mubr.bf16.gmra.mxu0 %v4688
      %v4973 = vpop.f32.mrf.mxu0
      %v4974 = vadd.f32 0.0, %v4973
      %v4975 = vpop.f32.mrf.mxu0
      %v4976 = vpop.f32.mrf.mxu0
      %v4977 = vadd.f32 0.0, %v4976
      %v4978 = vpop.f32.mrf.mxu0
      %4979 = vmatprep.mubr.bf16.mxu0 0
      %4980 = vmatmul.mubr.bf16.gmra.mxu0 %v4690
      %v4981 = vpop.f32.mrf.mxu0
      %v4982 = vadd.f32 0.0, %v4981
      %v4983 = vpop.f32.mrf.mxu0
      %v4984 = vpop.f32.mrf.mxu0
      %v4985 = vadd.f32 0.0, %v4984
      %v4986 = vpop.f32.mrf.mxu0
      %4987 = vdwg.mxu0
      %v4988 = vadd.f32 %v4573, %v4798
      %v4989 = vadd.f32 %v4574, %v4801
      %v4990 = vadd.f32 %v4575, %v4806
      %v4991 = vadd.f32 %v4576, %v4809
      %v4992 = vadd.f32 %v4577, %v4814
      %v4993 = vadd.f32 %v4578, %v4817
      %v4994 = vadd.f32 %v4579, %v4822
      %v4995 = vadd.f32 %v4580, %v4825
      %v4996 = vadd.f32 %v4581, %v4830
      %v4997 = vadd.f32 %v4582, %v4833
      %v4998 = vadd.f32 %v4583, %v4838
      %v4999 = vadd.f32 %v4584, %v4841
      %v5000 = vadd.f32 %v4585, %v4846
      %v5001 = vadd.f32 %v4586, %v4849
      %v5002 = vadd.f32 %v4587, %v4854
      %v5003 = vadd.f32 %v4588, %v4857
      %v5004 = vadd.f32 %v4589, %v4862
      %v5005 = vadd.f32 %v4590, %v4865
      %v5006 = vadd.f32 %v4591, %v4870
      %v5007 = vadd.f32 %v4592, %v4873
      %v5008 = vadd.f32 %v4593, %v4878
      %v5009 = vadd.f32 %v4594, %v4881
      %v5010 = vadd.f32 %v4595, %v4886
      %v5011 = vadd.f32 %v4596, %v4889
      %v5012 = vadd.f32 %v4597, %v4894
      %v5013 = vadd.f32 %v4598, %v4897
      %v5014 = vadd.f32 %v4599, %v4902
      %v5015 = vadd.f32 %v4600, %v4905
      %v5016 = vadd.f32 %v4601, %v4910
      %v5017 = vadd.f32 %v4602, %v4913
      %v5018 = vadd.f32 %v4603, %v4918
      %v5019 = vadd.f32 %v4604, %v4921
      %v5020 = vadd.f32 %v4605, %v4926
      %v5021 = vadd.f32 %v4606, %v4929
      %v5022 = vadd.f32 %v4607, %v4934
      %v5023 = vadd.f32 %v4608, %v4937
      %v5024 = vadd.f32 %v4609, %v4942
      %v5025 = vadd.f32 %v4610, %v4945
      %v5026 = vadd.f32 %v4611, %v4950
      %v5027 = vadd.f32 %v4612, %v4953
      %v5028 = vadd.f32 %v4613, %v4958
      %v5029 = vadd.f32 %v4614, %v4961
      %v5030 = vadd.f32 %v4615, %v4966
      %v5031 = vadd.f32 %v4616, %v4969
      %v5032 = vadd.f32 %v4617, %v4974
      %v5033 = vadd.f32 %v4618, %v4977
      %v5034 = vadd.f32 %v4619, %v4982
      %v5035 = vadd.f32 %v4620, %v4985
      %v5036 = vpack.c.bf16 %v4989, %v4988
      %v5037 = vpack.c.bf16 %v4991, %v4990
      %v5038 = vpack.c.bf16 %v4993, %v4992
      %v5039 = vpack.c.bf16 %v4995, %v4994
      %v5040 = vpack.c.bf16 %v4997, %v4996
      %v5041 = vpack.c.bf16 %v4999, %v4998
      %v5042 = vpack.c.bf16 %v5001, %v5000
      %v5043 = vpack.c.bf16 %v5003, %v5002
      %v5044 = vpack.c.bf16 %v5005, %v5004
      %v5045 = vpack.c.bf16 %v5007, %v5006
      %v5046 = vpack.c.bf16 %v5009, %v5008
      %v5047 = vpack.c.bf16 %v5011, %v5010
      %v5048 = vpack.c.bf16 %v5013, %v5012
      %v5049 = vpack.c.bf16 %v5015, %v5014
      %v5050 = vpack.c.bf16 %v5017, %v5016
      %v5051 = vpack.c.bf16 %v5019, %v5018
      %v5052 = vpack.c.bf16 %v5021, %v5020
      %v5053 = vpack.c.bf16 %v5023, %v5022
      %v5054 = vpack.c.bf16 %v5025, %v5024
      %v5055 = vpack.c.bf16 %v5027, %v5026
      %v5056 = vpack.c.bf16 %v5029, %v5028
      %v5057 = vpack.c.bf16 %v5031, %v5030
      %v5058 = vpack.c.bf16 %v5033, %v5032
      %v5059 = vpack.c.bf16 %v5035, %v5034
      %v5084 = vunpack.c.l.b16 %v5036
      %v5085 = vunpack.c.h.b16 %v5036
      %v5086 = vunpack.c.l.b16 %v5037
      %v5087 = vunpack.c.h.b16 %v5037
      %v5088 = vunpack.c.l.b16 %v5038
      %v5089 = vunpack.c.h.b16 %v5038
      %v5090 = vunpack.c.l.b16 %v5039
      %v5091 = vunpack.c.h.b16 %v5039
      %v5092 = vunpack.c.l.b16 %v5040
      %v5093 = vunpack.c.h.b16 %v5040
      %v5094 = vunpack.c.l.b16 %v5041
      %v5095 = vunpack.c.h.b16 %v5041
      %v5096 = vunpack.c.l.b16 %v5042
      %v5097 = vunpack.c.h.b16 %v5042
      %v5098 = vunpack.c.l.b16 %v5043
      %v5099 = vunpack.c.h.b16 %v5043
      %v5100 = vunpack.c.l.b16 %v5044
      %v5101 = vunpack.c.h.b16 %v5044
      %v5102 = vunpack.c.l.b16 %v5045
      %v5103 = vunpack.c.h.b16 %v5045
      %v5104 = vunpack.c.l.b16 %v5046
      %v5105 = vunpack.c.h.b16 %v5046
      %v5106 = vunpack.c.l.b16 %v5047
      %v5107 = vunpack.c.h.b16 %v5047
      %v5108 = vunpack.c.l.b16 %v5048
      %v5109 = vunpack.c.h.b16 %v5048
      %v5110 = vunpack.c.l.b16 %v5049
      %v5111 = vunpack.c.h.b16 %v5049
      %v5112 = vunpack.c.l.b16 %v5050
      %v5113 = vunpack.c.h.b16 %v5050
      %v5114 = vunpack.c.l.b16 %v5051
      %v5115 = vunpack.c.h.b16 %v5051
      %v5116 = vunpack.c.l.b16 %v5052
      %v5117 = vunpack.c.h.b16 %v5052
      %v5118 = vunpack.c.l.b16 %v5053
      %v5119 = vunpack.c.h.b16 %v5053
      %v5120 = vunpack.c.l.b16 %v5054
      %v5121 = vunpack.c.h.b16 %v5054
      %v5122 = vunpack.c.l.b16 %v5055
      %v5123 = vunpack.c.h.b16 %v5055
      %v5124 = vunpack.c.l.b16 %v5056
      %v5125 = vunpack.c.h.b16 %v5056
      %v5126 = vunpack.c.l.b16 %v5057
      %v5127 = vunpack.c.h.b16 %v5057
      %v5128 = vunpack.c.l.b16 %v5058
      %v5129 = vunpack.c.h.b16 %v5058
      %v5130 = vunpack.c.l.b16 %v5059
      %v5131 = vunpack.c.h.b16 %v5059
      %v5132 = vpack.c.b16 %v5084, %v5084
      %v5133 = vpack.c.b16 %v5085, %v5085
      %v5134 = vpack.c.b16 %v5086, %v5086
      %v5135 = vpack.c.b16 %v5087, %v5087
      %v5136 = vpack.c.b16 %v5088, %v5088
      %v5137 = vpack.c.b16 %v5089, %v5089
      %v5138 = vpack.c.b16 %v5090, %v5090
      %v5139 = vpack.c.b16 %v5091, %v5091
      %v5140 = vpack.c.b16 %v5092, %v5092
      %v5141 = vpack.c.b16 %v5093, %v5093
      %v5142 = vpack.c.b16 %v5094, %v5094
      %v5143 = vpack.c.b16 %v5095, %v5095
      %v5144 = vpack.c.b16 %v5096, %v5096
      %v5145 = vpack.c.b16 %v5097, %v5097
      %v5146 = vpack.c.b16 %v5098, %v5098
      %v5147 = vpack.c.b16 %v5099, %v5099
      %v5148 = vpack.c.b16 %v5100, %v5100
      %v5149 = vpack.c.b16 %v5101, %v5101
      %v5150 = vpack.c.b16 %v5102, %v5102
      %v5151 = vpack.c.b16 %v5103, %v5103
      %v5152 = vpack.c.b16 %v5104, %v5104
      %v5153 = vpack.c.b16 %v5105, %v5105
      %v5154 = vpack.c.b16 %v5106, %v5106
      %v5155 = vpack.c.b16 %v5107, %v5107
      %v5156 = vpack.c.b16 %v5108, %v5108
      %v5157 = vpack.c.b16 %v5109, %v5109
      %v5158 = vpack.c.b16 %v5110, %v5110
      %v5159 = vpack.c.b16 %v5111, %v5111
      %v5160 = vpack.c.b16 %v5112, %v5112
      %v5161 = vpack.c.b16 %v5113, %v5113
      %v5162 = vpack.c.b16 %v5114, %v5114
      %v5163 = vpack.c.b16 %v5115, %v5115
      %v5164 = vpack.c.b16 %v5116, %v5116
      %v5165 = vpack.c.b16 %v5117, %v5117
      %v5166 = vpack.c.b16 %v5118, %v5118
      %v5167 = vpack.c.b16 %v5119, %v5119
      %v5168 = vpack.c.b16 %v5120, %v5120
      %v5169 = vpack.c.b16 %v5121, %v5121
      %v5170 = vpack.c.b16 %v5122, %v5122
      %v5171 = vpack.c.b16 %v5123, %v5123
      %v5172 = vpack.c.b16 %v5124, %v5124
      %v5173 = vpack.c.b16 %v5125, %v5125
      %v5174 = vpack.c.b16 %v5126, %v5126
      %v5175 = vpack.c.b16 %v5127, %v5127
      %v5176 = vpack.c.b16 %v5128, %v5128
      %v5177 = vpack.c.b16 %v5129, %v5129
      %v5178 = vpack.c.b16 %v5130, %v5130
      %v5179 = vpack.c.b16 %v5131, %v5131
      %5228 = vst [vmem:[%s265] sm:$0xf] %v5132
      %5229 = vst [vmem:[%s265 + $0x4] sm:$0xf] %v5133
      %5230 = vst [vmem:[%s265 + $0x8] sm:$0xf] %v5134
      %5231 = vst [vmem:[%s265 + $0xc] sm:$0xf] %v5135
      %5232 = vst [vmem:[%s265 + $0x10] sm:$0xf] %v5136
      %5233 = vst [vmem:[%s265 + $0x14] sm:$0xf] %v5137
      %5234 = vst [vmem:[%s265 + $0x18] sm:$0xf] %v5138
      %5235 = vst [vmem:[%s265 + $0x1c] sm:$0xf] %v5139
      %5236 = vst [vmem:[%s265 + $0x20] sm:$0xf] %v5140
      %5237 = vst [vmem:[%s265 + $0x24] sm:$0xf] %v5141
      %5238 = vst [vmem:[%s265 + $0x28] sm:$0xf] %v5142
      %5239 = vst [vmem:[%s265 + $0x2c] sm:$0xf] %v5143
      %5240 = vst [vmem:[%s265 + $0x30] sm:$0xf] %v5144
      %5241 = vst [vmem:[%s265 + $0x34] sm:$0xf] %v5145
      %5242 = vst [vmem:[%s265 + $0x38] sm:$0xf] %v5146
      %5243 = vst [vmem:[%s265 + $0x3c] sm:$0xf] %v5147
      %5244 = vst [vmem:[%s265 + $0x40] sm:$0xf] %v5148
      %5245 = vst [vmem:[%s265 + $0x44] sm:$0xf] %v5149
      %5246 = vst [vmem:[%s265 + $0x48] sm:$0xf] %v5150
      %5247 = vst [vmem:[%s265 + $0x4c] sm:$0xf] %v5151
      %5248 = vst [vmem:[%s265 + $0x50] sm:$0xf] %v5152
      %5249 = vst [vmem:[%s265 + $0x54] sm:$0xf] %v5153
      %5250 = vst [vmem:[%s265 + $0x58] sm:$0xf] %v5154
      %5251 = vst [vmem:[%s265 + $0x5c] sm:$0xf] %v5155
      %5252 = vst [vmem:[%s265 + $0x60] sm:$0xf] %v5156
      %5253 = vst [vmem:[%s265 + $0x64] sm:$0xf] %v5157
      %5254 = vst [vmem:[%s265 + $0x68] sm:$0xf] %v5158
      %5255 = vst [vmem:[%s265 + $0x6c] sm:$0xf] %v5159
      %5256 = vst [vmem:[%s265 + $0x70] sm:$0xf] %v5160
      %5257 = vst [vmem:[%s265 + $0x74] sm:$0xf] %v5161
      %5258 = vst [vmem:[%s265 + $0x78] sm:$0xf] %v5162
      %5259 = vst [vmem:[%s265 + $0x7c] sm:$0xf] %v5163
      %5260 = vst [vmem:[%s265 + $0x80] sm:$0xf] %v5164
      %5261 = vst [vmem:[%s265 + $0x84] sm:$0xf] %v5165
      %5262 = vst [vmem:[%s265 + $0x88] sm:$0xf] %v5166
      %5263 = vst [vmem:[%s265 + $0x8c] sm:$0xf] %v5167
      %5264 = vst [vmem:[%s265 + $0x90] sm:$0xf] %v5168
      %5265 = vst [vmem:[%s265 + $0x94] sm:$0xf] %v5169
      %5266 = vst [vmem:[%s265 + $0x98] sm:$0xf] %v5170
      %5267 = vst [vmem:[%s265 + $0x9c] sm:$0xf] %v5171
      %5268 = vst [vmem:[%s265 + $0xa0] sm:$0xf] %v5172
      %5269 = vst [vmem:[%s265 + $0xa4] sm:$0xf] %v5173
      %5270 = vst [vmem:[%s265 + $0xa8] sm:$0xf] %v5174
      %5271 = vst [vmem:[%s265 + $0xac] sm:$0xf] %v5175
      %5272 = vst [vmem:[%s265 + $0xb0] sm:$0xf] %v5176
      %5273 = vst [vmem:[%s265 + $0xb4] sm:$0xf] %v5177
      %5274 = vst [vmem:[%s265 + $0xb8] sm:$0xf] %v5178
      %5275 = vst [vmem:[%s265 + $0xbc] sm:$0xf] %v5179
      %v5276 = vld [vmem:[%s256] sm:$0xff]
      %v5277 = vld [vmem:[%s256 + $0x8] sm:$0xff]
      %v5278 = vld [vmem:[%s256 + $0x10] sm:$0xff]
      %v5279 = vld [vmem:[%s256 + $0x18] sm:$0xff]
      %v5280 = vld [vmem:[%s256 + $0x20] sm:$0xff]
      %v5281 = vld [vmem:[%s256 + $0x28] sm:$0xff]
      %v5282 = vld [vmem:[%s256 + $0x30] sm:$0xff]
      %v5283 = vld [vmem:[%s256 + $0x38] sm:$0xff]
      %v5284 = vld [vmem:[%s256 + $0x40] sm:$0xff]
      %v5285 = vld [vmem:[%s256 + $0x48] sm:$0xff]
      %v5286 = vld [vmem:[%s256 + $0x50] sm:$0xff]
      %v5287 = vld [vmem:[%s256 + $0x58] sm:$0xff]
      %v5288 = vld [vmem:[%s256 + $0x60] sm:$0xff]
      %v5289 = vld [vmem:[%s256 + $0x68] sm:$0xff]
      %v5290 = vld [vmem:[%s256 + $0x70] sm:$0xff]
      %v5291 = vld [vmem:[%s256 + $0x78] sm:$0xff]
      %v5292 = vld [vmem:[%s256 + $0x80] sm:$0xff]
      %v5293 = vld [vmem:[%s256 + $0x88] sm:$0xff]
      %v5294 = vld [vmem:[%s256 + $0x90] sm:$0xff]
      %v5295 = vld [vmem:[%s256 + $0x98] sm:$0xff]
      %v5296 = vld [vmem:[%s256 + $0xa0] sm:$0xff]
      %v5297 = vld [vmem:[%s256 + $0xa8] sm:$0xff]
      %v5298 = vld [vmem:[%s256 + $0xb0] sm:$0xff]
      %v5299 = vld [vmem:[%s256 + $0xb8] sm:$0xff]
      %v5300 = vld [vmem:[%s256 + $0xc0] sm:$0xff]
      %v5301 = vld [vmem:[%s256 + $0xc8] sm:$0xff]
      %v5302 = vld [vmem:[%s256 + $0xd0] sm:$0xff]
      %v5303 = vld [vmem:[%s256 + $0xd8] sm:$0xff]
      %v5304 = vld [vmem:[%s256 + $0xe0] sm:$0xff]
      %v5305 = vld [vmem:[%s256 + $0xe8] sm:$0xff]
      %v5306 = vld [vmem:[%s256 + $0xf0] sm:$0xff]
      %v5307 = vld [vmem:[%s256 + $0xf8] sm:$0xff]
      %v5308 = vld [vmem:[%s256 + $0x100] sm:$0xff]
      %v5309 = vld [vmem:[%s256 + $0x108] sm:$0xff]
      %v5310 = vld [vmem:[%s256 + $0x110] sm:$0xff]
      %v5311 = vld [vmem:[%s256 + $0x118] sm:$0xff]
      %v5312 = vld [vmem:[%s256 + $0x120] sm:$0xff]
      %v5313 = vld [vmem:[%s256 + $0x128] sm:$0xff]
      %v5314 = vld [vmem:[%s256 + $0x130] sm:$0xff]
      %v5315 = vld [vmem:[%s256 + $0x138] sm:$0xff]
      %v5316 = vld [vmem:[%s256 + $0x140] sm:$0xff]
      %v5317 = vld [vmem:[%s256 + $0x148] sm:$0xff]
      %v5318 = vld [vmem:[%s256 + $0x150] sm:$0xff]
      %v5319 = vld [vmem:[%s256 + $0x158] sm:$0xff]
      %v5320 = vld [vmem:[%s256 + $0x160] sm:$0xff]
      %v5321 = vld [vmem:[%s256 + $0x168] sm:$0xff]
      %v5322 = vld [vmem:[%s256 + $0x170] sm:$0xff]
      %v5323 = vld [vmem:[%s256 + $0x178] sm:$0xff]
      %5325 = vset.pattern.permute.xlu0 0
      %5326 = vperm.xlu0 %5325, %v5276
      %v5327 = vpop.permute.xlu0 %5326
      %5330 = vset.pattern.permute.xlu0 0
      %5331 = vperm.xlu0 %5330, %v5277
      %v5332 = vpop.permute.xlu0 %5331
      %5335 = vset.pattern.permute.xlu0 0
      %5336 = vperm.xlu0 %5335, %v5278
      %v5337 = vpop.permute.xlu0 %5336
      %5340 = vset.pattern.permute.xlu0 0
      %5341 = vperm.xlu0 %5340, %v5279
      %v5342 = vpop.permute.xlu0 %5341
      %5345 = vset.pattern.permute.xlu0 0
      %5346 = vperm.xlu0 %5345, %v5280
      %v5347 = vpop.permute.xlu0 %5346
      %5350 = vset.pattern.permute.xlu0 0
      %5351 = vperm.xlu0 %5350, %v5281
      %v5352 = vpop.permute.xlu0 %5351
      %5355 = vset.pattern.permute.xlu0 0
      %5356 = vperm.xlu0 %5355, %v5282
      %v5357 = vpop.permute.xlu0 %5356
      %5360 = vset.pattern.permute.xlu0 0
      %5361 = vperm.xlu0 %5360, %v5283
      %v5362 = vpop.permute.xlu0 %5361
      %5365 = vset.pattern.permute.xlu0 0
      %5366 = vperm.xlu0 %5365, %v5284
      %v5367 = vpop.permute.xlu0 %5366
      %5370 = vset.pattern.permute.xlu0 0
      %5371 = vperm.xlu0 %5370, %v5285
      %v5372 = vpop.permute.xlu0 %5371
      %5375 = vset.pattern.permute.xlu0 0
      %5376 = vperm.xlu0 %5375, %v5286
      %v5377 = vpop.permute.xlu0 %5376
      %5380 = vset.pattern.permute.xlu0 0
      %5381 = vperm.xlu0 %5380, %v5287
      %v5382 = vpop.permute.xlu0 %5381
      %5385 = vset.pattern.permute.xlu0 0
      %5386 = vperm.xlu0 %5385, %v5288
      %v5387 = vpop.permute.xlu0 %5386
      %5390 = vset.pattern.permute.xlu0 0
      %5391 = vperm.xlu0 %5390, %v5289
      %v5392 = vpop.permute.xlu0 %5391
      %5395 = vset.pattern.permute.xlu0 0
      %5396 = vperm.xlu0 %5395, %v5290
      %v5397 = vpop.permute.xlu0 %5396
      %5400 = vset.pattern.permute.xlu0 0
      %5401 = vperm.xlu0 %5400, %v5291
      %v5402 = vpop.permute.xlu0 %5401
      %5405 = vset.pattern.permute.xlu0 0
      %5406 = vperm.xlu0 %5405, %v5292
      %v5407 = vpop.permute.xlu0 %5406
      %5410 = vset.pattern.permute.xlu0 0
      %5411 = vperm.xlu0 %5410, %v5293
      %v5412 = vpop.permute.xlu0 %5411
      %5415 = vset.pattern.permute.xlu0 0
      %5416 = vperm.xlu0 %5415, %v5294
      %v5417 = vpop.permute.xlu0 %5416
      %5420 = vset.pattern.permute.xlu0 0
      %5421 = vperm.xlu0 %5420, %v5295
      %v5422 = vpop.permute.xlu0 %5421
      %5425 = vset.pattern.permute.xlu0 0
      %5426 = vperm.xlu0 %5425, %v5296
      %v5427 = vpop.permute.xlu0 %5426
      %5430 = vset.pattern.permute.xlu0 0
      %5431 = vperm.xlu0 %5430, %v5297
      %v5432 = vpop.permute.xlu0 %5431
      %5435 = vset.pattern.permute.xlu0 0
      %5436 = vperm.xlu0 %5435, %v5298
      %v5437 = vpop.permute.xlu0 %5436
      %5440 = vset.pattern.permute.xlu0 0
      %5441 = vperm.xlu0 %5440, %v5299
      %v5442 = vpop.permute.xlu0 %5441
      %5445 = vset.pattern.permute.xlu0 0
      %5446 = vperm.xlu0 %5445, %v5300
      %v5447 = vpop.permute.xlu0 %5446
      %5450 = vset.pattern.permute.xlu0 0
      %5451 = vperm.xlu0 %5450, %v5301
      %v5452 = vpop.permute.xlu0 %5451
      %5455 = vset.pattern.permute.xlu0 0
      %5456 = vperm.xlu0 %5455, %v5302
      %v5457 = vpop.permute.xlu0 %5456
      %5460 = vset.pattern.permute.xlu0 0
      %5461 = vperm.xlu0 %5460, %v5303
      %v5462 = vpop.permute.xlu0 %5461
      %5465 = vset.pattern.permute.xlu0 0
      %5466 = vperm.xlu0 %5465, %v5304
      %v5467 = vpop.permute.xlu0 %5466
      %5470 = vset.pattern.permute.xlu0 0
      %5471 = vperm.xlu0 %5470, %v5305
      %v5472 = vpop.permute.xlu0 %5471
      %5475 = vset.pattern.permute.xlu0 0
      %5476 = vperm.xlu0 %5475, %v5306
      %v5477 = vpop.permute.xlu0 %5476
      %5480 = vset.pattern.permute.xlu0 0
      %5481 = vperm.xlu0 %5480, %v5307
      %v5482 = vpop.permute.xlu0 %5481
      %5485 = vset.pattern.permute.xlu0 0
      %5486 = vperm.xlu0 %5485, %v5308
      %v5487 = vpop.permute.xlu0 %5486
      %5490 = vset.pattern.permute.xlu0 0
      %5491 = vperm.xlu0 %5490, %v5309
      %v5492 = vpop.permute.xlu0 %5491
      %5495 = vset.pattern.permute.xlu0 0
      %5496 = vperm.xlu0 %5495, %v5310
      %v5497 = vpop.permute.xlu0 %5496
      %5500 = vset.pattern.permute.xlu0 0
      %5501 = vperm.xlu0 %5500, %v5311
      %v5502 = vpop.permute.xlu0 %5501
      %5505 = vset.pattern.permute.xlu0 0
      %5506 = vperm.xlu0 %5505, %v5312
      %v5507 = vpop.permute.xlu0 %5506
      %5510 = vset.pattern.permute.xlu0 0
      %5511 = vperm.xlu0 %5510, %v5313
      %v5512 = vpop.permute.xlu0 %5511
      %5515 = vset.pattern.permute.xlu0 0
      %5516 = vperm.xlu0 %5515, %v5314
      %v5517 = vpop.permute.xlu0 %5516
      %5520 = vset.pattern.permute.xlu0 0
      %5521 = vperm.xlu0 %5520, %v5315
      %v5522 = vpop.permute.xlu0 %5521
      %5525 = vset.pattern.permute.xlu0 0
      %5526 = vperm.xlu0 %5525, %v5316
      %v5527 = vpop.permute.xlu0 %5526
      %5530 = vset.pattern.permute.xlu0 0
      %5531 = vperm.xlu0 %5530, %v5317
      %v5532 = vpop.permute.xlu0 %5531
      %5535 = vset.pattern.permute.xlu0 0
      %5536 = vperm.xlu0 %5535, %v5318
      %v5537 = vpop.permute.xlu0 %5536
      %5540 = vset.pattern.permute.xlu0 0
      %5541 = vperm.xlu0 %5540, %v5319
      %v5542 = vpop.permute.xlu0 %5541
      %5545 = vset.pattern.permute.xlu0 0
      %5546 = vperm.xlu0 %5545, %v5320
      %v5547 = vpop.permute.xlu0 %5546
      %5550 = vset.pattern.permute.xlu0 0
      %5551 = vperm.xlu0 %5550, %v5321
      %v5552 = vpop.permute.xlu0 %5551
      %5555 = vset.pattern.permute.xlu0 0
      %5556 = vperm.xlu0 %5555, %v5322
      %v5557 = vpop.permute.xlu0 %5556
      %5560 = vset.pattern.permute.xlu0 0
      %5561 = vperm.xlu0 %5560, %v5323
      %v5562 = vpop.permute.xlu0 %5561
      %v5564 = vmul.f32 %v4988, %v5327
      %v5565 = vmul.f32 %v4989, %v5332
      %v5566 = vmul.f32 %v4990, %v5337
      %v5567 = vmul.f32 %v4991, %v5342
      %v5568 = vmul.f32 %v4992, %v5347
      %v5569 = vmul.f32 %v4993, %v5352
      %v5570 = vmul.f32 %v4994, %v5357
      %v5571 = vmul.f32 %v4995, %v5362
      %v5572 = vmul.f32 %v4996, %v5367
      %v5573 = vmul.f32 %v4997, %v5372
      %v5574 = vmul.f32 %v4998, %v5377
      %v5575 = vmul.f32 %v4999, %v5382
      %v5576 = vmul.f32 %v5000, %v5387
      %v5577 = vmul.f32 %v5001, %v5392
      %v5578 = vmul.f32 %v5002, %v5397
      %v5579 = vmul.f32 %v5003, %v5402
      %v5580 = vmul.f32 %v5004, %v5407
      %v5581 = vmul.f32 %v5005, %v5412
      %v5582 = vmul.f32 %v5006, %v5417
      %v5583 = vmul.f32 %v5007, %v5422
      %v5584 = vmul.f32 %v5008, %v5427
      %v5585 = vmul.f32 %v5009, %v5432
      %v5586 = vmul.f32 %v5010, %v5437
      %v5587 = vmul.f32 %v5011, %v5442
      %v5588 = vmul.f32 %v5012, %v5447
      %v5589 = vmul.f32 %v5013, %v5452
      %v5590 = vmul.f32 %v5014, %v5457
      %v5591 = vmul.f32 %v5015, %v5462
      %v5592 = vmul.f32 %v5016, %v5467
      %v5593 = vmul.f32 %v5017, %v5472
      %v5594 = vmul.f32 %v5018, %v5477
      %v5595 = vmul.f32 %v5019, %v5482
      %v5596 = vmul.f32 %v5020, %v5487
      %v5597 = vmul.f32 %v5021, %v5492
      %v5598 = vmul.f32 %v5022, %v5497
      %v5599 = vmul.f32 %v5023, %v5502
      %v5600 = vmul.f32 %v5024, %v5507
      %v5601 = vmul.f32 %v5025, %v5512
      %v5602 = vmul.f32 %v5026, %v5517
      %v5603 = vmul.f32 %v5027, %v5522
      %v5604 = vmul.f32 %v5028, %v5527
      %v5605 = vmul.f32 %v5029, %v5532
      %v5606 = vmul.f32 %v5030, %v5537
      %v5607 = vmul.f32 %v5031, %v5542
      %v5608 = vmul.f32 %v5032, %v5547
      %v5609 = vmul.f32 %v5033, %v5552
      %v5610 = vmul.f32 %v5034, %v5557
      %v5611 = vmul.f32 %v5035, %v5562
      %v5612 = vadd.f32 %v5564, %v5565
      %v5613 = vadd.f32 %v5612, %v5566
      %v5614 = vadd.f32 %v5613, %v5567
      %v5615 = vadd.f32 %v5614, %v5568
      %v5616 = vadd.f32 %v5615, %v5569
      %v5617 = vadd.f32 %v5616, %v5570
      %v5618 = vadd.f32 %v5617, %v5571
      %v5619 = vadd.f32 %v5618, %v5572
      %v5620 = vadd.f32 %v5619, %v5573
      %v5621 = vadd.f32 %v5620, %v5574
      %v5622 = vadd.f32 %v5621, %v5575
      %v5623 = vadd.f32 %v5622, %v5576
      %v5624 = vadd.f32 %v5623, %v5577
      %v5625 = vadd.f32 %v5624, %v5578
      %v5626 = vadd.f32 %v5625, %v5579
      %v5627 = vadd.f32 %v5626, %v5580
      %v5628 = vadd.f32 %v5627, %v5581
      %v5629 = vadd.f32 %v5628, %v5582
      %v5630 = vadd.f32 %v5629, %v5583
      %v5631 = vadd.f32 %v5630, %v5584
      %v5632 = vadd.f32 %v5631, %v5585
      %v5633 = vadd.f32 %v5632, %v5586
      %v5634 = vadd.f32 %v5633, %v5587
      %v5635 = vadd.f32 %v5634, %v5588
      %v5636 = vadd.f32 %v5635, %v5589
      %v5637 = vadd.f32 %v5636, %v5590
      %v5638 = vadd.f32 %v5637, %v5591
      %v5639 = vadd.f32 %v5638, %v5592
      %v5640 = vadd.f32 %v5639, %v5593
      %v5641 = vadd.f32 %v5640, %v5594
      %v5642 = vadd.f32 %v5641, %v5595
      %v5643 = vadd.f32 %v5642, %v5596
      %v5644 = vadd.f32 %v5643, %v5597
      %v5645 = vadd.f32 %v5644, %v5598
      %v5646 = vadd.f32 %v5645, %v5599
      %v5647 = vadd.f32 %v5646, %v5600
      %v5648 = vadd.f32 %v5647, %v5601
      %v5649 = vadd.f32 %v5648, %v5602
      %v5650 = vadd.f32 %v5649, %v5603
      %v5651 = vadd.f32 %v5650, %v5604
      %v5652 = vadd.f32 %v5651, %v5605
      %v5653 = vadd.f32 %v5652, %v5606
      %v5654 = vadd.f32 %v5653, %v5607
      %v5655 = vadd.f32 %v5654, %v5608
      %v5656 = vadd.f32 %v5655, %v5609
      %v5657 = vadd.f32 %v5656, %v5610
      %v5658 = vadd.f32 %v5657, %v5611
      %v5659 = vrot.slane %v5658, 4
      %v5660 = vadd.f32 %v5658, %v5659
      %v5661 = vrot.slane %v5660, 2
      %v5662 = vadd.f32 %v5660, %v5661
      %v5663 = vrot.slane %v5662, 1
      %v5664 = vadd.f32 %v5662, %v5663
      %5665 = vst [vmem:[%s272] sm:$0x1] %v5664
      %v5666 = vmul.f32 %v5564, %v5564
      %v5667 = vmul.f32 %v5565, %v5565
      %v5668 = vmul.f32 %v5566, %v5566
      %v5669 = vmul.f32 %v5567, %v5567
      %v5670 = vmul.f32 %v5568, %v5568
      %v5671 = vmul.f32 %v5569, %v5569
      %v5672 = vmul.f32 %v5570, %v5570
      %v5673 = vmul.f32 %v5571, %v5571
      %v5674 = vmul.f32 %v5572, %v5572
      %v5675 = vmul.f32 %v5573, %v5573
      %v5676 = vmul.f32 %v5574, %v5574
      %v5677 = vmul.f32 %v5575, %v5575
      %v5678 = vmul.f32 %v5576, %v5576
      %v5679 = vmul.f32 %v5577, %v5577
      %v5680 = vmul.f32 %v5578, %v5578
      %v5681 = vmul.f32 %v5579, %v5579
      %v5682 = vmul.f32 %v5580, %v5580
      %v5683 = vmul.f32 %v5581, %v5581
      %v5684 = vmul.f32 %v5582, %v5582
      %v5685 = vmul.f32 %v5583, %v5583
      %v5686 = vmul.f32 %v5584, %v5584
      %v5687 = vmul.f32 %v5585, %v5585
      %v5688 = vmul.f32 %v5586, %v5586
      %v5689 = vmul.f32 %v5587, %v5587
      %v5690 = vmul.f32 %v5588, %v5588
      %v5691 = vmul.f32 %v5589, %v5589
      %v5692 = vmul.f32 %v5590, %v5590
      %v5693 = vmul.f32 %v5591, %v5591
      %v5694 = vmul.f32 %v5592, %v5592
      %v5695 = vmul.f32 %v5593, %v5593
      %v5696 = vmul.f32 %v5594, %v5594
      %v5697 = vmul.f32 %v5595, %v5595
      %v5698 = vmul.f32 %v5596, %v5596
      %v5699 = vmul.f32 %v5597, %v5597
      %v5700 = vmul.f32 %v5598, %v5598
      %v5701 = vmul.f32 %v5599, %v5599
      %v5702 = vmul.f32 %v5600, %v5600
      %v5703 = vmul.f32 %v5601, %v5601
      %v5704 = vmul.f32 %v5602, %v5602
      %v5705 = vmul.f32 %v5603, %v5603
      %v5706 = vmul.f32 %v5604, %v5604
      %v5707 = vmul.f32 %v5605, %v5605
      %v5708 = vmul.f32 %v5606, %v5606
      %v5709 = vmul.f32 %v5607, %v5607
      %v5710 = vmul.f32 %v5608, %v5608
      %v5711 = vmul.f32 %v5609, %v5609
      %v5712 = vmul.f32 %v5610, %v5610
      %v5713 = vmul.f32 %v5611, %v5611
      %v5714 = vadd.f32 %v5666, %v5667
      %v5715 = vadd.f32 %v5714, %v5668
      %v5716 = vadd.f32 %v5715, %v5669
      %v5717 = vadd.f32 %v5716, %v5670
      %v5718 = vadd.f32 %v5717, %v5671
      %v5719 = vadd.f32 %v5718, %v5672
      %v5720 = vadd.f32 %v5719, %v5673
      %v5721 = vadd.f32 %v5720, %v5674
      %v5722 = vadd.f32 %v5721, %v5675
      %v5723 = vadd.f32 %v5722, %v5676
      %v5724 = vadd.f32 %v5723, %v5677
      %v5725 = vadd.f32 %v5724, %v5678
      %v5726 = vadd.f32 %v5725, %v5679
      %v5727 = vadd.f32 %v5726, %v5680
      %v5728 = vadd.f32 %v5727, %v5681
      %v5729 = vadd.f32 %v5728, %v5682
      %v5730 = vadd.f32 %v5729, %v5683
      %v5731 = vadd.f32 %v5730, %v5684
      %v5732 = vadd.f32 %v5731, %v5685
      %v5733 = vadd.f32 %v5732, %v5686
      %v5734 = vadd.f32 %v5733, %v5687
      %v5735 = vadd.f32 %v5734, %v5688
      %v5736 = vadd.f32 %v5735, %v5689
      %v5737 = vadd.f32 %v5736, %v5690
      %v5738 = vadd.f32 %v5737, %v5691
      %v5739 = vadd.f32 %v5738, %v5692
      %v5740 = vadd.f32 %v5739, %v5693
      %v5741 = vadd.f32 %v5740, %v5694
      %v5742 = vadd.f32 %v5741, %v5695
      %v5743 = vadd.f32 %v5742, %v5696
      %v5744 = vadd.f32 %v5743, %v5697
      %v5745 = vadd.f32 %v5744, %v5698
      %v5746 = vadd.f32 %v5745, %v5699
      %v5747 = vadd.f32 %v5746, %v5700
      %v5748 = vadd.f32 %v5747, %v5701
      %v5749 = vadd.f32 %v5748, %v5702
      %v5750 = vadd.f32 %v5749, %v5703
      %v5751 = vadd.f32 %v5750, %v5704
      %v5752 = vadd.f32 %v5751, %v5705
      %v5753 = vadd.f32 %v5752, %v5706
      %v5754 = vadd.f32 %v5753, %v5707
      %v5755 = vadd.f32 %v5754, %v5708
      %v5756 = vadd.f32 %v5755, %v5709
      %v5757 = vadd.f32 %v5756, %v5710
      %v5758 = vadd.f32 %v5757, %v5711
      %v5759 = vadd.f32 %v5758, %v5712
      %v5760 = vadd.f32 %v5759, %v5713
      %v5761 = vrot.slane %v5760, 4
      %v5762 = vadd.f32 %v5760, %v5761
      %v5763 = vrot.slane %v5762, 2
      %v5764 = vadd.f32 %v5762, %v5763
      %v5765 = vrot.slane %v5764, 1
      %v5766 = vadd.f32 %v5764, %v5765
      %5767 = vst [vmem:[%s272 + $0x1] sm:$0x1] %v5766
      %p5768 = scmp.lt.s32.totalorder %s20, 1
      %s5769 = scalar_select %p5768, %s20, 1
      %p5770 = scmp.lt.s32.totalorder %s21, 0
      %s5771 = scalar_select %p5770, %s21, 0
      %s5772 = smul.addr %s5771, 48
      %s5773 = smul.addr %s5769, 48
      %s5774 = sadd.s32 %s5772, %s5773
      %s5775 = smul.addr %s5774, 4
      %s5776 = scalar_lea.vmem %s3, %s5775
      %p5777 = scmp.lt.s32.totalorder %s20, 1
      %s5778 = scalar_select %p5777, %s20, 1
      %p5779 = scmp.lt.s32.totalorder %s21, 0
      %s5780 = scalar_select %p5779, %s21, 0
      %s5781 = sadd.s32 %s5780, %s5778
      %s5782 = smul.addr %s5781, 2
      %s5783 = scalar_lea.vmem %s4, %s5782
      // Predicated region
      $region33: #{conv_block_forward.4} parent=31 // pred_check
        %p5784 = pneg %p123
      $region34: #{conv_block_forward.4} parent=31 // pred_check_branch
        %5786 = sbr.rel (%p5784) target = $region36
      $region35: #{conv_block_forward.4} parent=31 // pred_region
        _
      $region36: #{conv_block_forward.4} parent=31 // pred_fallthru
        _
      // Predicated region
      $region37: #{conv_block_forward.4} parent=31 // pred_check
        %p5787 = pneg %p151
      $region38: #{conv_block_forward.4} parent=31 // pred_check_branch
        %5789 = sbr.rel (%p5787) target = $region40
      $region39: #{conv_block_forward.4} parent=31 // pred_region
        _
      $region40: #{conv_block_forward.4} parent=31 // pred_fallthru
        _
    $region32: #{conv_block_forward.4} parent=5 // pred_fallthru
      _
    %p5790 = scmp.le.s32.totalorder 2, %s11
    // Predicated region
    $region41: #{conv_block_forward.4} parent=5 // pred_check
      %p5791 = pneg %p5790
    $region42: #{conv_block_forward.4} parent=5 // pred_check_branch
      %5793 = sbr.rel (%p5791) target = $region44
    $region43: #{conv_block_forward.4} parent=5 // pred_region
      %s5794 = ssub.s32 %s11, 2
      // Predicated region
      $region45: #{conv_block_forward.4} parent=43 // pred_check
        %p5795 = pneg %p129
      $region46: #{conv_block_forward.4} parent=43 // pred_check_branch
        %5797 = sbr.rel (%p5795) target = $region48
      $region47: #{conv_block_forward.4} parent=43 // pred_region
        %p5798 = scmp.lt.s32.totalorder %s22, 1
        %s5799 = scalar_select %p5798, %s22, 1
        %p5800 = scmp.lt.s32.totalorder %s23, 0
        %s5801 = scalar_select %p5800, %s23, 0
        %s5802 = smul.addr %s5801, 48
        %s5803 = smul.addr %s5799, 48
        %s5804 = sadd.s32 %s5802, %s5803
        %s5805 = smul.addr %s5804, 4
        %s5806 = scalar_lea.vmem %s3, %s5805
      $region48: #{conv_block_forward.4} parent=43 // pred_fallthru
        _
      // Predicated region
      $region49: #{conv_block_forward.4} parent=43 // pred_check
        %p5807 = pneg %p157
      $region50: #{conv_block_forward.4} parent=43 // pred_check_branch
        %5809 = sbr.rel (%p5807) target = $region52
      $region51: #{conv_block_forward.4} parent=43 // pred_region
        %p5810 = scmp.lt.s32.totalorder %s22, 1
        %s5811 = scalar_select %p5810, %s22, 1
        %p5812 = scmp.lt.s32.totalorder %s23, 0
        %s5813 = scalar_select %p5812, %s23, 0
        %s5814 = sadd.s32 %s5813, %s5811
        %s5815 = smul.addr %s5814, 2
        %s5816 = scalar_lea.vmem %s4, %s5815
      $region52: #{conv_block_forward.4} parent=43 // pred_fallthru
        _
    $region44: #{conv_block_forward.4} parent=5 // pred_fallthru
      _
  $region6: #{conv_block_forward.4} parent=0 // loop_footer
    %s15 = sadd.s32 1, %s11
  $region7: #{conv_block_forward.4} parent=0 // loop_footer_branch
    %10 = sbr.rel target = $region3
  $region8: #{conv_block_forward.4} parent=0 // loop_exit
    _

// kernel: conv_block_forward.3
$region0: #{conv_block_forward.3}
  #allocation0 [shape = 'u32[]', space=smem, size = 0x4, offset = 0x4, fixed_abs, tag = 'smem constant byte address 0x4 - core index']
  #allocation1 [shape = 'u32[144,128]{1,0:T(1,128)}', space=vmem, size = 0x12000, scoped, tag = 'internal scratch']
  %s0 = inlined_call_operand.vmem [shape: bf16[2,1,440,4], index: 0, kind: input, shape index: {}]
  %s1 = inlined_call_operand.vmem [shape: bf16[9,4,128], index: 1, kind: input, shape index: {}]
  %s2 = inlined_call_operand.vmem [shape: f32[1,384,1], index: 2, kind: input, shape index: {}]
  %s3 = inlined_call_operand.vmem [shape: bf16[2,1,384,128], index: 3, kind: output, shape index: {0}]
  %s4 = inlined_call_operand.vmem [shape: f32[2,1,2,128], index: 4, kind: output, shape index: {1}]
  %5 = xla_tuple %s3, %s4
  %s6 = sld [smem:[#allocation0]]
  $region53: #{conv_block_forward.3} parent=0
    _
  %s8 = ssub.s32 1, %s6
  %s9 = scalar_select 0, %s8, %s6
  loop: start=0, step=1, limit=4
  $region2: #{conv_block_forward.3} parent=0 // loop_pre_header
    _
  $region3: #{conv_block_forward.3} parent=0 // loop_header
    %s11 = sphi 0, %s15
    %p12 = scmp.ge.s32.totalorder %s11, 4
    %s18 = sphi 0, %s30
    %s19 = sphi 0, %s26
    %s20 = sphi 0, %s18
    %s21 = sphi 0, %s19
    %s22 = sphi 0, %s20
    %s23 = sphi 0, %s21
    %s35 = sphi 0, %s37
    %s38 = sphi 0, %s35
    %s39 = sphi 0, %s38
    %s55 = sphi 0, %s39
    %s59 = sphi 0, %s59
    %s61 = sphi 0, %s59
    %s62 = sphi 0, %s61
    %s76 = sphi 0, %s62
    %s82 = sphi 0, %s84
    %s85 = sphi 0, %s82
    %s86 = sphi 0, %s85
    %s102 = sphi 0, %s86
    %s110 = sphi 0, %s112
    %s113 = sphi 0, %s110
    %s114 = sphi 0, %s113
    %s130 = sphi 0, %s114
    %s138 = sphi 0, %s140
    %s141 = sphi 0, %s138
    %s142 = sphi 0, %s141
    %s158 = sphi 0, %s142
  $region4: #{conv_block_forward.3} parent=0 // loop_header_branch
    %14 = sbr.rel (%p12) target = $region8
  $region5: #{conv_block_forward.3} parent=0 // loop_body
    %s16 = ssub.s32 %s11, 1
    %s17 = ssub.s32 %s11, 2
    %s24 = sadd.s32 1, %s19
    %p25 = scmp.ge.s32.totalorder %s24, 1
    %s26 = scalar_select %p25, 0, %s24
    %s27 = sadd.s32 1, %s18
    %s28 = scalar_select %p25, %s27, %s18
    %p29 = scmp.ge.s32.totalorder %s28, 2
    %s30 = scalar_select %p29, 0, %s28
    %s31 = ssub.s32 %s18, %s30
    %s32 = ssub.s32 %s19, %s26
    %s33 = sor.u32 %s31, %s32
    %p34 = scmp.eq.s32.totalorder %s33, 0
    %s36 = sadd.s32 %s35, 1
    %s37 = scalar_select %p34, %s35, %s36
    %p40 = pneg %p34
    %p41 = scmp.eq.s32.totalorder %s11, 1
    %p42 = por %p40, %p41
    %p43 = scmp.ne.s32.totalorder %s35, %s38
    %p44 = scmp.eq.s32.totalorder %s11, 0
    %p45 = por %p43, %p44
    %p46 = scmp.ne.s32.totalorder %s35, %s38
    %p47 = scmp.eq.s32.totalorder %s16, 1
    %p48 = por %p46, %p47
    %p49 = scmp.ne.s32.totalorder %s38, %s39
    %p50 = scmp.eq.s32.totalorder %s16, 0
    %p51 = por %p49, %p50
    %p52 = scmp.ne.s32.totalorder %s38, %s39
    %p53 = scmp.eq.s32.totalorder %s17, 1
    %p54 = por %p52, %p53
    %p56 = scmp.ne.s32.totalorder %s39, %s55
    %p57 = scmp.eq.s32.totalorder %s17, 0
    %p58 = por %p56, %p57
    %s60 = sadd.s32 %s59, 1
    %p63 = scmp.eq.s32.totalorder %s11, 1
    %p64 = scmp.ne.s32.totalorder %s59, %s61
    %p65 = scmp.eq.s32.totalorder %s11, 0
    %p66 = por %p64, %p65
    %p67 = scmp.ne.s32.totalorder %s59, %s61
    %p68 = scmp.eq.s32.totalorder %s16, 1
    %p69 = por %p67, %p68
    %p70 = scmp.ne.s32.totalorder %s61, %s62
    %p71 = scmp.eq.s32.totalorder %s16, 0
    %p72 = por %p70, %p71
    %p73 = scmp.ne.s32.totalorder %s61, %s62
    %p74 = scmp.eq.s32.totalorder %s17, 1
    %p75 = por %p73, %p74
    %p77 = scmp.ne.s32.totalorder %s62, %s76
    %p78 = scmp.eq.s32.totalorder %s17, 0
    %p79 = por %p77, %p78
    %s80 = ssub.s32 %s19, %s26
    %p81 = scmp.eq.s32.totalorder %s80, 0
    %s83 = sadd.s32 %s82, 1
    %s84 = scalar_select %p81, %s82, %s83
    %p87 = pneg %p81
    %p88 = scmp.eq.s32.totalorder %s11, 1
    %p89 = por %p87, %p88
    %p90 = scmp.ne.s32.totalorder %s82, %s85
    %p91 = scmp.eq.s32.totalorder %s11, 0
    %p92 = por %p90, %p91
    %p93 = scmp.ne.s32.totalorder %s82, %s85
    %p94 = scmp.eq.s32.totalorder %s16, 1
    %p95 = por %p93, %p94
    %p96 = scmp.ne.s32.totalorder %s85, %s86
    %p97 = scmp.eq.s32.totalorder %s16, 0
    %p98 = por %p96, %p97
    %p99 = scmp.ne.s32.totalorder %s85, %s86
    %p100 = scmp.eq.s32.totalorder %s17, 1
    %p101 = por %p99, %p100
    %p103 = scmp.ne.s32.totalorder %s86, %s102
    %p104 = scmp.eq.s32.totalorder %s17, 0
    %p105 = por %p103, %p104
    %s106 = ssub.s32 %s18, %s30
    %s107 = ssub.s32 %s19, %s26
    %s108 = sor.u32 %s106, %s107
    %p109 = scmp.eq.s32.totalorder %s108, 0
    %s111 = sadd.s32 %s110, 1
    %s112 = scalar_select %p109, %s110, %s111
    %p115 = pneg %p109
    %p116 = scmp.eq.s32.totalorder %s11, 1
    %p117 = por %p115, %p116
    %p118 = scmp.ne.s32.totalorder %s110, %s113
    %p119 = scmp.eq.s32.totalorder %s11, 0
    %p120 = por %p118, %p119
    %p121 = scmp.ne.s32.totalorder %s110, %s113
    %p122 = scmp.eq.s32.totalorder %s16, 1
    %p123 = por %p121, %p122
    %p124 = scmp.ne.s32.totalorder %s113, %s114
    %p125 = scmp.eq.s32.totalorder %s16, 0
    %p126 = por %p124, %p125
    %p127 = scmp.ne.s32.totalorder %s113, %s114
    %p128 = scmp.eq.s32.totalorder %s17, 1
    %p129 = por %p127, %p128
    %p131 = scmp.ne.s32.totalorder %s114, %s130
    %p132 = scmp.eq.s32.totalorder %s17, 0
    %p133 = por %p131, %p132
    %s134 = ssub.s32 %s18, %s30
    %s135 = ssub.s32 %s19, %s26
    %s136 = sor.u32 %s134, %s135
    %p137 = scmp.eq.s32.totalorder %s136, 0
    %s139 = sadd.s32 %s138, 1
    %s140 = scalar_select %p137, %s138, %s139
    %p143 = pneg %p137
    %p144 = scmp.eq.s32.totalorder %s11, 1
    %p145 = por %p143, %p144
    %p146 = scmp.ne.s32.totalorder %s138, %s141
    %p147 = scmp.eq.s32.totalorder %s11, 0
    %p148 = por %p146, %p147
    %p149 = scmp.ne.s32.totalorder %s138, %s141
    %p150 = scmp.eq.s32.totalorder %s16, 1
    %p151 = por %p149, %p150
    %p152 = scmp.ne.s32.totalorder %s141, %s142
    %p153 = scmp.eq.s32.totalorder %s16, 0
    %p154 = por %p152, %p153
    %p155 = scmp.ne.s32.totalorder %s141, %s142
    %p156 = scmp.eq.s32.totalorder %s17, 1
    %p157 = por %p155, %p156
    %p159 = scmp.ne.s32.totalorder %s142, %s158
    %p160 = scmp.eq.s32.totalorder %s17, 0
    %p161 = por %p159, %p160
    %p162 = scmp.le.s32.totalorder 1, %s11
    %p163 = scmp.lt.s32.totalorder %s11, 3
    %p164 = pnand %p162, %p163
    %p165 = pneg %p164
    // Predicated region
    $region9: #{conv_block_forward.3} parent=5 // pred_check
      _
    $region10: #{conv_block_forward.3} parent=5 // pred_check_branch
      %167 = sbr.rel (%p164) target = $region12
    $region11: #{conv_block_forward.3} parent=5 // pred_region
      %s168 = ssub.s32 %s11, 1
      // Predicated region
      $region13: #{conv_block_forward.3} parent=11 // pred_check
        %p169 = pneg %p72
      $region14: #{conv_block_forward.3} parent=11 // pred_check_branch
        %171 = sbr.rel (%p169) target = $region16
      $region15: #{conv_block_forward.3} parent=11 // pred_region
        _
      $region16: #{conv_block_forward.3} parent=11 // pred_fallthru
        _
      // Predicated region
      $region17: #{conv_block_forward.3} parent=11 // pred_check
        %p172 = pneg %p98
      $region18: #{conv_block_forward.3} parent=11 // pred_check_branch
        %174 = sbr.rel (%p172) target = $region20
      $region19: #{conv_block_forward.3} parent=11 // pred_region
        %p175 = scmp.lt.s32.totalorder %s21, 0
        %s176 = scalar_select %p175, %s21, 0
        %s177 = smul.addr %s176, 48
        %s178 = smul.addr %s177, 8
        %s179 = scalar_lea.vmem %s2, %s178
      $region20: #{conv_block_forward.3} parent=11 // pred_fallthru
        _
    $region12: #{conv_block_forward.3} parent=5 // pred_fallthru
      _
    %p180 = scmp.lt.s32.totalorder %s11, 2
    // Predicated region
    $region21: #{conv_block_forward.3} parent=5 // pred_check
      %p181 = pneg %p180
    $region22: #{conv_block_forward.3} parent=5 // pred_check_branch
      %183 = sbr.rel (%p181) target = $region24
    $region23: #{conv_block_forward.3} parent=5 // pred_region
      // Predicated region
      $region25: #{conv_block_forward.3} parent=23 // pred_check
        %p184 = pneg %p45
      $region26: #{conv_block_forward.3} parent=23 // pred_check_branch
        %186 = sbr.rel (%p184) target = $region28
      $region27: #{conv_block_forward.3} parent=23 // pred_region
        %p187 = scmp.lt.s32.totalorder %s18, 1
        %s188 = scalar_select %p187, %s18, 1
        %p189 = scmp.lt.s32.totalorder %s19, 0
        %s190 = scalar_select %p189, %s19, 0
        %s191 = smul.addr %s190, 55
        %s192 = smul.addr %s188, 55
        %s193 = sadd.s32 %s191, %s192
        %s194 = smul.addr %s193, 4
        %s195 = scalar_lea.vmem %s0, %s194
      $region28: #{conv_block_forward.3} parent=23 // pred_fallthru
        _
    $region24: #{conv_block_forward.3} parent=5 // pred_fallthru
      _
    %p196 = scmp.le.s32.totalorder 1, %s11
    %p197 = scmp.lt.s32.totalorder %s11, 3
    %p198 = pnand %p196, %p197
    %p199 = pneg %p198
    // Predicated region
    $region29: #{conv_block_forward.3} parent=5 // pred_check
      _
    $region30: #{conv_block_forward.3} parent=5 // pred_check_branch
      %201 = sbr.rel (%p198) target = $region32
    $region31: #{conv_block_forward.3} parent=5 // pred_region
      %s202 = ssub.s32 %s11, 1
      %p203 = scmp.lt.s32.totalorder %s20, 1
      %s204 = scalar_select %p203, %s20, 1
      %p205 = scmp.lt.s32.totalorder %s21, 0
      %s206 = scalar_select %p205, %s21, 0
      %s207 = smul.addr %s206, 55
      %s208 = smul.addr %s204, 55
      %s209 = sadd.s32 %s207, %s208
      %s210 = smul.addr %s209, 4
      %s211 = scalar_lea.vmem %s0, %s210
      %p212 = pneg %p51
      %p213 = pneg %p48
      %p214 = pneg %p72
      %p215 = pneg %p69
      %p216 = scmp.lt.s32.totalorder %s21, 0
      %s217 = scalar_select %p216, %s21, 0
      %s218 = smul.addr %s217, 48
      %s219 = smul.addr %s218, 8
      %s220 = scalar_lea.vmem %s2, %s219
      %p221 = pneg %p98
      %p222 = pneg %p95
      %p223 = pneg %p126
      %p224 = pneg %p123
      %p225 = scmp.lt.s32.totalorder %s20, 1
      %s226 = scalar_select %p225, %s20, 1
      %p227 = scmp.lt.s32.totalorder %s21, 0
      %s228 = scalar_select %p227, %s21, 0
      %s229 = smul.addr %s228, 48
      %s230 = smul.addr %s226, 48
      %s231 = sadd.s32 %s229, %s230
      %s232 = smul.addr %s231, 4
      %s233 = scalar_lea.vmem %s3, %s232
      %p234 = pneg %p154
      %p235 = pneg %p151
      %p236 = scmp.lt.s32.totalorder %s20, 1
      %s237 = scalar_select %p236, %s20, 1
      %p238 = scmp.lt.s32.totalorder %s21, 0
      %s239 = scalar_select %p238, %s21, 0
      %s240 = sadd.s32 %s239, %s237
      %s241 = smul.addr %s240, 2
      %s242 = scalar_lea.vmem %s4, %s241
      %p243 = scmp.lt.s32.totalorder %s20, 1
      %s244 = scalar_select %p243, %s20, 1
      %p245 = scmp.lt.s32.totalorder %s21, 0
      %s246 = scalar_select %p245, %s21, 0
      %s247 = smul.addr %s246, 55
      %s248 = smul.addr %s244, 55
      %s249 = sadd.s32 %s247, %s248
      %s250 = smul.addr %s249, 4
      %s251 = scalar_lea.vmem %s0, %s250
      %p252 = scmp.lt.s32.totalorder %s21, 0
      %s253 = scalar_select %p252, %s21, 0
      %s254 = smul.addr %s253, 48
      %s255 = smul.addr %s254, 8
      %s256 = scalar_lea.vmem %s2, %s255
      %p257 = scmp.lt.s32.totalorder %s20, 1
      %s258 = scalar_select %p257, %s20, 1
      %p259 = scmp.lt.s32.totalorder %s21, 0
      %s260 = scalar_select %p259, %s21, 0
      %s261 = smul.addr %s260, 48
      %s262 = smul.addr %s258, 48
      %s263 = sadd.s32 %s261, %s262
      %s264 = smul.addr %s263, 4
      %s265 = scalar_lea.vmem %s3, %s264
      %p266 = scmp.lt.s32.totalorder %s20, 1
      %s267 = scalar_select %p266, %s20, 1
      %p268 = scmp.lt.s32.totalorder %s21, 0
      %s269 = scalar_select %p268, %s21, 0
      %s270 = sadd.s32 %s269, %s267
      %s271 = smul.addr %s270, 2
      %s272 = scalar_lea.vmem %s4, %s271
      %v274 = vld [vmem:[%s251] sm:$0xf]
      %v275 = vld [vmem:[%s251 + $0x4] sm:$0xf]
      %v276 = vld [vmem:[%s251 + $0x8] sm:$0xf]
      %v277 = vld [vmem:[%s251 + $0xc] sm:$0xf]
      %v278 = vld [vmem:[%s251 + $0x10] sm:$0xf]
      %v279 = vld [vmem:[%s251 + $0x14] sm:$0xf]
      %v280 = vld [vmem:[%s251 + $0x18] sm:$0xf]
      %v281 = vld [vmem:[%s251 + $0x1c] sm:$0xf]
      %v282 = vld [vmem:[%s251 + $0x20] sm:$0xf]
      %v283 = vld [vmem:[%s251 + $0x24] sm:$0xf]
      %v284 = vld [vmem:[%s251 + $0x28] sm:$0xf]
      %v285 = vld [vmem:[%s251 + $0x2c] sm:$0xf]
      %v286 = vld [vmem:[%s251 + $0x30] sm:$0xf]
      %v287 = vld [vmem:[%s251 + $0x34] sm:$0xf]
      %v288 = vld [vmem:[%s251 + $0x38] sm:$0xf]
      %v289 = vld [vmem:[%s251 + $0x3c] sm:$0xf]
      %v290 = vld [vmem:[%s251 + $0x40] sm:$0xf]
      %v291 = vld [vmem:[%s251 + $0x44] sm:$0xf]
      %v292 = vld [vmem:[%s251 + $0x48] sm:$0xf]
      %v293 = vld [vmem:[%s251 + $0x4c] sm:$0xf]
      %v294 = vld [vmem:[%s251 + $0x50] sm:$0xf]
      %v295 = vld [vmem:[%s251 + $0x54] sm:$0xf]
      %v296 = vld [vmem:[%s251 + $0x58] sm:$0xf]
      %v297 = vld [vmem:[%s251 + $0x5c] sm:$0xf]
      %v298 = vld [vmem:[%s251 + $0x60] sm:$0xf]
      %v299 = vld [vmem:[%s251 + $0x64] sm:$0xf]
      %v300 = vld [vmem:[%s251 + $0x68] sm:$0xf]
      %v301 = vld [vmem:[%s251 + $0x6c] sm:$0xf]
      %v302 = vld [vmem:[%s251 + $0x70] sm:$0xf]
      %v303 = vld [vmem:[%s251 + $0x74] sm:$0xf]
      %v304 = vld [vmem:[%s251 + $0x78] sm:$0xf]
      %v305 = vld [vmem:[%s251 + $0x7c] sm:$0xf]
      %v306 = vld [vmem:[%s251 + $0x80] sm:$0xf]
      %v307 = vld [vmem:[%s251 + $0x84] sm:$0xf]
      %v308 = vld [vmem:[%s251 + $0x88] sm:$0xf]
      %v309 = vld [vmem:[%s251 + $0x8c] sm:$0xf]
      %v310 = vld [vmem:[%s251 + $0x90] sm:$0xf]
      %v311 = vld [vmem:[%s251 + $0x94] sm:$0xf]
      %v312 = vld [vmem:[%s251 + $0x98] sm:$0xf]
      %v313 = vld [vmem:[%s251 + $0x9c] sm:$0xf]
      %v314 = vld [vmem:[%s251 + $0xa0] sm:$0xf]
      %v315 = vld [vmem:[%s251 + $0xa4] sm:$0xf]
      %v316 = vld [vmem:[%s251 + $0xa8] sm:$0xf]
      %v317 = vld [vmem:[%s251 + $0xac] sm:$0xf]
      %v318 = vld [vmem:[%s251 + $0xb0] sm:$0xf]
      %v319 = vld [vmem:[%s251 + $0xb4] sm:$0xf]
      %v320 = vld [vmem:[%s251 + $0xb8] sm:$0xf]
      %v321 = vld [vmem:[%s251 + $0xbc] sm:$0xf]
      %v322 = vld [vmem:[%s1] sm:$0x3]
      %v323 = vld [vmem:[%s251 + $0xc0] sm:$0x1]
      %s324 = scalar_lea.vmem %s1, 2
      %v325 = vld [vmem:[%s324] sm:$0x3]
      %v375 = vunpack.c.l.b16 %v274
      %v376 = vunpack.c.l.b16 %v275
      %v377 = vunpack.c.l.b16 %v276
      %v378 = vunpack.c.l.b16 %v277
      %v379 = vunpack.c.l.b16 %v278
      %v380 = vunpack.c.l.b16 %v279
      %v381 = vunpack.c.l.b16 %v280
      %v382 = vunpack.c.l.b16 %v281
      %v383 = vunpack.c.l.b16 %v282
      %v384 = vunpack.c.l.b16 %v283
      %v385 = vunpack.c.l.b16 %v284
      %v386 = vunpack.c.l.b16 %v285
      %v387 = vunpack.c.l.b16 %v286
      %v388 = vunpack.c.l.b16 %v287
      %v389 = vunpack.c.l.b16 %v288
      %v390 = vunpack.c.l.b16 %v289
      %v391 = vunpack.c.l.b16 %v290
      %v392 = vunpack.c.l.b16 %v291
      %v393 = vunpack.c.l.b16 %v292
      %v394 = vunpack.c.l.b16 %v293
      %v395 = vunpack.c.l.b16 %v294
      %v396 = vunpack.c.l.b16 %v295
      %v397 = vunpack.c.l.b16 %v296
      %v398 = vunpack.c.l.b16 %v297
      %v399 = vunpack.c.l.b16 %v298
      %v400 = vunpack.c.l.b16 %v299
      %v401 = vunpack.c.l.b16 %v300
      %v402 = vunpack.c.l.b16 %v301
      %v403 = vunpack.c.l.b16 %v302
      %v404 = vunpack.c.l.b16 %v303
      %v405 = vunpack.c.l.b16 %v304
      %v406 = vunpack.c.l.b16 %v305
      %v407 = vunpack.c.l.b16 %v306
      %v408 = vunpack.c.l.b16 %v307
      %v409 = vunpack.c.l.b16 %v308
      %v410 = vunpack.c.l.b16 %v309
      %v411 = vunpack.c.l.b16 %v310
      %v412 = vunpack.c.l.b16 %v311
      %v413 = vunpack.c.l.b16 %v312
      %v414 = vunpack.c.l.b16 %v313
      %v415 = vunpack.c.l.b16 %v314
      %v416 = vunpack.c.l.b16 %v315
      %v417 = vunpack.c.l.b16 %v316
      %v418 = vunpack.c.l.b16 %v317
      %v419 = vunpack.c.l.b16 %v318
      %v420 = vunpack.c.l.b16 %v319
      %v421 = vunpack.c.l.b16 %v320
      %v422 = vunpack.c.l.b16 %v321
      %v423 = vunpack.c.l.b16 %v323
      %v424 = vpack.c.b16 %v376, %v375
      %v425 = vpack.c.b16 %v378, %v377
      %v426 = vpack.c.b16 %v380, %v379
      %v427 = vpack.c.b16 %v382, %v381
      %v428 = vpack.c.b16 %v384, %v383
      %v429 = vpack.c.b16 %v386, %v385
      %v430 = vpack.c.b16 %v388, %v387
      %v431 = vpack.c.b16 %v390, %v389
      %v432 = vpack.c.b16 %v392, %v391
      %v433 = vpack.c.b16 %v394, %v393
      %v434 = vpack.c.b16 %v396, %v395
      %v435 = vpack.c.b16 %v398, %v397
      %v436 = vpack.c.b16 %v400, %v399
      %v437 = vpack.c.b16 %v402, %v401
      %v438 = vpack.c.b16 %v404, %v403
      %v439 = vpack.c.b16 %v406, %v405
      %v440 = vpack.c.b16 %v408, %v407
      %v441 = vpack.c.b16 %v410, %v409
      %v442 = vpack.c.b16 %v412, %v411
      %v443 = vpack.c.b16 %v414, %v413
      %v444 = vpack.c.b16 %v416, %v415
      %v445 = vpack.c.b16 %v418, %v417
      %v446 = vpack.c.b16 %v420, %v419
      %v447 = vpack.c.b16 %v422, %v421
      %v448 = vpack.c.b16 %v423, %v423
      %vm449 = vsmask.f32 7424
      %v451 = vshrl.u32 %v424, 16
      %v453 = vshll.u32 %v424, 16
      %v455 = vrot.slane %v453, 1
      %v456 = vor.u32 %v451, %v455
      %v458 = vshll.u32 %v425, 16
      %v460 = vrot.slane %v458, 1
      %v461 = vsel %vm449, %v456, %v460
      %v462 = vshrl.u32 %v425, 16
      %v464 = vor.u32 %v462, %v460
      %v466 = vshll.u32 %v426, 16
      %v468 = vrot.slane %v466, 1
      %v469 = vsel %vm449, %v464, %v468
      %v470 = vshrl.u32 %v426, 16
      %v472 = vor.u32 %v470, %v468
      %v474 = vshll.u32 %v427, 16
      %v476 = vrot.slane %v474, 1
      %v477 = vsel %vm449, %v472, %v476
      %v478 = vshrl.u32 %v427, 16
      %v480 = vor.u32 %v478, %v476
      %v482 = vshll.u32 %v428, 16
      %v484 = vrot.slane %v482, 1
      %v485 = vsel %vm449, %v480, %v484
      %v486 = vshrl.u32 %v428, 16
      %v488 = vor.u32 %v486, %v484
      %v490 = vshll.u32 %v429, 16
      %v492 = vrot.slane %v490, 1
      %v493 = vsel %vm449, %v488, %v492
      %v494 = vshrl.u32 %v429, 16
      %v496 = vor.u32 %v494, %v492
      %v498 = vshll.u32 %v430, 16
      %v500 = vrot.slane %v498, 1
      %v501 = vsel %vm449, %v496, %v500
      %v502 = vshrl.u32 %v430, 16
      %v504 = vor.u32 %v502, %v500
      %v506 = vshll.u32 %v431, 16
      %v508 = vrot.slane %v506, 1
      %v509 = vsel %vm449, %v504, %v508
      %v510 = vshrl.u32 %v431, 16
      %v512 = vor.u32 %v510, %v508
      %v514 = vshll.u32 %v432, 16
      %v516 = vrot.slane %v514, 1
      %v517 = vsel %vm449, %v512, %v516
      %v518 = vshrl.u32 %v432, 16
      %v520 = vor.u32 %v518, %v516
      %v522 = vshll.u32 %v433, 16
      %v524 = vrot.slane %v522, 1
      %v525 = vsel %vm449, %v520, %v524
      %v526 = vshrl.u32 %v433, 16
      %v528 = vor.u32 %v526, %v524
      %v530 = vshll.u32 %v434, 16
      %v532 = vrot.slane %v530, 1
      %v533 = vsel %vm449, %v528, %v532
      %v534 = vshrl.u32 %v434, 16
      %v536 = vor.u32 %v534, %v532
      %v538 = vshll.u32 %v435, 16
      %v540 = vrot.slane %v538, 1
      %v541 = vsel %vm449, %v536, %v540
      %v542 = vshrl.u32 %v435, 16
      %v544 = vor.u32 %v542, %v540
      %v546 = vshll.u32 %v436, 16
      %v548 = vrot.slane %v546, 1
      %v549 = vsel %vm449, %v544, %v548
      %v550 = vshrl.u32 %v436, 16
      %v552 = vor.u32 %v550, %v548
      %v554 = vshll.u32 %v437, 16
      %v556 = vrot.slane %v554, 1
      %v557 = vsel %vm449, %v552, %v556
      %v558 = vshrl.u32 %v437, 16
      %v560 = vor.u32 %v558, %v556
      %v562 = vshll.u32 %v438, 16
      %v564 = vrot.slane %v562, 1
      %v565 = vsel %vm449, %v560, %v564
      %v566 = vshrl.u32 %v438, 16
      %v568 = vor.u32 %v566, %v564
      %v570 = vshll.u32 %v439, 16
      %v572 = vrot.slane %v570, 1
      %v573 = vsel %vm449, %v568, %v572
      %v574 = vshrl.u32 %v439, 16
      %v576 = vor.u32 %v574, %v572
      %v578 = vshll.u32 %v440, 16
      %v580 = vrot.slane %v578, 1
      %v581 = vsel %vm449, %v576, %v580
      %v582 = vshrl.u32 %v440, 16
      %v584 = vor.u32 %v582, %v580
      %v586 = vshll.u32 %v441, 16
      %v588 = vrot.slane %v586, 1
      %v589 = vsel %vm449, %v584, %v588
      %v590 = vshrl.u32 %v441, 16
      %v592 = vor.u32 %v590, %v588
      %v594 = vshll.u32 %v442, 16
      %v596 = vrot.slane %v594, 1
      %v597 = vsel %vm449, %v592, %v596
      %v598 = vshrl.u32 %v442, 16
      %v600 = vor.u32 %v598, %v596
      %v602 = vshll.u32 %v443, 16
      %v604 = vrot.slane %v602, 1
      %v605 = vsel %vm449, %v600, %v604
      %v606 = vshrl.u32 %v443, 16
      %v608 = vor.u32 %v606, %v604
      %v610 = vshll.u32 %v444, 16
      %v612 = vrot.slane %v610, 1
      %v613 = vsel %vm449, %v608, %v612
      %v614 = vshrl.u32 %v444, 16
      %v616 = vor.u32 %v614, %v612
      %v618 = vshll.u32 %v445, 16
      %v620 = vrot.slane %v618, 1
      %v621 = vsel %vm449, %v616, %v620
      %v622 = vshrl.u32 %v445, 16
      %v624 = vor.u32 %v622, %v620
      %v626 = vshll.u32 %v446, 16
      %v628 = vrot.slane %v626, 1
      %v629 = vsel %vm449, %v624, %v628
      %v630 = vshrl.u32 %v446, 16
      %v632 = vor.u32 %v630, %v628
      %v634 = vshll.u32 %v447, 16
      %v636 = vrot.slane %v634, 1
      %v637 = vsel %vm449, %v632, %v636
      %v638 = vshrl.u32 %v447, 16
      %v640 = vor.u32 %v638, %v636
      %v642 = vshll.u32 %v448, 16
      %v644 = vrot.slane %v642, 1
      %v645 = vsel %vm449, %v640, %v644
      %vm646 = vcmask 31744
      %v648 = vsel %vm646, %v461, 0
      %v651 = vsel %vm646, %v469, 0
      %v654 = vsel %vm646, %v477, 0
      %v657 = vsel %vm646, %v485, 0
      %v660 = vsel %vm646, %v493, 0
      %v663 = vsel %vm646, %v501, 0
      %v666 = vsel %vm646, %v509, 0
      %v669 = vsel %vm646, %v517, 0
      %v672 = vsel %vm646, %v525, 0
      %v675 = vsel %vm646, %v533, 0
      %v678 = vsel %vm646, %v541, 0
      %v681 = vsel %vm646, %v549, 0
      %v684 = vsel %vm646, %v557, 0
      %v687 = vsel %vm646, %v565, 0
      %v690 = vsel %vm646, %v573, 0
      %v693 = vsel %vm646, %v581, 0
      %v696 = vsel %vm646, %v589, 0
      %v699 = vsel %vm646, %v597, 0
      %v702 = vsel %vm646, %v605, 0
      %v705 = vsel %vm646, %v613, 0
      %v708 = vsel %vm646, %v621, 0
      %v711 = vsel %vm646, %v629, 0
      %v714 = vsel %vm646, %v637, 0
      %v717 = vsel %vm646, %v645, 0
      %vm719 = vcmask 1041408
      %v721 = vsel %vm719, %v325, 0
      %723 = vmatprep.subr.bf16.mxu0 0
      %724 = vmatpush1.bf16.msra.mxu0 0
      %725 = vmatprep.subr.bf16.mxu0 0
      %726 = vmatpush1.bf16.msra.mxu0 0
      %727 = vmatprep.subr.bf16.mxu0 0
      %728 = vmatpush1.bf16.msra.mxu0 0
      %729 = vmatprep.subr.bf16.mxu0 0
      %730 = vmatpush1.bf16.msra.mxu0 0
      %731 = vmatprep.subr.bf16.mxu0 0
      %732 = vmatpush1.bf16.msra.mxu0 0
      %733 = vmatprep.subr.bf16.mxu0 0
      %734 = vmatpush1.bf16.msra.mxu0 0
      %735 = vmatprep.subr.bf16.mxu0 0
      %736 = vmatpush1.bf16.msra.mxu0 0
      %737 = vmatprep.subr.bf16.mxu0 0
      %738 = vmatpush1.bf16.msra.mxu0 %v721
      %739 = vmatprep.subr.bf16.mxu0 0
      %740 = vmatpush2.bf16.msra.mxu0 0
      %741 = vmatprep.subr.bf16.mxu0 0
      %742 = vmatpush2.bf16.msra.mxu0 0
      %743 = vmatprep.subr.bf16.mxu0 0
      %744 = vmatpush2.bf16.msra.mxu0 0
      %745 = vmatprep.subr.bf16.mxu0 0
      %746 = vmatpush2.bf16.msra.mxu0 0
      %747 = vmatprep.subr.bf16.mxu0 0
      %748 = vmatpush2.bf16.msra.mxu0 0
      %749 = vmatprep.subr.bf16.mxu0 0
      %750 = vmatpush2.bf16.msra.mxu0 0
      %751 = vmatprep.subr.bf16.mxu0 0
      %752 = vmatpush2.bf16.msra.mxu0 0
      %753 = vmatprep.subr.bf16.mxu0 0
      %754 = vmatpush2.bf16.msra.mxu0 0
      %755 = vmatprep.mubr.bf16.mxu0 0
      %756 = vmatmul.mubr.bf16.gmra.mxu0 %v648
      %v757 = vpop.f32.mrf.mxu0
      %v758 = vadd.f32 0.0, %v757
      %v759 = vpop.f32.mrf.mxu0
      %v760 = vpop.f32.mrf.mxu0
      %v761 = vadd.f32 0.0, %v760
      %v762 = vpop.f32.mrf.mxu0
      %763 = vmatprep.mubr.bf16.mxu0 0
      %764 = vmatmul.mubr.bf16.gmra.mxu0 %v651
      %v765 = vpop.f32.mrf.mxu0
      %v766 = vadd.f32 0.0, %v765
      %v767 = vpop.f32.mrf.mxu0
      %v768 = vpop.f32.mrf.mxu0
      %v769 = vadd.f32 0.0, %v768
      %v770 = vpop.f32.mrf.mxu0
      %771 = vmatprep.mubr.bf16.mxu0 0
      %772 = vmatmul.mubr.bf16.gmra.mxu0 %v654
      %v773 = vpop.f32.mrf.mxu0
      %v774 = vadd.f32 0.0, %v773
      %v775 = vpop.f32.mrf.mxu0
      %v776 = vpop.f32.mrf.mxu0
      %v777 = vadd.f32 0.0, %v776
      %v778 = vpop.f32.mrf.mxu0
      %779 = vmatprep.mubr.bf16.mxu0 0
      %780 = vmatmul.mubr.bf16.gmra.mxu0 %v657
      %v781 = vpop.f32.mrf.mxu0
      %v782 = vadd.f32 0.0, %v781
      %v783 = vpop.f32.mrf.mxu0
      %v784 = vpop.f32.mrf.mxu0
      %v785 = vadd.f32 0.0, %v784
      %v786 = vpop.f32.mrf.mxu0
      %787 = vmatprep.mubr.bf16.mxu0 0
      %788 = vmatmul.mubr.bf16.gmra.mxu0 %v660
      %v789 = vpop.f32.mrf.mxu0
      %v790 = vadd.f32 0.0, %v789
      %v791 = vpop.f32.mrf.mxu0
      %v792 = vpop.f32.mrf.mxu0
      %v793 = vadd.f32 0.0, %v792
      %v794 = vpop.f32.mrf.mxu0
      %795 = vmatprep.mubr.bf16.mxu0 0
      %796 = vmatmul.mubr.bf16.gmra.mxu0 %v663
      %v797 = vpop.f32.mrf.mxu0
      %v798 = vadd.f32 0.0, %v797
      %v799 = vpop.f32.mrf.mxu0
      %v800 = vpop.f32.mrf.mxu0
      %v801 = vadd.f32 0.0, %v800
      %v802 = vpop.f32.mrf.mxu0
      %803 = vmatprep.mubr.bf16.mxu0 0
      %804 = vmatmul.mubr.bf16.gmra.mxu0 %v666
      %v805 = vpop.f32.mrf.mxu0
      %v806 = vadd.f32 0.0, %v805
      %v807 = vpop.f32.mrf.mxu0
      %v808 = vpop.f32.mrf.mxu0
      %v809 = vadd.f32 0.0, %v808
      %v810 = vpop.f32.mrf.mxu0
      %811 = vmatprep.mubr.bf16.mxu0 0
      %812 = vmatmul.mubr.bf16.gmra.mxu0 %v669
      %v813 = vpop.f32.mrf.mxu0
      %v814 = vadd.f32 0.0, %v813
      %v815 = vpop.f32.mrf.mxu0
      %v816 = vpop.f32.mrf.mxu0
      %v817 = vadd.f32 0.0, %v816
      %v818 = vpop.f32.mrf.mxu0
      %819 = vmatprep.mubr.bf16.mxu0 0
      %820 = vmatmul.mubr.bf16.gmra.mxu0 %v672
      %v821 = vpop.f32.mrf.mxu0
      %v822 = vadd.f32 0.0, %v821
      %v823 = vpop.f32.mrf.mxu0
      %v824 = vpop.f32.mrf.mxu0
      %v825 = vadd.f32 0.0, %v824
      %v826 = vpop.f32.mrf.mxu0
      %827 = vmatprep.mubr.bf16.mxu0 0
      %828 = vmatmul.mubr.bf16.gmra.mxu0 %v675
      %v829 = vpop.f32.mrf.mxu0
      %v830 = vadd.f32 0.0, %v829
      %v831 = vpop.f32.mrf.mxu0
      %v832 = vpop.f32.mrf.mxu0
      %v833 = vadd.f32 0.0, %v832
      %v834 = vpop.f32.mrf.mxu0
      %835 = vmatprep.mubr.bf16.mxu0 0
      %836 = vmatmul.mubr.bf16.gmra.mxu0 %v678
      %v837 = vpop.f32.mrf.mxu0
      %v838 = vadd.f32 0.0, %v837
      %v839 = vpop.f32.mrf.mxu0
      %v840 = vpop.f32.mrf.mxu0
      %v841 = vadd.f32 0.0, %v840
      %v842 = vpop.f32.mrf.mxu0
      %843 = vmatprep.mubr.bf16.mxu0 0
      %844 = vmatmul.mubr.bf16.gmra.mxu0 %v681
      %v845 = vpop.f32.mrf.mxu0
      %v846 = vadd.f32 0.0, %v845
      %v847 = vpop.f32.mrf.mxu0
      %v848 = vpop.f32.mrf.mxu0
      %v849 = vadd.f32 0.0, %v848
      %v850 = vpop.f32.mrf.mxu0
      %851 = vmatprep.mubr.bf16.mxu0 0
      %852 = vmatmul.mubr.bf16.gmra.mxu0 %v684
      %v853 = vpop.f32.mrf.mxu0
      %v854 = vadd.f32 0.0, %v853
      %v855 = vpop.f32.mrf.mxu0
      %v856 = vpop.f32.mrf.mxu0
      %v857 = vadd.f32 0.0, %v856
      %v858 = vpop.f32.mrf.mxu0
      %859 = vmatprep.mubr.bf16.mxu0 0
      %860 = vmatmul.mubr.bf16.gmra.mxu0 %v687
      %v861 = vpop.f32.mrf.mxu0
      %v862 = vadd.f32 0.0, %v861
      %v863 = vpop.f32.mrf.mxu0
      %v864 = vpop.f32.mrf.mxu0
      %v865 = vadd.f32 0.0, %v864
      %v866 = vpop.f32.mrf.mxu0
      %867 = vmatprep.mubr.bf16.mxu0 0
      %868 = vmatmul.mubr.bf16.gmra.mxu0 %v690
      %v869 = vpop.f32.mrf.mxu0
      %v870 = vadd.f32 0.0, %v869
      %v871 = vpop.f32.mrf.mxu0
      %v872 = vpop.f32.mrf.mxu0
      %v873 = vadd.f32 0.0, %v872
      %v874 = vpop.f32.mrf.mxu0
      %875 = vmatprep.mubr.bf16.mxu0 0
      %876 = vmatmul.mubr.bf16.gmra.mxu0 %v693
      %v877 = vpop.f32.mrf.mxu0
      %v878 = vadd.f32 0.0, %v877
      %v879 = vpop.f32.mrf.mxu0
      %v880 = vpop.f32.mrf.mxu0
      %v881 = vadd.f32 0.0, %v880
      %v882 = vpop.f32.mrf.mxu0
      %883 = vmatprep.mubr.bf16.mxu0 0
      %884 = vmatmul.mubr.bf16.gmra.mxu0 %v696
      %v885 = vpop.f32.mrf.mxu0
      %v886 = vadd.f32 0.0, %v885
      %v887 = vpop.f32.mrf.mxu0
      %v888 = vpop.f32.mrf.mxu0
      %v889 = vadd.f32 0.0, %v888
      %v890 = vpop.f32.mrf.mxu0
      %891 = vmatprep.mubr.bf16.mxu0 0
      %892 = vmatmul.mubr.bf16.gmra.mxu0 %v699
      %v893 = vpop.f32.mrf.mxu0
      %v894 = vadd.f32 0.0, %v893
      %v895 = vpop.f32.mrf.mxu0
      %v896 = vpop.f32.mrf.mxu0
      %v897 = vadd.f32 0.0, %v896
      %v898 = vpop.f32.mrf.mxu0
      %899 = vmatprep.mubr.bf16.mxu0 0
      %900 = vmatmul.mubr.bf16.gmra.mxu0 %v702
      %v901 = vpop.f32.mrf.mxu0
      %v902 = vadd.f32 0.0, %v901
      %v903 = vpop.f32.mrf.mxu0
      %v904 = vpop.f32.mrf.mxu0
      %v905 = vadd.f32 0.0, %v904
      %v906 = vpop.f32.mrf.mxu0
      %907 = vmatprep.mubr.bf16.mxu0 0
      %908 = vmatmul.mubr.bf16.gmra.mxu0 %v705
      %v909 = vpop.f32.mrf.mxu0
      %v910 = vadd.f32 0.0, %v909
      %v911 = vpop.f32.mrf.mxu0
      %v912 = vpop.f32.mrf.mxu0
      %v913 = vadd.f32 0.0, %v912
      %v914 = vpop.f32.mrf.mxu0
      %915 = vmatprep.mubr.bf16.mxu0 0
      %916 = vmatmul.mubr.bf16.gmra.mxu0 %v708
      %v917 = vpop.f32.mrf.mxu0
      %v918 = vadd.f32 0.0, %v917
      %v919 = vpop.f32.mrf.mxu0
      %v920 = vpop.f32.mrf.mxu0
      %v921 = vadd.f32 0.0, %v920
      %v922 = vpop.f32.mrf.mxu0
      %923 = vmatprep.mubr.bf16.mxu0 0
      %924 = vmatmul.mubr.bf16.gmra.mxu0 %v711
      %v925 = vpop.f32.mrf.mxu0
      %v926 = vadd.f32 0.0, %v925
      %v927 = vpop.f32.mrf.mxu0
      %v928 = vpop.f32.mrf.mxu0
      %v929 = vadd.f32 0.0, %v928
      %v930 = vpop.f32.mrf.mxu0
      %931 = vmatprep.mubr.bf16.mxu0 0
      %932 = vmatmul.mubr.bf16.gmra.mxu0 %v714
      %v933 = vpop.f32.mrf.mxu0
      %v934 = vadd.f32 0.0, %v933
      %v935 = vpop.f32.mrf.mxu0
      %v936 = vpop.f32.mrf.mxu0
      %v937 = vadd.f32 0.0, %v936
      %v938 = vpop.f32.mrf.mxu0
      %939 = vmatprep.mubr.bf16.mxu0 0
      %940 = vmatmul.mubr.bf16.gmra.mxu0 %v717
      %v941 = vpop.f32.mrf.mxu0
      %v942 = vadd.f32 0.0, %v941
      %v943 = vpop.f32.mrf.mxu0
      %v944 = vpop.f32.mrf.mxu0
      %v945 = vadd.f32 0.0, %v944
      %v946 = vpop.f32.mrf.mxu0
      %947 = vdwg.mxu0
      %v948 = vsel %vm646, %v424, 0
      %v950 = vsel %vm646, %v425, 0
      %v952 = vsel %vm646, %v426, 0
      %v954 = vsel %vm646, %v427, 0
      %v956 = vsel %vm646, %v428, 0
      %v958 = vsel %vm646, %v429, 0
      %v960 = vsel %vm646, %v430, 0
      %v962 = vsel %vm646, %v431, 0
      %v964 = vsel %vm646, %v432, 0
      %v966 = vsel %vm646, %v433, 0
      %v968 = vsel %vm646, %v434, 0
      %v970 = vsel %vm646, %v435, 0
      %v972 = vsel %vm646, %v436, 0
      %v974 = vsel %vm646, %v437, 0
      %v976 = vsel %vm646, %v438, 0
      %v978 = vsel %vm646, %v439, 0
      %v980 = vsel %vm646, %v440, 0
      %v982 = vsel %vm646, %v441, 0
      %v984 = vsel %vm646, %v442, 0
      %v986 = vsel %vm646, %v443, 0
      %v988 = vsel %vm646, %v444, 0
      %v990 = vsel %vm646, %v445, 0
      %v992 = vsel %vm646, %v446, 0
      %v994 = vsel %vm646, %v447, 0
      %v997 = vsel %vm719, %v322, 0
      %999 = vmatprep.subr.bf16.mxu0 0
      %1000 = vmatpush1.bf16.msra.mxu0 0
      %1001 = vmatprep.subr.bf16.mxu0 0
      %1002 = vmatpush1.bf16.msra.mxu0 0
      %1003 = vmatprep.subr.bf16.mxu0 0
      %1004 = vmatpush1.bf16.msra.mxu0 0
      %1005 = vmatprep.subr.bf16.mxu0 0
      %1006 = vmatpush1.bf16.msra.mxu0 0
      %1007 = vmatprep.subr.bf16.mxu0 0
      %1008 = vmatpush1.bf16.msra.mxu0 0
      %1009 = vmatprep.subr.bf16.mxu0 0
      %1010 = vmatpush1.bf16.msra.mxu0 0
      %1011 = vmatprep.subr.bf16.mxu0 0
      %1012 = vmatpush1.bf16.msra.mxu0 0
      %1013 = vmatprep.subr.bf16.mxu0 0
      %1014 = vmatpush1.bf16.msra.mxu0 %v997
      %1015 = vmatprep.subr.bf16.mxu0 0
      %1016 = vmatpush2.bf16.msra.mxu0 0
      %1017 = vmatprep.subr.bf16.mxu0 0
      %1018 = vmatpush2.bf16.msra.mxu0 0
      %1019 = vmatprep.subr.bf16.mxu0 0
      %1020 = vmatpush2.bf16.msra.mxu0 0
      %1021 = vmatprep.subr.bf16.mxu0 0
      %1022 = vmatpush2.bf16.msra.mxu0 0
      %1023 = vmatprep.subr.bf16.mxu0 0
      %1024 = vmatpush2.bf16.msra.mxu0 0
      %1025 = vmatprep.subr.bf16.mxu0 0
      %1026 = vmatpush2.bf16.msra.mxu0 0
      %1027 = vmatprep.subr.bf16.mxu0 0
      %1028 = vmatpush2.bf16.msra.mxu0 0
      %1029 = vmatprep.subr.bf16.mxu0 0
      %1030 = vmatpush2.bf16.msra.mxu0 0
      %1031 = vmatprep.mubr.bf16.mxu0 0
      %1032 = vmatmul.mubr.bf16.gmra.mxu0 %v948
      %v1033 = vpop.f32.mrf.mxu0
      %v1034 = vadd.f32 %v758, %v1033
      %v1035 = vpop.f32.mrf.mxu0
      %v1036 = vpop.f32.mrf.mxu0
      %v1037 = vadd.f32 %v761, %v1036
      %v1038 = vpop.f32.mrf.mxu0
      %1039 = vmatprep.mubr.bf16.mxu0 0
      %1040 = vmatmul.mubr.bf16.gmra.mxu0 %v950
      %v1041 = vpop.f32.mrf.mxu0
      %v1042 = vadd.f32 %v766, %v1041
      %v1043 = vpop.f32.mrf.mxu0
      %v1044 = vpop.f32.mrf.mxu0
      %v1045 = vadd.f32 %v769, %v1044
      %v1046 = vpop.f32.mrf.mxu0
      %1047 = vmatprep.mubr.bf16.mxu0 0
      %1048 = vmatmul.mubr.bf16.gmra.mxu0 %v952
      %v1049 = vpop.f32.mrf.mxu0
      %v1050 = vadd.f32 %v774, %v1049
      %v1051 = vpop.f32.mrf.mxu0
      %v1052 = vpop.f32.mrf.mxu0
      %v1053 = vadd.f32 %v777, %v1052
      %v1054 = vpop.f32.mrf.mxu0
      %1055 = vmatprep.mubr.bf16.mxu0 0
      %1056 = vmatmul.mubr.bf16.gmra.mxu0 %v954
      %v1057 = vpop.f32.mrf.mxu0
      %v1058 = vadd.f32 %v782, %v1057
      %v1059 = vpop.f32.mrf.mxu0
      %v1060 = vpop.f32.mrf.mxu0
      %v1061 = vadd.f32 %v785, %v1060
      %v1062 = vpop.f32.mrf.mxu0
      %1063 = vmatprep.mubr.bf16.mxu0 0
      %1064 = vmatmul.mubr.bf16.gmra.mxu0 %v956
      %v1065 = vpop.f32.mrf.mxu0
      %v1066 = vadd.f32 %v790, %v1065
      %v1067 = vpop.f32.mrf.mxu0
      %v1068 = vpop.f32.mrf.mxu0
      %v1069 = vadd.f32 %v793, %v1068
      %v1070 = vpop.f32.mrf.mxu0
      %1071 = vmatprep.mubr.bf16.mxu0 0
      %1072 = vmatmul.mubr.bf16.gmra.mxu0 %v958
      %v1073 = vpop.f32.mrf.mxu0
      %v1074 = vadd.f32 %v798, %v1073
      %v1075 = vpop.f32.mrf.mxu0
      %v1076 = vpop.f32.mrf.mxu0
      %v1077 = vadd.f32 %v801, %v1076
      %v1078 = vpop.f32.mrf.mxu0
      %1079 = vmatprep.mubr.bf16.mxu0 0
      %1080 = vmatmul.mubr.bf16.gmra.mxu0 %v960
      %v1081 = vpop.f32.mrf.mxu0
      %v1082 = vadd.f32 %v806, %v1081
      %v1083 = vpop.f32.mrf.mxu0
      %v1084 = vpop.f32.mrf.mxu0
      %v1085 = vadd.f32 %v809, %v1084
      %v1086 = vpop.f32.mrf.mxu0
      %1087 = vmatprep.mubr.bf16.mxu0 0
      %1088 = vmatmul.mubr.bf16.gmra.mxu0 %v962
      %v1089 = vpop.f32.mrf.mxu0
      %v1090 = vadd.f32 %v814, %v1089
      %v1091 = vpop.f32.mrf.mxu0
      %v1092 = vpop.f32.mrf.mxu0
      %v1093 = vadd.f32 %v817, %v1092
      %v1094 = vpop.f32.mrf.mxu0
      %1095 = vmatprep.mubr.bf16.mxu0 0
      %1096 = vmatmul.mubr.bf16.gmra.mxu0 %v964
      %v1097 = vpop.f32.mrf.mxu0
      %v1098 = vadd.f32 %v822, %v1097
      %v1099 = vpop.f32.mrf.mxu0
      %v1100 = vpop.f32.mrf.mxu0
      %v1101 = vadd.f32 %v825, %v1100
      %v1102 = vpop.f32.mrf.mxu0
      %1103 = vmatprep.mubr.bf16.mxu0 0
      %1104 = vmatmul.mubr.bf16.gmra.mxu0 %v966
      %v1105 = vpop.f32.mrf.mxu0
      %v1106 = vadd.f32 %v830, %v1105
      %v1107 = vpop.f32.mrf.mxu0
      %v1108 = vpop.f32.mrf.mxu0
      %v1109 = vadd.f32 %v833, %v1108
      %v1110 = vpop.f32.mrf.mxu0
      %1111 = vmatprep.mubr.bf16.mxu0 0
      %1112 = vmatmul.mubr.bf16.gmra.mxu0 %v968
      %v1113 = vpop.f32.mrf.mxu0
      %v1114 = vadd.f32 %v838, %v1113
      %v1115 = vpop.f32.mrf.mxu0
      %v1116 = vpop.f32.mrf.mxu0
      %v1117 = vadd.f32 %v841, %v1116
      %v1118 = vpop.f32.mrf.mxu0
      %1119 = vmatprep.mubr.bf16.mxu0 0
      %1120 = vmatmul.mubr.bf16.gmra.mxu0 %v970
      %v1121 = vpop.f32.mrf.mxu0
      %v1122 = vadd.f32 %v846, %v1121
      %v1123 = vpop.f32.mrf.mxu0
      %v1124 = vpop.f32.mrf.mxu0
      %v1125 = vadd.f32 %v849, %v1124
      %v1126 = vpop.f32.mrf.mxu0
      %1127 = vmatprep.mubr.bf16.mxu0 0
      %1128 = vmatmul.mubr.bf16.gmra.mxu0 %v972
      %v1129 = vpop.f32.mrf.mxu0
      %v1130 = vadd.f32 %v854, %v1129
      %v1131 = vpop.f32.mrf.mxu0
      %v1132 = vpop.f32.mrf.mxu0
      %v1133 = vadd.f32 %v857, %v1132
      %v1134 = vpop.f32.mrf.mxu0
      %1135 = vmatprep.mubr.bf16.mxu0 0
      %1136 = vmatmul.mubr.bf16.gmra.mxu0 %v974
      %v1137 = vpop.f32.mrf.mxu0
      %v1138 = vadd.f32 %v862, %v1137
      %v1139 = vpop.f32.mrf.mxu0
      %v1140 = vpop.f32.mrf.mxu0
      %v1141 = vadd.f32 %v865, %v1140
      %v1142 = vpop.f32.mrf.mxu0
      %1143 = vmatprep.mubr.bf16.mxu0 0
      %1144 = vmatmul.mubr.bf16.gmra.mxu0 %v976
      %v1145 = vpop.f32.mrf.mxu0
      %v1146 = vadd.f32 %v870, %v1145
      %v1147 = vpop.f32.mrf.mxu0
      %v1148 = vpop.f32.mrf.mxu0
      %v1149 = vadd.f32 %v873, %v1148
      %v1150 = vpop.f32.mrf.mxu0
      %1151 = vmatprep.mubr.bf16.mxu0 0
      %1152 = vmatmul.mubr.bf16.gmra.mxu0 %v978
      %v1153 = vpop.f32.mrf.mxu0
      %v1154 = vadd.f32 %v878, %v1153
      %v1155 = vpop.f32.mrf.mxu0
      %v1156 = vpop.f32.mrf.mxu0
      %v1157 = vadd.f32 %v881, %v1156
      %v1158 = vpop.f32.mrf.mxu0
      %1159 = vmatprep.mubr.bf16.mxu0 0
      %1160 = vmatmul.mubr.bf16.gmra.mxu0 %v980
      %v1161 = vpop.f32.mrf.mxu0
      %v1162 = vadd.f32 %v886, %v1161
      %v1163 = vpop.f32.mrf.mxu0
      %v1164 = vpop.f32.mrf.mxu0
      %v1165 = vadd.f32 %v889, %v1164
      %v1166 = vpop.f32.mrf.mxu0
      %1167 = vmatprep.mubr.bf16.mxu0 0
      %1168 = vmatmul.mubr.bf16.gmra.mxu0 %v982
      %v1169 = vpop.f32.mrf.mxu0
      %v1170 = vadd.f32 %v894, %v1169
      %v1171 = vpop.f32.mrf.mxu0
      %v1172 = vpop.f32.mrf.mxu0
      %v1173 = vadd.f32 %v897, %v1172
      %v1174 = vpop.f32.mrf.mxu0
      %1175 = vmatprep.mubr.bf16.mxu0 0
      %1176 = vmatmul.mubr.bf16.gmra.mxu0 %v984
      %v1177 = vpop.f32.mrf.mxu0
      %v1178 = vadd.f32 %v902, %v1177
      %v1179 = vpop.f32.mrf.mxu0
      %v1180 = vpop.f32.mrf.mxu0
      %v1181 = vadd.f32 %v905, %v1180
      %v1182 = vpop.f32.mrf.mxu0
      %1183 = vmatprep.mubr.bf16.mxu0 0
      %1184 = vmatmul.mubr.bf16.gmra.mxu0 %v986
      %v1185 = vpop.f32.mrf.mxu0
      %v1186 = vadd.f32 %v910, %v1185
      %v1187 = vpop.f32.mrf.mxu0
      %v1188 = vpop.f32.mrf.mxu0
      %v1189 = vadd.f32 %v913, %v1188
      %v1190 = vpop.f32.mrf.mxu0
      %1191 = vmatprep.mubr.bf16.mxu0 0
      %1192 = vmatmul.mubr.bf16.gmra.mxu0 %v988
      %v1193 = vpop.f32.mrf.mxu0
      %v1194 = vadd.f32 %v918, %v1193
      %v1195 = vpop.f32.mrf.mxu0
      %v1196 = vpop.f32.mrf.mxu0
      %v1197 = vadd.f32 %v921, %v1196
      %v1198 = vpop.f32.mrf.mxu0
      %1199 = vmatprep.mubr.bf16.mxu0 0
      %1200 = vmatmul.mubr.bf16.gmra.mxu0 %v990
      %v1201 = vpop.f32.mrf.mxu0
      %v1202 = vadd.f32 %v926, %v1201
      %v1203 = vpop.f32.mrf.mxu0
      %v1204 = vpop.f32.mrf.mxu0
      %v1205 = vadd.f32 %v929, %v1204
      %v1206 = vpop.f32.mrf.mxu0
      %1207 = vmatprep.mubr.bf16.mxu0 0
      %1208 = vmatmul.mubr.bf16.gmra.mxu0 %v992
      %v1209 = vpop.f32.mrf.mxu0
      %v1210 = vadd.f32 %v934, %v1209
      %v1211 = vpop.f32.mrf.mxu0
      %v1212 = vpop.f32.mrf.mxu0
      %v1213 = vadd.f32 %v937, %v1212
      %v1214 = vpop.f32.mrf.mxu0
      %1215 = vmatprep.mubr.bf16.mxu0 0
      %1216 = vmatmul.mubr.bf16.gmra.mxu0 %v994
      %v1217 = vpop.f32.mrf.mxu0
      %v1218 = vadd.f32 %v942, %v1217
      %v1219 = vpop.f32.mrf.mxu0
      %v1220 = vpop.f32.mrf.mxu0
      %v1221 = vadd.f32 %v945, %v1220
      %v1222 = vpop.f32.mrf.mxu0
      %1223 = vdwg.mxu0
      %v1224 = vld [vmem:[%s251] sm:$0xe]
      %s1225 = scalar_lea.vmem %s1, 4
      %v1226 = vld [vmem:[%s1225] sm:$0x3]
      %v1228 = vunpack.c.l.b16 %v1224
      %v1229 = vpack.c.b16 %v376, %v1228
      %vm1230 = vcmask 1046528
      %v1231 = vrot.slane %v1229, 1
      %v1232 = vrot.slane %v425, 1
      %v1233 = vsel %vm1230, %v1231, %v1232
      %v1234 = vrot.slane %v426, 1
      %v1235 = vsel %vm1230, %v1232, %v1234
      %v1236 = vrot.slane %v427, 1
      %v1237 = vsel %vm1230, %v1234, %v1236
      %v1238 = vrot.slane %v428, 1
      %v1239 = vsel %vm1230, %v1236, %v1238
      %v1240 = vrot.slane %v429, 1
      %v1241 = vsel %vm1230, %v1238, %v1240
      %v1242 = vrot.slane %v430, 1
      %v1243 = vsel %vm1230, %v1240, %v1242
      %v1244 = vrot.slane %v431, 1
      %v1245 = vsel %vm1230, %v1242, %v1244
      %v1246 = vrot.slane %v432, 1
      %v1247 = vsel %vm1230, %v1244, %v1246
      %v1248 = vrot.slane %v433, 1
      %v1249 = vsel %vm1230, %v1246, %v1248
      %v1250 = vrot.slane %v434, 1
      %v1251 = vsel %vm1230, %v1248, %v1250
      %v1252 = vrot.slane %v435, 1
      %v1253 = vsel %vm1230, %v1250, %v1252
      %v1254 = vrot.slane %v436, 1
      %v1255 = vsel %vm1230, %v1252, %v1254
      %v1256 = vrot.slane %v437, 1
      %v1257 = vsel %vm1230, %v1254, %v1256
      %v1258 = vrot.slane %v438, 1
      %v1259 = vsel %vm1230, %v1256, %v1258
      %v1260 = vrot.slane %v439, 1
      %v1261 = vsel %vm1230, %v1258, %v1260
      %v1262 = vrot.slane %v440, 1
      %v1263 = vsel %vm1230, %v1260, %v1262
      %v1264 = vrot.slane %v441, 1
      %v1265 = vsel %vm1230, %v1262, %v1264
      %v1266 = vrot.slane %v442, 1
      %v1267 = vsel %vm1230, %v1264, %v1266
      %v1268 = vrot.slane %v443, 1
      %v1269 = vsel %vm1230, %v1266, %v1268
      %v1270 = vrot.slane %v444, 1
      %v1271 = vsel %vm1230, %v1268, %v1270
      %v1272 = vrot.slane %v445, 1
      %v1273 = vsel %vm1230, %v1270, %v1272
      %v1274 = vrot.slane %v446, 1
      %v1275 = vsel %vm1230, %v1272, %v1274
      %v1276 = vrot.slane %v447, 1
      %v1277 = vsel %vm1230, %v1274, %v1276
      %v1278 = vrot.slane %v448, 1
      %v1279 = vsel %vm1230, %v1276, %v1278
      %v1281 = vsel %vm646, %v1233, 0
      %v1284 = vsel %vm646, %v1235, 0
      %v1287 = vsel %vm646, %v1237, 0
      %v1290 = vsel %vm646, %v1239, 0
      %v1293 = vsel %vm646, %v1241, 0
      %v1296 = vsel %vm646, %v1243, 0
      %v1299 = vsel %vm646, %v1245, 0
      %v1302 = vsel %vm646, %v1247, 0
      %v1305 = vsel %vm646, %v1249, 0
      %v1308 = vsel %vm646, %v1251, 0
      %v1311 = vsel %vm646, %v1253, 0
      %v1314 = vsel %vm646, %v1255, 0
      %v1317 = vsel %vm646, %v1257, 0
      %v1320 = vsel %vm646, %v1259, 0
      %v1323 = vsel %vm646, %v1261, 0
      %v1326 = vsel %vm646, %v1263, 0
      %v1329 = vsel %vm646, %v1265, 0
      %v1332 = vsel %vm646, %v1267, 0
      %v1335 = vsel %vm646, %v1269, 0
      %v1338 = vsel %vm646, %v1271, 0
      %v1341 = vsel %vm646, %v1273, 0
      %v1344 = vsel %vm646, %v1275, 0
      %v1347 = vsel %vm646, %v1277, 0
      %v1350 = vsel %vm646, %v1279, 0
      %v1353 = vsel %vm719, %v1226, 0
      %1355 = vmatprep.subr.bf16.mxu0 0
      %1356 = vmatpush1.bf16.msra.mxu0 0
      %1357 = vmatprep.subr.bf16.mxu0 0
      %1358 = vmatpush1.bf16.msra.mxu0 0
      %1359 = vmatprep.subr.bf16.mxu0 0
      %1360 = vmatpush1.bf16.msra.mxu0 0
      %1361 = vmatprep.subr.bf16.mxu0 0
      %1362 = vmatpush1.bf16.msra.mxu0 0
      %1363 = vmatprep.subr.bf16.mxu0 0
      %1364 = vmatpush1.bf16.msra.mxu0 0
      %1365 = vmatprep.subr.bf16.mxu0 0
      %1366 = vmatpush1.bf16.msra.mxu0 0
      %1367 = vmatprep.subr.bf16.mxu0 0
      %1368 = vmatpush1.bf16.msra.mxu0 0
      %1369 = vmatprep.subr.bf16.mxu0 0
      %1370 = vmatpush1.bf16.msra.mxu0 %v1353
      %1371 = vmatprep.subr.bf16.mxu0 0
      %1372 = vmatpush2.bf16.msra.mxu0 0
      %1373 = vmatprep.subr.bf16.mxu0 0
      %1374 = vmatpush2.bf16.msra.mxu0 0
      %1375 = vmatprep.subr.bf16.mxu0 0
      %1376 = vmatpush2.bf16.msra.mxu0 0
      %1377 = vmatprep.subr.bf16.mxu0 0
      %1378 = vmatpush2.bf16.msra.mxu0 0
      %1379 = vmatprep.subr.bf16.mxu0 0
      %1380 = vmatpush2.bf16.msra.mxu0 0
      %1381 = vmatprep.subr.bf16.mxu0 0
      %1382 = vmatpush2.bf16.msra.mxu0 0
      %1383 = vmatprep.subr.bf16.mxu0 0
      %1384 = vmatpush2.bf16.msra.mxu0 0
      %1385 = vmatprep.subr.bf16.mxu0 0
      %1386 = vmatpush2.bf16.msra.mxu0 0
      %1387 = vmatprep.mubr.bf16.mxu0 0
      %1388 = vmatmul.mubr.bf16.gmra.mxu0 %v1281
      %v1389 = vpop.f32.mrf.mxu0
      %v1390 = vadd.f32 0.0, %v1389
      %v1391 = vpop.f32.mrf.mxu0
      %v1392 = vpop.f32.mrf.mxu0
      %v1393 = vadd.f32 0.0, %v1392
      %v1394 = vpop.f32.mrf.mxu0
      %1395 = vmatprep.mubr.bf16.mxu0 0
      %1396 = vmatmul.mubr.bf16.gmra.mxu0 %v1284
      %v1397 = vpop.f32.mrf.mxu0
      %v1398 = vadd.f32 0.0, %v1397
      %v1399 = vpop.f32.mrf.mxu0
      %v1400 = vpop.f32.mrf.mxu0
      %v1401 = vadd.f32 0.0, %v1400
      %v1402 = vpop.f32.mrf.mxu0
      %1403 = vmatprep.mubr.bf16.mxu0 0
      %1404 = vmatmul.mubr.bf16.gmra.mxu0 %v1287
      %v1405 = vpop.f32.mrf.mxu0
      %v1406 = vadd.f32 0.0, %v1405
      %v1407 = vpop.f32.mrf.mxu0
      %v1408 = vpop.f32.mrf.mxu0
      %v1409 = vadd.f32 0.0, %v1408
      %v1410 = vpop.f32.mrf.mxu0
      %1411 = vmatprep.mubr.bf16.mxu0 0
      %1412 = vmatmul.mubr.bf16.gmra.mxu0 %v1290
      %v1413 = vpop.f32.mrf.mxu0
      %v1414 = vadd.f32 0.0, %v1413
      %v1415 = vpop.f32.mrf.mxu0
      %v1416 = vpop.f32.mrf.mxu0
      %v1417 = vadd.f32 0.0, %v1416
      %v1418 = vpop.f32.mrf.mxu0
      %1419 = vmatprep.mubr.bf16.mxu0 0
      %1420 = vmatmul.mubr.bf16.gmra.mxu0 %v1293
      %v1421 = vpop.f32.mrf.mxu0
      %v1422 = vadd.f32 0.0, %v1421
      %v1423 = vpop.f32.mrf.mxu0
      %v1424 = vpop.f32.mrf.mxu0
      %v1425 = vadd.f32 0.0, %v1424
      %v1426 = vpop.f32.mrf.mxu0
      %1427 = vmatprep.mubr.bf16.mxu0 0
      %1428 = vmatmul.mubr.bf16.gmra.mxu0 %v1296
      %v1429 = vpop.f32.mrf.mxu0
      %v1430 = vadd.f32 0.0, %v1429
      %v1431 = vpop.f32.mrf.mxu0
      %v1432 = vpop.f32.mrf.mxu0
      %v1433 = vadd.f32 0.0, %v1432
      %v1434 = vpop.f32.mrf.mxu0
      %1435 = vmatprep.mubr.bf16.mxu0 0
      %1436 = vmatmul.mubr.bf16.gmra.mxu0 %v1299
      %v1437 = vpop.f32.mrf.mxu0
      %v1438 = vadd.f32 0.0, %v1437
      %v1439 = vpop.f32.mrf.mxu0
      %v1440 = vpop.f32.mrf.mxu0
      %v1441 = vadd.f32 0.0, %v1440
      %v1442 = vpop.f32.mrf.mxu0
      %1443 = vmatprep.mubr.bf16.mxu0 0
      %1444 = vmatmul.mubr.bf16.gmra.mxu0 %v1302
      %v1445 = vpop.f32.mrf.mxu0
      %v1446 = vadd.f32 0.0, %v1445
      %v1447 = vpop.f32.mrf.mxu0
      %v1448 = vpop.f32.mrf.mxu0
      %v1449 = vadd.f32 0.0, %v1448
      %v1450 = vpop.f32.mrf.mxu0
      %1451 = vmatprep.mubr.bf16.mxu0 0
      %1452 = vmatmul.mubr.bf16.gmra.mxu0 %v1305
      %v1453 = vpop.f32.mrf.mxu0
      %v1454 = vadd.f32 0.0, %v1453
      %v1455 = vpop.f32.mrf.mxu0
      %v1456 = vpop.f32.mrf.mxu0
      %v1457 = vadd.f32 0.0, %v1456
      %v1458 = vpop.f32.mrf.mxu0
      %1459 = vmatprep.mubr.bf16.mxu0 0
      %1460 = vmatmul.mubr.bf16.gmra.mxu0 %v1308
      %v1461 = vpop.f32.mrf.mxu0
      %v1462 = vadd.f32 0.0, %v1461
      %v1463 = vpop.f32.mrf.mxu0
      %v1464 = vpop.f32.mrf.mxu0
      %v1465 = vadd.f32 0.0, %v1464
      %v1466 = vpop.f32.mrf.mxu0
      %1467 = vmatprep.mubr.bf16.mxu0 0
      %1468 = vmatmul.mubr.bf16.gmra.mxu0 %v1311
      %v1469 = vpop.f32.mrf.mxu0
      %v1470 = vadd.f32 0.0, %v1469
      %v1471 = vpop.f32.mrf.mxu0
      %v1472 = vpop.f32.mrf.mxu0
      %v1473 = vadd.f32 0.0, %v1472
      %v1474 = vpop.f32.mrf.mxu0
      %1475 = vmatprep.mubr.bf16.mxu0 0
      %1476 = vmatmul.mubr.bf16.gmra.mxu0 %v1314
      %v1477 = vpop.f32.mrf.mxu0
      %v1478 = vadd.f32 0.0, %v1477
      %v1479 = vpop.f32.mrf.mxu0
      %v1480 = vpop.f32.mrf.mxu0
      %v1481 = vadd.f32 0.0, %v1480
      %v1482 = vpop.f32.mrf.mxu0
      %1483 = vmatprep.mubr.bf16.mxu0 0
      %1484 = vmatmul.mubr.bf16.gmra.mxu0 %v1317
      %v1485 = vpop.f32.mrf.mxu0
      %v1486 = vadd.f32 0.0, %v1485
      %v1487 = vpop.f32.mrf.mxu0
      %v1488 = vpop.f32.mrf.mxu0
      %v1489 = vadd.f32 0.0, %v1488
      %v1490 = vpop.f32.mrf.mxu0
      %1491 = vmatprep.mubr.bf16.mxu0 0
      %1492 = vmatmul.mubr.bf16.gmra.mxu0 %v1320
      %v1493 = vpop.f32.mrf.mxu0
      %v1494 = vadd.f32 0.0, %v1493
      %v1495 = vpop.f32.mrf.mxu0
      %v1496 = vpop.f32.mrf.mxu0
      %v1497 = vadd.f32 0.0, %v1496
      %v1498 = vpop.f32.mrf.mxu0
      %1499 = vmatprep.mubr.bf16.mxu0 0
      %1500 = vmatmul.mubr.bf16.gmra.mxu0 %v1323
      %v1501 = vpop.f32.mrf.mxu0
      %v1502 = vadd.f32 0.0, %v1501
      %v1503 = vpop.f32.mrf.mxu0
      %v1504 = vpop.f32.mrf.mxu0
      %v1505 = vadd.f32 0.0, %v1504
      %v1506 = vpop.f32.mrf.mxu0
      %1507 = vmatprep.mubr.bf16.mxu0 0
      %1508 = vmatmul.mubr.bf16.gmra.mxu0 %v1326
      %v1509 = vpop.f32.mrf.mxu0
      %v1510 = vadd.f32 0.0, %v1509
      %v1511 = vpop.f32.mrf.mxu0
      %v1512 = vpop.f32.mrf.mxu0
      %v1513 = vadd.f32 0.0, %v1512
      %v1514 = vpop.f32.mrf.mxu0
      %1515 = vmatprep.mubr.bf16.mxu0 0
      %1516 = vmatmul.mubr.bf16.gmra.mxu0 %v1329
      %v1517 = vpop.f32.mrf.mxu0
      %v1518 = vadd.f32 0.0, %v1517
      %v1519 = vpop.f32.mrf.mxu0
      %v1520 = vpop.f32.mrf.mxu0
      %v1521 = vadd.f32 0.0, %v1520
      %v1522 = vpop.f32.mrf.mxu0
      %1523 = vmatprep.mubr.bf16.mxu0 0
      %1524 = vmatmul.mubr.bf16.gmra.mxu0 %v1332
      %v1525 = vpop.f32.mrf.mxu0
      %v1526 = vadd.f32 0.0, %v1525
      %v1527 = vpop.f32.mrf.mxu0
      %v1528 = vpop.f32.mrf.mxu0
      %v1529 = vadd.f32 0.0, %v1528
      %v1530 = vpop.f32.mrf.mxu0
      %1531 = vmatprep.mubr.bf16.mxu0 0
      %1532 = vmatmul.mubr.bf16.gmra.mxu0 %v1335
      %v1533 = vpop.f32.mrf.mxu0
      %v1534 = vadd.f32 0.0, %v1533
      %v1535 = vpop.f32.mrf.mxu0
      %v1536 = vpop.f32.mrf.mxu0
      %v1537 = vadd.f32 0.0, %v1536
      %v1538 = vpop.f32.mrf.mxu0
      %1539 = vmatprep.mubr.bf16.mxu0 0
      %1540 = vmatmul.mubr.bf16.gmra.mxu0 %v1338
      %v1541 = vpop.f32.mrf.mxu0
      %v1542 = vadd.f32 0.0, %v1541
      %v1543 = vpop.f32.mrf.mxu0
      %v1544 = vpop.f32.mrf.mxu0
      %v1545 = vadd.f32 0.0, %v1544
      %v1546 = vpop.f32.mrf.mxu0
      %1547 = vmatprep.mubr.bf16.mxu0 0
      %1548 = vmatmul.mubr.bf16.gmra.mxu0 %v1341
      %v1549 = vpop.f32.mrf.mxu0
      %v1550 = vadd.f32 0.0, %v1549
      %v1551 = vpop.f32.mrf.mxu0
      %v1552 = vpop.f32.mrf.mxu0
      %v1553 = vadd.f32 0.0, %v1552
      %v1554 = vpop.f32.mrf.mxu0
      %1555 = vmatprep.mubr.bf16.mxu0 0
      %1556 = vmatmul.mubr.bf16.gmra.mxu0 %v1344
      %v1557 = vpop.f32.mrf.mxu0
      %v1558 = vadd.f32 0.0, %v1557
      %v1559 = vpop.f32.mrf.mxu0
      %v1560 = vpop.f32.mrf.mxu0
      %v1561 = vadd.f32 0.0, %v1560
      %v1562 = vpop.f32.mrf.mxu0
      %1563 = vmatprep.mubr.bf16.mxu0 0
      %1564 = vmatmul.mubr.bf16.gmra.mxu0 %v1347
      %v1565 = vpop.f32.mrf.mxu0
      %v1566 = vadd.f32 0.0, %v1565
      %v1567 = vpop.f32.mrf.mxu0
      %v1568 = vpop.f32.mrf.mxu0
      %v1569 = vadd.f32 0.0, %v1568
      %v1570 = vpop.f32.mrf.mxu0
      %1571 = vmatprep.mubr.bf16.mxu0 0
      %1572 = vmatmul.mubr.bf16.gmra.mxu0 %v1350
      %v1573 = vpop.f32.mrf.mxu0
      %v1574 = vadd.f32 0.0, %v1573
      %v1575 = vpop.f32.mrf.mxu0
      %v1576 = vpop.f32.mrf.mxu0
      %v1577 = vadd.f32 0.0, %v1576
      %v1578 = vpop.f32.mrf.mxu0
      %1579 = vdwg.mxu0
      %v1580 = vadd.f32 %v1034, %v1390
      %v1581 = vadd.f32 %v1037, %v1393
      %v1582 = vadd.f32 %v1042, %v1398
      %v1583 = vadd.f32 %v1045, %v1401
      %v1584 = vadd.f32 %v1050, %v1406
      %v1585 = vadd.f32 %v1053, %v1409
      %v1586 = vadd.f32 %v1058, %v1414
      %v1587 = vadd.f32 %v1061, %v1417
      %v1588 = vadd.f32 %v1066, %v1422
      %v1589 = vadd.f32 %v1069, %v1425
      %v1590 = vadd.f32 %v1074, %v1430
      %v1591 = vadd.f32 %v1077, %v1433
      %v1592 = vadd.f32 %v1082, %v1438
      %v1593 = vadd.f32 %v1085, %v1441
      %v1594 = vadd.f32 %v1090, %v1446
      %v1595 = vadd.f32 %v1093, %v1449
      %v1596 = vadd.f32 %v1098, %v1454
      %v1597 = vadd.f32 %v1101, %v1457
      %v1598 = vadd.f32 %v1106, %v1462
      %v1599 = vadd.f32 %v1109, %v1465
      %v1600 = vadd.f32 %v1114, %v1470
      %v1601 = vadd.f32 %v1117, %v1473
      %v1602 = vadd.f32 %v1122, %v1478
      %v1603 = vadd.f32 %v1125, %v1481
      %v1604 = vadd.f32 %v1130, %v1486
      %v1605 = vadd.f32 %v1133, %v1489
      %v1606 = vadd.f32 %v1138, %v1494
      %v1607 = vadd.f32 %v1141, %v1497
      %v1608 = vadd.f32 %v1146, %v1502
      %v1609 = vadd.f32 %v1149, %v1505
      %v1610 = vadd.f32 %v1154, %v1510
      %v1611 = vadd.f32 %v1157, %v1513
      %v1612 = vadd.f32 %v1162, %v1518
      %v1613 = vadd.f32 %v1165, %v1521
      %v1614 = vadd.f32 %v1170, %v1526
      %v1615 = vadd.f32 %v1173, %v1529
      %v1616 = vadd.f32 %v1178, %v1534
      %v1617 = vadd.f32 %v1181, %v1537
      %v1618 = vadd.f32 %v1186, %v1542
      %v1619 = vadd.f32 %v1189, %v1545
      %v1620 = vadd.f32 %v1194, %v1550
      %v1621 = vadd.f32 %v1197, %v1553
      %v1622 = vadd.f32 %v1202, %v1558
      %v1623 = vadd.f32 %v1205, %v1561
      %v1624 = vadd.f32 %v1210, %v1566
      %v1625 = vadd.f32 %v1213, %v1569
      %v1626 = vadd.f32 %v1218, %v1574
      %v1627 = vadd.f32 %v1221, %v1577
      %v1628 = vld [vmem:[%s251 + $0xc] sm:$0xf]
      %v1629 = vld [vmem:[%s251 + $0x10] sm:$0xf]
      %v1630 = vld [vmem:[%s251 + $0x14] sm:$0xf]
      %v1631 = vld [vmem:[%s251 + $0x18] sm:$0xf]
      %v1632 = vld [vmem:[%s251 + $0x1c] sm:$0xf]
      %v1633 = vld [vmem:[%s251 + $0x20] sm:$0xf]
      %v1634 = vld [vmem:[%s251 + $0x24] sm:$0xf]
      %v1635 = vld [vmem:[%s251 + $0x28] sm:$0xf]
      %v1636 = vld [vmem:[%s251 + $0x2c] sm:$0xf]
      %v1637 = vld [vmem:[%s251 + $0x30] sm:$0xf]
      %v1638 = vld [vmem:[%s251 + $0x34] sm:$0xf]
      %v1639 = vld [vmem:[%s251 + $0x38] sm:$0xf]
      %v1640 = vld [vmem:[%s251 + $0x3c] sm:$0xf]
      %v1641 = vld [vmem:[%s251 + $0x40] sm:$0xf]
      %v1642 = vld [vmem:[%s251 + $0x44] sm:$0xf]
      %v1643 = vld [vmem:[%s251 + $0x48] sm:$0xf]
      %v1644 = vld [vmem:[%s251 + $0x4c] sm:$0xf]
      %v1645 = vld [vmem:[%s251 + $0x50] sm:$0xf]
      %v1646 = vld [vmem:[%s251 + $0x54] sm:$0xf]
      %v1647 = vld [vmem:[%s251 + $0x58] sm:$0xf]
      %v1648 = vld [vmem:[%s251 + $0x5c] sm:$0xf]
      %v1649 = vld [vmem:[%s251 + $0x60] sm:$0xf]
      %v1650 = vld [vmem:[%s251 + $0x64] sm:$0xf]
      %v1651 = vld [vmem:[%s251 + $0x68] sm:$0xf]
      %v1652 = vld [vmem:[%s251 + $0x6c] sm:$0xf]
      %v1653 = vld [vmem:[%s251 + $0x70] sm:$0xf]
      %v1654 = vld [vmem:[%s251 + $0x74] sm:$0xf]
      %v1655 = vld [vmem:[%s251 + $0x78] sm:$0xf]
      %v1656 = vld [vmem:[%s251 + $0x7c] sm:$0xf]
      %v1657 = vld [vmem:[%s251 + $0x80] sm:$0xf]
      %v1658 = vld [vmem:[%s251 + $0x84] sm:$0xf]
      %v1659 = vld [vmem:[%s251 + $0x88] sm:$0xf]
      %v1660 = vld [vmem:[%s251 + $0x8c] sm:$0xf]
      %v1661 = vld [vmem:[%s251 + $0x90] sm:$0xf]
      %v1662 = vld [vmem:[%s251 + $0x94] sm:$0xf]
      %v1663 = vld [vmem:[%s251 + $0x98] sm:$0xf]
      %v1664 = vld [vmem:[%s251 + $0x9c] sm:$0xf]
      %v1665 = vld [vmem:[%s251 + $0xa0] sm:$0xf]
      %v1666 = vld [vmem:[%s251 + $0xa4] sm:$0xf]
      %v1667 = vld [vmem:[%s251 + $0xa8] sm:$0xf]
      %v1668 = vld [vmem:[%s251 + $0xac] sm:$0xf]
      %v1669 = vld [vmem:[%s251 + $0xb0] sm:$0xf]
      %v1670 = vld [vmem:[%s251 + $0xb4] sm:$0xf]
      %v1671 = vld [vmem:[%s251 + $0xb8] sm:$0xf]
      %v1672 = vld [vmem:[%s251 + $0xbc] sm:$0xf]
      %v1673 = vld [vmem:[%s251 + $0xc0] sm:$0xf]
      %v1674 = vld [vmem:[%s251 + $0xc4] sm:$0xf]
      %v1675 = vld [vmem:[%s251 + $0xc8] sm:$0xf]
      %s1676 = scalar_lea.vmem %s1, 6
      %v1677 = vld [vmem:[%s1676] sm:$0x3]
      %v1726 = vunpack.c.l.b16 %v1628
      %v1727 = vunpack.c.l.b16 %v1629
      %v1728 = vunpack.c.l.b16 %v1630
      %v1729 = vunpack.c.l.b16 %v1631
      %v1730 = vunpack.c.l.b16 %v1632
      %v1731 = vunpack.c.l.b16 %v1633
      %v1732 = vunpack.c.l.b16 %v1634
      %v1733 = vunpack.c.l.b16 %v1635
      %v1734 = vunpack.c.l.b16 %v1636
      %v1735 = vunpack.c.l.b16 %v1637
      %v1736 = vunpack.c.l.b16 %v1638
      %v1737 = vunpack.c.l.b16 %v1639
      %v1738 = vunpack.c.l.b16 %v1640
      %v1739 = vunpack.c.l.b16 %v1641
      %v1740 = vunpack.c.l.b16 %v1642
      %v1741 = vunpack.c.l.b16 %v1643
      %v1742 = vunpack.c.l.b16 %v1644
      %v1743 = vunpack.c.l.b16 %v1645
      %v1744 = vunpack.c.l.b16 %v1646
      %v1745 = vunpack.c.l.b16 %v1647
      %v1746 = vunpack.c.l.b16 %v1648
      %v1747 = vunpack.c.l.b16 %v1649
      %v1748 = vunpack.c.l.b16 %v1650
      %v1749 = vunpack.c.l.b16 %v1651
      %v1750 = vunpack.c.l.b16 %v1652
      %v1751 = vunpack.c.l.b16 %v1653
      %v1752 = vunpack.c.l.b16 %v1654
      %v1753 = vunpack.c.l.b16 %v1655
      %v1754 = vunpack.c.l.b16 %v1656
      %v1755 = vunpack.c.l.b16 %v1657
      %v1756 = vunpack.c.l.b16 %v1658
      %v1757 = vunpack.c.l.b16 %v1659
      %v1758 = vunpack.c.l.b16 %v1660
      %v1759 = vunpack.c.l.b16 %v1661
      %v1760 = vunpack.c.l.b16 %v1662
      %v1761 = vunpack.c.l.b16 %v1663
      %v1762 = vunpack.c.l.b16 %v1664
      %v1763 = vunpack.c.l.b16 %v1665
      %v1764 = vunpack.c.l.b16 %v1666
      %v1765 = vunpack.c.l.b16 %v1667
      %v1766 = vunpack.c.l.b16 %v1668
      %v1767 = vunpack.c.l.b16 %v1669
      %v1768 = vunpack.c.l.b16 %v1670
      %v1769 = vunpack.c.l.b16 %v1671
      %v1770 = vunpack.c.l.b16 %v1672
      %v1771 = vunpack.c.l.b16 %v1673
      %v1772 = vunpack.c.l.b16 %v1674
      %v1773 = vunpack.c.l.b16 %v1675
      %v1774 = vpack.c.b16 %v1727, %v1726
      %v1775 = vpack.c.b16 %v1729, %v1728
      %v1776 = vpack.c.b16 %v1731, %v1730
      %v1777 = vpack.c.b16 %v1733, %v1732
      %v1778 = vpack.c.b16 %v1735, %v1734
      %v1779 = vpack.c.b16 %v1737, %v1736
      %v1780 = vpack.c.b16 %v1739, %v1738
      %v1781 = vpack.c.b16 %v1741, %v1740
      %v1782 = vpack.c.b16 %v1743, %v1742
      %v1783 = vpack.c.b16 %v1745, %v1744
      %v1784 = vpack.c.b16 %v1747, %v1746
      %v1785 = vpack.c.b16 %v1749, %v1748
      %v1786 = vpack.c.b16 %v1751, %v1750
      %v1787 = vpack.c.b16 %v1753, %v1752
      %v1788 = vpack.c.b16 %v1755, %v1754
      %v1789 = vpack.c.b16 %v1757, %v1756
      %v1790 = vpack.c.b16 %v1759, %v1758
      %v1791 = vpack.c.b16 %v1761, %v1760
      %v1792 = vpack.c.b16 %v1763, %v1762
      %v1793 = vpack.c.b16 %v1765, %v1764
      %v1794 = vpack.c.b16 %v1767, %v1766
      %v1795 = vpack.c.b16 %v1769, %v1768
      %v1796 = vpack.c.b16 %v1771, %v1770
      %v1797 = vpack.c.b16 %v1773, %v1772
      %v1799 = vsel %vm646, %v1774, 0
      %v1802 = vsel %vm646, %v1775, 0
      %v1805 = vsel %vm646, %v1776, 0
      %v1808 = vsel %vm646, %v1777, 0
      %v1811 = vsel %vm646, %v1778, 0
      %v1814 = vsel %vm646, %v1779, 0
      %v1817 = vsel %vm646, %v1780, 0
      %v1820 = vsel %vm646, %v1781, 0
      %v1823 = vsel %vm646, %v1782, 0
      %v1826 = vsel %vm646, %v1783, 0
      %v1829 = vsel %vm646, %v1784, 0
      %v1832 = vsel %vm646, %v1785, 0
      %v1835 = vsel %vm646, %v1786, 0
      %v1838 = vsel %vm646, %v1787, 0
      %v1841 = vsel %vm646, %v1788, 0
      %v1844 = vsel %vm646, %v1789, 0
      %v1847 = vsel %vm646, %v1790, 0
      %v1850 = vsel %vm646, %v1791, 0
      %v1853 = vsel %vm646, %v1792, 0
      %v1856 = vsel %vm646, %v1793, 0
      %v1859 = vsel %vm646, %v1794, 0
      %v1862 = vsel %vm646, %v1795, 0
      %v1865 = vsel %vm646, %v1796, 0
      %v1868 = vsel %vm646, %v1797, 0
      %v1871 = vsel %vm719, %v1677, 0
      %1873 = vmatprep.subr.bf16.mxu0 0
      %1874 = vmatpush1.bf16.msra.mxu0 0
      %1875 = vmatprep.subr.bf16.mxu0 0
      %1876 = vmatpush1.bf16.msra.mxu0 0
      %1877 = vmatprep.subr.bf16.mxu0 0
      %1878 = vmatpush1.bf16.msra.mxu0 0
      %1879 = vmatprep.subr.bf16.mxu0 0
      %1880 = vmatpush1.bf16.msra.mxu0 0
      %1881 = vmatprep.subr.bf16.mxu0 0
      %1882 = vmatpush1.bf16.msra.mxu0 0
      %1883 = vmatprep.subr.bf16.mxu0 0
      %1884 = vmatpush1.bf16.msra.mxu0 0
      %1885 = vmatprep.subr.bf16.mxu0 0
      %1886 = vmatpush1.bf16.msra.mxu0 0
      %1887 = vmatprep.subr.bf16.mxu0 0
      %1888 = vmatpush1.bf16.msra.mxu0 %v1871
      %1889 = vmatprep.subr.bf16.mxu0 0
      %1890 = vmatpush2.bf16.msra.mxu0 0
      %1891 = vmatprep.subr.bf16.mxu0 0
      %1892 = vmatpush2.bf16.msra.mxu0 0
      %1893 = vmatprep.subr.bf16.mxu0 0
      %1894 = vmatpush2.bf16.msra.mxu0 0
      %1895 = vmatprep.subr.bf16.mxu0 0
      %1896 = vmatpush2.bf16.msra.mxu0 0
      %1897 = vmatprep.subr.bf16.mxu0 0
      %1898 = vmatpush2.bf16.msra.mxu0 0
      %1899 = vmatprep.subr.bf16.mxu0 0
      %1900 = vmatpush2.bf16.msra.mxu0 0
      %1901 = vmatprep.subr.bf16.mxu0 0
      %1902 = vmatpush2.bf16.msra.mxu0 0
      %1903 = vmatprep.subr.bf16.mxu0 0
      %1904 = vmatpush2.bf16.msra.mxu0 0
      %1905 = vmatprep.mubr.bf16.mxu0 0
      %1906 = vmatmul.mubr.bf16.gmra.mxu0 %v1799
      %v1907 = vpop.f32.mrf.mxu0
      %v1908 = vadd.f32 0.0, %v1907
      %v1909 = vpop.f32.mrf.mxu0
      %v1910 = vpop.f32.mrf.mxu0
      %v1911 = vadd.f32 0.0, %v1910
      %v1912 = vpop.f32.mrf.mxu0
      %1913 = vmatprep.mubr.bf16.mxu0 0
      %1914 = vmatmul.mubr.bf16.gmra.mxu0 %v1802
      %v1915 = vpop.f32.mrf.mxu0
      %v1916 = vadd.f32 0.0, %v1915
      %v1917 = vpop.f32.mrf.mxu0
      %v1918 = vpop.f32.mrf.mxu0
      %v1919 = vadd.f32 0.0, %v1918
      %v1920 = vpop.f32.mrf.mxu0
      %1921 = vmatprep.mubr.bf16.mxu0 0
      %1922 = vmatmul.mubr.bf16.gmra.mxu0 %v1805
      %v1923 = vpop.f32.mrf.mxu0
      %v1924 = vadd.f32 0.0, %v1923
      %v1925 = vpop.f32.mrf.mxu0
      %v1926 = vpop.f32.mrf.mxu0
      %v1927 = vadd.f32 0.0, %v1926
      %v1928 = vpop.f32.mrf.mxu0
      %1929 = vmatprep.mubr.bf16.mxu0 0
      %1930 = vmatmul.mubr.bf16.gmra.mxu0 %v1808
      %v1931 = vpop.f32.mrf.mxu0
      %v1932 = vadd.f32 0.0, %v1931
      %v1933 = vpop.f32.mrf.mxu0
      %v1934 = vpop.f32.mrf.mxu0
      %v1935 = vadd.f32 0.0, %v1934
      %v1936 = vpop.f32.mrf.mxu0
      %1937 = vmatprep.mubr.bf16.mxu0 0
      %1938 = vmatmul.mubr.bf16.gmra.mxu0 %v1811
      %v1939 = vpop.f32.mrf.mxu0
      %v1940 = vadd.f32 0.0, %v1939
      %v1941 = vpop.f32.mrf.mxu0
      %v1942 = vpop.f32.mrf.mxu0
      %v1943 = vadd.f32 0.0, %v1942
      %v1944 = vpop.f32.mrf.mxu0
      %1945 = vmatprep.mubr.bf16.mxu0 0
      %1946 = vmatmul.mubr.bf16.gmra.mxu0 %v1814
      %v1947 = vpop.f32.mrf.mxu0
      %v1948 = vadd.f32 0.0, %v1947
      %v1949 = vpop.f32.mrf.mxu0
      %v1950 = vpop.f32.mrf.mxu0
      %v1951 = vadd.f32 0.0, %v1950
      %v1952 = vpop.f32.mrf.mxu0
      %1953 = vmatprep.mubr.bf16.mxu0 0
      %1954 = vmatmul.mubr.bf16.gmra.mxu0 %v1817
      %v1955 = vpop.f32.mrf.mxu0
      %v1956 = vadd.f32 0.0, %v1955
      %v1957 = vpop.f32.mrf.mxu0
      %v1958 = vpop.f32.mrf.mxu0
      %v1959 = vadd.f32 0.0, %v1958
      %v1960 = vpop.f32.mrf.mxu0
      %1961 = vmatprep.mubr.bf16.mxu0 0
      %1962 = vmatmul.mubr.bf16.gmra.mxu0 %v1820
      %v1963 = vpop.f32.mrf.mxu0
      %v1964 = vadd.f32 0.0, %v1963
      %v1965 = vpop.f32.mrf.mxu0
      %v1966 = vpop.f32.mrf.mxu0
      %v1967 = vadd.f32 0.0, %v1966
      %v1968 = vpop.f32.mrf.mxu0
      %1969 = vmatprep.mubr.bf16.mxu0 0
      %1970 = vmatmul.mubr.bf16.gmra.mxu0 %v1823
      %v1971 = vpop.f32.mrf.mxu0
      %v1972 = vadd.f32 0.0, %v1971
      %v1973 = vpop.f32.mrf.mxu0
      %v1974 = vpop.f32.mrf.mxu0
      %v1975 = vadd.f32 0.0, %v1974
      %v1976 = vpop.f32.mrf.mxu0
      %1977 = vmatprep.mubr.bf16.mxu0 0
      %1978 = vmatmul.mubr.bf16.gmra.mxu0 %v1826
      %v1979 = vpop.f32.mrf.mxu0
      %v1980 = vadd.f32 0.0, %v1979
      %v1981 = vpop.f32.mrf.mxu0
      %v1982 = vpop.f32.mrf.mxu0
      %v1983 = vadd.f32 0.0, %v1982
      %v1984 = vpop.f32.mrf.mxu0
      %1985 = vmatprep.mubr.bf16.mxu0 0
      %1986 = vmatmul.mubr.bf16.gmra.mxu0 %v1829
      %v1987 = vpop.f32.mrf.mxu0
      %v1988 = vadd.f32 0.0, %v1987
      %v1989 = vpop.f32.mrf.mxu0
      %v1990 = vpop.f32.mrf.mxu0
      %v1991 = vadd.f32 0.0, %v1990
      %v1992 = vpop.f32.mrf.mxu0
      %1993 = vmatprep.mubr.bf16.mxu0 0
      %1994 = vmatmul.mubr.bf16.gmra.mxu0 %v1832
      %v1995 = vpop.f32.mrf.mxu0
      %v1996 = vadd.f32 0.0, %v1995
      %v1997 = vpop.f32.mrf.mxu0
      %v1998 = vpop.f32.mrf.mxu0
      %v1999 = vadd.f32 0.0, %v1998
      %v2000 = vpop.f32.mrf.mxu0
      %2001 = vmatprep.mubr.bf16.mxu0 0
      %2002 = vmatmul.mubr.bf16.gmra.mxu0 %v1835
      %v2003 = vpop.f32.mrf.mxu0
      %v2004 = vadd.f32 0.0, %v2003
      %v2005 = vpop.f32.mrf.mxu0
      %v2006 = vpop.f32.mrf.mxu0
      %v2007 = vadd.f32 0.0, %v2006
      %v2008 = vpop.f32.mrf.mxu0
      %2009 = vmatprep.mubr.bf16.mxu0 0
      %2010 = vmatmul.mubr.bf16.gmra.mxu0 %v1838
      %v2011 = vpop.f32.mrf.mxu0
      %v2012 = vadd.f32 0.0, %v2011
      %v2013 = vpop.f32.mrf.mxu0
      %v2014 = vpop.f32.mrf.mxu0
      %v2015 = vadd.f32 0.0, %v2014
      %v2016 = vpop.f32.mrf.mxu0
      %2017 = vmatprep.mubr.bf16.mxu0 0
      %2018 = vmatmul.mubr.bf16.gmra.mxu0 %v1841
      %v2019 = vpop.f32.mrf.mxu0
      %v2020 = vadd.f32 0.0, %v2019
      %v2021 = vpop.f32.mrf.mxu0
      %v2022 = vpop.f32.mrf.mxu0
      %v2023 = vadd.f32 0.0, %v2022
      %v2024 = vpop.f32.mrf.mxu0
      %2025 = vmatprep.mubr.bf16.mxu0 0
      %2026 = vmatmul.mubr.bf16.gmra.mxu0 %v1844
      %v2027 = vpop.f32.mrf.mxu0
      %v2028 = vadd.f32 0.0, %v2027
      %v2029 = vpop.f32.mrf.mxu0
      %v2030 = vpop.f32.mrf.mxu0
      %v2031 = vadd.f32 0.0, %v2030
      %v2032 = vpop.f32.mrf.mxu0
      %2033 = vmatprep.mubr.bf16.mxu0 0
      %2034 = vmatmul.mubr.bf16.gmra.mxu0 %v1847
      %v2035 = vpop.f32.mrf.mxu0
      %v2036 = vadd.f32 0.0, %v2035
      %v2037 = vpop.f32.mrf.mxu0
      %v2038 = vpop.f32.mrf.mxu0
      %v2039 = vadd.f32 0.0, %v2038
      %v2040 = vpop.f32.mrf.mxu0
      %2041 = vmatprep.mubr.bf16.mxu0 0
      %2042 = vmatmul.mubr.bf16.gmra.mxu0 %v1850
      %v2043 = vpop.f32.mrf.mxu0
      %v2044 = vadd.f32 0.0, %v2043
      %v2045 = vpop.f32.mrf.mxu0
      %v2046 = vpop.f32.mrf.mxu0
      %v2047 = vadd.f32 0.0, %v2046
      %v2048 = vpop.f32.mrf.mxu0
      %2049 = vmatprep.mubr.bf16.mxu0 0
      %2050 = vmatmul.mubr.bf16.gmra.mxu0 %v1853
      %v2051 = vpop.f32.mrf.mxu0
      %v2052 = vadd.f32 0.0, %v2051
      %v2053 = vpop.f32.mrf.mxu0
      %v2054 = vpop.f32.mrf.mxu0
      %v2055 = vadd.f32 0.0, %v2054
      %v2056 = vpop.f32.mrf.mxu0
      %2057 = vmatprep.mubr.bf16.mxu0 0
      %2058 = vmatmul.mubr.bf16.gmra.mxu0 %v1856
      %v2059 = vpop.f32.mrf.mxu0
      %v2060 = vadd.f32 0.0, %v2059
      %v2061 = vpop.f32.mrf.mxu0
      %v2062 = vpop.f32.mrf.mxu0
      %v2063 = vadd.f32 0.0, %v2062
      %v2064 = vpop.f32.mrf.mxu0
      %2065 = vmatprep.mubr.bf16.mxu0 0
      %2066 = vmatmul.mubr.bf16.gmra.mxu0 %v1859
      %v2067 = vpop.f32.mrf.mxu0
      %v2068 = vadd.f32 0.0, %v2067
      %v2069 = vpop.f32.mrf.mxu0
      %v2070 = vpop.f32.mrf.mxu0
      %v2071 = vadd.f32 0.0, %v2070
      %v2072 = vpop.f32.mrf.mxu0
      %2073 = vmatprep.mubr.bf16.mxu0 0
      %2074 = vmatmul.mubr.bf16.gmra.mxu0 %v1862
      %v2075 = vpop.f32.mrf.mxu0
      %v2076 = vadd.f32 0.0, %v2075
      %v2077 = vpop.f32.mrf.mxu0
      %v2078 = vpop.f32.mrf.mxu0
      %v2079 = vadd.f32 0.0, %v2078
      %v2080 = vpop.f32.mrf.mxu0
      %2081 = vmatprep.mubr.bf16.mxu0 0
      %2082 = vmatmul.mubr.bf16.gmra.mxu0 %v1865
      %v2083 = vpop.f32.mrf.mxu0
      %v2084 = vadd.f32 0.0, %v2083
      %v2085 = vpop.f32.mrf.mxu0
      %v2086 = vpop.f32.mrf.mxu0
      %v2087 = vadd.f32 0.0, %v2086
      %v2088 = vpop.f32.mrf.mxu0
      %2089 = vmatprep.mubr.bf16.mxu0 0
      %2090 = vmatmul.mubr.bf16.gmra.mxu0 %v1868
      %v2091 = vpop.f32.mrf.mxu0
      %v2092 = vadd.f32 0.0, %v2091
      %v2093 = vpop.f32.mrf.mxu0
      %v2094 = vpop.f32.mrf.mxu0
      %v2095 = vadd.f32 0.0, %v2094
      %v2096 = vpop.f32.mrf.mxu0
      %2097 = vdwg.mxu0
      %v2098 = vadd.f32 %v1580, %v1908
      %v2099 = vadd.f32 %v1581, %v1911
      %v2100 = vadd.f32 %v1582, %v1916
      %v2101 = vadd.f32 %v1583, %v1919
      %v2102 = vadd.f32 %v1584, %v1924
      %v2103 = vadd.f32 %v1585, %v1927
      %v2104 = vadd.f32 %v1586, %v1932
      %v2105 = vadd.f32 %v1587, %v1935
      %v2106 = vadd.f32 %v1588, %v1940
      %v2107 = vadd.f32 %v1589, %v1943
      %v2108 = vadd.f32 %v1590, %v1948
      %v2109 = vadd.f32 %v1591, %v1951
      %v2110 = vadd.f32 %v1592, %v1956
      %v2111 = vadd.f32 %v1593, %v1959
      %v2112 = vadd.f32 %v1594, %v1964
      %v2113 = vadd.f32 %v1595, %v1967
      %v2114 = vadd.f32 %v1596, %v1972
      %v2115 = vadd.f32 %v1597, %v1975
      %v2116 = vadd.f32 %v1598, %v1980
      %v2117 = vadd.f32 %v1599, %v1983
      %v2118 = vadd.f32 %v1600, %v1988
      %v2119 = vadd.f32 %v1601, %v1991
      %v2120 = vadd.f32 %v1602, %v1996
      %v2121 = vadd.f32 %v1603, %v1999
      %v2122 = vadd.f32 %v1604, %v2004
      %v2123 = vadd.f32 %v1605, %v2007
      %v2124 = vadd.f32 %v1606, %v2012
      %v2125 = vadd.f32 %v1607, %v2015
      %v2126 = vadd.f32 %v1608, %v2020
      %v2127 = vadd.f32 %v1609, %v2023
      %v2128 = vadd.f32 %v1610, %v2028
      %v2129 = vadd.f32 %v1611, %v2031
      %v2130 = vadd.f32 %v1612, %v2036
      %v2131 = vadd.f32 %v1613, %v2039
      %v2132 = vadd.f32 %v1614, %v2044
      %v2133 = vadd.f32 %v1615, %v2047
      %v2134 = vadd.f32 %v1616, %v2052
      %v2135 = vadd.f32 %v1617, %v2055
      %v2136 = vadd.f32 %v1618, %v2060
      %v2137 = vadd.f32 %v1619, %v2063
      %v2138 = vadd.f32 %v1620, %v2068
      %v2139 = vadd.f32 %v1621, %v2071
      %v2140 = vadd.f32 %v1622, %v2076
      %v2141 = vadd.f32 %v1623, %v2079
      %v2142 = vadd.f32 %v1624, %v2084
      %v2143 = vadd.f32 %v1625, %v2087
      %v2144 = vadd.f32 %v1626, %v2092
      %v2145 = vadd.f32 %v1627, %v2095
      %v2146 = vld [vmem:[%s251 + $0xc] sm:$0xf]
      %v2147 = vld [vmem:[%s251 + $0x10] sm:$0xf]
      %v2148 = vld [vmem:[%s251 + $0x14] sm:$0xf]
      %v2149 = vld [vmem:[%s251 + $0x18] sm:$0xf]
      %v2150 = vld [vmem:[%s251 + $0x1c] sm:$0xf]
      %v2151 = vld [vmem:[%s251 + $0x20] sm:$0xf]
      %v2152 = vld [vmem:[%s251 + $0x24] sm:$0xf]
      %v2153 = vld [vmem:[%s251 + $0x28] sm:$0xf]
      %v2154 = vld [vmem:[%s251 + $0x2c] sm:$0xf]
      %v2155 = vld [vmem:[%s251 + $0x30] sm:$0xf]
      %v2156 = vld [vmem:[%s251 + $0x34] sm:$0xf]
      %v2157 = vld [vmem:[%s251 + $0x38] sm:$0xf]
      %v2158 = vld [vmem:[%s251 + $0x3c] sm:$0xf]
      %v2159 = vld [vmem:[%s251 + $0x40] sm:$0xf]
      %v2160 = vld [vmem:[%s251 + $0x44] sm:$0xf]
      %v2161 = vld [vmem:[%s251 + $0x48] sm:$0xf]
      %v2162 = vld [vmem:[%s251 + $0x4c] sm:$0xf]
      %v2163 = vld [vmem:[%s251 + $0x50] sm:$0xf]
      %v2164 = vld [vmem:[%s251 + $0x54] sm:$0xf]
      %v2165 = vld [vmem:[%s251 + $0x58] sm:$0xf]
      %v2166 = vld [vmem:[%s251 + $0x5c] sm:$0xf]
      %v2167 = vld [vmem:[%s251 + $0x60] sm:$0xf]
      %v2168 = vld [vmem:[%s251 + $0x64] sm:$0xf]
      %v2169 = vld [vmem:[%s251 + $0x68] sm:$0xf]
      %v2170 = vld [vmem:[%s251 + $0x6c] sm:$0xf]
      %v2171 = vld [vmem:[%s251 + $0x70] sm:$0xf]
      %v2172 = vld [vmem:[%s251 + $0x74] sm:$0xf]
      %v2173 = vld [vmem:[%s251 + $0x78] sm:$0xf]
      %v2174 = vld [vmem:[%s251 + $0x7c] sm:$0xf]
      %v2175 = vld [vmem:[%s251 + $0x80] sm:$0xf]
      %v2176 = vld [vmem:[%s251 + $0x84] sm:$0xf]
      %v2177 = vld [vmem:[%s251 + $0x88] sm:$0xf]
      %v2178 = vld [vmem:[%s251 + $0x8c] sm:$0xf]
      %v2179 = vld [vmem:[%s251 + $0x90] sm:$0xf]
      %v2180 = vld [vmem:[%s251 + $0x94] sm:$0xf]
      %v2181 = vld [vmem:[%s251 + $0x98] sm:$0xf]
      %v2182 = vld [vmem:[%s251 + $0x9c] sm:$0xf]
      %v2183 = vld [vmem:[%s251 + $0xa0] sm:$0xf]
      %v2184 = vld [vmem:[%s251 + $0xa4] sm:$0xf]
      %v2185 = vld [vmem:[%s251 + $0xa8] sm:$0xf]
      %v2186 = vld [vmem:[%s251 + $0xac] sm:$0xf]
      %v2187 = vld [vmem:[%s251 + $0xb0] sm:$0xf]
      %v2188 = vld [vmem:[%s251 + $0xb4] sm:$0xf]
      %v2189 = vld [vmem:[%s251 + $0xb8] sm:$0xf]
      %v2190 = vld [vmem:[%s251 + $0xbc] sm:$0xf]
      %v2191 = vld [vmem:[%s251 + $0xc0] sm:$0xf]
      %v2192 = vld [vmem:[%s251 + $0xc4] sm:$0xf]
      %v2193 = vld [vmem:[%s251 + $0xc8] sm:$0xf]
      %v2194 = vld [vmem:[%s251 + $0xcc] sm:$0x1]
      %s2195 = scalar_lea.vmem %s1, 8
      %v2196 = vld [vmem:[%s2195] sm:$0x3]
      %v2246 = vunpack.c.l.b16 %v2146
      %v2247 = vunpack.c.l.b16 %v2147
      %v2248 = vunpack.c.l.b16 %v2148
      %v2249 = vunpack.c.l.b16 %v2149
      %v2250 = vunpack.c.l.b16 %v2150
      %v2251 = vunpack.c.l.b16 %v2151
      %v2252 = vunpack.c.l.b16 %v2152
      %v2253 = vunpack.c.l.b16 %v2153
      %v2254 = vunpack.c.l.b16 %v2154
      %v2255 = vunpack.c.l.b16 %v2155
      %v2256 = vunpack.c.l.b16 %v2156
      %v2257 = vunpack.c.l.b16 %v2157
      %v2258 = vunpack.c.l.b16 %v2158
      %v2259 = vunpack.c.l.b16 %v2159
      %v2260 = vunpack.c.l.b16 %v2160
      %v2261 = vunpack.c.l.b16 %v2161
      %v2262 = vunpack.c.l.b16 %v2162
      %v2263 = vunpack.c.l.b16 %v2163
      %v2264 = vunpack.c.l.b16 %v2164
      %v2265 = vunpack.c.l.b16 %v2165
      %v2266 = vunpack.c.l.b16 %v2166
      %v2267 = vunpack.c.l.b16 %v2167
      %v2268 = vunpack.c.l.b16 %v2168
      %v2269 = vunpack.c.l.b16 %v2169
      %v2270 = vunpack.c.l.b16 %v2170
      %v2271 = vunpack.c.l.b16 %v2171
      %v2272 = vunpack.c.l.b16 %v2172
      %v2273 = vunpack.c.l.b16 %v2173
      %v2274 = vunpack.c.l.b16 %v2174
      %v2275 = vunpack.c.l.b16 %v2175
      %v2276 = vunpack.c.l.b16 %v2176
      %v2277 = vunpack.c.l.b16 %v2177
      %v2278 = vunpack.c.l.b16 %v2178
      %v2279 = vunpack.c.l.b16 %v2179
      %v2280 = vunpack.c.l.b16 %v2180
      %v2281 = vunpack.c.l.b16 %v2181
      %v2282 = vunpack.c.l.b16 %v2182
      %v2283 = vunpack.c.l.b16 %v2183
      %v2284 = vunpack.c.l.b16 %v2184
      %v2285 = vunpack.c.l.b16 %v2185
      %v2286 = vunpack.c.l.b16 %v2186
      %v2287 = vunpack.c.l.b16 %v2187
      %v2288 = vunpack.c.l.b16 %v2188
      %v2289 = vunpack.c.l.b16 %v2189
      %v2290 = vunpack.c.l.b16 %v2190
      %v2291 = vunpack.c.l.b16 %v2191
      %v2292 = vunpack.c.l.b16 %v2192
      %v2293 = vunpack.c.l.b16 %v2193
      %v2294 = vunpack.c.l.b16 %v2194
      %v2295 = vpack.c.b16 %v2247, %v2246
      %v2296 = vpack.c.b16 %v2249, %v2248
      %v2297 = vpack.c.b16 %v2251, %v2250
      %v2298 = vpack.c.b16 %v2253, %v2252
      %v2299 = vpack.c.b16 %v2255, %v2254
      %v2300 = vpack.c.b16 %v2257, %v2256
      %v2301 = vpack.c.b16 %v2259, %v2258
      %v2302 = vpack.c.b16 %v2261, %v2260
      %v2303 = vpack.c.b16 %v2263, %v2262
      %v2304 = vpack.c.b16 %v2265, %v2264
      %v2305 = vpack.c.b16 %v2267, %v2266
      %v2306 = vpack.c.b16 %v2269, %v2268
      %v2307 = vpack.c.b16 %v2271, %v2270
      %v2308 = vpack.c.b16 %v2273, %v2272
      %v2309 = vpack.c.b16 %v2275, %v2274
      %v2310 = vpack.c.b16 %v2277, %v2276
      %v2311 = vpack.c.b16 %v2279, %v2278
      %v2312 = vpack.c.b16 %v2281, %v2280
      %v2313 = vpack.c.b16 %v2283, %v2282
      %v2314 = vpack.c.b16 %v2285, %v2284
      %v2315 = vpack.c.b16 %v2287, %v2286
      %v2316 = vpack.c.b16 %v2289, %v2288
      %v2317 = vpack.c.b16 %v2291, %v2290
      %v2318 = vpack.c.b16 %v2293, %v2292
      %v2319 = vpack.c.b16 %v2294, %v2294
      %v2321 = vshrl.u32 %v2295, 16
      %v2323 = vshll.u32 %v2295, 16
      %v2325 = vrot.slane %v2323, 1
      %v2326 = vor.u32 %v2321, %v2325
      %v2328 = vshll.u32 %v2296, 16
      %v2330 = vrot.slane %v2328, 1
      %v2331 = vsel %vm449, %v2326, %v2330
      %v2332 = vshrl.u32 %v2296, 16
      %v2334 = vor.u32 %v2332, %v2330
      %v2336 = vshll.u32 %v2297, 16
      %v2338 = vrot.slane %v2336, 1
      %v2339 = vsel %vm449, %v2334, %v2338
      %v2340 = vshrl.u32 %v2297, 16
      %v2342 = vor.u32 %v2340, %v2338
      %v2344 = vshll.u32 %v2298, 16
      %v2346 = vrot.slane %v2344, 1
      %v2347 = vsel %vm449, %v2342, %v2346
      %v2348 = vshrl.u32 %v2298, 16
      %v2350 = vor.u32 %v2348, %v2346
      %v2352 = vshll.u32 %v2299, 16
      %v2354 = vrot.slane %v2352, 1
      %v2355 = vsel %vm449, %v2350, %v2354
      %v2356 = vshrl.u32 %v2299, 16
      %v2358 = vor.u32 %v2356, %v2354
      %v2360 = vshll.u32 %v2300, 16
      %v2362 = vrot.slane %v2360, 1
      %v2363 = vsel %vm449, %v2358, %v2362
      %v2364 = vshrl.u32 %v2300, 16
      %v2366 = vor.u32 %v2364, %v2362
      %v2368 = vshll.u32 %v2301, 16
      %v2370 = vrot.slane %v2368, 1
      %v2371 = vsel %vm449, %v2366, %v2370
      %v2372 = vshrl.u32 %v2301, 16
      %v2374 = vor.u32 %v2372, %v2370
      %v2376 = vshll.u32 %v2302, 16
      %v2378 = vrot.slane %v2376, 1
      %v2379 = vsel %vm449, %v2374, %v2378
      %v2380 = vshrl.u32 %v2302, 16
      %v2382 = vor.u32 %v2380, %v2378
      %v2384 = vshll.u32 %v2303, 16
      %v2386 = vrot.slane %v2384, 1
      %v2387 = vsel %vm449, %v2382, %v2386
      %v2388 = vshrl.u32 %v2303, 16
      %v2390 = vor.u32 %v2388, %v2386
      %v2392 = vshll.u32 %v2304, 16
      %v2394 = vrot.slane %v2392, 1
      %v2395 = vsel %vm449, %v2390, %v2394
      %v2396 = vshrl.u32 %v2304, 16
      %v2398 = vor.u32 %v2396, %v2394
      %v2400 = vshll.u32 %v2305, 16
      %v2402 = vrot.slane %v2400, 1
      %v2403 = vsel %vm449, %v2398, %v2402
      %v2404 = vshrl.u32 %v2305, 16
      %v2406 = vor.u32 %v2404, %v2402
      %v2408 = vshll.u32 %v2306, 16
      %v2410 = vrot.slane %v2408, 1
      %v2411 = vsel %vm449, %v2406, %v2410
      %v2412 = vshrl.u32 %v2306, 16
      %v2414 = vor.u32 %v2412, %v2410
      %v2416 = vshll.u32 %v2307, 16
      %v2418 = vrot.slane %v2416, 1
      %v2419 = vsel %vm449, %v2414, %v2418
      %v2420 = vshrl.u32 %v2307, 16
      %v2422 = vor.u32 %v2420, %v2418
      %v2424 = vshll.u32 %v2308, 16
      %v2426 = vrot.slane %v2424, 1
      %v2427 = vsel %vm449, %v2422, %v2426
      %v2428 = vshrl.u32 %v2308, 16
      %v2430 = vor.u32 %v2428, %v2426
      %v2432 = vshll.u32 %v2309, 16
      %v2434 = vrot.slane %v2432, 1
      %v2435 = vsel %vm449, %v2430, %v2434
      %v2436 = vshrl.u32 %v2309, 16
      %v2438 = vor.u32 %v2436, %v2434
      %v2440 = vshll.u32 %v2310, 16
      %v2442 = vrot.slane %v2440, 1
      %v2443 = vsel %vm449, %v2438, %v2442
      %v2444 = vshrl.u32 %v2310, 16
      %v2446 = vor.u32 %v2444, %v2442
      %v2448 = vshll.u32 %v2311, 16
      %v2450 = vrot.slane %v2448, 1
      %v2451 = vsel %vm449, %v2446, %v2450
      %v2452 = vshrl.u32 %v2311, 16
      %v2454 = vor.u32 %v2452, %v2450
      %v2456 = vshll.u32 %v2312, 16
      %v2458 = vrot.slane %v2456, 1
      %v2459 = vsel %vm449, %v2454, %v2458
      %v2460 = vshrl.u32 %v2312, 16
      %v2462 = vor.u32 %v2460, %v2458
      %v2464 = vshll.u32 %v2313, 16
      %v2466 = vrot.slane %v2464, 1
      %v2467 = vsel %vm449, %v2462, %v2466
      %v2468 = vshrl.u32 %v2313, 16
      %v2470 = vor.u32 %v2468, %v2466
      %v2472 = vshll.u32 %v2314, 16
      %v2474 = vrot.slane %v2472, 1
      %v2475 = vsel %vm449, %v2470, %v2474
      %v2476 = vshrl.u32 %v2314, 16
      %v2478 = vor.u32 %v2476, %v2474
      %v2480 = vshll.u32 %v2315, 16
      %v2482 = vrot.slane %v2480, 1
      %v2483 = vsel %vm449, %v2478, %v2482
      %v2484 = vshrl.u32 %v2315, 16
      %v2486 = vor.u32 %v2484, %v2482
      %v2488 = vshll.u32 %v2316, 16
      %v2490 = vrot.slane %v2488, 1
      %v2491 = vsel %vm449, %v2486, %v2490
      %v2492 = vshrl.u32 %v2316, 16
      %v2494 = vor.u32 %v2492, %v2490
      %v2496 = vshll.u32 %v2317, 16
      %v2498 = vrot.slane %v2496, 1
      %v2499 = vsel %vm449, %v2494, %v2498
      %v2500 = vshrl.u32 %v2317, 16
      %v2502 = vor.u32 %v2500, %v2498
      %v2504 = vshll.u32 %v2318, 16
      %v2506 = vrot.slane %v2504, 1
      %v2507 = vsel %vm449, %v2502, %v2506
      %v2508 = vshrl.u32 %v2318, 16
      %v2510 = vor.u32 %v2508, %v2506
      %v2512 = vshll.u32 %v2319, 16
      %v2514 = vrot.slane %v2512, 1
      %v2515 = vsel %vm449, %v2510, %v2514
      %v2517 = vsel %vm646, %v2331, 0
      %v2520 = vsel %vm646, %v2339, 0
      %v2523 = vsel %vm646, %v2347, 0
      %v2526 = vsel %vm646, %v2355, 0
      %v2529 = vsel %vm646, %v2363, 0
      %v2532 = vsel %vm646, %v2371, 0
      %v2535 = vsel %vm646, %v2379, 0
      %v2538 = vsel %vm646, %v2387, 0
      %v2541 = vsel %vm646, %v2395, 0
      %v2544 = vsel %vm646, %v2403, 0
      %v2547 = vsel %vm646, %v2411, 0
      %v2550 = vsel %vm646, %v2419, 0
      %v2553 = vsel %vm646, %v2427, 0
      %v2556 = vsel %vm646, %v2435, 0
      %v2559 = vsel %vm646, %v2443, 0
      %v2562 = vsel %vm646, %v2451, 0
      %v2565 = vsel %vm646, %v2459, 0
      %v2568 = vsel %vm646, %v2467, 0
      %v2571 = vsel %vm646, %v2475, 0
      %v2574 = vsel %vm646, %v2483, 0
      %v2577 = vsel %vm646, %v2491, 0
      %v2580 = vsel %vm646, %v2499, 0
      %v2583 = vsel %vm646, %v2507, 0
      %v2586 = vsel %vm646, %v2515, 0
      %v2589 = vsel %vm719, %v2196, 0
      %2591 = vmatprep.subr.bf16.mxu0 0
      %2592 = vmatpush1.bf16.msra.mxu0 0
      %2593 = vmatprep.subr.bf16.mxu0 0
      %2594 = vmatpush1.bf16.msra.mxu0 0
      %2595 = vmatprep.subr.bf16.mxu0 0
      %2596 = vmatpush1.bf16.msra.mxu0 0
      %2597 = vmatprep.subr.bf16.mxu0 0
      %2598 = vmatpush1.bf16.msra.mxu0 0
      %2599 = vmatprep.subr.bf16.mxu0 0
      %2600 = vmatpush1.bf16.msra.mxu0 0
      %2601 = vmatprep.subr.bf16.mxu0 0
      %2602 = vmatpush1.bf16.msra.mxu0 0
      %2603 = vmatprep.subr.bf16.mxu0 0
      %2604 = vmatpush1.bf16.msra.mxu0 0
      %2605 = vmatprep.subr.bf16.mxu0 0
      %2606 = vmatpush1.bf16.msra.mxu0 %v2589
      %2607 = vmatprep.subr.bf16.mxu0 0
      %2608 = vmatpush2.bf16.msra.mxu0 0
      %2609 = vmatprep.subr.bf16.mxu0 0
      %2610 = vmatpush2.bf16.msra.mxu0 0
      %2611 = vmatprep.subr.bf16.mxu0 0
      %2612 = vmatpush2.bf16.msra.mxu0 0
      %2613 = vmatprep.subr.bf16.mxu0 0
      %2614 = vmatpush2.bf16.msra.mxu0 0
      %2615 = vmatprep.subr.bf16.mxu0 0
      %2616 = vmatpush2.bf16.msra.mxu0 0
      %2617 = vmatprep.subr.bf16.mxu0 0
      %2618 = vmatpush2.bf16.msra.mxu0 0
      %2619 = vmatprep.subr.bf16.mxu0 0
      %2620 = vmatpush2.bf16.msra.mxu0 0
      %2621 = vmatprep.subr.bf16.mxu0 0
      %2622 = vmatpush2.bf16.msra.mxu0 0
      %2623 = vmatprep.mubr.bf16.mxu0 0
      %2624 = vmatmul.mubr.bf16.gmra.mxu0 %v2517
      %v2625 = vpop.f32.mrf.mxu0
      %v2626 = vadd.f32 0.0, %v2625
      %v2627 = vpop.f32.mrf.mxu0
      %v2628 = vpop.f32.mrf.mxu0
      %v2629 = vadd.f32 0.0, %v2628
      %v2630 = vpop.f32.mrf.mxu0
      %2631 = vmatprep.mubr.bf16.mxu0 0
      %2632 = vmatmul.mubr.bf16.gmra.mxu0 %v2520
      %v2633 = vpop.f32.mrf.mxu0
      %v2634 = vadd.f32 0.0, %v2633
      %v2635 = vpop.f32.mrf.mxu0
      %v2636 = vpop.f32.mrf.mxu0
      %v2637 = vadd.f32 0.0, %v2636
      %v2638 = vpop.f32.mrf.mxu0
      %2639 = vmatprep.mubr.bf16.mxu0 0
      %2640 = vmatmul.mubr.bf16.gmra.mxu0 %v2523
      %v2641 = vpop.f32.mrf.mxu0
      %v2642 = vadd.f32 0.0, %v2641
      %v2643 = vpop.f32.mrf.mxu0
      %v2644 = vpop.f32.mrf.mxu0
      %v2645 = vadd.f32 0.0, %v2644
      %v2646 = vpop.f32.mrf.mxu0
      %2647 = vmatprep.mubr.bf16.mxu0 0
      %2648 = vmatmul.mubr.bf16.gmra.mxu0 %v2526
      %v2649 = vpop.f32.mrf.mxu0
      %v2650 = vadd.f32 0.0, %v2649
      %v2651 = vpop.f32.mrf.mxu0
      %v2652 = vpop.f32.mrf.mxu0
      %v2653 = vadd.f32 0.0, %v2652
      %v2654 = vpop.f32.mrf.mxu0
      %2655 = vmatprep.mubr.bf16.mxu0 0
      %2656 = vmatmul.mubr.bf16.gmra.mxu0 %v2529
      %v2657 = vpop.f32.mrf.mxu0
      %v2658 = vadd.f32 0.0, %v2657
      %v2659 = vpop.f32.mrf.mxu0
      %v2660 = vpop.f32.mrf.mxu0
      %v2661 = vadd.f32 0.0, %v2660
      %v2662 = vpop.f32.mrf.mxu0
      %2663 = vmatprep.mubr.bf16.mxu0 0
      %2664 = vmatmul.mubr.bf16.gmra.mxu0 %v2532
      %v2665 = vpop.f32.mrf.mxu0
      %v2666 = vadd.f32 0.0, %v2665
      %v2667 = vpop.f32.mrf.mxu0
      %v2668 = vpop.f32.mrf.mxu0
      %v2669 = vadd.f32 0.0, %v2668
      %v2670 = vpop.f32.mrf.mxu0
      %2671 = vmatprep.mubr.bf16.mxu0 0
      %2672 = vmatmul.mubr.bf16.gmra.mxu0 %v2535
      %v2673 = vpop.f32.mrf.mxu0
      %v2674 = vadd.f32 0.0, %v2673
      %v2675 = vpop.f32.mrf.mxu0
      %v2676 = vpop.f32.mrf.mxu0
      %v2677 = vadd.f32 0.0, %v2676
      %v2678 = vpop.f32.mrf.mxu0
      %2679 = vmatprep.mubr.bf16.mxu0 0
      %2680 = vmatmul.mubr.bf16.gmra.mxu0 %v2538
      %v2681 = vpop.f32.mrf.mxu0
      %v2682 = vadd.f32 0.0, %v2681
      %v2683 = vpop.f32.mrf.mxu0
      %v2684 = vpop.f32.mrf.mxu0
      %v2685 = vadd.f32 0.0, %v2684
      %v2686 = vpop.f32.mrf.mxu0
      %2687 = vmatprep.mubr.bf16.mxu0 0
      %2688 = vmatmul.mubr.bf16.gmra.mxu0 %v2541
      %v2689 = vpop.f32.mrf.mxu0
      %v2690 = vadd.f32 0.0, %v2689
      %v2691 = vpop.f32.mrf.mxu0
      %v2692 = vpop.f32.mrf.mxu0
      %v2693 = vadd.f32 0.0, %v2692
      %v2694 = vpop.f32.mrf.mxu0
      %2695 = vmatprep.mubr.bf16.mxu0 0
      %2696 = vmatmul.mubr.bf16.gmra.mxu0 %v2544
      %v2697 = vpop.f32.mrf.mxu0
      %v2698 = vadd.f32 0.0, %v2697
      %v2699 = vpop.f32.mrf.mxu0
      %v2700 = vpop.f32.mrf.mxu0
      %v2701 = vadd.f32 0.0, %v2700
      %v2702 = vpop.f32.mrf.mxu0
      %2703 = vmatprep.mubr.bf16.mxu0 0
      %2704 = vmatmul.mubr.bf16.gmra.mxu0 %v2547
      %v2705 = vpop.f32.mrf.mxu0
      %v2706 = vadd.f32 0.0, %v2705
      %v2707 = vpop.f32.mrf.mxu0
      %v2708 = vpop.f32.mrf.mxu0
      %v2709 = vadd.f32 0.0, %v2708
      %v2710 = vpop.f32.mrf.mxu0
      %2711 = vmatprep.mubr.bf16.mxu0 0
      %2712 = vmatmul.mubr.bf16.gmra.mxu0 %v2550
      %v2713 = vpop.f32.mrf.mxu0
      %v2714 = vadd.f32 0.0, %v2713
      %v2715 = vpop.f32.mrf.mxu0
      %v2716 = vpop.f32.mrf.mxu0
      %v2717 = vadd.f32 0.0, %v2716
      %v2718 = vpop.f32.mrf.mxu0
      %2719 = vmatprep.mubr.bf16.mxu0 0
      %2720 = vmatmul.mubr.bf16.gmra.mxu0 %v2553
      %v2721 = vpop.f32.mrf.mxu0
      %v2722 = vadd.f32 0.0, %v2721
      %v2723 = vpop.f32.mrf.mxu0
      %v2724 = vpop.f32.mrf.mxu0
      %v2725 = vadd.f32 0.0, %v2724
      %v2726 = vpop.f32.mrf.mxu0
      %2727 = vmatprep.mubr.bf16.mxu0 0
      %2728 = vmatmul.mubr.bf16.gmra.mxu0 %v2556
      %v2729 = vpop.f32.mrf.mxu0
      %v2730 = vadd.f32 0.0, %v2729
      %v2731 = vpop.f32.mrf.mxu0
      %v2732 = vpop.f32.mrf.mxu0
      %v2733 = vadd.f32 0.0, %v2732
      %v2734 = vpop.f32.mrf.mxu0
      %2735 = vmatprep.mubr.bf16.mxu0 0
      %2736 = vmatmul.mubr.bf16.gmra.mxu0 %v2559
      %v2737 = vpop.f32.mrf.mxu0
      %v2738 = vadd.f32 0.0, %v2737
      %v2739 = vpop.f32.mrf.mxu0
      %v2740 = vpop.f32.mrf.mxu0
      %v2741 = vadd.f32 0.0, %v2740
      %v2742 = vpop.f32.mrf.mxu0
      %2743 = vmatprep.mubr.bf16.mxu0 0
      %2744 = vmatmul.mubr.bf16.gmra.mxu0 %v2562
      %v2745 = vpop.f32.mrf.mxu0
      %v2746 = vadd.f32 0.0, %v2745
      %v2747 = vpop.f32.mrf.mxu0
      %v2748 = vpop.f32.mrf.mxu0
      %v2749 = vadd.f32 0.0, %v2748
      %v2750 = vpop.f32.mrf.mxu0
      %2751 = vmatprep.mubr.bf16.mxu0 0
      %2752 = vmatmul.mubr.bf16.gmra.mxu0 %v2565
      %v2753 = vpop.f32.mrf.mxu0
      %v2754 = vadd.f32 0.0, %v2753
      %v2755 = vpop.f32.mrf.mxu0
      %v2756 = vpop.f32.mrf.mxu0
      %v2757 = vadd.f32 0.0, %v2756
      %v2758 = vpop.f32.mrf.mxu0
      %2759 = vmatprep.mubr.bf16.mxu0 0
      %2760 = vmatmul.mubr.bf16.gmra.mxu0 %v2568
      %v2761 = vpop.f32.mrf.mxu0
      %v2762 = vadd.f32 0.0, %v2761
      %v2763 = vpop.f32.mrf.mxu0
      %v2764 = vpop.f32.mrf.mxu0
      %v2765 = vadd.f32 0.0, %v2764
      %v2766 = vpop.f32.mrf.mxu0
      %2767 = vmatprep.mubr.bf16.mxu0 0
      %2768 = vmatmul.mubr.bf16.gmra.mxu0 %v2571
      %v2769 = vpop.f32.mrf.mxu0
      %v2770 = vadd.f32 0.0, %v2769
      %v2771 = vpop.f32.mrf.mxu0
      %v2772 = vpop.f32.mrf.mxu0
      %v2773 = vadd.f32 0.0, %v2772
      %v2774 = vpop.f32.mrf.mxu0
      %2775 = vmatprep.mubr.bf16.mxu0 0
      %2776 = vmatmul.mubr.bf16.gmra.mxu0 %v2574
      %v2777 = vpop.f32.mrf.mxu0
      %v2778 = vadd.f32 0.0, %v2777
      %v2779 = vpop.f32.mrf.mxu0
      %v2780 = vpop.f32.mrf.mxu0
      %v2781 = vadd.f32 0.0, %v2780
      %v2782 = vpop.f32.mrf.mxu0
      %2783 = vmatprep.mubr.bf16.mxu0 0
      %2784 = vmatmul.mubr.bf16.gmra.mxu0 %v2577
      %v2785 = vpop.f32.mrf.mxu0
      %v2786 = vadd.f32 0.0, %v2785
      %v2787 = vpop.f32.mrf.mxu0
      %v2788 = vpop.f32.mrf.mxu0
      %v2789 = vadd.f32 0.0, %v2788
      %v2790 = vpop.f32.mrf.mxu0
      %2791 = vmatprep.mubr.bf16.mxu0 0
      %2792 = vmatmul.mubr.bf16.gmra.mxu0 %v2580
      %v2793 = vpop.f32.mrf.mxu0
      %v2794 = vadd.f32 0.0, %v2793
      %v2795 = vpop.f32.mrf.mxu0
      %v2796 = vpop.f32.mrf.mxu0
      %v2797 = vadd.f32 0.0, %v2796
      %v2798 = vpop.f32.mrf.mxu0
      %2799 = vmatprep.mubr.bf16.mxu0 0
      %2800 = vmatmul.mubr.bf16.gmra.mxu0 %v2583
      %v2801 = vpop.f32.mrf.mxu0
      %v2802 = vadd.f32 0.0, %v2801
      %v2803 = vpop.f32.mrf.mxu0
      %v2804 = vpop.f32.mrf.mxu0
      %v2805 = vadd.f32 0.0, %v2804
      %v2806 = vpop.f32.mrf.mxu0
      %2807 = vmatprep.mubr.bf16.mxu0 0
      %2808 = vmatmul.mubr.bf16.gmra.mxu0 %v2586
      %v2809 = vpop.f32.mrf.mxu0
      %v2810 = vadd.f32 0.0, %v2809
      %v2811 = vpop.f32.mrf.mxu0
      %v2812 = vpop.f32.mrf.mxu0
      %v2813 = vadd.f32 0.0, %v2812
      %v2814 = vpop.f32.mrf.mxu0
      %2815 = vdwg.mxu0
      %v2816 = vadd.f32 %v2098, %v2626
      %v2817 = vadd.f32 %v2099, %v2629
      %v2818 = vadd.f32 %v2100, %v2634
      %v2819 = vadd.f32 %v2101, %v2637
      %v2820 = vadd.f32 %v2102, %v2642
      %v2821 = vadd.f32 %v2103, %v2645
      %v2822 = vadd.f32 %v2104, %v2650
      %v2823 = vadd.f32 %v2105, %v2653
      %v2824 = vadd.f32 %v2106, %v2658
      %v2825 = vadd.f32 %v2107, %v2661
      %v2826 = vadd.f32 %v2108, %v2666
      %v2827 = vadd.f32 %v2109, %v2669
      %v2828 = vadd.f32 %v2110, %v2674
      %v2829 = vadd.f32 %v2111, %v2677
      %v2830 = vadd.f32 %v2112, %v2682
      %v2831 = vadd.f32 %v2113, %v2685
      %v2832 = vadd.f32 %v2114, %v2690
      %v2833 = vadd.f32 %v2115, %v2693
      %v2834 = vadd.f32 %v2116, %v2698
      %v2835 = vadd.f32 %v2117, %v2701
      %v2836 = vadd.f32 %v2118, %v2706
      %v2837 = vadd.f32 %v2119, %v2709
      %v2838 = vadd.f32 %v2120, %v2714
      %v2839 = vadd.f32 %v2121, %v2717
      %v2840 = vadd.f32 %v2122, %v2722
      %v2841 = vadd.f32 %v2123, %v2725
      %v2842 = vadd.f32 %v2124, %v2730
      %v2843 = vadd.f32 %v2125, %v2733
      %v2844 = vadd.f32 %v2126, %v2738
      %v2845 = vadd.f32 %v2127, %v2741
      %v2846 = vadd.f32 %v2128, %v2746
      %v2847 = vadd.f32 %v2129, %v2749
      %v2848 = vadd.f32 %v2130, %v2754
      %v2849 = vadd.f32 %v2131, %v2757
      %v2850 = vadd.f32 %v2132, %v2762
      %v2851 = vadd.f32 %v2133, %v2765
      %v2852 = vadd.f32 %v2134, %v2770
      %v2853 = vadd.f32 %v2135, %v2773
      %v2854 = vadd.f32 %v2136, %v2778
      %v2855 = vadd.f32 %v2137, %v2781
      %v2856 = vadd.f32 %v2138, %v2786
      %v2857 = vadd.f32 %v2139, %v2789
      %v2858 = vadd.f32 %v2140, %v2794
      %v2859 = vadd.f32 %v2141, %v2797
      %v2860 = vadd.f32 %v2142, %v2802
      %v2861 = vadd.f32 %v2143, %v2805
      %v2862 = vadd.f32 %v2144, %v2810
      %v2863 = vadd.f32 %v2145, %v2813
      %v2864 = vld [vmem:[%s251 + $0xc] sm:$0xe]
      %s2865 = scalar_lea.vmem %s1, 10
      %v2866 = vld [vmem:[%s2865] sm:$0x3]
      %v2868 = vunpack.c.l.b16 %v2864
      %v2869 = vpack.c.b16 %v2247, %v2868
      %v2870 = vrot.slane %v2869, 1
      %v2871 = vrot.slane %v2296, 1
      %v2872 = vsel %vm1230, %v2870, %v2871
      %v2873 = vrot.slane %v2297, 1
      %v2874 = vsel %vm1230, %v2871, %v2873
      %v2875 = vrot.slane %v2298, 1
      %v2876 = vsel %vm1230, %v2873, %v2875
      %v2877 = vrot.slane %v2299, 1
      %v2878 = vsel %vm1230, %v2875, %v2877
      %v2879 = vrot.slane %v2300, 1
      %v2880 = vsel %vm1230, %v2877, %v2879
      %v2881 = vrot.slane %v2301, 1
      %v2882 = vsel %vm1230, %v2879, %v2881
      %v2883 = vrot.slane %v2302, 1
      %v2884 = vsel %vm1230, %v2881, %v2883
      %v2885 = vrot.slane %v2303, 1
      %v2886 = vsel %vm1230, %v2883, %v2885
      %v2887 = vrot.slane %v2304, 1
      %v2888 = vsel %vm1230, %v2885, %v2887
      %v2889 = vrot.slane %v2305, 1
      %v2890 = vsel %vm1230, %v2887, %v2889
      %v2891 = vrot.slane %v2306, 1
      %v2892 = vsel %vm1230, %v2889, %v2891
      %v2893 = vrot.slane %v2307, 1
      %v2894 = vsel %vm1230, %v2891, %v2893
      %v2895 = vrot.slane %v2308, 1
      %v2896 = vsel %vm1230, %v2893, %v2895
      %v2897 = vrot.slane %v2309, 1
      %v2898 = vsel %vm1230, %v2895, %v2897
      %v2899 = vrot.slane %v2310, 1
      %v2900 = vsel %vm1230, %v2897, %v2899
      %v2901 = vrot.slane %v2311, 1
      %v2902 = vsel %vm1230, %v2899, %v2901
      %v2903 = vrot.slane %v2312, 1
      %v2904 = vsel %vm1230, %v2901, %v2903
      %v2905 = vrot.slane %v2313, 1
      %v2906 = vsel %vm1230, %v2903, %v2905
      %v2907 = vrot.slane %v2314, 1
      %v2908 = vsel %vm1230, %v2905, %v2907
      %v2909 = vrot.slane %v2315, 1
      %v2910 = vsel %vm1230, %v2907, %v2909
      %v2911 = vrot.slane %v2316, 1
      %v2912 = vsel %vm1230, %v2909, %v2911
      %v2913 = vrot.slane %v2317, 1
      %v2914 = vsel %vm1230, %v2911, %v2913
      %v2915 = vrot.slane %v2318, 1
      %v2916 = vsel %vm1230, %v2913, %v2915
      %v2917 = vrot.slane %v2319, 1
      %v2918 = vsel %vm1230, %v2915, %v2917
      %v2920 = vsel %vm646, %v2872, 0
      %v2923 = vsel %vm646, %v2874, 0
      %v2926 = vsel %vm646, %v2876, 0
      %v2929 = vsel %vm646, %v2878, 0
      %v2932 = vsel %vm646, %v2880, 0
      %v2935 = vsel %vm646, %v2882, 0
      %v2938 = vsel %vm646, %v2884, 0
      %v2941 = vsel %vm646, %v2886, 0
      %v2944 = vsel %vm646, %v2888, 0
      %v2947 = vsel %vm646, %v2890, 0
      %v2950 = vsel %vm646, %v2892, 0
      %v2953 = vsel %vm646, %v2894, 0
      %v2956 = vsel %vm646, %v2896, 0
      %v2959 = vsel %vm646, %v2898, 0
      %v2962 = vsel %vm646, %v2900, 0
      %v2965 = vsel %vm646, %v2902, 0
      %v2968 = vsel %vm646, %v2904, 0
      %v2971 = vsel %vm646, %v2906, 0
      %v2974 = vsel %vm646, %v2908, 0
      %v2977 = vsel %vm646, %v2910, 0
      %v2980 = vsel %vm646, %v2912, 0
      %v2983 = vsel %vm646, %v2914, 0
      %v2986 = vsel %vm646, %v2916, 0
      %v2989 = vsel %vm646, %v2918, 0
      %v2992 = vsel %vm719, %v2866, 0
      %2994 = vmatprep.subr.bf16.mxu0 0
      %2995 = vmatpush1.bf16.msra.mxu0 0
      %2996 = vmatprep.subr.bf16.mxu0 0
      %2997 = vmatpush1.bf16.msra.mxu0 0
      %2998 = vmatprep.subr.bf16.mxu0 0
      %2999 = vmatpush1.bf16.msra.mxu0 0
      %3000 = vmatprep.subr.bf16.mxu0 0
      %3001 = vmatpush1.bf16.msra.mxu0 0
      %3002 = vmatprep.subr.bf16.mxu0 0
      %3003 = vmatpush1.bf16.msra.mxu0 0
      %3004 = vmatprep.subr.bf16.mxu0 0
      %3005 = vmatpush1.bf16.msra.mxu0 0
      %3006 = vmatprep.subr.bf16.mxu0 0
      %3007 = vmatpush1.bf16.msra.mxu0 0
      %3008 = vmatprep.subr.bf16.mxu0 0
      %3009 = vmatpush1.bf16.msra.mxu0 %v2992
      %3010 = vmatprep.subr.bf16.mxu0 0
      %3011 = vmatpush2.bf16.msra.mxu0 0
      %3012 = vmatprep.subr.bf16.mxu0 0
      %3013 = vmatpush2.bf16.msra.mxu0 0
      %3014 = vmatprep.subr.bf16.mxu0 0
      %3015 = vmatpush2.bf16.msra.mxu0 0
      %3016 = vmatprep.subr.bf16.mxu0 0
      %3017 = vmatpush2.bf16.msra.mxu0 0
      %3018 = vmatprep.subr.bf16.mxu0 0
      %3019 = vmatpush2.bf16.msra.mxu0 0
      %3020 = vmatprep.subr.bf16.mxu0 0
      %3021 = vmatpush2.bf16.msra.mxu0 0
      %3022 = vmatprep.subr.bf16.mxu0 0
      %3023 = vmatpush2.bf16.msra.mxu0 0
      %3024 = vmatprep.subr.bf16.mxu0 0
      %3025 = vmatpush2.bf16.msra.mxu0 0
      %3026 = vmatprep.mubr.bf16.mxu0 0
      %3027 = vmatmul.mubr.bf16.gmra.mxu0 %v2920
      %v3028 = vpop.f32.mrf.mxu0
      %v3029 = vadd.f32 0.0, %v3028
      %v3030 = vpop.f32.mrf.mxu0
      %v3031 = vpop.f32.mrf.mxu0
      %v3032 = vadd.f32 0.0, %v3031
      %v3033 = vpop.f32.mrf.mxu0
      %3034 = vmatprep.mubr.bf16.mxu0 0
      %3035 = vmatmul.mubr.bf16.gmra.mxu0 %v2923
      %v3036 = vpop.f32.mrf.mxu0
      %v3037 = vadd.f32 0.0, %v3036
      %v3038 = vpop.f32.mrf.mxu0
      %v3039 = vpop.f32.mrf.mxu0
      %v3040 = vadd.f32 0.0, %v3039
      %v3041 = vpop.f32.mrf.mxu0
      %3042 = vmatprep.mubr.bf16.mxu0 0
      %3043 = vmatmul.mubr.bf16.gmra.mxu0 %v2926
      %v3044 = vpop.f32.mrf.mxu0
      %v3045 = vadd.f32 0.0, %v3044
      %v3046 = vpop.f32.mrf.mxu0
      %v3047 = vpop.f32.mrf.mxu0
      %v3048 = vadd.f32 0.0, %v3047
      %v3049 = vpop.f32.mrf.mxu0
      %3050 = vmatprep.mubr.bf16.mxu0 0
      %3051 = vmatmul.mubr.bf16.gmra.mxu0 %v2929
      %v3052 = vpop.f32.mrf.mxu0
      %v3053 = vadd.f32 0.0, %v3052
      %v3054 = vpop.f32.mrf.mxu0
      %v3055 = vpop.f32.mrf.mxu0
      %v3056 = vadd.f32 0.0, %v3055
      %v3057 = vpop.f32.mrf.mxu0
      %3058 = vmatprep.mubr.bf16.mxu0 0
      %3059 = vmatmul.mubr.bf16.gmra.mxu0 %v2932
      %v3060 = vpop.f32.mrf.mxu0
      %v3061 = vadd.f32 0.0, %v3060
      %v3062 = vpop.f32.mrf.mxu0
      %v3063 = vpop.f32.mrf.mxu0
      %v3064 = vadd.f32 0.0, %v3063
      %v3065 = vpop.f32.mrf.mxu0
      %3066 = vmatprep.mubr.bf16.mxu0 0
      %3067 = vmatmul.mubr.bf16.gmra.mxu0 %v2935
      %v3068 = vpop.f32.mrf.mxu0
      %v3069 = vadd.f32 0.0, %v3068
      %v3070 = vpop.f32.mrf.mxu0
      %v3071 = vpop.f32.mrf.mxu0
      %v3072 = vadd.f32 0.0, %v3071
      %v3073 = vpop.f32.mrf.mxu0
      %3074 = vmatprep.mubr.bf16.mxu0 0
      %3075 = vmatmul.mubr.bf16.gmra.mxu0 %v2938
      %v3076 = vpop.f32.mrf.mxu0
      %v3077 = vadd.f32 0.0, %v3076
      %v3078 = vpop.f32.mrf.mxu0
      %v3079 = vpop.f32.mrf.mxu0
      %v3080 = vadd.f32 0.0, %v3079
      %v3081 = vpop.f32.mrf.mxu0
      %3082 = vmatprep.mubr.bf16.mxu0 0
      %3083 = vmatmul.mubr.bf16.gmra.mxu0 %v2941
      %v3084 = vpop.f32.mrf.mxu0
      %v3085 = vadd.f32 0.0, %v3084
      %v3086 = vpop.f32.mrf.mxu0
      %v3087 = vpop.f32.mrf.mxu0
      %v3088 = vadd.f32 0.0, %v3087
      %v3089 = vpop.f32.mrf.mxu0
      %3090 = vmatprep.mubr.bf16.mxu0 0
      %3091 = vmatmul.mubr.bf16.gmra.mxu0 %v2944
      %v3092 = vpop.f32.mrf.mxu0
      %v3093 = vadd.f32 0.0, %v3092
      %v3094 = vpop.f32.mrf.mxu0
      %v3095 = vpop.f32.mrf.mxu0
      %v3096 = vadd.f32 0.0, %v3095
      %v3097 = vpop.f32.mrf.mxu0
      %3098 = vmatprep.mubr.bf16.mxu0 0
      %3099 = vmatmul.mubr.bf16.gmra.mxu0 %v2947
      %v3100 = vpop.f32.mrf.mxu0
      %v3101 = vadd.f32 0.0, %v3100
      %v3102 = vpop.f32.mrf.mxu0
      %v3103 = vpop.f32.mrf.mxu0
      %v3104 = vadd.f32 0.0, %v3103
      %v3105 = vpop.f32.mrf.mxu0
      %3106 = vmatprep.mubr.bf16.mxu0 0
      %3107 = vmatmul.mubr.bf16.gmra.mxu0 %v2950
      %v3108 = vpop.f32.mrf.mxu0
      %v3109 = vadd.f32 0.0, %v3108
      %v3110 = vpop.f32.mrf.mxu0
      %v3111 = vpop.f32.mrf.mxu0
      %v3112 = vadd.f32 0.0, %v3111
      %v3113 = vpop.f32.mrf.mxu0
      %3114 = vmatprep.mubr.bf16.mxu0 0
      %3115 = vmatmul.mubr.bf16.gmra.mxu0 %v2953
      %v3116 = vpop.f32.mrf.mxu0
      %v3117 = vadd.f32 0.0, %v3116
      %v3118 = vpop.f32.mrf.mxu0
      %v3119 = vpop.f32.mrf.mxu0
      %v3120 = vadd.f32 0.0, %v3119
      %v3121 = vpop.f32.mrf.mxu0
      %3122 = vmatprep.mubr.bf16.mxu0 0
      %3123 = vmatmul.mubr.bf16.gmra.mxu0 %v2956
      %v3124 = vpop.f32.mrf.mxu0
      %v3125 = vadd.f32 0.0, %v3124
      %v3126 = vpop.f32.mrf.mxu0
      %v3127 = vpop.f32.mrf.mxu0
      %v3128 = vadd.f32 0.0, %v3127
      %v3129 = vpop.f32.mrf.mxu0
      %3130 = vmatprep.mubr.bf16.mxu0 0
      %3131 = vmatmul.mubr.bf16.gmra.mxu0 %v2959
      %v3132 = vpop.f32.mrf.mxu0
      %v3133 = vadd.f32 0.0, %v3132
      %v3134 = vpop.f32.mrf.mxu0
      %v3135 = vpop.f32.mrf.mxu0
      %v3136 = vadd.f32 0.0, %v3135
      %v3137 = vpop.f32.mrf.mxu0
      %3138 = vmatprep.mubr.bf16.mxu0 0
      %3139 = vmatmul.mubr.bf16.gmra.mxu0 %v2962
      %v3140 = vpop.f32.mrf.mxu0
      %v3141 = vadd.f32 0.0, %v3140
      %v3142 = vpop.f32.mrf.mxu0
      %v3143 = vpop.f32.mrf.mxu0
      %v3144 = vadd.f32 0.0, %v3143
      %v3145 = vpop.f32.mrf.mxu0
      %3146 = vmatprep.mubr.bf16.mxu0 0
      %3147 = vmatmul.mubr.bf16.gmra.mxu0 %v2965
      %v3148 = vpop.f32.mrf.mxu0
      %v3149 = vadd.f32 0.0, %v3148
      %v3150 = vpop.f32.mrf.mxu0
      %v3151 = vpop.f32.mrf.mxu0
      %v3152 = vadd.f32 0.0, %v3151
      %v3153 = vpop.f32.mrf.mxu0
      %3154 = vmatprep.mubr.bf16.mxu0 0
      %3155 = vmatmul.mubr.bf16.gmra.mxu0 %v2968
      %v3156 = vpop.f32.mrf.mxu0
      %v3157 = vadd.f32 0.0, %v3156
      %v3158 = vpop.f32.mrf.mxu0
      %v3159 = vpop.f32.mrf.mxu0
      %v3160 = vadd.f32 0.0, %v3159
      %v3161 = vpop.f32.mrf.mxu0
      %3162 = vmatprep.mubr.bf16.mxu0 0
      %3163 = vmatmul.mubr.bf16.gmra.mxu0 %v2971
      %v3164 = vpop.f32.mrf.mxu0
      %v3165 = vadd.f32 0.0, %v3164
      %v3166 = vpop.f32.mrf.mxu0
      %v3167 = vpop.f32.mrf.mxu0
      %v3168 = vadd.f32 0.0, %v3167
      %v3169 = vpop.f32.mrf.mxu0
      %3170 = vmatprep.mubr.bf16.mxu0 0
      %3171 = vmatmul.mubr.bf16.gmra.mxu0 %v2974
      %v3172 = vpop.f32.mrf.mxu0
      %v3173 = vadd.f32 0.0, %v3172
      %v3174 = vpop.f32.mrf.mxu0
      %v3175 = vpop.f32.mrf.mxu0
      %v3176 = vadd.f32 0.0, %v3175
      %v3177 = vpop.f32.mrf.mxu0
      %3178 = vmatprep.mubr.bf16.mxu0 0
      %3179 = vmatmul.mubr.bf16.gmra.mxu0 %v2977
      %v3180 = vpop.f32.mrf.mxu0
      %v3181 = vadd.f32 0.0, %v3180
      %v3182 = vpop.f32.mrf.mxu0
      %v3183 = vpop.f32.mrf.mxu0
      %v3184 = vadd.f32 0.0, %v3183
      %v3185 = vpop.f32.mrf.mxu0
      %3186 = vmatprep.mubr.bf16.mxu0 0
      %3187 = vmatmul.mubr.bf16.gmra.mxu0 %v2980
      %v3188 = vpop.f32.mrf.mxu0
      %v3189 = vadd.f32 0.0, %v3188
      %v3190 = vpop.f32.mrf.mxu0
      %v3191 = vpop.f32.mrf.mxu0
      %v3192 = vadd.f32 0.0, %v3191
      %v3193 = vpop.f32.mrf.mxu0
      %3194 = vmatprep.mubr.bf16.mxu0 0
      %3195 = vmatmul.mubr.bf16.gmra.mxu0 %v2983
      %v3196 = vpop.f32.mrf.mxu0
      %v3197 = vadd.f32 0.0, %v3196
      %v3198 = vpop.f32.mrf.mxu0
      %v3199 = vpop.f32.mrf.mxu0
      %v3200 = vadd.f32 0.0, %v3199
      %v3201 = vpop.f32.mrf.mxu0
      %3202 = vmatprep.mubr.bf16.mxu0 0
      %3203 = vmatmul.mubr.bf16.gmra.mxu0 %v2986
      %v3204 = vpop.f32.mrf.mxu0
      %v3205 = vadd.f32 0.0, %v3204
      %v3206 = vpop.f32.mrf.mxu0
      %v3207 = vpop.f32.mrf.mxu0
      %v3208 = vadd.f32 0.0, %v3207
      %v3209 = vpop.f32.mrf.mxu0
      %3210 = vmatprep.mubr.bf16.mxu0 0
      %3211 = vmatmul.mubr.bf16.gmra.mxu0 %v2989
      %v3212 = vpop.f32.mrf.mxu0
      %v3213 = vadd.f32 0.0, %v3212
      %v3214 = vpop.f32.mrf.mxu0
      %v3215 = vpop.f32.mrf.mxu0
      %v3216 = vadd.f32 0.0, %v3215
      %v3217 = vpop.f32.mrf.mxu0
      %3218 = vdwg.mxu0
      %v3219 = vadd.f32 %v2816, %v3029
      %v3220 = vadd.f32 %v2817, %v3032
      %v3221 = vadd.f32 %v2818, %v3037
      %v3222 = vadd.f32 %v2819, %v3040
      %v3223 = vadd.f32 %v2820, %v3045
      %v3224 = vadd.f32 %v2821, %v3048
      %v3225 = vadd.f32 %v2822, %v3053
      %v3226 = vadd.f32 %v2823, %v3056
      %v3227 = vadd.f32 %v2824, %v3061
      %v3228 = vadd.f32 %v2825, %v3064
      %v3229 = vadd.f32 %v2826, %v3069
      %v3230 = vadd.f32 %v2827, %v3072
      %v3231 = vadd.f32 %v2828, %v3077
      %v3232 = vadd.f32 %v2829, %v3080
      %v3233 = vadd.f32 %v2830, %v3085
      %v3234 = vadd.f32 %v2831, %v3088
      %v3235 = vadd.f32 %v2832, %v3093
      %v3236 = vadd.f32 %v2833, %v3096
      %v3237 = vadd.f32 %v2834, %v3101
      %v3238 = vadd.f32 %v2835, %v3104
      %v3239 = vadd.f32 %v2836, %v3109
      %v3240 = vadd.f32 %v2837, %v3112
      %v3241 = vadd.f32 %v2838, %v3117
      %v3242 = vadd.f32 %v2839, %v3120
      %v3243 = vadd.f32 %v2840, %v3125
      %v3244 = vadd.f32 %v2841, %v3128
      %v3245 = vadd.f32 %v2842, %v3133
      %v3246 = vadd.f32 %v2843, %v3136
      %v3247 = vadd.f32 %v2844, %v3141
      %v3248 = vadd.f32 %v2845, %v3144
      %v3249 = vadd.f32 %v2846, %v3149
      %v3250 = vadd.f32 %v2847, %v3152
      %v3251 = vadd.f32 %v2848, %v3157
      %v3252 = vadd.f32 %v2849, %v3160
      %v3253 = vadd.f32 %v2850, %v3165
      %v3254 = vadd.f32 %v2851, %v3168
      %v3255 = vadd.f32 %v2852, %v3173
      %v3256 = vadd.f32 %v2853, %v3176
      %v3257 = vadd.f32 %v2854, %v3181
      %v3258 = vadd.f32 %v2855, %v3184
      %v3259 = vadd.f32 %v2856, %v3189
      %v3260 = vadd.f32 %v2857, %v3192
      %v3261 = vadd.f32 %v2858, %v3197
      %v3262 = vadd.f32 %v2859, %v3200
      %v3263 = vadd.f32 %v2860, %v3205
      %v3264 = vadd.f32 %v2861, %v3208
      %v3265 = vadd.f32 %v2862, %v3213
      %v3266 = vadd.f32 %v2863, %v3216
      %v3267 = vld [vmem:[%s251 + $0x18] sm:$0xf]
      %v3268 = vld [vmem:[%s251 + $0x1c] sm:$0xf]
      %v3269 = vld [vmem:[%s251 + $0x20] sm:$0xf]
      %v3270 = vld [vmem:[%s251 + $0x24] sm:$0xf]
      %v3271 = vld [vmem:[%s251 + $0x28] sm:$0xf]
      %v3272 = vld [vmem:[%s251 + $0x2c] sm:$0xf]
      %v3273 = vld [vmem:[%s251 + $0x30] sm:$0xf]
      %v3274 = vld [vmem:[%s251 + $0x34] sm:$0xf]
      %v3275 = vld [vmem:[%s251 + $0x38] sm:$0xf]
      %v3276 = vld [vmem:[%s251 + $0x3c] sm:$0xf]
      %v3277 = vld [vmem:[%s251 + $0x40] sm:$0xf]
      %v3278 = vld [vmem:[%s251 + $0x44] sm:$0xf]
      %v3279 = vld [vmem:[%s251 + $0x48] sm:$0xf]
      %v3280 = vld [vmem:[%s251 + $0x4c] sm:$0xf]
      %v3281 = vld [vmem:[%s251 + $0x50] sm:$0xf]
      %v3282 = vld [vmem:[%s251 + $0x54] sm:$0xf]
      %v3283 = vld [vmem:[%s251 + $0x58] sm:$0xf]
      %v3284 = vld [vmem:[%s251 + $0x5c] sm:$0xf]
      %v3285 = vld [vmem:[%s251 + $0x60] sm:$0xf]
      %v3286 = vld [vmem:[%s251 + $0x64] sm:$0xf]
      %v3287 = vld [vmem:[%s251 + $0x68] sm:$0xf]
      %v3288 = vld [vmem:[%s251 + $0x6c] sm:$0xf]
      %v3289 = vld [vmem:[%s251 + $0x70] sm:$0xf]
      %v3290 = vld [vmem:[%s251 + $0x74] sm:$0xf]
      %v3291 = vld [vmem:[%s251 + $0x78] sm:$0xf]
      %v3292 = vld [vmem:[%s251 + $0x7c] sm:$0xf]
      %v3293 = vld [vmem:[%s251 + $0x80] sm:$0xf]
      %v3294 = vld [vmem:[%s251 + $0x84] sm:$0xf]
      %v3295 = vld [vmem:[%s251 + $0x88] sm:$0xf]
      %v3296 = vld [vmem:[%s251 + $0x8c] sm:$0xf]
      %v3297 = vld [vmem:[%s251 + $0x90] sm:$0xf]
      %v3298 = vld [vmem:[%s251 + $0x94] sm:$0xf]
      %v3299 = vld [vmem:[%s251 + $0x98] sm:$0xf]
      %v3300 = vld [vmem:[%s251 + $0x9c] sm:$0xf]
      %v3301 = vld [vmem:[%s251 + $0xa0] sm:$0xf]
      %v3302 = vld [vmem:[%s251 + $0xa4] sm:$0xf]
      %v3303 = vld [vmem:[%s251 + $0xa8] sm:$0xf]
      %v3304 = vld [vmem:[%s251 + $0xac] sm:$0xf]
      %v3305 = vld [vmem:[%s251 + $0xb0] sm:$0xf]
      %v3306 = vld [vmem:[%s251 + $0xb4] sm:$0xf]
      %v3307 = vld [vmem:[%s251 + $0xb8] sm:$0xf]
      %v3308 = vld [vmem:[%s251 + $0xbc] sm:$0xf]
      %v3309 = vld [vmem:[%s251 + $0xc0] sm:$0xf]
      %v3310 = vld [vmem:[%s251 + $0xc4] sm:$0xf]
      %v3311 = vld [vmem:[%s251 + $0xc8] sm:$0xf]
      %v3312 = vld [vmem:[%s251 + $0xcc] sm:$0xf]
      %v3313 = vld [vmem:[%s251 + $0xd0] sm:$0xf]
      %v3314 = vld [vmem:[%s251 + $0xd4] sm:$0xf]
      %s3315 = scalar_lea.vmem %s1, 12
      %v3316 = vld [vmem:[%s3315] sm:$0x3]
      %v3365 = vunpack.c.l.b16 %v3267
      %v3366 = vunpack.c.l.b16 %v3268
      %v3367 = vunpack.c.l.b16 %v3269
      %v3368 = vunpack.c.l.b16 %v3270
      %v3369 = vunpack.c.l.b16 %v3271
      %v3370 = vunpack.c.l.b16 %v3272
      %v3371 = vunpack.c.l.b16 %v3273
      %v3372 = vunpack.c.l.b16 %v3274
      %v3373 = vunpack.c.l.b16 %v3275
      %v3374 = vunpack.c.l.b16 %v3276
      %v3375 = vunpack.c.l.b16 %v3277
      %v3376 = vunpack.c.l.b16 %v3278
      %v3377 = vunpack.c.l.b16 %v3279
      %v3378 = vunpack.c.l.b16 %v3280
      %v3379 = vunpack.c.l.b16 %v3281
      %v3380 = vunpack.c.l.b16 %v3282
      %v3381 = vunpack.c.l.b16 %v3283
      %v3382 = vunpack.c.l.b16 %v3284
      %v3383 = vunpack.c.l.b16 %v3285
      %v3384 = vunpack.c.l.b16 %v3286
      %v3385 = vunpack.c.l.b16 %v3287
      %v3386 = vunpack.c.l.b16 %v3288
      %v3387 = vunpack.c.l.b16 %v3289
      %v3388 = vunpack.c.l.b16 %v3290
      %v3389 = vunpack.c.l.b16 %v3291
      %v3390 = vunpack.c.l.b16 %v3292
      %v3391 = vunpack.c.l.b16 %v3293
      %v3392 = vunpack.c.l.b16 %v3294
      %v3393 = vunpack.c.l.b16 %v3295
      %v3394 = vunpack.c.l.b16 %v3296
      %v3395 = vunpack.c.l.b16 %v3297
      %v3396 = vunpack.c.l.b16 %v3298
      %v3397 = vunpack.c.l.b16 %v3299
      %v3398 = vunpack.c.l.b16 %v3300
      %v3399 = vunpack.c.l.b16 %v3301
      %v3400 = vunpack.c.l.b16 %v3302
      %v3401 = vunpack.c.l.b16 %v3303
      %v3402 = vunpack.c.l.b16 %v3304
      %v3403 = vunpack.c.l.b16 %v3305
      %v3404 = vunpack.c.l.b16 %v3306
      %v3405 = vunpack.c.l.b16 %v3307
      %v3406 = vunpack.c.l.b16 %v3308
      %v3407 = vunpack.c.l.b16 %v3309
      %v3408 = vunpack.c.l.b16 %v3310
      %v3409 = vunpack.c.l.b16 %v3311
      %v3410 = vunpack.c.l.b16 %v3312
      %v3411 = vunpack.c.l.b16 %v3313
      %v3412 = vunpack.c.l.b16 %v3314
      %v3413 = vpack.c.b16 %v3366, %v3365
      %v3414 = vpack.c.b16 %v3368, %v3367
      %v3415 = vpack.c.b16 %v3370, %v3369
      %v3416 = vpack.c.b16 %v3372, %v3371
      %v3417 = vpack.c.b16 %v3374, %v3373
      %v3418 = vpack.c.b16 %v3376, %v3375
      %v3419 = vpack.c.b16 %v3378, %v3377
      %v3420 = vpack.c.b16 %v3380, %v3379
      %v3421 = vpack.c.b16 %v3382, %v3381
      %v3422 = vpack.c.b16 %v3384, %v3383
      %v3423 = vpack.c.b16 %v3386, %v3385
      %v3424 = vpack.c.b16 %v3388, %v3387
      %v3425 = vpack.c.b16 %v3390, %v3389
      %v3426 = vpack.c.b16 %v3392, %v3391
      %v3427 = vpack.c.b16 %v3394, %v3393
      %v3428 = vpack.c.b16 %v3396, %v3395
      %v3429 = vpack.c.b16 %v3398, %v3397
      %v3430 = vpack.c.b16 %v3400, %v3399
      %v3431 = vpack.c.b16 %v3402, %v3401
      %v3432 = vpack.c.b16 %v3404, %v3403
      %v3433 = vpack.c.b16 %v3406, %v3405
      %v3434 = vpack.c.b16 %v3408, %v3407
      %v3435 = vpack.c.b16 %v3410, %v3409
      %v3436 = vpack.c.b16 %v3412, %v3411
      %v3438 = vsel %vm646, %v3413, 0
      %v3441 = vsel %vm646, %v3414, 0
      %v3444 = vsel %vm646, %v3415, 0
      %v3447 = vsel %vm646, %v3416, 0
      %v3450 = vsel %vm646, %v3417, 0
      %v3453 = vsel %vm646, %v3418, 0
      %v3456 = vsel %vm646, %v3419, 0
      %v3459 = vsel %vm646, %v3420, 0
      %v3462 = vsel %vm646, %v3421, 0
      %v3465 = vsel %vm646, %v3422, 0
      %v3468 = vsel %vm646, %v3423, 0
      %v3471 = vsel %vm646, %v3424, 0
      %v3474 = vsel %vm646, %v3425, 0
      %v3477 = vsel %vm646, %v3426, 0
      %v3480 = vsel %vm646, %v3427, 0
      %v3483 = vsel %vm646, %v3428, 0
      %v3486 = vsel %vm646, %v3429, 0
      %v3489 = vsel %vm646, %v3430, 0
      %v3492 = vsel %vm646, %v3431, 0
      %v3495 = vsel %vm646, %v3432, 0
      %v3498 = vsel %vm646, %v3433, 0
      %v3501 = vsel %vm646, %v3434, 0
      %v3504 = vsel %vm646, %v3435, 0
      %v3507 = vsel %vm646, %v3436, 0
      %v3510 = vsel %vm719, %v3316, 0
      %3512 = vmatprep.subr.bf16.mxu0 0
      %3513 = vmatpush1.bf16.msra.mxu0 0
      %3514 = vmatprep.subr.bf16.mxu0 0
      %3515 = vmatpush1.bf16.msra.mxu0 0
      %3516 = vmatprep.subr.bf16.mxu0 0
      %3517 = vmatpush1.bf16.msra.mxu0 0
      %3518 = vmatprep.subr.bf16.mxu0 0
      %3519 = vmatpush1.bf16.msra.mxu0 0
      %3520 = vmatprep.subr.bf16.mxu0 0
      %3521 = vmatpush1.bf16.msra.mxu0 0
      %3522 = vmatprep.subr.bf16.mxu0 0
      %3523 = vmatpush1.bf16.msra.mxu0 0
      %3524 = vmatprep.subr.bf16.mxu0 0
      %3525 = vmatpush1.bf16.msra.mxu0 0
      %3526 = vmatprep.subr.bf16.mxu0 0
      %3527 = vmatpush1.bf16.msra.mxu0 %v3510
      %3528 = vmatprep.subr.bf16.mxu0 0
      %3529 = vmatpush2.bf16.msra.mxu0 0
      %3530 = vmatprep.subr.bf16.mxu0 0
      %3531 = vmatpush2.bf16.msra.mxu0 0
      %3532 = vmatprep.subr.bf16.mxu0 0
      %3533 = vmatpush2.bf16.msra.mxu0 0
      %3534 = vmatprep.subr.bf16.mxu0 0
      %3535 = vmatpush2.bf16.msra.mxu0 0
      %3536 = vmatprep.subr.bf16.mxu0 0
      %3537 = vmatpush2.bf16.msra.mxu0 0
      %3538 = vmatprep.subr.bf16.mxu0 0
      %3539 = vmatpush2.bf16.msra.mxu0 0
      %3540 = vmatprep.subr.bf16.mxu0 0
      %3541 = vmatpush2.bf16.msra.mxu0 0
      %3542 = vmatprep.subr.bf16.mxu0 0
      %3543 = vmatpush2.bf16.msra.mxu0 0
      %3544 = vmatprep.mubr.bf16.mxu0 0
      %3545 = vmatmul.mubr.bf16.gmra.mxu0 %v3438
      %v3546 = vpop.f32.mrf.mxu0
      %v3547 = vadd.f32 0.0, %v3546
      %v3548 = vpop.f32.mrf.mxu0
      %v3549 = vpop.f32.mrf.mxu0
      %v3550 = vadd.f32 0.0, %v3549
      %v3551 = vpop.f32.mrf.mxu0
      %3552 = vmatprep.mubr.bf16.mxu0 0
      %3553 = vmatmul.mubr.bf16.gmra.mxu0 %v3441
      %v3554 = vpop.f32.mrf.mxu0
      %v3555 = vadd.f32 0.0, %v3554
      %v3556 = vpop.f32.mrf.mxu0
      %v3557 = vpop.f32.mrf.mxu0
      %v3558 = vadd.f32 0.0, %v3557
      %v3559 = vpop.f32.mrf.mxu0
      %3560 = vmatprep.mubr.bf16.mxu0 0
      %3561 = vmatmul.mubr.bf16.gmra.mxu0 %v3444
      %v3562 = vpop.f32.mrf.mxu0
      %v3563 = vadd.f32 0.0, %v3562
      %v3564 = vpop.f32.mrf.mxu0
      %v3565 = vpop.f32.mrf.mxu0
      %v3566 = vadd.f32 0.0, %v3565
      %v3567 = vpop.f32.mrf.mxu0
      %3568 = vmatprep.mubr.bf16.mxu0 0
      %3569 = vmatmul.mubr.bf16.gmra.mxu0 %v3447
      %v3570 = vpop.f32.mrf.mxu0
      %v3571 = vadd.f32 0.0, %v3570
      %v3572 = vpop.f32.mrf.mxu0
      %v3573 = vpop.f32.mrf.mxu0
      %v3574 = vadd.f32 0.0, %v3573
      %v3575 = vpop.f32.mrf.mxu0
      %3576 = vmatprep.mubr.bf16.mxu0 0
      %3577 = vmatmul.mubr.bf16.gmra.mxu0 %v3450
      %v3578 = vpop.f32.mrf.mxu0
      %v3579 = vadd.f32 0.0, %v3578
      %v3580 = vpop.f32.mrf.mxu0
      %v3581 = vpop.f32.mrf.mxu0
      %v3582 = vadd.f32 0.0, %v3581
      %v3583 = vpop.f32.mrf.mxu0
      %3584 = vmatprep.mubr.bf16.mxu0 0
      %3585 = vmatmul.mubr.bf16.gmra.mxu0 %v3453
      %v3586 = vpop.f32.mrf.mxu0
      %v3587 = vadd.f32 0.0, %v3586
      %v3588 = vpop.f32.mrf.mxu0
      %v3589 = vpop.f32.mrf.mxu0
      %v3590 = vadd.f32 0.0, %v3589
      %v3591 = vpop.f32.mrf.mxu0
      %3592 = vmatprep.mubr.bf16.mxu0 0
      %3593 = vmatmul.mubr.bf16.gmra.mxu0 %v3456
      %v3594 = vpop.f32.mrf.mxu0
      %v3595 = vadd.f32 0.0, %v3594
      %v3596 = vpop.f32.mrf.mxu0
      %v3597 = vpop.f32.mrf.mxu0
      %v3598 = vadd.f32 0.0, %v3597
      %v3599 = vpop.f32.mrf.mxu0
      %3600 = vmatprep.mubr.bf16.mxu0 0
      %3601 = vmatmul.mubr.bf16.gmra.mxu0 %v3459
      %v3602 = vpop.f32.mrf.mxu0
      %v3603 = vadd.f32 0.0, %v3602
      %v3604 = vpop.f32.mrf.mxu0
      %v3605 = vpop.f32.mrf.mxu0
      %v3606 = vadd.f32 0.0, %v3605
      %v3607 = vpop.f32.mrf.mxu0
      %3608 = vmatprep.mubr.bf16.mxu0 0
      %3609 = vmatmul.mubr.bf16.gmra.mxu0 %v3462
      %v3610 = vpop.f32.mrf.mxu0
      %v3611 = vadd.f32 0.0, %v3610
      %v3612 = vpop.f32.mrf.mxu0
      %v3613 = vpop.f32.mrf.mxu0
      %v3614 = vadd.f32 0.0, %v3613
      %v3615 = vpop.f32.mrf.mxu0
      %3616 = vmatprep.mubr.bf16.mxu0 0
      %3617 = vmatmul.mubr.bf16.gmra.mxu0 %v3465
      %v3618 = vpop.f32.mrf.mxu0
      %v3619 = vadd.f32 0.0, %v3618
      %v3620 = vpop.f32.mrf.mxu0
      %v3621 = vpop.f32.mrf.mxu0
      %v3622 = vadd.f32 0.0, %v3621
      %v3623 = vpop.f32.mrf.mxu0
      %3624 = vmatprep.mubr.bf16.mxu0 0
      %3625 = vmatmul.mubr.bf16.gmra.mxu0 %v3468
      %v3626 = vpop.f32.mrf.mxu0
      %v3627 = vadd.f32 0.0, %v3626
      %v3628 = vpop.f32.mrf.mxu0
      %v3629 = vpop.f32.mrf.mxu0
      %v3630 = vadd.f32 0.0, %v3629
      %v3631 = vpop.f32.mrf.mxu0
      %3632 = vmatprep.mubr.bf16.mxu0 0
      %3633 = vmatmul.mubr.bf16.gmra.mxu0 %v3471
      %v3634 = vpop.f32.mrf.mxu0
      %v3635 = vadd.f32 0.0, %v3634
      %v3636 = vpop.f32.mrf.mxu0
      %v3637 = vpop.f32.mrf.mxu0
      %v3638 = vadd.f32 0.0, %v3637
      %v3639 = vpop.f32.mrf.mxu0
      %3640 = vmatprep.mubr.bf16.mxu0 0
      %3641 = vmatmul.mubr.bf16.gmra.mxu0 %v3474
      %v3642 = vpop.f32.mrf.mxu0
      %v3643 = vadd.f32 0.0, %v3642
      %v3644 = vpop.f32.mrf.mxu0
      %v3645 = vpop.f32.mrf.mxu0
      %v3646 = vadd.f32 0.0, %v3645
      %v3647 = vpop.f32.mrf.mxu0
      %3648 = vmatprep.mubr.bf16.mxu0 0
      %3649 = vmatmul.mubr.bf16.gmra.mxu0 %v3477
      %v3650 = vpop.f32.mrf.mxu0
      %v3651 = vadd.f32 0.0, %v3650
      %v3652 = vpop.f32.mrf.mxu0
      %v3653 = vpop.f32.mrf.mxu0
      %v3654 = vadd.f32 0.0, %v3653
      %v3655 = vpop.f32.mrf.mxu0
      %3656 = vmatprep.mubr.bf16.mxu0 0
      %3657 = vmatmul.mubr.bf16.gmra.mxu0 %v3480
      %v3658 = vpop.f32.mrf.mxu0
      %v3659 = vadd.f32 0.0, %v3658
      %v3660 = vpop.f32.mrf.mxu0
      %v3661 = vpop.f32.mrf.mxu0
      %v3662 = vadd.f32 0.0, %v3661
      %v3663 = vpop.f32.mrf.mxu0
      %3664 = vmatprep.mubr.bf16.mxu0 0
      %3665 = vmatmul.mubr.bf16.gmra.mxu0 %v3483
      %v3666 = vpop.f32.mrf.mxu0
      %v3667 = vadd.f32 0.0, %v3666
      %v3668 = vpop.f32.mrf.mxu0
      %v3669 = vpop.f32.mrf.mxu0
      %v3670 = vadd.f32 0.0, %v3669
      %v3671 = vpop.f32.mrf.mxu0
      %3672 = vmatprep.mubr.bf16.mxu0 0
      %3673 = vmatmul.mubr.bf16.gmra.mxu0 %v3486
      %v3674 = vpop.f32.mrf.mxu0
      %v3675 = vadd.f32 0.0, %v3674
      %v3676 = vpop.f32.mrf.mxu0
      %v3677 = vpop.f32.mrf.mxu0
      %v3678 = vadd.f32 0.0, %v3677
      %v3679 = vpop.f32.mrf.mxu0
      %3680 = vmatprep.mubr.bf16.mxu0 0
      %3681 = vmatmul.mubr.bf16.gmra.mxu0 %v3489
      %v3682 = vpop.f32.mrf.mxu0
      %v3683 = vadd.f32 0.0, %v3682
      %v3684 = vpop.f32.mrf.mxu0
      %v3685 = vpop.f32.mrf.mxu0
      %v3686 = vadd.f32 0.0, %v3685
      %v3687 = vpop.f32.mrf.mxu0
      %3688 = vmatprep.mubr.bf16.mxu0 0
      %3689 = vmatmul.mubr.bf16.gmra.mxu0 %v3492
      %v3690 = vpop.f32.mrf.mxu0
      %v3691 = vadd.f32 0.0, %v3690
      %v3692 = vpop.f32.mrf.mxu0
      %v3693 = vpop.f32.mrf.mxu0
      %v3694 = vadd.f32 0.0, %v3693
      %v3695 = vpop.f32.mrf.mxu0
      %3696 = vmatprep.mubr.bf16.mxu0 0
      %3697 = vmatmul.mubr.bf16.gmra.mxu0 %v3495
      %v3698 = vpop.f32.mrf.mxu0
      %v3699 = vadd.f32 0.0, %v3698
      %v3700 = vpop.f32.mrf.mxu0
      %v3701 = vpop.f32.mrf.mxu0
      %v3702 = vadd.f32 0.0, %v3701
      %v3703 = vpop.f32.mrf.mxu0
      %3704 = vmatprep.mubr.bf16.mxu0 0
      %3705 = vmatmul.mubr.bf16.gmra.mxu0 %v3498
      %v3706 = vpop.f32.mrf.mxu0
      %v3707 = vadd.f32 0.0, %v3706
      %v3708 = vpop.f32.mrf.mxu0
      %v3709 = vpop.f32.mrf.mxu0
      %v3710 = vadd.f32 0.0, %v3709
      %v3711 = vpop.f32.mrf.mxu0
      %3712 = vmatprep.mubr.bf16.mxu0 0
      %3713 = vmatmul.mubr.bf16.gmra.mxu0 %v3501
      %v3714 = vpop.f32.mrf.mxu0
      %v3715 = vadd.f32 0.0, %v3714
      %v3716 = vpop.f32.mrf.mxu0
      %v3717 = vpop.f32.mrf.mxu0
      %v3718 = vadd.f32 0.0, %v3717
      %v3719 = vpop.f32.mrf.mxu0
      %3720 = vmatprep.mubr.bf16.mxu0 0
      %3721 = vmatmul.mubr.bf16.gmra.mxu0 %v3504
      %v3722 = vpop.f32.mrf.mxu0
      %v3723 = vadd.f32 0.0, %v3722
      %v3724 = vpop.f32.mrf.mxu0
      %v3725 = vpop.f32.mrf.mxu0
      %v3726 = vadd.f32 0.0, %v3725
      %v3727 = vpop.f32.mrf.mxu0
      %3728 = vmatprep.mubr.bf16.mxu0 0
      %3729 = vmatmul.mubr.bf16.gmra.mxu0 %v3507
      %v3730 = vpop.f32.mrf.mxu0
      %v3731 = vadd.f32 0.0, %v3730
      %v3732 = vpop.f32.mrf.mxu0
      %v3733 = vpop.f32.mrf.mxu0
      %v3734 = vadd.f32 0.0, %v3733
      %v3735 = vpop.f32.mrf.mxu0
      %3736 = vdwg.mxu0
      %v3737 = vadd.f32 %v3219, %v3547
      %v3738 = vadd.f32 %v3220, %v3550
      %v3739 = vadd.f32 %v3221, %v3555
      %v3740 = vadd.f32 %v3222, %v3558
      %v3741 = vadd.f32 %v3223, %v3563
      %v3742 = vadd.f32 %v3224, %v3566
      %v3743 = vadd.f32 %v3225, %v3571
      %v3744 = vadd.f32 %v3226, %v3574
      %v3745 = vadd.f32 %v3227, %v3579
      %v3746 = vadd.f32 %v3228, %v3582
      %v3747 = vadd.f32 %v3229, %v3587
      %v3748 = vadd.f32 %v3230, %v3590
      %v3749 = vadd.f32 %v3231, %v3595
      %v3750 = vadd.f32 %v3232, %v3598
      %v3751 = vadd.f32 %v3233, %v3603
      %v3752 = vadd.f32 %v3234, %v3606
      %v3753 = vadd.f32 %v3235, %v3611
      %v3754 = vadd.f32 %v3236, %v3614
      %v3755 = vadd.f32 %v3237, %v3619
      %v3756 = vadd.f32 %v3238, %v3622
      %v3757 = vadd.f32 %v3239, %v3627
      %v3758 = vadd.f32 %v3240, %v3630
      %v3759 = vadd.f32 %v3241, %v3635
      %v3760 = vadd.f32 %v3242, %v3638
      %v3761 = vadd.f32 %v3243, %v3643
      %v3762 = vadd.f32 %v3244, %v3646
      %v3763 = vadd.f32 %v3245, %v3651
      %v3764 = vadd.f32 %v3246, %v3654
      %v3765 = vadd.f32 %v3247, %v3659
      %v3766 = vadd.f32 %v3248, %v3662
      %v3767 = vadd.f32 %v3249, %v3667
      %v3768 = vadd.f32 %v3250, %v3670
      %v3769 = vadd.f32 %v3251, %v3675
      %v3770 = vadd.f32 %v3252, %v3678
      %v3771 = vadd.f32 %v3253, %v3683
      %v3772 = vadd.f32 %v3254, %v3686
      %v3773 = vadd.f32 %v3255, %v3691
      %v3774 = vadd.f32 %v3256, %v3694
      %v3775 = vadd.f32 %v3257, %v3699
      %v3776 = vadd.f32 %v3258, %v3702
      %v3777 = vadd.f32 %v3259, %v3707
      %v3778 = vadd.f32 %v3260, %v3710
      %v3779 = vadd.f32 %v3261, %v3715
      %v3780 = vadd.f32 %v3262, %v3718
      %v3781 = vadd.f32 %v3263, %v3723
      %v3782 = vadd.f32 %v3264, %v3726
      %v3783 = vadd.f32 %v3265, %v3731
      %v3784 = vadd.f32 %v3266, %v3734
      %v3785 = vld [vmem:[%s251 + $0x18] sm:$0xf]
      %v3786 = vld [vmem:[%s251 + $0x1c] sm:$0xf]
      %v3787 = vld [vmem:[%s251 + $0x20] sm:$0xf]
      %v3788 = vld [vmem:[%s251 + $0x24] sm:$0xf]
      %v3789 = vld [vmem:[%s251 + $0x28] sm:$0xf]
      %v3790 = vld [vmem:[%s251 + $0x2c] sm:$0xf]
      %v3791 = vld [vmem:[%s251 + $0x30] sm:$0xf]
      %v3792 = vld [vmem:[%s251 + $0x34] sm:$0xf]
      %v3793 = vld [vmem:[%s251 + $0x38] sm:$0xf]
      %v3794 = vld [vmem:[%s251 + $0x3c] sm:$0xf]
      %v3795 = vld [vmem:[%s251 + $0x40] sm:$0xf]
      %v3796 = vld [vmem:[%s251 + $0x44] sm:$0xf]
      %v3797 = vld [vmem:[%s251 + $0x48] sm:$0xf]
      %v3798 = vld [vmem:[%s251 + $0x4c] sm:$0xf]
      %v3799 = vld [vmem:[%s251 + $0x50] sm:$0xf]
      %v3800 = vld [vmem:[%s251 + $0x54] sm:$0xf]
      %v3801 = vld [vmem:[%s251 + $0x58] sm:$0xf]
      %v3802 = vld [vmem:[%s251 + $0x5c] sm:$0xf]
      %v3803 = vld [vmem:[%s251 + $0x60] sm:$0xf]
      %v3804 = vld [vmem:[%s251 + $0x64] sm:$0xf]
      %v3805 = vld [vmem:[%s251 + $0x68] sm:$0xf]
      %v3806 = vld [vmem:[%s251 + $0x6c] sm:$0xf]
      %v3807 = vld [vmem:[%s251 + $0x70] sm:$0xf]
      %v3808 = vld [vmem:[%s251 + $0x74] sm:$0xf]
      %v3809 = vld [vmem:[%s251 + $0x78] sm:$0xf]
      %v3810 = vld [vmem:[%s251 + $0x7c] sm:$0xf]
      %v3811 = vld [vmem:[%s251 + $0x80] sm:$0xf]
      %v3812 = vld [vmem:[%s251 + $0x84] sm:$0xf]
      %v3813 = vld [vmem:[%s251 + $0x88] sm:$0xf]
      %v3814 = vld [vmem:[%s251 + $0x8c] sm:$0xf]
      %v3815 = vld [vmem:[%s251 + $0x90] sm:$0xf]
      %v3816 = vld [vmem:[%s251 + $0x94] sm:$0xf]
      %v3817 = vld [vmem:[%s251 + $0x98] sm:$0xf]
      %v3818 = vld [vmem:[%s251 + $0x9c] sm:$0xf]
      %v3819 = vld [vmem:[%s251 + $0xa0] sm:$0xf]
      %v3820 = vld [vmem:[%s251 + $0xa4] sm:$0xf]
      %v3821 = vld [vmem:[%s251 + $0xa8] sm:$0xf]
      %v3822 = vld [vmem:[%s251 + $0xac] sm:$0xf]
      %v3823 = vld [vmem:[%s251 + $0xb0] sm:$0xf]
      %v3824 = vld [vmem:[%s251 + $0xb4] sm:$0xf]
      %v3825 = vld [vmem:[%s251 + $0xb8] sm:$0xf]
      %v3826 = vld [vmem:[%s251 + $0xbc] sm:$0xf]
      %v3827 = vld [vmem:[%s251 + $0xc0] sm:$0xf]
      %v3828 = vld [vmem:[%s251 + $0xc4] sm:$0xf]
      %v3829 = vld [vmem:[%s251 + $0xc8] sm:$0xf]
      %v3830 = vld [vmem:[%s251 + $0xcc] sm:$0xf]
      %v3831 = vld [vmem:[%s251 + $0xd0] sm:$0xf]
      %v3832 = vld [vmem:[%s251 + $0xd4] sm:$0xf]
      %v3833 = vld [vmem:[%s251 + $0xd8] sm:$0x1]
      %s3834 = scalar_lea.vmem %s1, 14
      %v3835 = vld [vmem:[%s3834] sm:$0x3]
      %v3885 = vunpack.c.l.b16 %v3785
      %v3886 = vunpack.c.l.b16 %v3786
      %v3887 = vunpack.c.l.b16 %v3787
      %v3888 = vunpack.c.l.b16 %v3788
      %v3889 = vunpack.c.l.b16 %v3789
      %v3890 = vunpack.c.l.b16 %v3790
      %v3891 = vunpack.c.l.b16 %v3791
      %v3892 = vunpack.c.l.b16 %v3792
      %v3893 = vunpack.c.l.b16 %v3793
      %v3894 = vunpack.c.l.b16 %v3794
      %v3895 = vunpack.c.l.b16 %v3795
      %v3896 = vunpack.c.l.b16 %v3796
      %v3897 = vunpack.c.l.b16 %v3797
      %v3898 = vunpack.c.l.b16 %v3798
      %v3899 = vunpack.c.l.b16 %v3799
      %v3900 = vunpack.c.l.b16 %v3800
      %v3901 = vunpack.c.l.b16 %v3801
      %v3902 = vunpack.c.l.b16 %v3802
      %v3903 = vunpack.c.l.b16 %v3803
      %v3904 = vunpack.c.l.b16 %v3804
      %v3905 = vunpack.c.l.b16 %v3805
      %v3906 = vunpack.c.l.b16 %v3806
      %v3907 = vunpack.c.l.b16 %v3807
      %v3908 = vunpack.c.l.b16 %v3808
      %v3909 = vunpack.c.l.b16 %v3809
      %v3910 = vunpack.c.l.b16 %v3810
      %v3911 = vunpack.c.l.b16 %v3811
      %v3912 = vunpack.c.l.b16 %v3812
      %v3913 = vunpack.c.l.b16 %v3813
      %v3914 = vunpack.c.l.b16 %v3814
      %v3915 = vunpack.c.l.b16 %v3815
      %v3916 = vunpack.c.l.b16 %v3816
      %v3917 = vunpack.c.l.b16 %v3817
      %v3918 = vunpack.c.l.b16 %v3818
      %v3919 = vunpack.c.l.b16 %v3819
      %v3920 = vunpack.c.l.b16 %v3820
      %v3921 = vunpack.c.l.b16 %v3821
      %v3922 = vunpack.c.l.b16 %v3822
      %v3923 = vunpack.c.l.b16 %v3823
      %v3924 = vunpack.c.l.b16 %v3824
      %v3925 = vunpack.c.l.b16 %v3825
      %v3926 = vunpack.c.l.b16 %v3826
      %v3927 = vunpack.c.l.b16 %v3827
      %v3928 = vunpack.c.l.b16 %v3828
      %v3929 = vunpack.c.l.b16 %v3829
      %v3930 = vunpack.c.l.b16 %v3830
      %v3931 = vunpack.c.l.b16 %v3831
      %v3932 = vunpack.c.l.b16 %v3832
      %v3933 = vunpack.c.l.b16 %v3833
      %v3934 = vpack.c.b16 %v3886, %v3885
      %v3935 = vpack.c.b16 %v3888, %v3887
      %v3936 = vpack.c.b16 %v3890, %v3889
      %v3937 = vpack.c.b16 %v3892, %v3891
      %v3938 = vpack.c.b16 %v3894, %v3893
      %v3939 = vpack.c.b16 %v3896, %v3895
      %v3940 = vpack.c.b16 %v3898, %v3897
      %v3941 = vpack.c.b16 %v3900, %v3899
      %v3942 = vpack.c.b16 %v3902, %v3901
      %v3943 = vpack.c.b16 %v3904, %v3903
      %v3944 = vpack.c.b16 %v3906, %v3905
      %v3945 = vpack.c.b16 %v3908, %v3907
      %v3946 = vpack.c.b16 %v3910, %v3909
      %v3947 = vpack.c.b16 %v3912, %v3911
      %v3948 = vpack.c.b16 %v3914, %v3913
      %v3949 = vpack.c.b16 %v3916, %v3915
      %v3950 = vpack.c.b16 %v3918, %v3917
      %v3951 = vpack.c.b16 %v3920, %v3919
      %v3952 = vpack.c.b16 %v3922, %v3921
      %v3953 = vpack.c.b16 %v3924, %v3923
      %v3954 = vpack.c.b16 %v3926, %v3925
      %v3955 = vpack.c.b16 %v3928, %v3927
      %v3956 = vpack.c.b16 %v3930, %v3929
      %v3957 = vpack.c.b16 %v3932, %v3931
      %v3958 = vpack.c.b16 %v3933, %v3933
      %v3960 = vshrl.u32 %v3934, 16
      %v3962 = vshll.u32 %v3934, 16
      %v3964 = vrot.slane %v3962, 1
      %v3965 = vor.u32 %v3960, %v3964
      %v3967 = vshll.u32 %v3935, 16
      %v3969 = vrot.slane %v3967, 1
      %v3970 = vsel %vm449, %v3965, %v3969
      %v3971 = vshrl.u32 %v3935, 16
      %v3973 = vor.u32 %v3971, %v3969
      %v3975 = vshll.u32 %v3936, 16
      %v3977 = vrot.slane %v3975, 1
      %v3978 = vsel %vm449, %v3973, %v3977
      %v3979 = vshrl.u32 %v3936, 16
      %v3981 = vor.u32 %v3979, %v3977
      %v3983 = vshll.u32 %v3937, 16
      %v3985 = vrot.slane %v3983, 1
      %v3986 = vsel %vm449, %v3981, %v3985
      %v3987 = vshrl.u32 %v3937, 16
      %v3989 = vor.u32 %v3987, %v3985
      %v3991 = vshll.u32 %v3938, 16
      %v3993 = vrot.slane %v3991, 1
      %v3994 = vsel %vm449, %v3989, %v3993
      %v3995 = vshrl.u32 %v3938, 16
      %v3997 = vor.u32 %v3995, %v3993
      %v3999 = vshll.u32 %v3939, 16
      %v4001 = vrot.slane %v3999, 1
      %v4002 = vsel %vm449, %v3997, %v4001
      %v4003 = vshrl.u32 %v3939, 16
      %v4005 = vor.u32 %v4003, %v4001
      %v4007 = vshll.u32 %v3940, 16
      %v4009 = vrot.slane %v4007, 1
      %v4010 = vsel %vm449, %v4005, %v4009
      %v4011 = vshrl.u32 %v3940, 16
      %v4013 = vor.u32 %v4011, %v4009
      %v4015 = vshll.u32 %v3941, 16
      %v4017 = vrot.slane %v4015, 1
      %v4018 = vsel %vm449, %v4013, %v4017
      %v4019 = vshrl.u32 %v3941, 16
      %v4021 = vor.u32 %v4019, %v4017
      %v4023 = vshll.u32 %v3942, 16
      %v4025 = vrot.slane %v4023, 1
      %v4026 = vsel %vm449, %v4021, %v4025
      %v4027 = vshrl.u32 %v3942, 16
      %v4029 = vor.u32 %v4027, %v4025
      %v4031 = vshll.u32 %v3943, 16
      %v4033 = vrot.slane %v4031, 1
      %v4034 = vsel %vm449, %v4029, %v4033
      %v4035 = vshrl.u32 %v3943, 16
      %v4037 = vor.u32 %v4035, %v4033
      %v4039 = vshll.u32 %v3944, 16
      %v4041 = vrot.slane %v4039, 1
      %v4042 = vsel %vm449, %v4037, %v4041
      %v4043 = vshrl.u32 %v3944, 16
      %v4045 = vor.u32 %v4043, %v4041
      %v4047 = vshll.u32 %v3945, 16
      %v4049 = vrot.slane %v4047, 1
      %v4050 = vsel %vm449, %v4045, %v4049
      %v4051 = vshrl.u32 %v3945, 16
      %v4053 = vor.u32 %v4051, %v4049
      %v4055 = vshll.u32 %v3946, 16
      %v4057 = vrot.slane %v4055, 1
      %v4058 = vsel %vm449, %v4053, %v4057
      %v4059 = vshrl.u32 %v3946, 16
      %v4061 = vor.u32 %v4059, %v4057
      %v4063 = vshll.u32 %v3947, 16
      %v4065 = vrot.slane %v4063, 1
      %v4066 = vsel %vm449, %v4061, %v4065
      %v4067 = vshrl.u32 %v3947, 16
      %v4069 = vor.u32 %v4067, %v4065
      %v4071 = vshll.u32 %v3948, 16
      %v4073 = vrot.slane %v4071, 1
      %v4074 = vsel %vm449, %v4069, %v4073
      %v4075 = vshrl.u32 %v3948, 16
      %v4077 = vor.u32 %v4075, %v4073
      %v4079 = vshll.u32 %v3949, 16
      %v4081 = vrot.slane %v4079, 1
      %v4082 = vsel %vm449, %v4077, %v4081
      %v4083 = vshrl.u32 %v3949, 16
      %v4085 = vor.u32 %v4083, %v4081
      %v4087 = vshll.u32 %v3950, 16
      %v4089 = vrot.slane %v4087, 1
      %v4090 = vsel %vm449, %v4085, %v4089
      %v4091 = vshrl.u32 %v3950, 16
      %v4093 = vor.u32 %v4091, %v4089
      %v4095 = vshll.u32 %v3951, 16
      %v4097 = vrot.slane %v4095, 1
      %v4098 = vsel %vm449, %v4093, %v4097
      %v4099 = vshrl.u32 %v3951, 16
      %v4101 = vor.u32 %v4099, %v4097
      %v4103 = vshll.u32 %v3952, 16
      %v4105 = vrot.slane %v4103, 1
      %v4106 = vsel %vm449, %v4101, %v4105
      %v4107 = vshrl.u32 %v3952, 16
      %v4109 = vor.u32 %v4107, %v4105
      %v4111 = vshll.u32 %v3953, 16
      %v4113 = vrot.slane %v4111, 1
      %v4114 = vsel %vm449, %v4109, %v4113
      %v4115 = vshrl.u32 %v3953, 16
      %v4117 = vor.u32 %v4115, %v4113
      %v4119 = vshll.u32 %v3954, 16
      %v4121 = vrot.slane %v4119, 1
      %v4122 = vsel %vm449, %v4117, %v4121
      %v4123 = vshrl.u32 %v3954, 16
      %v4125 = vor.u32 %v4123, %v4121
      %v4127 = vshll.u32 %v3955, 16
      %v4129 = vrot.slane %v4127, 1
      %v4130 = vsel %vm449, %v4125, %v4129
      %v4131 = vshrl.u32 %v3955, 16
      %v4133 = vor.u32 %v4131, %v4129
      %v4135 = vshll.u32 %v3956, 16
      %v4137 = vrot.slane %v4135, 1
      %v4138 = vsel %vm449, %v4133, %v4137
      %v4139 = vshrl.u32 %v3956, 16
      %v4141 = vor.u32 %v4139, %v4137
      %v4143 = vshll.u32 %v3957, 16
      %v4145 = vrot.slane %v4143, 1
      %v4146 = vsel %vm449, %v4141, %v4145
      %v4147 = vshrl.u32 %v3957, 16
      %v4149 = vor.u32 %v4147, %v4145
      %v4151 = vshll.u32 %v3958, 16
      %v4153 = vrot.slane %v4151, 1
      %v4154 = vsel %vm449, %v4149, %v4153
      %v4156 = vsel %vm646, %v3970, 0
      %v4159 = vsel %vm646, %v3978, 0
      %v4162 = vsel %vm646, %v3986, 0
      %v4165 = vsel %vm646, %v3994, 0
      %v4168 = vsel %vm646, %v4002, 0
      %v4171 = vsel %vm646, %v4010, 0
      %v4174 = vsel %vm646, %v4018, 0
      %v4177 = vsel %vm646, %v4026, 0
      %v4180 = vsel %vm646, %v4034, 0
      %v4183 = vsel %vm646, %v4042, 0
      %v4186 = vsel %vm646, %v4050, 0
      %v4189 = vsel %vm646, %v4058, 0
      %v4192 = vsel %vm646, %v4066, 0
      %v4195 = vsel %vm646, %v4074, 0
      %v4198 = vsel %vm646, %v4082, 0
      %v4201 = vsel %vm646, %v4090, 0
      %v4204 = vsel %vm646, %v4098, 0
      %v4207 = vsel %vm646, %v4106, 0
      %v4210 = vsel %vm646, %v4114, 0
      %v4213 = vsel %vm646, %v4122, 0
      %v4216 = vsel %vm646, %v4130, 0
      %v4219 = vsel %vm646, %v4138, 0
      %v4222 = vsel %vm646, %v4146, 0
      %v4225 = vsel %vm646, %v4154, 0
      %v4228 = vsel %vm719, %v3835, 0
      %4230 = vmatprep.subr.bf16.mxu0 0
      %4231 = vmatpush1.bf16.msra.mxu0 0
      %4232 = vmatprep.subr.bf16.mxu0 0
      %4233 = vmatpush1.bf16.msra.mxu0 0
      %4234 = vmatprep.subr.bf16.mxu0 0
      %4235 = vmatpush1.bf16.msra.mxu0 0
      %4236 = vmatprep.subr.bf16.mxu0 0
      %4237 = vmatpush1.bf16.msra.mxu0 0
      %4238 = vmatprep.subr.bf16.mxu0 0
      %4239 = vmatpush1.bf16.msra.mxu0 0
      %4240 = vmatprep.subr.bf16.mxu0 0
      %4241 = vmatpush1.bf16.msra.mxu0 0
      %4242 = vmatprep.subr.bf16.mxu0 0
      %4243 = vmatpush1.bf16.msra.mxu0 0
      %4244 = vmatprep.subr.bf16.mxu0 0
      %4245 = vmatpush1.bf16.msra.mxu0 %v4228
      %4246 = vmatprep.subr.bf16.mxu0 0
      %4247 = vmatpush2.bf16.msra.mxu0 0
      %4248 = vmatprep.subr.bf16.mxu0 0
      %4249 = vmatpush2.bf16.msra.mxu0 0
      %4250 = vmatprep.subr.bf16.mxu0 0
      %4251 = vmatpush2.bf16.msra.mxu0 0
      %4252 = vmatprep.subr.bf16.mxu0 0
      %4253 = vmatpush2.bf16.msra.mxu0 0
      %4254 = vmatprep.subr.bf16.mxu0 0
      %4255 = vmatpush2.bf16.msra.mxu0 0
      %4256 = vmatprep.subr.bf16.mxu0 0
      %4257 = vmatpush2.bf16.msra.mxu0 0
      %4258 = vmatprep.subr.bf16.mxu0 0
      %4259 = vmatpush2.bf16.msra.mxu0 0
      %4260 = vmatprep.subr.bf16.mxu0 0
      %4261 = vmatpush2.bf16.msra.mxu0 0
      %4262 = vmatprep.mubr.bf16.mxu0 0
      %4263 = vmatmul.mubr.bf16.gmra.mxu0 %v4156
      %v4264 = vpop.f32.mrf.mxu0
      %v4265 = vadd.f32 0.0, %v4264
      %v4266 = vpop.f32.mrf.mxu0
      %v4267 = vpop.f32.mrf.mxu0
      %v4268 = vadd.f32 0.0, %v4267
      %v4269 = vpop.f32.mrf.mxu0
      %4270 = vmatprep.mubr.bf16.mxu0 0
      %4271 = vmatmul.mubr.bf16.gmra.mxu0 %v4159
      %v4272 = vpop.f32.mrf.mxu0
      %v4273 = vadd.f32 0.0, %v4272
      %v4274 = vpop.f32.mrf.mxu0
      %v4275 = vpop.f32.mrf.mxu0
      %v4276 = vadd.f32 0.0, %v4275
      %v4277 = vpop.f32.mrf.mxu0
      %4278 = vmatprep.mubr.bf16.mxu0 0
      %4279 = vmatmul.mubr.bf16.gmra.mxu0 %v4162
      %v4280 = vpop.f32.mrf.mxu0
      %v4281 = vadd.f32 0.0, %v4280
      %v4282 = vpop.f32.mrf.mxu0
      %v4283 = vpop.f32.mrf.mxu0
      %v4284 = vadd.f32 0.0, %v4283
      %v4285 = vpop.f32.mrf.mxu0
      %4286 = vmatprep.mubr.bf16.mxu0 0
      %4287 = vmatmul.mubr.bf16.gmra.mxu0 %v4165
      %v4288 = vpop.f32.mrf.mxu0
      %v4289 = vadd.f32 0.0, %v4288
      %v4290 = vpop.f32.mrf.mxu0
      %v4291 = vpop.f32.mrf.mxu0
      %v4292 = vadd.f32 0.0, %v4291
      %v4293 = vpop.f32.mrf.mxu0
      %4294 = vmatprep.mubr.bf16.mxu0 0
      %4295 = vmatmul.mubr.bf16.gmra.mxu0 %v4168
      %v4296 = vpop.f32.mrf.mxu0
      %v4297 = vadd.f32 0.0, %v4296
      %v4298 = vpop.f32.mrf.mxu0
      %v4299 = vpop.f32.mrf.mxu0
      %v4300 = vadd.f32 0.0, %v4299
      %v4301 = vpop.f32.mrf.mxu0
      %4302 = vmatprep.mubr.bf16.mxu0 0
      %4303 = vmatmul.mubr.bf16.gmra.mxu0 %v4171
      %v4304 = vpop.f32.mrf.mxu0
      %v4305 = vadd.f32 0.0, %v4304
      %v4306 = vpop.f32.mrf.mxu0
      %v4307 = vpop.f32.mrf.mxu0
      %v4308 = vadd.f32 0.0, %v4307
      %v4309 = vpop.f32.mrf.mxu0
      %4310 = vmatprep.mubr.bf16.mxu0 0
      %4311 = vmatmul.mubr.bf16.gmra.mxu0 %v4174
      %v4312 = vpop.f32.mrf.mxu0
      %v4313 = vadd.f32 0.0, %v4312
      %v4314 = vpop.f32.mrf.mxu0
      %v4315 = vpop.f32.mrf.mxu0
      %v4316 = vadd.f32 0.0, %v4315
      %v4317 = vpop.f32.mrf.mxu0
      %4318 = vmatprep.mubr.bf16.mxu0 0
      %4319 = vmatmul.mubr.bf16.gmra.mxu0 %v4177
      %v4320 = vpop.f32.mrf.mxu0
      %v4321 = vadd.f32 0.0, %v4320
      %v4322 = vpop.f32.mrf.mxu0
      %v4323 = vpop.f32.mrf.mxu0
      %v4324 = vadd.f32 0.0, %v4323
      %v4325 = vpop.f32.mrf.mxu0
      %4326 = vmatprep.mubr.bf16.mxu0 0
      %4327 = vmatmul.mubr.bf16.gmra.mxu0 %v4180
      %v4328 = vpop.f32.mrf.mxu0
      %v4329 = vadd.f32 0.0, %v4328
      %v4330 = vpop.f32.mrf.mxu0
      %v4331 = vpop.f32.mrf.mxu0
      %v4332 = vadd.f32 0.0, %v4331
      %v4333 = vpop.f32.mrf.mxu0
      %4334 = vmatprep.mubr.bf16.mxu0 0
      %4335 = vmatmul.mubr.bf16.gmra.mxu0 %v4183
      %v4336 = vpop.f32.mrf.mxu0
      %v4337 = vadd.f32 0.0, %v4336
      %v4338 = vpop.f32.mrf.mxu0
      %v4339 = vpop.f32.mrf.mxu0
      %v4340 = vadd.f32 0.0, %v4339
      %v4341 = vpop.f32.mrf.mxu0
      %4342 = vmatprep.mubr.bf16.mxu0 0
      %4343 = vmatmul.mubr.bf16.gmra.mxu0 %v4186
      %v4344 = vpop.f32.mrf.mxu0
      %v4345 = vadd.f32 0.0, %v4344
      %v4346 = vpop.f32.mrf.mxu0
      %v4347 = vpop.f32.mrf.mxu0
      %v4348 = vadd.f32 0.0, %v4347
      %v4349 = vpop.f32.mrf.mxu0
      %4350 = vmatprep.mubr.bf16.mxu0 0
      %4351 = vmatmul.mubr.bf16.gmra.mxu0 %v4189
      %v4352 = vpop.f32.mrf.mxu0
      %v4353 = vadd.f32 0.0, %v4352
      %v4354 = vpop.f32.mrf.mxu0
      %v4355 = vpop.f32.mrf.mxu0
      %v4356 = vadd.f32 0.0, %v4355
      %v4357 = vpop.f32.mrf.mxu0
      %4358 = vmatprep.mubr.bf16.mxu0 0
      %4359 = vmatmul.mubr.bf16.gmra.mxu0 %v4192
      %v4360 = vpop.f32.mrf.mxu0
      %v4361 = vadd.f32 0.0, %v4360
      %v4362 = vpop.f32.mrf.mxu0
      %v4363 = vpop.f32.mrf.mxu0
      %v4364 = vadd.f32 0.0, %v4363
      %v4365 = vpop.f32.mrf.mxu0
      %4366 = vmatprep.mubr.bf16.mxu0 0
      %4367 = vmatmul.mubr.bf16.gmra.mxu0 %v4195
      %v4368 = vpop.f32.mrf.mxu0
      %v4369 = vadd.f32 0.0, %v4368
      %v4370 = vpop.f32.mrf.mxu0
      %v4371 = vpop.f32.mrf.mxu0
      %v4372 = vadd.f32 0.0, %v4371
      %v4373 = vpop.f32.mrf.mxu0
      %4374 = vmatprep.mubr.bf16.mxu0 0
      %4375 = vmatmul.mubr.bf16.gmra.mxu0 %v4198
      %v4376 = vpop.f32.mrf.mxu0
      %v4377 = vadd.f32 0.0, %v4376
      %v4378 = vpop.f32.mrf.mxu0
      %v4379 = vpop.f32.mrf.mxu0
      %v4380 = vadd.f32 0.0, %v4379
      %v4381 = vpop.f32.mrf.mxu0
      %4382 = vmatprep.mubr.bf16.mxu0 0
      %4383 = vmatmul.mubr.bf16.gmra.mxu0 %v4201
      %v4384 = vpop.f32.mrf.mxu0
      %v4385 = vadd.f32 0.0, %v4384
      %v4386 = vpop.f32.mrf.mxu0
      %v4387 = vpop.f32.mrf.mxu0
      %v4388 = vadd.f32 0.0, %v4387
      %v4389 = vpop.f32.mrf.mxu0
      %4390 = vmatprep.mubr.bf16.mxu0 0
      %4391 = vmatmul.mubr.bf16.gmra.mxu0 %v4204
      %v4392 = vpop.f32.mrf.mxu0
      %v4393 = vadd.f32 0.0, %v4392
      %v4394 = vpop.f32.mrf.mxu0
      %v4395 = vpop.f32.mrf.mxu0
      %v4396 = vadd.f32 0.0, %v4395
      %v4397 = vpop.f32.mrf.mxu0
      %4398 = vmatprep.mubr.bf16.mxu0 0
      %4399 = vmatmul.mubr.bf16.gmra.mxu0 %v4207
      %v4400 = vpop.f32.mrf.mxu0
      %v4401 = vadd.f32 0.0, %v4400
      %v4402 = vpop.f32.mrf.mxu0
      %v4403 = vpop.f32.mrf.mxu0
      %v4404 = vadd.f32 0.0, %v4403
      %v4405 = vpop.f32.mrf.mxu0
      %4406 = vmatprep.mubr.bf16.mxu0 0
      %4407 = vmatmul.mubr.bf16.gmra.mxu0 %v4210
      %v4408 = vpop.f32.mrf.mxu0
      %v4409 = vadd.f32 0.0, %v4408
      %v4410 = vpop.f32.mrf.mxu0
      %v4411 = vpop.f32.mrf.mxu0
      %v4412 = vadd.f32 0.0, %v4411
      %v4413 = vpop.f32.mrf.mxu0
      %4414 = vmatprep.mubr.bf16.mxu0 0
      %4415 = vmatmul.mubr.bf16.gmra.mxu0 %v4213
      %v4416 = vpop.f32.mrf.mxu0
      %v4417 = vadd.f32 0.0, %v4416
      %v4418 = vpop.f32.mrf.mxu0
      %v4419 = vpop.f32.mrf.mxu0
      %v4420 = vadd.f32 0.0, %v4419
      %v4421 = vpop.f32.mrf.mxu0
      %4422 = vmatprep.mubr.bf16.mxu0 0
      %4423 = vmatmul.mubr.bf16.gmra.mxu0 %v4216
      %v4424 = vpop.f32.mrf.mxu0
      %v4425 = vadd.f32 0.0, %v4424
      %v4426 = vpop.f32.mrf.mxu0
      %v4427 = vpop.f32.mrf.mxu0
      %v4428 = vadd.f32 0.0, %v4427
      %v4429 = vpop.f32.mrf.mxu0
      %4430 = vmatprep.mubr.bf16.mxu0 0
      %4431 = vmatmul.mubr.bf16.gmra.mxu0 %v4219
      %v4432 = vpop.f32.mrf.mxu0
      %v4433 = vadd.f32 0.0, %v4432
      %v4434 = vpop.f32.mrf.mxu0
      %v4435 = vpop.f32.mrf.mxu0
      %v4436 = vadd.f32 0.0, %v4435
      %v4437 = vpop.f32.mrf.mxu0
      %4438 = vmatprep.mubr.bf16.mxu0 0
      %4439 = vmatmul.mubr.bf16.gmra.mxu0 %v4222
      %v4440 = vpop.f32.mrf.mxu0
      %v4441 = vadd.f32 0.0, %v4440
      %v4442 = vpop.f32.mrf.mxu0
      %v4443 = vpop.f32.mrf.mxu0
      %v4444 = vadd.f32 0.0, %v4443
      %v4445 = vpop.f32.mrf.mxu0
      %4446 = vmatprep.mubr.bf16.mxu0 0
      %4447 = vmatmul.mubr.bf16.gmra.mxu0 %v4225
      %v4448 = vpop.f32.mrf.mxu0
      %v4449 = vadd.f32 0.0, %v4448
      %v4450 = vpop.f32.mrf.mxu0
      %v4451 = vpop.f32.mrf.mxu0
      %v4452 = vadd.f32 0.0, %v4451
      %v4453 = vpop.f32.mrf.mxu0
      %4454 = vdwg.mxu0
      %v4455 = vadd.f32 %v3737, %v4265
      %v4456 = vadd.f32 %v3738, %v4268
      %v4457 = vadd.f32 %v3739, %v4273
      %v4458 = vadd.f32 %v3740, %v4276
      %v4459 = vadd.f32 %v3741, %v4281
      %v4460 = vadd.f32 %v3742, %v4284
      %v4461 = vadd.f32 %v3743, %v4289
      %v4462 = vadd.f32 %v3744, %v4292
      %v4463 = vadd.f32 %v3745, %v4297
      %v4464 = vadd.f32 %v3746, %v4300
      %v4465 = vadd.f32 %v3747, %v4305
      %v4466 = vadd.f32 %v3748, %v4308
      %v4467 = vadd.f32 %v3749, %v4313
      %v4468 = vadd.f32 %v3750, %v4316
      %v4469 = vadd.f32 %v3751, %v4321
      %v4470 = vadd.f32 %v3752, %v4324
      %v4471 = vadd.f32 %v3753, %v4329
      %v4472 = vadd.f32 %v3754, %v4332
      %v4473 = vadd.f32 %v3755, %v4337
      %v4474 = vadd.f32 %v3756, %v4340
      %v4475 = vadd.f32 %v3757, %v4345
      %v4476 = vadd.f32 %v3758, %v4348
      %v4477 = vadd.f32 %v3759, %v4353
      %v4478 = vadd.f32 %v3760, %v4356
      %v4479 = vadd.f32 %v3761, %v4361
      %v4480 = vadd.f32 %v3762, %v4364
      %v4481 = vadd.f32 %v3763, %v4369
      %v4482 = vadd.f32 %v3764, %v4372
      %v4483 = vadd.f32 %v3765, %v4377
      %v4484 = vadd.f32 %v3766, %v4380
      %v4485 = vadd.f32 %v3767, %v4385
      %v4486 = vadd.f32 %v3768, %v4388
      %v4487 = vadd.f32 %v3769, %v4393
      %v4488 = vadd.f32 %v3770, %v4396
      %v4489 = vadd.f32 %v3771, %v4401
      %v4490 = vadd.f32 %v3772, %v4404
      %v4491 = vadd.f32 %v3773, %v4409
      %v4492 = vadd.f32 %v3774, %v4412
      %v4493 = vadd.f32 %v3775, %v4417
      %v4494 = vadd.f32 %v3776, %v4420
      %v4495 = vadd.f32 %v3777, %v4425
      %v4496 = vadd.f32 %v3778, %v4428
      %v4497 = vadd.f32 %v3779, %v4433
      %v4498 = vadd.f32 %v3780, %v4436
      %v4499 = vadd.f32 %v3781, %v4441
      %v4500 = vadd.f32 %v3782, %v4444
      %v4501 = vadd.f32 %v3783, %v4449
      %v4502 = vadd.f32 %v3784, %v4452
      %v4503 = vld [vmem:[%s251 + $0x18] sm:$0xe]
      %s4504 = scalar_lea.vmem %s1, 16
      %v4505 = vld [vmem:[%s4504] sm:$0x3]
      %v4507 = vunpack.c.l.b16 %v4503
      %v4508 = vpack.c.b16 %v3886, %v4507
      %v4509 = vrot.slane %v4508, 1
      %v4510 = vrot.slane %v3935, 1
      %v4511 = vsel %vm1230, %v4509, %v4510
      %v4512 = vrot.slane %v3936, 1
      %v4513 = vsel %vm1230, %v4510, %v4512
      %v4514 = vrot.slane %v3937, 1
      %v4515 = vsel %vm1230, %v4512, %v4514
      %v4516 = vrot.slane %v3938, 1
      %v4517 = vsel %vm1230, %v4514, %v4516
      %v4518 = vrot.slane %v3939, 1
      %v4519 = vsel %vm1230, %v4516, %v4518
      %v4520 = vrot.slane %v3940, 1
      %v4521 = vsel %vm1230, %v4518, %v4520
      %v4522 = vrot.slane %v3941, 1
      %v4523 = vsel %vm1230, %v4520, %v4522
      %v4524 = vrot.slane %v3942, 1
      %v4525 = vsel %vm1230, %v4522, %v4524
      %v4526 = vrot.slane %v3943, 1
      %v4527 = vsel %vm1230, %v4524, %v4526
      %v4528 = vrot.slane %v3944, 1
      %v4529 = vsel %vm1230, %v4526, %v4528
      %v4530 = vrot.slane %v3945, 1
      %v4531 = vsel %vm1230, %v4528, %v4530
      %v4532 = vrot.slane %v3946, 1
      %v4533 = vsel %vm1230, %v4530, %v4532
      %v4534 = vrot.slane %v3947, 1
      %v4535 = vsel %vm1230, %v4532, %v4534
      %v4536 = vrot.slane %v3948, 1
      %v4537 = vsel %vm1230, %v4534, %v4536
      %v4538 = vrot.slane %v3949, 1
      %v4539 = vsel %vm1230, %v4536, %v4538
      %v4540 = vrot.slane %v3950, 1
      %v4541 = vsel %vm1230, %v4538, %v4540
      %v4542 = vrot.slane %v3951, 1
      %v4543 = vsel %vm1230, %v4540, %v4542
      %v4544 = vrot.slane %v3952, 1
      %v4545 = vsel %vm1230, %v4542, %v4544
      %v4546 = vrot.slane %v3953, 1
      %v4547 = vsel %vm1230, %v4544, %v4546
      %v4548 = vrot.slane %v3954, 1
      %v4549 = vsel %vm1230, %v4546, %v4548
      %v4550 = vrot.slane %v3955, 1
      %v4551 = vsel %vm1230, %v4548, %v4550
      %v4552 = vrot.slane %v3956, 1
      %v4553 = vsel %vm1230, %v4550, %v4552
      %v4554 = vrot.slane %v3957, 1
      %v4555 = vsel %vm1230, %v4552, %v4554
      %v4556 = vrot.slane %v3958, 1
      %v4557 = vsel %vm1230, %v4554, %v4556
      %v4559 = vsel %vm646, %v4511, 0
      %v4562 = vsel %vm646, %v4513, 0
      %v4565 = vsel %vm646, %v4515, 0
      %v4568 = vsel %vm646, %v4517, 0
      %v4571 = vsel %vm646, %v4519, 0
      %v4574 = vsel %vm646, %v4521, 0
      %v4577 = vsel %vm646, %v4523, 0
      %v4580 = vsel %vm646, %v4525, 0
      %v4583 = vsel %vm646, %v4527, 0
      %v4586 = vsel %vm646, %v4529, 0
      %v4589 = vsel %vm646, %v4531, 0
      %v4592 = vsel %vm646, %v4533, 0
      %v4595 = vsel %vm646, %v4535, 0
      %v4598 = vsel %vm646, %v4537, 0
      %v4601 = vsel %vm646, %v4539, 0
      %v4604 = vsel %vm646, %v4541, 0
      %v4607 = vsel %vm646, %v4543, 0
      %v4610 = vsel %vm646, %v4545, 0
      %v4613 = vsel %vm646, %v4547, 0
      %v4616 = vsel %vm646, %v4549, 0
      %v4619 = vsel %vm646, %v4551, 0
      %v4622 = vsel %vm646, %v4553, 0
      %v4625 = vsel %vm646, %v4555, 0
      %v4628 = vsel %vm646, %v4557, 0
      %v4631 = vsel %vm719, %v4505, 0
      %4633 = vmatprep.subr.bf16.mxu0 0
      %4634 = vmatpush1.bf16.msra.mxu0 0
      %4635 = vmatprep.subr.bf16.mxu0 0
      %4636 = vmatpush1.bf16.msra.mxu0 0
      %4637 = vmatprep.subr.bf16.mxu0 0
      %4638 = vmatpush1.bf16.msra.mxu0 0
      %4639 = vmatprep.subr.bf16.mxu0 0
      %4640 = vmatpush1.bf16.msra.mxu0 0
      %4641 = vmatprep.subr.bf16.mxu0 0
      %4642 = vmatpush1.bf16.msra.mxu0 0
      %4643 = vmatprep.subr.bf16.mxu0 0
      %4644 = vmatpush1.bf16.msra.mxu0 0
      %4645 = vmatprep.subr.bf16.mxu0 0
      %4646 = vmatpush1.bf16.msra.mxu0 0
      %4647 = vmatprep.subr.bf16.mxu0 0
      %4648 = vmatpush1.bf16.msra.mxu0 %v4631
      %4649 = vmatprep.subr.bf16.mxu0 0
      %4650 = vmatpush2.bf16.msra.mxu0 0
      %4651 = vmatprep.subr.bf16.mxu0 0
      %4652 = vmatpush2.bf16.msra.mxu0 0
      %4653 = vmatprep.subr.bf16.mxu0 0
      %4654 = vmatpush2.bf16.msra.mxu0 0
      %4655 = vmatprep.subr.bf16.mxu0 0
      %4656 = vmatpush2.bf16.msra.mxu0 0
      %4657 = vmatprep.subr.bf16.mxu0 0
      %4658 = vmatpush2.bf16.msra.mxu0 0
      %4659 = vmatprep.subr.bf16.mxu0 0
      %4660 = vmatpush2.bf16.msra.mxu0 0
      %4661 = vmatprep.subr.bf16.mxu0 0
      %4662 = vmatpush2.bf16.msra.mxu0 0
      %4663 = vmatprep.subr.bf16.mxu0 0
      %4664 = vmatpush2.bf16.msra.mxu0 0
      %4665 = vmatprep.mubr.bf16.mxu0 0
      %4666 = vmatmul.mubr.bf16.gmra.mxu0 %v4559
      %v4667 = vpop.f32.mrf.mxu0
      %v4668 = vadd.f32 0.0, %v4667
      %v4669 = vpop.f32.mrf.mxu0
      %v4670 = vpop.f32.mrf.mxu0
      %v4671 = vadd.f32 0.0, %v4670
      %v4672 = vpop.f32.mrf.mxu0
      %4673 = vmatprep.mubr.bf16.mxu0 0
      %4674 = vmatmul.mubr.bf16.gmra.mxu0 %v4562
      %v4675 = vpop.f32.mrf.mxu0
      %v4676 = vadd.f32 0.0, %v4675
      %v4677 = vpop.f32.mrf.mxu0
      %v4678 = vpop.f32.mrf.mxu0
      %v4679 = vadd.f32 0.0, %v4678
      %v4680 = vpop.f32.mrf.mxu0
      %4681 = vmatprep.mubr.bf16.mxu0 0
      %4682 = vmatmul.mubr.bf16.gmra.mxu0 %v4565
      %v4683 = vpop.f32.mrf.mxu0
      %v4684 = vadd.f32 0.0, %v4683
      %v4685 = vpop.f32.mrf.mxu0
      %v4686 = vpop.f32.mrf.mxu0
      %v4687 = vadd.f32 0.0, %v4686
      %v4688 = vpop.f32.mrf.mxu0
      %4689 = vmatprep.mubr.bf16.mxu0 0
      %4690 = vmatmul.mubr.bf16.gmra.mxu0 %v4568
      %v4691 = vpop.f32.mrf.mxu0
      %v4692 = vadd.f32 0.0, %v4691
      %v4693 = vpop.f32.mrf.mxu0
      %v4694 = vpop.f32.mrf.mxu0
      %v4695 = vadd.f32 0.0, %v4694
      %v4696 = vpop.f32.mrf.mxu0
      %4697 = vmatprep.mubr.bf16.mxu0 0
      %4698 = vmatmul.mubr.bf16.gmra.mxu0 %v4571
      %v4699 = vpop.f32.mrf.mxu0
      %v4700 = vadd.f32 0.0, %v4699
      %v4701 = vpop.f32.mrf.mxu0
      %v4702 = vpop.f32.mrf.mxu0
      %v4703 = vadd.f32 0.0, %v4702
      %v4704 = vpop.f32.mrf.mxu0
      %4705 = vmatprep.mubr.bf16.mxu0 0
      %4706 = vmatmul.mubr.bf16.gmra.mxu0 %v4574
      %v4707 = vpop.f32.mrf.mxu0
      %v4708 = vadd.f32 0.0, %v4707
      %v4709 = vpop.f32.mrf.mxu0
      %v4710 = vpop.f32.mrf.mxu0
      %v4711 = vadd.f32 0.0, %v4710
      %v4712 = vpop.f32.mrf.mxu0
      %4713 = vmatprep.mubr.bf16.mxu0 0
      %4714 = vmatmul.mubr.bf16.gmra.mxu0 %v4577
      %v4715 = vpop.f32.mrf.mxu0
      %v4716 = vadd.f32 0.0, %v4715
      %v4717 = vpop.f32.mrf.mxu0
      %v4718 = vpop.f32.mrf.mxu0
      %v4719 = vadd.f32 0.0, %v4718
      %v4720 = vpop.f32.mrf.mxu0
      %4721 = vmatprep.mubr.bf16.mxu0 0
      %4722 = vmatmul.mubr.bf16.gmra.mxu0 %v4580
      %v4723 = vpop.f32.mrf.mxu0
      %v4724 = vadd.f32 0.0, %v4723
      %v4725 = vpop.f32.mrf.mxu0
      %v4726 = vpop.f32.mrf.mxu0
      %v4727 = vadd.f32 0.0, %v4726
      %v4728 = vpop.f32.mrf.mxu0
      %4729 = vmatprep.mubr.bf16.mxu0 0
      %4730 = vmatmul.mubr.bf16.gmra.mxu0 %v4583
      %v4731 = vpop.f32.mrf.mxu0
      %v4732 = vadd.f32 0.0, %v4731
      %v4733 = vpop.f32.mrf.mxu0
      %v4734 = vpop.f32.mrf.mxu0
      %v4735 = vadd.f32 0.0, %v4734
      %v4736 = vpop.f32.mrf.mxu0
      %4737 = vmatprep.mubr.bf16.mxu0 0
      %4738 = vmatmul.mubr.bf16.gmra.mxu0 %v4586
      %v4739 = vpop.f32.mrf.mxu0
      %v4740 = vadd.f32 0.0, %v4739
      %v4741 = vpop.f32.mrf.mxu0
      %v4742 = vpop.f32.mrf.mxu0
      %v4743 = vadd.f32 0.0, %v4742
      %v4744 = vpop.f32.mrf.mxu0
      %4745 = vmatprep.mubr.bf16.mxu0 0
      %4746 = vmatmul.mubr.bf16.gmra.mxu0 %v4589
      %v4747 = vpop.f32.mrf.mxu0
      %v4748 = vadd.f32 0.0, %v4747
      %v4749 = vpop.f32.mrf.mxu0
      %v4750 = vpop.f32.mrf.mxu0
      %v4751 = vadd.f32 0.0, %v4750
      %v4752 = vpop.f32.mrf.mxu0
      %4753 = vmatprep.mubr.bf16.mxu0 0
      %4754 = vmatmul.mubr.bf16.gmra.mxu0 %v4592
      %v4755 = vpop.f32.mrf.mxu0
      %v4756 = vadd.f32 0.0, %v4755
      %v4757 = vpop.f32.mrf.mxu0
      %v4758 = vpop.f32.mrf.mxu0
      %v4759 = vadd.f32 0.0, %v4758
      %v4760 = vpop.f32.mrf.mxu0
      %4761 = vmatprep.mubr.bf16.mxu0 0
      %4762 = vmatmul.mubr.bf16.gmra.mxu0 %v4595
      %v4763 = vpop.f32.mrf.mxu0
      %v4764 = vadd.f32 0.0, %v4763
      %v4765 = vpop.f32.mrf.mxu0
      %v4766 = vpop.f32.mrf.mxu0
      %v4767 = vadd.f32 0.0, %v4766
      %v4768 = vpop.f32.mrf.mxu0
      %4769 = vmatprep.mubr.bf16.mxu0 0
      %4770 = vmatmul.mubr.bf16.gmra.mxu0 %v4598
      %v4771 = vpop.f32.mrf.mxu0
      %v4772 = vadd.f32 0.0, %v4771
      %v4773 = vpop.f32.mrf.mxu0
      %v4774 = vpop.f32.mrf.mxu0
      %v4775 = vadd.f32 0.0, %v4774
      %v4776 = vpop.f32.mrf.mxu0
      %4777 = vmatprep.mubr.bf16.mxu0 0
      %4778 = vmatmul.mubr.bf16.gmra.mxu0 %v4601
      %v4779 = vpop.f32.mrf.mxu0
      %v4780 = vadd.f32 0.0, %v4779
      %v4781 = vpop.f32.mrf.mxu0
      %v4782 = vpop.f32.mrf.mxu0
      %v4783 = vadd.f32 0.0, %v4782
      %v4784 = vpop.f32.mrf.mxu0
      %4785 = vmatprep.mubr.bf16.mxu0 0
      %4786 = vmatmul.mubr.bf16.gmra.mxu0 %v4604
      %v4787 = vpop.f32.mrf.mxu0
      %v4788 = vadd.f32 0.0, %v4787
      %v4789 = vpop.f32.mrf.mxu0
      %v4790 = vpop.f32.mrf.mxu0
      %v4791 = vadd.f32 0.0, %v4790
      %v4792 = vpop.f32.mrf.mxu0
      %4793 = vmatprep.mubr.bf16.mxu0 0
      %4794 = vmatmul.mubr.bf16.gmra.mxu0 %v4607
      %v4795 = vpop.f32.mrf.mxu0
      %v4796 = vadd.f32 0.0, %v4795
      %v4797 = vpop.f32.mrf.mxu0
      %v4798 = vpop.f32.mrf.mxu0
      %v4799 = vadd.f32 0.0, %v4798
      %v4800 = vpop.f32.mrf.mxu0
      %4801 = vmatprep.mubr.bf16.mxu0 0
      %4802 = vmatmul.mubr.bf16.gmra.mxu0 %v4610
      %v4803 = vpop.f32.mrf.mxu0
      %v4804 = vadd.f32 0.0, %v4803
      %v4805 = vpop.f32.mrf.mxu0
      %v4806 = vpop.f32.mrf.mxu0
      %v4807 = vadd.f32 0.0, %v4806
      %v4808 = vpop.f32.mrf.mxu0
      %4809 = vmatprep.mubr.bf16.mxu0 0
      %4810 = vmatmul.mubr.bf16.gmra.mxu0 %v4613
      %v4811 = vpop.f32.mrf.mxu0
      %v4812 = vadd.f32 0.0, %v4811
      %v4813 = vpop.f32.mrf.mxu0
      %v4814 = vpop.f32.mrf.mxu0
      %v4815 = vadd.f32 0.0, %v4814
      %v4816 = vpop.f32.mrf.mxu0
      %4817 = vmatprep.mubr.bf16.mxu0 0
      %4818 = vmatmul.mubr.bf16.gmra.mxu0 %v4616
      %v4819 = vpop.f32.mrf.mxu0
      %v4820 = vadd.f32 0.0, %v4819
      %v4821 = vpop.f32.mrf.mxu0
      %v4822 = vpop.f32.mrf.mxu0
      %v4823 = vadd.f32 0.0, %v4822
      %v4824 = vpop.f32.mrf.mxu0
      %4825 = vmatprep.mubr.bf16.mxu0 0
      %4826 = vmatmul.mubr.bf16.gmra.mxu0 %v4619
      %v4827 = vpop.f32.mrf.mxu0
      %v4828 = vadd.f32 0.0, %v4827
      %v4829 = vpop.f32.mrf.mxu0
      %v4830 = vpop.f32.mrf.mxu0
      %v4831 = vadd.f32 0.0, %v4830
      %v4832 = vpop.f32.mrf.mxu0
      %4833 = vmatprep.mubr.bf16.mxu0 0
      %4834 = vmatmul.mubr.bf16.gmra.mxu0 %v4622
      %v4835 = vpop.f32.mrf.mxu0
      %v4836 = vadd.f32 0.0, %v4835
      %v4837 = vpop.f32.mrf.mxu0
      %v4838 = vpop.f32.mrf.mxu0
      %v4839 = vadd.f32 0.0, %v4838
      %v4840 = vpop.f32.mrf.mxu0
      %4841 = vmatprep.mubr.bf16.mxu0 0
      %4842 = vmatmul.mubr.bf16.gmra.mxu0 %v4625
      %v4843 = vpop.f32.mrf.mxu0
      %v4844 = vadd.f32 0.0, %v4843
      %v4845 = vpop.f32.mrf.mxu0
      %v4846 = vpop.f32.mrf.mxu0
      %v4847 = vadd.f32 0.0, %v4846
      %v4848 = vpop.f32.mrf.mxu0
      %4849 = vmatprep.mubr.bf16.mxu0 0
      %4850 = vmatmul.mubr.bf16.gmra.mxu0 %v4628
      %v4851 = vpop.f32.mrf.mxu0
      %v4852 = vadd.f32 0.0, %v4851
      %v4853 = vpop.f32.mrf.mxu0
      %v4854 = vpop.f32.mrf.mxu0
      %v4855 = vadd.f32 0.0, %v4854
      %v4856 = vpop.f32.mrf.mxu0
      %4857 = vdwg.mxu0
      %v4858 = vadd.f32 %v4455, %v4668
      %v4859 = vadd.f32 %v4456, %v4671
      %v4860 = vadd.f32 %v4457, %v4676
      %v4861 = vadd.f32 %v4458, %v4679
      %v4862 = vadd.f32 %v4459, %v4684
      %v4863 = vadd.f32 %v4460, %v4687
      %v4864 = vadd.f32 %v4461, %v4692
      %v4865 = vadd.f32 %v4462, %v4695
      %v4866 = vadd.f32 %v4463, %v4700
      %v4867 = vadd.f32 %v4464, %v4703
      %v4868 = vadd.f32 %v4465, %v4708
      %v4869 = vadd.f32 %v4466, %v4711
      %v4870 = vadd.f32 %v4467, %v4716
      %v4871 = vadd.f32 %v4468, %v4719
      %v4872 = vadd.f32 %v4469, %v4724
      %v4873 = vadd.f32 %v4470, %v4727
      %v4874 = vadd.f32 %v4471, %v4732
      %v4875 = vadd.f32 %v4472, %v4735
      %v4876 = vadd.f32 %v4473, %v4740
      %v4877 = vadd.f32 %v4474, %v4743
      %v4878 = vadd.f32 %v4475, %v4748
      %v4879 = vadd.f32 %v4476, %v4751
      %v4880 = vadd.f32 %v4477, %v4756
      %v4881 = vadd.f32 %v4478, %v4759
      %v4882 = vadd.f32 %v4479, %v4764
      %v4883 = vadd.f32 %v4480, %v4767
      %v4884 = vadd.f32 %v4481, %v4772
      %v4885 = vadd.f32 %v4482, %v4775
      %v4886 = vadd.f32 %v4483, %v4780
      %v4887 = vadd.f32 %v4484, %v4783
      %v4888 = vadd.f32 %v4485, %v4788
      %v4889 = vadd.f32 %v4486, %v4791
      %v4890 = vadd.f32 %v4487, %v4796
      %v4891 = vadd.f32 %v4488, %v4799
      %v4892 = vadd.f32 %v4489, %v4804
      %v4893 = vadd.f32 %v4490, %v4807
      %v4894 = vadd.f32 %v4491, %v4812
      %v4895 = vadd.f32 %v4492, %v4815
      %v4896 = vadd.f32 %v4493, %v4820
      %v4897 = vadd.f32 %v4494, %v4823
      %v4898 = vadd.f32 %v4495, %v4828
      %v4899 = vadd.f32 %v4496, %v4831
      %v4900 = vadd.f32 %v4497, %v4836
      %v4901 = vadd.f32 %v4498, %v4839
      %v4902 = vadd.f32 %v4499, %v4844
      %v4903 = vadd.f32 %v4500, %v4847
      %v4904 = vadd.f32 %v4501, %v4852
      %v4905 = vadd.f32 %v4502, %v4855
      %v4906 = vpack.c.bf16 %v4859, %v4858
      %v4907 = vpack.c.bf16 %v4861, %v4860
      %v4908 = vpack.c.bf16 %v4863, %v4862
      %v4909 = vpack.c.bf16 %v4865, %v4864
      %v4910 = vpack.c.bf16 %v4867, %v4866
      %v4911 = vpack.c.bf16 %v4869, %v4868
      %v4912 = vpack.c.bf16 %v4871, %v4870
      %v4913 = vpack.c.bf16 %v4873, %v4872
      %v4914 = vpack.c.bf16 %v4875, %v4874
      %v4915 = vpack.c.bf16 %v4877, %v4876
      %v4916 = vpack.c.bf16 %v4879, %v4878
      %v4917 = vpack.c.bf16 %v4881, %v4880
      %v4918 = vpack.c.bf16 %v4883, %v4882
      %v4919 = vpack.c.bf16 %v4885, %v4884
      %v4920 = vpack.c.bf16 %v4887, %v4886
      %v4921 = vpack.c.bf16 %v4889, %v4888
      %v4922 = vpack.c.bf16 %v4891, %v4890
      %v4923 = vpack.c.bf16 %v4893, %v4892
      %v4924 = vpack.c.bf16 %v4895, %v4894
      %v4925 = vpack.c.bf16 %v4897, %v4896
      %v4926 = vpack.c.bf16 %v4899, %v4898
      %v4927 = vpack.c.bf16 %v4901, %v4900
      %v4928 = vpack.c.bf16 %v4903, %v4902
      %v4929 = vpack.c.bf16 %v4905, %v4904
      %v4954 = vunpack.c.l.b16 %v4906
      %v4955 = vunpack.c.h.b16 %v4906
      %v4956 = vunpack.c.l.b16 %v4907
      %v4957 = vunpack.c.h.b16 %v4907
      %v4958 = vunpack.c.l.b16 %v4908
      %v4959 = vunpack.c.h.b16 %v4908
      %v4960 = vunpack.c.l.b16 %v4909
      %v4961 = vunpack.c.h.b16 %v4909
      %v4962 = vunpack.c.l.b16 %v4910
      %v4963 = vunpack.c.h.b16 %v4910
      %v4964 = vunpack.c.l.b16 %v4911
      %v4965 = vunpack.c.h.b16 %v4911
      %v4966 = vunpack.c.l.b16 %v4912
      %v4967 = vunpack.c.h.b16 %v4912
      %v4968 = vunpack.c.l.b16 %v4913
      %v4969 = vunpack.c.h.b16 %v4913
      %v4970 = vunpack.c.l.b16 %v4914
      %v4971 = vunpack.c.h.b16 %v4914
      %v4972 = vunpack.c.l.b16 %v4915
      %v4973 = vunpack.c.h.b16 %v4915
      %v4974 = vunpack.c.l.b16 %v4916
      %v4975 = vunpack.c.h.b16 %v4916
      %v4976 = vunpack.c.l.b16 %v4917
      %v4977 = vunpack.c.h.b16 %v4917
      %v4978 = vunpack.c.l.b16 %v4918
      %v4979 = vunpack.c.h.b16 %v4918
      %v4980 = vunpack.c.l.b16 %v4919
      %v4981 = vunpack.c.h.b16 %v4919
      %v4982 = vunpack.c.l.b16 %v4920
      %v4983 = vunpack.c.h.b16 %v4920
      %v4984 = vunpack.c.l.b16 %v4921
      %v4985 = vunpack.c.h.b16 %v4921
      %v4986 = vunpack.c.l.b16 %v4922
      %v4987 = vunpack.c.h.b16 %v4922
      %v4988 = vunpack.c.l.b16 %v4923
      %v4989 = vunpack.c.h.b16 %v4923
      %v4990 = vunpack.c.l.b16 %v4924
      %v4991 = vunpack.c.h.b16 %v4924
      %v4992 = vunpack.c.l.b16 %v4925
      %v4993 = vunpack.c.h.b16 %v4925
      %v4994 = vunpack.c.l.b16 %v4926
      %v4995 = vunpack.c.h.b16 %v4926
      %v4996 = vunpack.c.l.b16 %v4927
      %v4997 = vunpack.c.h.b16 %v4927
      %v4998 = vunpack.c.l.b16 %v4928
      %v4999 = vunpack.c.h.b16 %v4928
      %v5000 = vunpack.c.l.b16 %v4929
      %v5001 = vunpack.c.h.b16 %v4929
      %v5002 = vpack.c.b16 %v4954, %v4954
      %v5003 = vpack.c.b16 %v4955, %v4955
      %v5004 = vpack.c.b16 %v4956, %v4956
      %v5005 = vpack.c.b16 %v4957, %v4957
      %v5006 = vpack.c.b16 %v4958, %v4958
      %v5007 = vpack.c.b16 %v4959, %v4959
      %v5008 = vpack.c.b16 %v4960, %v4960
      %v5009 = vpack.c.b16 %v4961, %v4961
      %v5010 = vpack.c.b16 %v4962, %v4962
      %v5011 = vpack.c.b16 %v4963, %v4963
      %v5012 = vpack.c.b16 %v4964, %v4964
      %v5013 = vpack.c.b16 %v4965, %v4965
      %v5014 = vpack.c.b16 %v4966, %v4966
      %v5015 = vpack.c.b16 %v4967, %v4967
      %v5016 = vpack.c.b16 %v4968, %v4968
      %v5017 = vpack.c.b16 %v4969, %v4969
      %v5018 = vpack.c.b16 %v4970, %v4970
      %v5019 = vpack.c.b16 %v4971, %v4971
      %v5020 = vpack.c.b16 %v4972, %v4972
      %v5021 = vpack.c.b16 %v4973, %v4973
      %v5022 = vpack.c.b16 %v4974, %v4974
      %v5023 = vpack.c.b16 %v4975, %v4975
      %v5024 = vpack.c.b16 %v4976, %v4976
      %v5025 = vpack.c.b16 %v4977, %v4977
      %v5026 = vpack.c.b16 %v4978, %v4978
      %v5027 = vpack.c.b16 %v4979, %v4979
      %v5028 = vpack.c.b16 %v4980, %v4980
      %v5029 = vpack.c.b16 %v4981, %v4981
      %v5030 = vpack.c.b16 %v4982, %v4982
      %v5031 = vpack.c.b16 %v4983, %v4983
      %v5032 = vpack.c.b16 %v4984, %v4984
      %v5033 = vpack.c.b16 %v4985, %v4985
      %v5034 = vpack.c.b16 %v4986, %v4986
      %v5035 = vpack.c.b16 %v4987, %v4987
      %v5036 = vpack.c.b16 %v4988, %v4988
      %v5037 = vpack.c.b16 %v4989, %v4989
      %v5038 = vpack.c.b16 %v4990, %v4990
      %v5039 = vpack.c.b16 %v4991, %v4991
      %v5040 = vpack.c.b16 %v4992, %v4992
      %v5041 = vpack.c.b16 %v4993, %v4993
      %v5042 = vpack.c.b16 %v4994, %v4994
      %v5043 = vpack.c.b16 %v4995, %v4995
      %v5044 = vpack.c.b16 %v4996, %v4996
      %v5045 = vpack.c.b16 %v4997, %v4997
      %v5046 = vpack.c.b16 %v4998, %v4998
      %v5047 = vpack.c.b16 %v4999, %v4999
      %v5048 = vpack.c.b16 %v5000, %v5000
      %v5049 = vpack.c.b16 %v5001, %v5001
      %5098 = vst [vmem:[%s265] sm:$0xf] %v5002
      %5099 = vst [vmem:[%s265 + $0x4] sm:$0xf] %v5003
      %5100 = vst [vmem:[%s265 + $0x8] sm:$0xf] %v5004
      %5101 = vst [vmem:[%s265 + $0xc] sm:$0xf] %v5005
      %5102 = vst [vmem:[%s265 + $0x10] sm:$0xf] %v5006
      %5103 = vst [vmem:[%s265 + $0x14] sm:$0xf] %v5007
      %5104 = vst [vmem:[%s265 + $0x18] sm:$0xf] %v5008
      %5105 = vst [vmem:[%s265 + $0x1c] sm:$0xf] %v5009
      %5106 = vst [vmem:[%s265 + $0x20] sm:$0xf] %v5010
      %5107 = vst [vmem:[%s265 + $0x24] sm:$0xf] %v5011
      %5108 = vst [vmem:[%s265 + $0x28] sm:$0xf] %v5012
      %5109 = vst [vmem:[%s265 + $0x2c] sm:$0xf] %v5013
      %5110 = vst [vmem:[%s265 + $0x30] sm:$0xf] %v5014
      %5111 = vst [vmem:[%s265 + $0x34] sm:$0xf] %v5015
      %5112 = vst [vmem:[%s265 + $0x38] sm:$0xf] %v5016
      %5113 = vst [vmem:[%s265 + $0x3c] sm:$0xf] %v5017
      %5114 = vst [vmem:[%s265 + $0x40] sm:$0xf] %v5018
      %5115 = vst [vmem:[%s265 + $0x44] sm:$0xf] %v5019
      %5116 = vst [vmem:[%s265 + $0x48] sm:$0xf] %v5020
      %5117 = vst [vmem:[%s265 + $0x4c] sm:$0xf] %v5021
      %5118 = vst [vmem:[%s265 + $0x50] sm:$0xf] %v5022
      %5119 = vst [vmem:[%s265 + $0x54] sm:$0xf] %v5023
      %5120 = vst [vmem:[%s265 + $0x58] sm:$0xf] %v5024
      %5121 = vst [vmem:[%s265 + $0x5c] sm:$0xf] %v5025
      %5122 = vst [vmem:[%s265 + $0x60] sm:$0xf] %v5026
      %5123 = vst [vmem:[%s265 + $0x64] sm:$0xf] %v5027
      %5124 = vst [vmem:[%s265 + $0x68] sm:$0xf] %v5028
      %5125 = vst [vmem:[%s265 + $0x6c] sm:$0xf] %v5029
      %5126 = vst [vmem:[%s265 + $0x70] sm:$0xf] %v5030
      %5127 = vst [vmem:[%s265 + $0x74] sm:$0xf] %v5031
      %5128 = vst [vmem:[%s265 + $0x78] sm:$0xf] %v5032
      %5129 = vst [vmem:[%s265 + $0x7c] sm:$0xf] %v5033
      %5130 = vst [vmem:[%s265 + $0x80] sm:$0xf] %v5034
      %5131 = vst [vmem:[%s265 + $0x84] sm:$0xf] %v5035
      %5132 = vst [vmem:[%s265 + $0x88] sm:$0xf] %v5036
      %5133 = vst [vmem:[%s265 + $0x8c] sm:$0xf] %v5037
      %5134 = vst [vmem:[%s265 + $0x90] sm:$0xf] %v5038
      %5135 = vst [vmem:[%s265 + $0x94] sm:$0xf] %v5039
      %5136 = vst [vmem:[%s265 + $0x98] sm:$0xf] %v5040
      %5137 = vst [vmem:[%s265 + $0x9c] sm:$0xf] %v5041
      %5138 = vst [vmem:[%s265 + $0xa0] sm:$0xf] %v5042
      %5139 = vst [vmem:[%s265 + $0xa4] sm:$0xf] %v5043
      %5140 = vst [vmem:[%s265 + $0xa8] sm:$0xf] %v5044
      %5141 = vst [vmem:[%s265 + $0xac] sm:$0xf] %v5045
      %5142 = vst [vmem:[%s265 + $0xb0] sm:$0xf] %v5046
      %5143 = vst [vmem:[%s265 + $0xb4] sm:$0xf] %v5047
      %5144 = vst [vmem:[%s265 + $0xb8] sm:$0xf] %v5048
      %5145 = vst [vmem:[%s265 + $0xbc] sm:$0xf] %v5049
      %v5146 = vld [vmem:[%s256] sm:$0xff]
      %v5147 = vld [vmem:[%s256 + $0x8] sm:$0xff]
      %v5148 = vld [vmem:[%s256 + $0x10] sm:$0xff]
      %v5149 = vld [vmem:[%s256 + $0x18] sm:$0xff]
      %v5150 = vld [vmem:[%s256 + $0x20] sm:$0xff]
      %v5151 = vld [vmem:[%s256 + $0x28] sm:$0xff]
      %v5152 = vld [vmem:[%s256 + $0x30] sm:$0xff]
      %v5153 = vld [vmem:[%s256 + $0x38] sm:$0xff]
      %v5154 = vld [vmem:[%s256 + $0x40] sm:$0xff]
      %v5155 = vld [vmem:[%s256 + $0x48] sm:$0xff]
      %v5156 = vld [vmem:[%s256 + $0x50] sm:$0xff]
      %v5157 = vld [vmem:[%s256 + $0x58] sm:$0xff]
      %v5158 = vld [vmem:[%s256 + $0x60] sm:$0xff]
      %v5159 = vld [vmem:[%s256 + $0x68] sm:$0xff]
      %v5160 = vld [vmem:[%s256 + $0x70] sm:$0xff]
      %v5161 = vld [vmem:[%s256 + $0x78] sm:$0xff]
      %v5162 = vld [vmem:[%s256 + $0x80] sm:$0xff]
      %v5163 = vld [vmem:[%s256 + $0x88] sm:$0xff]
      %v5164 = vld [vmem:[%s256 + $0x90] sm:$0xff]
      %v5165 = vld [vmem:[%s256 + $0x98] sm:$0xff]
      %v5166 = vld [vmem:[%s256 + $0xa0] sm:$0xff]
      %v5167 = vld [vmem:[%s256 + $0xa8] sm:$0xff]
      %v5168 = vld [vmem:[%s256 + $0xb0] sm:$0xff]
      %v5169 = vld [vmem:[%s256 + $0xb8] sm:$0xff]
      %v5170 = vld [vmem:[%s256 + $0xc0] sm:$0xff]
      %v5171 = vld [vmem:[%s256 + $0xc8] sm:$0xff]
      %v5172 = vld [vmem:[%s256 + $0xd0] sm:$0xff]
      %v5173 = vld [vmem:[%s256 + $0xd8] sm:$0xff]
      %v5174 = vld [vmem:[%s256 + $0xe0] sm:$0xff]
      %v5175 = vld [vmem:[%s256 + $0xe8] sm:$0xff]
      %v5176 = vld [vmem:[%s256 + $0xf0] sm:$0xff]
      %v5177 = vld [vmem:[%s256 + $0xf8] sm:$0xff]
      %v5178 = vld [vmem:[%s256 + $0x100] sm:$0xff]
      %v5179 = vld [vmem:[%s256 + $0x108] sm:$0xff]
      %v5180 = vld [vmem:[%s256 + $0x110] sm:$0xff]
      %v5181 = vld [vmem:[%s256 + $0x118] sm:$0xff]
      %v5182 = vld [vmem:[%s256 + $0x120] sm:$0xff]
      %v5183 = vld [vmem:[%s256 + $0x128] sm:$0xff]
      %v5184 = vld [vmem:[%s256 + $0x130] sm:$0xff]
      %v5185 = vld [vmem:[%s256 + $0x138] sm:$0xff]
      %v5186 = vld [vmem:[%s256 + $0x140] sm:$0xff]
      %v5187 = vld [vmem:[%s256 + $0x148] sm:$0xff]
      %v5188 = vld [vmem:[%s256 + $0x150] sm:$0xff]
      %v5189 = vld [vmem:[%s256 + $0x158] sm:$0xff]
      %v5190 = vld [vmem:[%s256 + $0x160] sm:$0xff]
      %v5191 = vld [vmem:[%s256 + $0x168] sm:$0xff]
      %v5192 = vld [vmem:[%s256 + $0x170] sm:$0xff]
      %v5193 = vld [vmem:[%s256 + $0x178] sm:$0xff]
      %5195 = vset.pattern.permute.xlu0 0
      %5196 = vperm.xlu0 %5195, %v5146
      %v5197 = vpop.permute.xlu0 %5196
      %5200 = vset.pattern.permute.xlu0 0
      %5201 = vperm.xlu0 %5200, %v5147
      %v5202 = vpop.permute.xlu0 %5201
      %5205 = vset.pattern.permute.xlu0 0
      %5206 = vperm.xlu0 %5205, %v5148
      %v5207 = vpop.permute.xlu0 %5206
      %5210 = vset.pattern.permute.xlu0 0
      %5211 = vperm.xlu0 %5210, %v5149
      %v5212 = vpop.permute.xlu0 %5211
      %5215 = vset.pattern.permute.xlu0 0
      %5216 = vperm.xlu0 %5215, %v5150
      %v5217 = vpop.permute.xlu0 %5216
      %5220 = vset.pattern.permute.xlu0 0
      %5221 = vperm.xlu0 %5220, %v5151
      %v5222 = vpop.permute.xlu0 %5221
      %5225 = vset.pattern.permute.xlu0 0
      %5226 = vperm.xlu0 %5225, %v5152
      %v5227 = vpop.permute.xlu0 %5226
      %5230 = vset.pattern.permute.xlu0 0
      %5231 = vperm.xlu0 %5230, %v5153
      %v5232 = vpop.permute.xlu0 %5231
      %5235 = vset.pattern.permute.xlu0 0
      %5236 = vperm.xlu0 %5235, %v5154
      %v5237 = vpop.permute.xlu0 %5236
      %5240 = vset.pattern.permute.xlu0 0
      %5241 = vperm.xlu0 %5240, %v5155
      %v5242 = vpop.permute.xlu0 %5241
      %5245 = vset.pattern.permute.xlu0 0
      %5246 = vperm.xlu0 %5245, %v5156
      %v5247 = vpop.permute.xlu0 %5246
      %5250 = vset.pattern.permute.xlu0 0
      %5251 = vperm.xlu0 %5250, %v5157
      %v5252 = vpop.permute.xlu0 %5251
      %5255 = vset.pattern.permute.xlu0 0
      %5256 = vperm.xlu0 %5255, %v5158
      %v5257 = vpop.permute.xlu0 %5256
      %5260 = vset.pattern.permute.xlu0 0
      %5261 = vperm.xlu0 %5260, %v5159
      %v5262 = vpop.permute.xlu0 %5261
      %5265 = vset.pattern.permute.xlu0 0
      %5266 = vperm.xlu0 %5265, %v5160
      %v5267 = vpop.permute.xlu0 %5266
      %5270 = vset.pattern.permute.xlu0 0
      %5271 = vperm.xlu0 %5270, %v5161
      %v5272 = vpop.permute.xlu0 %5271
      %5275 = vset.pattern.permute.xlu0 0
      %5276 = vperm.xlu0 %5275, %v5162
      %v5277 = vpop.permute.xlu0 %5276
      %5280 = vset.pattern.permute.xlu0 0
      %5281 = vperm.xlu0 %5280, %v5163
      %v5282 = vpop.permute.xlu0 %5281
      %5285 = vset.pattern.permute.xlu0 0
      %5286 = vperm.xlu0 %5285, %v5164
      %v5287 = vpop.permute.xlu0 %5286
      %5290 = vset.pattern.permute.xlu0 0
      %5291 = vperm.xlu0 %5290, %v5165
      %v5292 = vpop.permute.xlu0 %5291
      %5295 = vset.pattern.permute.xlu0 0
      %5296 = vperm.xlu0 %5295, %v5166
      %v5297 = vpop.permute.xlu0 %5296
      %5300 = vset.pattern.permute.xlu0 0
      %5301 = vperm.xlu0 %5300, %v5167
      %v5302 = vpop.permute.xlu0 %5301
      %5305 = vset.pattern.permute.xlu0 0
      %5306 = vperm.xlu0 %5305, %v5168
      %v5307 = vpop.permute.xlu0 %5306
      %5310 = vset.pattern.permute.xlu0 0
      %5311 = vperm.xlu0 %5310, %v5169
      %v5312 = vpop.permute.xlu0 %5311
      %5315 = vset.pattern.permute.xlu0 0
      %5316 = vperm.xlu0 %5315, %v5170
      %v5317 = vpop.permute.xlu0 %5316
      %5320 = vset.pattern.permute.xlu0 0
      %5321 = vperm.xlu0 %5320, %v5171
      %v5322 = vpop.permute.xlu0 %5321
      %5325 = vset.pattern.permute.xlu0 0
      %5326 = vperm.xlu0 %5325, %v5172
      %v5327 = vpop.permute.xlu0 %5326
      %5330 = vset.pattern.permute.xlu0 0
      %5331 = vperm.xlu0 %5330, %v5173
      %v5332 = vpop.permute.xlu0 %5331
      %5335 = vset.pattern.permute.xlu0 0
      %5336 = vperm.xlu0 %5335, %v5174
      %v5337 = vpop.permute.xlu0 %5336
      %5340 = vset.pattern.permute.xlu0 0
      %5341 = vperm.xlu0 %5340, %v5175
      %v5342 = vpop.permute.xlu0 %5341
      %5345 = vset.pattern.permute.xlu0 0
      %5346 = vperm.xlu0 %5345, %v5176
      %v5347 = vpop.permute.xlu0 %5346
      %5350 = vset.pattern.permute.xlu0 0
      %5351 = vperm.xlu0 %5350, %v5177
      %v5352 = vpop.permute.xlu0 %5351
      %5355 = vset.pattern.permute.xlu0 0
      %5356 = vperm.xlu0 %5355, %v5178
      %v5357 = vpop.permute.xlu0 %5356
      %5360 = vset.pattern.permute.xlu0 0
      %5361 = vperm.xlu0 %5360, %v5179
      %v5362 = vpop.permute.xlu0 %5361
      %5365 = vset.pattern.permute.xlu0 0
      %5366 = vperm.xlu0 %5365, %v5180
      %v5367 = vpop.permute.xlu0 %5366
      %5370 = vset.pattern.permute.xlu0 0
      %5371 = vperm.xlu0 %5370, %v5181
      %v5372 = vpop.permute.xlu0 %5371
      %5375 = vset.pattern.permute.xlu0 0
      %5376 = vperm.xlu0 %5375, %v5182
      %v5377 = vpop.permute.xlu0 %5376
      %5380 = vset.pattern.permute.xlu0 0
      %5381 = vperm.xlu0 %5380, %v5183
      %v5382 = vpop.permute.xlu0 %5381
      %5385 = vset.pattern.permute.xlu0 0
      %5386 = vperm.xlu0 %5385, %v5184
      %v5387 = vpop.permute.xlu0 %5386
      %5390 = vset.pattern.permute.xlu0 0
      %5391 = vperm.xlu0 %5390, %v5185
      %v5392 = vpop.permute.xlu0 %5391
      %5395 = vset.pattern.permute.xlu0 0
      %5396 = vperm.xlu0 %5395, %v5186
      %v5397 = vpop.permute.xlu0 %5396
      %5400 = vset.pattern.permute.xlu0 0
      %5401 = vperm.xlu0 %5400, %v5187
      %v5402 = vpop.permute.xlu0 %5401
      %5405 = vset.pattern.permute.xlu0 0
      %5406 = vperm.xlu0 %5405, %v5188
      %v5407 = vpop.permute.xlu0 %5406
      %5410 = vset.pattern.permute.xlu0 0
      %5411 = vperm.xlu0 %5410, %v5189
      %v5412 = vpop.permute.xlu0 %5411
      %5415 = vset.pattern.permute.xlu0 0
      %5416 = vperm.xlu0 %5415, %v5190
      %v5417 = vpop.permute.xlu0 %5416
      %5420 = vset.pattern.permute.xlu0 0
      %5421 = vperm.xlu0 %5420, %v5191
      %v5422 = vpop.permute.xlu0 %5421
      %5425 = vset.pattern.permute.xlu0 0
      %5426 = vperm.xlu0 %5425, %v5192
      %v5427 = vpop.permute.xlu0 %5426
      %5430 = vset.pattern.permute.xlu0 0
      %5431 = vperm.xlu0 %5430, %v5193
      %v5432 = vpop.permute.xlu0 %5431
      %v5434 = vmul.f32 %v4858, %v5197
      %v5435 = vmul.f32 %v4859, %v5202
      %v5436 = vmul.f32 %v4860, %v5207
      %v5437 = vmul.f32 %v4861, %v5212
      %v5438 = vmul.f32 %v4862, %v5217
      %v5439 = vmul.f32 %v4863, %v5222
      %v5440 = vmul.f32 %v4864, %v5227
      %v5441 = vmul.f32 %v4865, %v5232
      %v5442 = vmul.f32 %v4866, %v5237
      %v5443 = vmul.f32 %v4867, %v5242
      %v5444 = vmul.f32 %v4868, %v5247
      %v5445 = vmul.f32 %v4869, %v5252
      %v5446 = vmul.f32 %v4870, %v5257
      %v5447 = vmul.f32 %v4871, %v5262
      %v5448 = vmul.f32 %v4872, %v5267
      %v5449 = vmul.f32 %v4873, %v5272
      %v5450 = vmul.f32 %v4874, %v5277
      %v5451 = vmul.f32 %v4875, %v5282
      %v5452 = vmul.f32 %v4876, %v5287
      %v5453 = vmul.f32 %v4877, %v5292
      %v5454 = vmul.f32 %v4878, %v5297
      %v5455 = vmul.f32 %v4879, %v5302
      %v5456 = vmul.f32 %v4880, %v5307
      %v5457 = vmul.f32 %v4881, %v5312
      %v5458 = vmul.f32 %v4882, %v5317
      %v5459 = vmul.f32 %v4883, %v5322
      %v5460 = vmul.f32 %v4884, %v5327
      %v5461 = vmul.f32 %v4885, %v5332
      %v5462 = vmul.f32 %v4886, %v5337
      %v5463 = vmul.f32 %v4887, %v5342
      %v5464 = vmul.f32 %v4888, %v5347
      %v5465 = vmul.f32 %v4889, %v5352
      %v5466 = vmul.f32 %v4890, %v5357
      %v5467 = vmul.f32 %v4891, %v5362
      %v5468 = vmul.f32 %v4892, %v5367
      %v5469 = vmul.f32 %v4893, %v5372
      %v5470 = vmul.f32 %v4894, %v5377
      %v5471 = vmul.f32 %v4895, %v5382
      %v5472 = vmul.f32 %v4896, %v5387
      %v5473 = vmul.f32 %v4897, %v5392
      %v5474 = vmul.f32 %v4898, %v5397
      %v5475 = vmul.f32 %v4899, %v5402
      %v5476 = vmul.f32 %v4900, %v5407
      %v5477 = vmul.f32 %v4901, %v5412
      %v5478 = vmul.f32 %v4902, %v5417
      %v5479 = vmul.f32 %v4903, %v5422
      %v5480 = vmul.f32 %v4904, %v5427
      %v5481 = vmul.f32 %v4905, %v5432
      %v5482 = vadd.f32 %v5434, %v5435
      %v5483 = vadd.f32 %v5482, %v5436
      %v5484 = vadd.f32 %v5483, %v5437
      %v5485 = vadd.f32 %v5484, %v5438
      %v5486 = vadd.f32 %v5485, %v5439
      %v5487 = vadd.f32 %v5486, %v5440
      %v5488 = vadd.f32 %v5487, %v5441
      %v5489 = vadd.f32 %v5488, %v5442
      %v5490 = vadd.f32 %v5489, %v5443
      %v5491 = vadd.f32 %v5490, %v5444
      %v5492 = vadd.f32 %v5491, %v5445
      %v5493 = vadd.f32 %v5492, %v5446
      %v5494 = vadd.f32 %v5493, %v5447
      %v5495 = vadd.f32 %v5494, %v5448
      %v5496 = vadd.f32 %v5495, %v5449
      %v5497 = vadd.f32 %v5496, %v5450
      %v5498 = vadd.f32 %v5497, %v5451
      %v5499 = vadd.f32 %v5498, %v5452
      %v5500 = vadd.f32 %v5499, %v5453
      %v5501 = vadd.f32 %v5500, %v5454
      %v5502 = vadd.f32 %v5501, %v5455
      %v5503 = vadd.f32 %v5502, %v5456
      %v5504 = vadd.f32 %v5503, %v5457
      %v5505 = vadd.f32 %v5504, %v5458
      %v5506 = vadd.f32 %v5505, %v5459
      %v5507 = vadd.f32 %v5506, %v5460
      %v5508 = vadd.f32 %v5507, %v5461
      %v5509 = vadd.f32 %v5508, %v5462
      %v5510 = vadd.f32 %v5509, %v5463
      %v5511 = vadd.f32 %v5510, %v5464
      %v5512 = vadd.f32 %v5511, %v5465
      %v5513 = vadd.f32 %v5512, %v5466
      %v5514 = vadd.f32 %v5513, %v5467
      %v5515 = vadd.f32 %v5514, %v5468
      %v5516 = vadd.f32 %v5515, %v5469
      %v5517 = vadd.f32 %v5516, %v5470
      %v5518 = vadd.f32 %v5517, %v5471
      %v5519 = vadd.f32 %v5518, %v5472
      %v5520 = vadd.f32 %v5519, %v5473
      %v5521 = vadd.f32 %v5520, %v5474
      %v5522 = vadd.f32 %v5521, %v5475
      %v5523 = vadd.f32 %v5522, %v5476
      %v5524 = vadd.f32 %v5523, %v5477
      %v5525 = vadd.f32 %v5524, %v5478
      %v5526 = vadd.f32 %v5525, %v5479
      %v5527 = vadd.f32 %v5526, %v5480
      %v5528 = vadd.f32 %v5527, %v5481
      %v5529 = vrot.slane %v5528, 4
      %v5530 = vadd.f32 %v5528, %v5529
      %v5531 = vrot.slane %v5530, 2
      %v5532 = vadd.f32 %v5530, %v5531
      %v5533 = vrot.slane %v5532, 1
      %v5534 = vadd.f32 %v5532, %v5533
      %5535 = vst [vmem:[%s272] sm:$0x1] %v5534
      %v5536 = vmul.f32 %v5434, %v5434
      %v5537 = vmul.f32 %v5435, %v5435
      %v5538 = vmul.f32 %v5436, %v5436
      %v5539 = vmul.f32 %v5437, %v5437
      %v5540 = vmul.f32 %v5438, %v5438
      %v5541 = vmul.f32 %v5439, %v5439
      %v5542 = vmul.f32 %v5440, %v5440
      %v5543 = vmul.f32 %v5441, %v5441
      %v5544 = vmul.f32 %v5442, %v5442
      %v5545 = vmul.f32 %v5443, %v5443
      %v5546 = vmul.f32 %v5444, %v5444
      %v5547 = vmul.f32 %v5445, %v5445
      %v5548 = vmul.f32 %v5446, %v5446
      %v5549 = vmul.f32 %v5447, %v5447
      %v5550 = vmul.f32 %v5448, %v5448
      %v5551 = vmul.f32 %v5449, %v5449
      %v5552 = vmul.f32 %v5450, %v5450
      %v5553 = vmul.f32 %v5451, %v5451
      %v5554 = vmul.f32 %v5452, %v5452
      %v5555 = vmul.f32 %v5453, %v5453
      %v5556 = vmul.f32 %v5454, %v5454
      %v5557 = vmul.f32 %v5455, %v5455
      %v5558 = vmul.f32 %v5456, %v5456
      %v5559 = vmul.f32 %v5457, %v5457
      %v5560 = vmul.f32 %v5458, %v5458
      %v5561 = vmul.f32 %v5459, %v5459
      %v5562 = vmul.f32 %v5460, %v5460
      %v5563 = vmul.f32 %v5461, %v5461
      %v5564 = vmul.f32 %v5462, %v5462
      %v5565 = vmul.f32 %v5463, %v5463
      %v5566 = vmul.f32 %v5464, %v5464
      %v5567 = vmul.f32 %v5465, %v5465
      %v5568 = vmul.f32 %v5466, %v5466
      %v5569 = vmul.f32 %v5467, %v5467
      %v5570 = vmul.f32 %v5468, %v5468
      %v5571 = vmul.f32 %v5469, %v5469
      %v5572 = vmul.f32 %v5470, %v5470
      %v5573 = vmul.f32 %v5471, %v5471
      %v5574 = vmul.f32 %v5472, %v5472
      %v5575 = vmul.f32 %v5473, %v5473
      %v5576 = vmul.f32 %v5474, %v5474
      %v5577 = vmul.f32 %v5475, %v5475
      %v5578 = vmul.f32 %v5476, %v5476
      %v5579 = vmul.f32 %v5477, %v5477
      %v5580 = vmul.f32 %v5478, %v5478
      %v5581 = vmul.f32 %v5479, %v5479
      %v5582 = vmul.f32 %v5480, %v5480
      %v5583 = vmul.f32 %v5481, %v5481
      %v5584 = vadd.f32 %v5536, %v5537
      %v5585 = vadd.f32 %v5584, %v5538
      %v5586 = vadd.f32 %v5585, %v5539
      %v5587 = vadd.f32 %v5586, %v5540
      %v5588 = vadd.f32 %v5587, %v5541
      %v5589 = vadd.f32 %v5588, %v5542
      %v5590 = vadd.f32 %v5589, %v5543
      %v5591 = vadd.f32 %v5590, %v5544
      %v5592 = vadd.f32 %v5591, %v5545
      %v5593 = vadd.f32 %v5592, %v5546
      %v5594 = vadd.f32 %v5593, %v5547
      %v5595 = vadd.f32 %v5594, %v5548
      %v5596 = vadd.f32 %v5595, %v5549
      %v5597 = vadd.f32 %v5596, %v5550
      %v5598 = vadd.f32 %v5597, %v5551
      %v5599 = vadd.f32 %v5598, %v5552
      %v5600 = vadd.f32 %v5599, %v5553
      %v5601 = vadd.f32 %v5600, %v5554
      %v5602 = vadd.f32 %v5601, %v5555
      %v5603 = vadd.f32 %v5602, %v5556
      %v5604 = vadd.f32 %v5603, %v5557
      %v5605 = vadd.f32 %v5604, %v5558
      %v5606 = vadd.f32 %v5605, %v5559
      %v5607 = vadd.f32 %v5606, %v5560
      %v5608 = vadd.f32 %v5607, %v5561
      %v5609 = vadd.f32 %v5608, %v5562
      %v5610 = vadd.f32 %v5609, %v5563
      %v5611 = vadd.f32 %v5610, %v5564
      %v5612 = vadd.f32 %v5611, %v5565
      %v5613 = vadd.f32 %v5612, %v5566
      %v5614 = vadd.f32 %v5613, %v5567
      %v5615 = vadd.f32 %v5614, %v5568
      %v5616 = vadd.f32 %v5615, %v5569
      %v5617 = vadd.f32 %v5616, %v5570
      %v5618 = vadd.f32 %v5617, %v5571
      %v5619 = vadd.f32 %v5618, %v5572
      %v5620 = vadd.f32 %v5619, %v5573
      %v5621 = vadd.f32 %v5620, %v5574
      %v5622 = vadd.f32 %v5621, %v5575
      %v5623 = vadd.f32 %v5622, %v5576
      %v5624 = vadd.f32 %v5623, %v5577
      %v5625 = vadd.f32 %v5624, %v5578
      %v5626 = vadd.f32 %v5625, %v5579
      %v5627 = vadd.f32 %v5626, %v5580
      %v5628 = vadd.f32 %v5627, %v5581
      %v5629 = vadd.f32 %v5628, %v5582
      %v5630 = vadd.f32 %v5629, %v5583
      %v5631 = vrot.slane %v5630, 4
      %v5632 = vadd.f32 %v5630, %v5631
      %v5633 = vrot.slane %v5632, 2
      %v5634 = vadd.f32 %v5632, %v5633
      %v5635 = vrot.slane %v5634, 1
      %v5636 = vadd.f32 %v5634, %v5635
      %5637 = vst [vmem:[%s272 + $0x1] sm:$0x1] %v5636
      %p5638 = scmp.lt.s32.totalorder %s20, 1
      %s5639 = scalar_select %p5638, %s20, 1
      %p5640 = scmp.lt.s32.totalorder %s21, 0
      %s5641 = scalar_select %p5640, %s21, 0
      %s5642 = smul.addr %s5641, 48
      %s5643 = smul.addr %s5639, 48
      %s5644 = sadd.s32 %s5642, %s5643
      %s5645 = smul.addr %s5644, 4
      %s5646 = scalar_lea.vmem %s3, %s5645
      %p5647 = scmp.lt.s32.totalorder %s20, 1
      %s5648 = scalar_select %p5647, %s20, 1
      %p5649 = scmp.lt.s32.totalorder %s21, 0
      %s5650 = scalar_select %p5649, %s21, 0
      %s5651 = sadd.s32 %s5650, %s5648
      %s5652 = smul.addr %s5651, 2
      %s5653 = scalar_lea.vmem %s4, %s5652
      // Predicated region
      $region33: #{conv_block_forward.3} parent=31 // pred_check
        %p5654 = pneg %p123
      $region34: #{conv_block_forward.3} parent=31 // pred_check_branch
        %5656 = sbr.rel (%p5654) target = $region36
      $region35: #{conv_block_forward.3} parent=31 // pred_region
        _
      $region36: #{conv_block_forward.3} parent=31 // pred_fallthru
        _
      // Predicated region
      $region37: #{conv_block_forward.3} parent=31 // pred_check
        %p5657 = pneg %p151
      $region38: #{conv_block_forward.3} parent=31 // pred_check_branch
        %5659 = sbr.rel (%p5657) target = $region40
      $region39: #{conv_block_forward.3} parent=31 // pred_region
        _
      $region40: #{conv_block_forward.3} parent=31 // pred_fallthru
        _
    $region32: #{conv_block_forward.3} parent=5 // pred_fallthru
      _
    %p5660 = scmp.le.s32.totalorder 2, %s11
    // Predicated region
    $region41: #{conv_block_forward.3} parent=5 // pred_check
      %p5661 = pneg %p5660
    $region42: #{conv_block_forward.3} parent=5 // pred_check_branch
      %5663 = sbr.rel (%p5661) target = $region44
    $region43: #{conv_block_forward.3} parent=5 // pred_region
      %s5664 = ssub.s32 %s11, 2
      // Predicated region
      $region45: #{conv_block_forward.3} parent=43 // pred_check
        %p5665 = pneg %p129
      $region46: #{conv_block_forward.3} parent=43 // pred_check_branch
        %5667 = sbr.rel (%p5665) target = $region48
      $region47: #{conv_block_forward.3} parent=43 // pred_region
        %p5668 = scmp.lt.s32.totalorder %s22, 1
        %s5669 = scalar_select %p5668, %s22, 1
        %p5670 = scmp.lt.s32.totalorder %s23, 0
        %s5671 = scalar_select %p5670, %s23, 0
        %s5672 = smul.addr %s5671, 48
        %s5673 = smul.addr %s5669, 48
        %s5674 = sadd.s32 %s5672, %s5673
        %s5675 = smul.addr %s5674, 4
        %s5676 = scalar_lea.vmem %s3, %s5675
      $region48: #{conv_block_forward.3} parent=43 // pred_fallthru
        _
      // Predicated region
      $region49: #{conv_block_forward.3} parent=43 // pred_check
        %p5677 = pneg %p157
      $region50: #{conv_block_forward.3} parent=43 // pred_check_branch
        %5679 = sbr.rel (%p5677) target = $region52
      $region51: #{conv_block_forward.3} parent=43 // pred_region
        %p5680 = scmp.lt.s32.totalorder %s22, 1
        %s5681 = scalar_select %p5680, %s22, 1
        %p5682 = scmp.lt.s32.totalorder %s23, 0
        %s5683 = scalar_select %p5682, %s23, 0
        %s5684 = sadd.s32 %s5683, %s5681
        %s5685 = smul.addr %s5684, 2
        %s5686 = scalar_lea.vmem %s4, %s5685
      $region52: #{conv_block_forward.3} parent=43 // pred_fallthru
        _
    $region44: #{conv_block_forward.3} parent=5 // pred_fallthru
      _
  $region6: #{conv_block_forward.3} parent=0 // loop_footer
    %s15 = sadd.s32 1, %s11
  $region7: #{conv_block_forward.3} parent=0 // loop_footer_branch
    %10 = sbr.rel target = $region3
  $region8: #{conv_block_forward.3} parent=0 // loop_exit
    _

</llo_original>
